<compile_context>
chip_gen: v5e
topology: v5e:2x2
jax: 0.10.0
libtpu: 0.0.40
codegen_flags: <defaults>
</compile_context>

<pallas_src>
import functools

import jax
import jax.numpy as jnp
from jax.experimental import pallas as pl
from jax.experimental.pallas import tpu as pltpu

LANE = 128


def _round_up(v, m):
    return (v + m - 1) // m * m


def _chip_config():
    """(preferred row tile, VMEM-limit cap in bytes) per TPU generation."""
    try:
        kind = jax.devices()[0].device_kind.lower()
    except Exception:
        kind = ""
    if "v5" in kind or "v6" in kind:
        # 128 MiB physical VMEM -> big tiles, generous scoped limit.
        return 512, 96 * 1024 * 1024
    # v7x-like (64 MiB per TensorCore) or unknown: be conservative.
    return 256, 48 * 1024 * 1024


def _clamp_vmem(nbytes, cap):
    need = int(nbytes * 1.4) + (4 << 20)
    return min(max(need, 32 << 20), cap)


# Whole-array-in-VMEM BlockSpec: a single resident copy, no per-grid-step
# windowing and no double buffering (constant-index inputs).
_MS = getattr(pltpu, "MemorySpace", None) or getattr(pltpu, "TPUMemorySpace")
_RESIDENT_SPEC = pl.BlockSpec(memory_space=_MS.VMEM)


def _row_spec(tile_n, cols):
    return pl.BlockSpec((tile_n, cols), lambda i: (i, 0))


# ----------------------------------------------------------------------------
# Shared GRU cell (PyTorch nn.GRUCell semantics, gate order r, z, n).
# MXU matmuls in bf16 with f32 accumulation; gate math in f32.
# Gate slices sit at lane offsets 0, HG_pad, 2*HG_pad (multiples of 128).
# ----------------------------------------------------------------------------
def _gru_cell(x_bf16, h_f32, wih, whh, bih, bhh):
    hg = whh.shape[0]
    gi = jnp.dot(x_bf16, wih, preferred_element_type=jnp.float32) + bih
    gh = jnp.dot(h_f32.astype(jnp.bfloat16), whh,
                 preferred_element_type=jnp.float32) + bhh
    r = jax.nn.sigmoid(gi[:, :hg] + gh[:, :hg])
    z = jax.nn.sigmoid(gi[:, hg:2 * hg] + gh[:, hg:2 * hg])
    n = jnp.tanh(gi[:, 2 * hg:] + r * gh[:, 2 * hg:])
    return (1.0 - z) * n + z * h_f32


# ----------------------------------------------------------------------------
# Small-graph fused kernel: whole network in one gridless pallas_call.
# ----------------------------------------------------------------------------
def _fused_kernel(nlayers, x_ref, a_ref, h0_ref, lin_w_ref, lin_b_ref,
                  conv_w_ref, conv_b_ref, wih_ref, whh_ref, bih_ref, bhh_ref,
                  fc_w_ref, fc_b_ref, out_ref):
    wih, whh = wih_ref[...], whh_ref[...]
    bih, bhh = bih_ref[...], bhh_ref[...]
    a = a_ref[...]

    x = jnp.dot(x_ref[...], lin_w_ref[...], preferred_element_type=jnp.float32)
    x_bf = jnp.maximum(x + lin_b_ref[...], 0.0).astype(jnp.bfloat16)
    h = _gru_cell(x_bf, h0_ref[...], wih, whh, bih, bhh)

    for l in range(nlayers):                      # static unroll
        ax = jnp.dot(a, x_bf, preferred_element_type=jnp.float32)
        agg = jnp.dot(ax.astype(jnp.bfloat16), conv_w_ref[l],
                      preferred_element_type=jnp.float32)
        x_bf = jnp.maximum(agg + conv_b_ref[l], 0.0).astype(jnp.bfloat16)
        h = _gru_cell(x_bf, h, wih, whh, bih, bhh)

    out_ref[...] = (jnp.dot(h.astype(jnp.bfloat16), fc_w_ref[...],
                            preferred_element_type=jnp.float32)
                    + fc_b_ref[...])


# ----------------------------------------------------------------------------
# Tiled-path kernels (row-parallel over node blocks).
# ----------------------------------------------------------------------------
def _embed_kernel(x_ref, h0_ref, lin_w_ref, lin_b_ref,
                  wih_ref, whh_ref, bih_ref, bhh_ref,
                  x_out_ref, h_out_ref):
    x = jnp.dot(x_ref[...], lin_w_ref[...], preferred_element_type=jnp.float32)
    x_bf = jnp.maximum(x + lin_b_ref[...], 0.0).astype(jnp.bfloat16)
    h_out_ref[...] = _gru_cell(x_bf, h0_ref[...], wih_ref[...], whh_ref[...],
                               bih_ref[...], bhh_ref[...])
    x_out_ref[...] = x_bf


def _conv_gru_kernel(a_ref, xall_ref, h_ref, conv_w_ref, conv_b_ref,
                     wih_ref, whh_ref, bih_ref, bhh_ref,
                     x_out_ref, h_out_ref):
    # agg = (A_hat[rows, :] @ x_all) @ W  (associativity of the dense form).
    ax = jnp.dot(a_ref[...], xall_ref[...], preferred_element_type=jnp.float32)
    agg = jnp.dot(ax.astype(jnp.bfloat16), conv_w_ref[...],
                  preferred_element_type=jnp.float32)
    x_bf = jnp.maximum(agg + conv_b_ref[...], 0.0).astype(jnp.bfloat16)
    h_out_ref[...] = _gru_cell(x_bf, h_ref[...], wih_ref[...], whh_ref[...],
                               bih_ref[...], bhh_ref[...])
    x_out_ref[...] = x_bf


def _conv_gru_fc_kernel(a_ref, xall_ref, h_ref, conv_w_ref, conv_b_ref,
                        wih_ref, whh_ref, bih_ref, bhh_ref,
                        fc_w_ref, fc_b_ref, out_ref):
    # Last layer: conv + relu + GRU + fc fused; only the logits leave VMEM.
    ax = jnp.dot(a_ref[...], xall_ref[...], preferred_element_type=jnp.float32)
    agg = jnp.dot(ax.astype(jnp.bfloat16), conv_w_ref[...],
                  preferred_element_type=jnp.float32)
    x_bf = jnp.maximum(agg + conv_b_ref[...], 0.0).astype(jnp.bfloat16)
    h = _gru_cell(x_bf, h_ref[...], wih_ref[...], whh_ref[...],
                  bih_ref[...], bhh_ref[...])
    out_ref[...] = (jnp.dot(h.astype(jnp.bfloat16), fc_w_ref[...],
                            preferred_element_type=jnp.float32)
                    + fc_b_ref[...])


def _fc_kernel(h_ref, fc_w_ref, fc_b_ref, out_ref):
    # Only used when there are zero conv layers.
    out_ref[...] = (jnp.dot(h_ref[...].astype(jnp.bfloat16), fc_w_ref[...],
                            preferred_element_type=jnp.float32)
                    + fc_b_ref[...])


# ----------------------------------------------------------------------------
# Wrapper: padding, dtype casting, path selection, pallas_call dispatch.
# ----------------------------------------------------------------------------
@functools.partial(jax.jit, static_argnames=("small_graph_max_nodes",))
def gcn_forward(x, a_hat, h0, params, *, small_graph_max_nodes=1024):
    n, f = x.shape
    hid = params["lin_w"].shape[1]
    hg = params["gru_whh"].shape[0]
    ncls = params["fc_w"].shape[1]
    nlayers = int(params["conv_w"].shape[0])

    tile_pref, vmem_cap = _chip_config()

    h_pad = _round_up(hid, LANE)
    hg_pad = _round_up(hg, LANE)
    c_pad = _round_up(ncls, LANE)
    f_pad = _round_up(f, 8)   # full-dim block -> exempt from the 128-lane rule

    # ---- static path selection --------------------------------------------
    n_small = _round_up(max(n, 8), LANE)
    fused_bytes = (
        n_small * n_small * 2 + n_small * f_pad * 2 + n_small * hg_pad * 4
        + n_small * c_pad * 4
        + n_small * (3 * h_pad + 10 * hg_pad) * 4          # f32 temporaries
        + (f_pad * h_pad + max(nlayers, 1) * h_pad * h_pad
           + (h_pad + hg_pad) * 3 * hg_pad + hg_pad * c_pad) * 2)
    use_fused = (n <= small_graph_max_nodes
                 and int(fused_bytes * 1.4) < vmem_cap)

    if use_fused:
        tile_n = n_small
        n_pad = n_small
    else:
        tile_n = min(tile_pref, _round_up(max(n, 8), LANE))
        n_pad = _round_up(max(n, tile_n), tile_n)

    # ---- padding / casting --------------------------------------------------
    def pad2(a, rows, cols):
        return jnp.pad(a, ((0, rows - a.shape[0]), (0, cols - a.shape[1])))

    x_p = pad2(x, n_pad, f_pad).astype(jnp.bfloat16)
    a_p = pad2(a_hat, n_pad, n_pad).astype(jnp.bfloat16)
    h_p = pad2(h0, n_pad, hg_pad).astype(jnp.float32)

    lin_w = pad2(params["lin_w"], f_pad, h_pad).astype(jnp.bfloat16)
    lin_b = pad2(params["lin_b"], 1, h_pad).astype(jnp.float32)
    nl_store = max(nlayers, 1)
    conv_w = jnp.pad(params["conv_w"],
                     ((0, nl_store - nlayers), (0, h_pad - hid), (0, h_pad - hid))
                     ).astype(jnp.bfloat16)
    conv_b = jnp.pad(params["conv_b"],
                     ((0, nl_store - nlayers), (0, 0), (0, h_pad - hid))
                     ).astype(jnp.float32)
    fc_w = pad2(params["fc_w"], hg_pad, c_pad).astype(jnp.bfloat16)
    fc_b = pad2(params["fc_b"], 1, c_pad).astype(jnp.float32)

    # GRU weights: pad each gate block (r, z, n) independently so every gate
    # occupies a lane-aligned 128-lane slab.
    def pad_gru_w(w, in_dim, in_pad):
        w3 = w.reshape(in_dim, 3, hg)
        w3 = jnp.pad(w3, ((0, in_pad - in_dim), (0, 0), (0, hg_pad - hg)))
        return w3.reshape(in_pad, 3 * hg_pad).astype(jnp.bfloat16)

    def pad_gru_b(b):
        b3 = b.reshape(1, 3, hg)
        b3 = jnp.pad(b3, ((0, 0), (0, 0), (0, hg_pad - hg)))
        return b3.reshape(1, 3 * hg_pad).astype(jnp.float32)

    wih = pad_gru_w(params["gru_wih"], hid, h_pad)
    whh = pad_gru_w(params["gru_whh"], hg, hg_pad)
    bih = pad_gru_b(params["gru_bih"])
    bhh = pad_gru_b(params["gru_bhh"])

    # ---- small-graph fused path ---------------------------------------------
    if use_fused:
        out_p = pl.pallas_call(
            functools.partial(_fused_kernel, nlayers),
            out_shape=jax.ShapeDtypeStruct((n_pad, c_pad), jnp.float32),
            compiler_params=pltpu.CompilerParams(
                vmem_limit_bytes=_clamp_vmem(fused_bytes, vmem_cap)),
        )(x_p, a_p, h_p, lin_w, lin_b, conv_w, conv_b,
          wih, whh, bih, bhh, fc_w, fc_b)
        return out_p[:n, :ncls]

    # ---- tiled large-graph path ---------------------------------------------
    grid = (n_pad // tile_n,)

    # VMEM budget derived from the *largest* stage (stage 2):
    # double-buffered A_hat row blocks + single-copy resident x + blocked
    # h / outputs + weights + f32 temporaries, with headroom.
    stage2_bytes = (
        2 * tile_n * n_pad * 2                    # A_hat row blocks (bf16, x2)
        + n_pad * h_pad * 2                       # resident x (single copy)
        + 2 * tile_n * hg_pad * 4                 # h row blocks
        + 2 * tile_n * h_pad * 2 + 2 * tile_n * hg_pad * 4
        + 2 * tile_n * c_pad * 4                  # outputs
        + tile_n * (3 * h_pad + 10 * hg_pad) * 4  # f32 temporaries
        + (f_pad * h_pad + h_pad * h_pad + (h_pad + hg_pad) * 3 * hg_pad
           + hg_pad * c_pad) * 2)                 # weights
    cp = pltpu.CompilerParams(
        dimension_semantics=("parallel",),        # row blocks shard across TCs
        vmem_limit_bytes=_clamp_vmem(stage2_bytes, vmem_cap))

    # Stage 1: x = relu(lin(x)); h = gru(x, h0)
    xf, hf = pl.pallas_call(
        _embed_kernel,
        grid=grid,
        in_specs=[
            _row_spec(tile_n, f_pad),             # x row block (full F width)
            _row_spec(tile_n, hg_pad),            # h0 row block
            _RESIDENT_SPEC, _RESIDENT_SPEC,       # lin_w, lin_b
            _RESIDENT_SPEC, _RESIDENT_SPEC,       # wih, whh
            _RESIDENT_SPEC, _RESIDENT_SPEC,       # bih, bhh
        ],
        out_specs=[_row_spec(tile_n, h_pad), _row_spec(tile_n, hg_pad)],
        out_shape=(jax.ShapeDtypeStruct((n_pad, h_pad), jnp.bfloat16),
                   jax.ShapeDtypeStruct((n_pad, hg_pad), jnp.float32)),
        compiler_params=cp,
    )(x_p, h_p, lin_w, lin_b, wih, whh, bih, bhh)

    # Stage 2: first (L-1) conv+GRU layers, statically unrolled.
    for l in range(nlayers - 1):
        xf, hf = pl.pallas_call(
            _conv_gru_kernel,
            grid=grid,
            in_specs=[
                _row_spec(tile_n, n_pad),         # streamed A_hat row block
                _RESIDENT_SPEC,                   # full x, single VMEM copy
                _row_spec(tile_n, hg_pad),        # h row block
                _RESIDENT_SPEC, _RESIDENT_SPEC,   # conv W, b
                _RESIDENT_SPEC, _RESIDENT_SPEC,   # wih, whh
                _RESIDENT_SPEC, _RESIDENT_SPEC,   # bih, bhh
            ],
            out_specs=[_row_spec(tile_n, h_pad), _row_spec(tile_n, hg_pad)],
            out_shape=(jax.ShapeDtypeStruct((n_pad, h_pad), jnp.bfloat16),
                       jax.ShapeDtypeStruct((n_pad, hg_pad), jnp.float32)),
            compiler_params=cp,
        )(a_p, xf, hf, conv_w[l], conv_b[l], wih, whh, bih, bhh)

    # Last conv layer with the fc head fused in (or standalone fc if L == 0).
    if nlayers >= 1:
        out_p = pl.pallas_call(
            _conv_gru_fc_kernel,
            grid=grid,
            in_specs=[
                _row_spec(tile_n, n_pad),
                _RESIDENT_SPEC,
                _row_spec(tile_n, hg_pad),
                _RESIDENT_SPEC, _RESIDENT_SPEC,   # conv W, b
                _RESIDENT_SPEC, _RESIDENT_SPEC,   # wih, whh
                _RESIDENT_SPEC, _RESIDENT_SPEC,   # bih, bhh
                _RESIDENT_SPEC, _RESIDENT_SPEC,   # fc_w, fc_b
            ],
            out_specs=_row_spec(tile_n, c_pad),
            out_shape=jax.ShapeDtypeStruct((n_pad, c_pad), jnp.float32),
            compiler_params=cp,
        )(a_p, xf, hf, conv_w[nlayers - 1], conv_b[nlayers - 1],
          wih, whh, bih, bhh, fc_w, fc_b)
    else:
        out_p = pl.pallas_call(
            _fc_kernel,
            grid=grid,
            in_specs=[_row_spec(tile_n, hg_pad), _RESIDENT_SPEC, _RESIDENT_SPEC],
            out_specs=_row_spec(tile_n, c_pad),
            out_shape=jax.ShapeDtypeStruct((n_pad, c_pad), jnp.float32),
            compiler_params=cp,
        )(hf, fc_w, fc_b)

    return out_p[:n, :ncls]


# ----------------------------------------------------------------------------
# Glue: dense normalized adjacency, matching torch_geometric GCNConv defaults
# (add_self_loops=True, symmetric D^-1/2 (A+I) D^-1/2 normalization).
# ----------------------------------------------------------------------------
def build_norm_adj(edge_index, edge_weight, num_nodes):
    src = edge_index[0]
    dst = edge_index[1]
    loops = jnp.arange(num_nodes, dtype=edge_index.dtype)
    src = jnp.concatenate([src, loops])
    dst = jnp.concatenate([dst, loops])
    w = jnp.concatenate([edge_weight, jnp.ones((num_nodes,), jnp.float32)])
    deg = jnp.zeros((num_nodes,), jnp.float32).at[dst].add(w)
    dinv = jnp.where(deg > 0, 1.0 / jnp.sqrt(deg), 0.0)
    norm = dinv[src] * w * dinv[dst]
    # out[target] = sum_src norm * x[src]  =>  A_hat[target, source]
    a_hat = jnp.zeros((num_nodes, num_nodes), jnp.float32).at[dst, src].add(norm)
    return a_hat


def init_params(key, num_features, hidden_channels, h_gru, hidden_layers, nclasses):
    ks = jax.random.split(key, 9)
    s = 0.1
    return {
        # already transposed to [in, out] layout for the kernels
        "lin_w": s * jax.random.normal(ks[0], (num_features, hidden_channels), jnp.float32),
        "lin_b": s * jax.random.normal(ks[1], (1, hidden_channels), jnp.float32),
        "conv_w": s * jax.random.normal(ks[2], (hidden_layers, hidden_channels, hidden_channels), jnp.float32),
        "conv_b": s * jax.random.normal(ks[3], (hidden_layers, 1, hidden_channels), jnp.float32),
        "gru_wih": s * jax.random.normal(ks[4], (hidden_channels, 3 * h_gru), jnp.float32),
        "gru_whh": s * jax.random.normal(ks[5], (h_gru, 3 * h_gru), jnp.float32),
        "gru_bih": s * jax.random.normal(ks[6], (1, 3 * h_gru), jnp.float32),
        "gru_bhh": s * jax.random.normal(ks[7], (1, 3 * h_gru), jnp.float32),
        "fc_w": s * jax.random.normal(ks[8], (h_gru, nclasses), jnp.float32),
        "fc_b": jnp.zeros((1, nclasses), jnp.float32),
    }


if __name__ == "__main__":
    # Small, deterministic problem.
    num_nodes = 200
    num_features = 16
    hidden_channels = 64
    h_gru = 32
    hidden_layers = 2
    nclasses = 5

    key = jax.random.PRNGKey(0)
    k_x, k_h, k_p = jax.random.split(key, 3)

    x = jax.random.normal(k_x, (num_nodes, num_features), jnp.float32)

    # Ring graph (both directions) + a few chords.
    idx = jnp.arange(num_nodes)
    chord_src = jnp.array([0, 3, 7, 11, 42, 99, 123, 150], dtype=jnp.int32)
    chord_dst = jnp.array([80, 120, 2, 5, 160, 17, 60, 199], dtype=jnp.int32)
    src = jnp.concatenate([idx, (idx + 1) % num_nodes, chord_src])
    dst = jnp.concatenate([(idx + 1) % num_nodes, idx, chord_dst])
    edge_index = jnp.stack([src, dst]).astype(jnp.int32)   # [2, E]
    edge_weight = jnp.ones((edge_index.shape[1],), jnp.float32)

    a_hat = build_norm_adj(edge_index, edge_weight, num_nodes)

    # torch.randn initial hidden state -> deterministic jax normal here.
    h0 = jax.random.normal(k_h, (num_nodes, h_gru), jnp.float32)

    params = init_params(k_p, num_features, hidden_channels, h_gru,
                         hidden_layers, nclasses)

    # Default: small-graph fused single-kernel path.
    out = jax.block_until_ready(gcn_forward(x, a_hat, h0, params))
    assert out.shape == (num_nodes, nclasses)
    assert bool(jnp.all(jnp.isfinite(out)))

    # Also exercise the tiled large-graph path on the same inputs and check
    # the two paths agree.
    out_tiled = jax.block_until_ready(
        gcn_forward(x, a_hat, h0, params, small_graph_max_nodes=0))
    assert out_tiled.shape == (num_nodes, nclasses)
    assert bool(jnp.all(jnp.isfinite(out_tiled)))
    assert bool(jnp.allclose(out, out_tiled, rtol=2e-2, atol=2e-2))

    print("KERNEL_OK")
</pallas_src>

<mosaic_0001>
module attributes {stable_mosaic.version = 11 : i64} {
  func.func @_fused_kernel(%arg0: memref<256x16xbf16, #tpu.memory_space<vmem>>, %arg1: memref<256x256xbf16, #tpu.memory_space<vmem>>, %arg2: memref<256x128xf32, #tpu.memory_space<vmem>>, %arg3: memref<16x128xbf16, #tpu.memory_space<vmem>>, %arg4: memref<1x128xf32, #tpu.memory_space<vmem>>, %arg5: memref<2x128x128xbf16, #tpu.memory_space<vmem>>, %arg6: memref<2x1x128xf32, #tpu.memory_space<vmem>>, %arg7: memref<128x384xbf16, #tpu.memory_space<vmem>>, %arg8: memref<128x384xbf16, #tpu.memory_space<vmem>>, %arg9: memref<1x384xf32, #tpu.memory_space<vmem>>, %arg10: memref<1x384xf32, #tpu.memory_space<vmem>>, %arg11: memref<128x128xbf16, #tpu.memory_space<vmem>>, %arg12: memref<1x128xf32, #tpu.memory_space<vmem>>, %arg13: memref<256x128xf32, #tpu.memory_space<vmem>>) attributes {dimension_semantics = [], scalar_prefetch = 0 : i64, scratch_operands = 0 : i64, tpu.core_type = #tpu.core_type<tc>} {
    %c0 = arith.constant 0 : index
    %c0_0 = arith.constant 0 : index
    %0 = vector.load %arg7[%c0, %c0_0] : memref<128x384xbf16, #tpu.memory_space<vmem>>, vector<128x384xbf16>
    %c0_1 = arith.constant 0 : index
    %c0_2 = arith.constant 0 : index
    %1 = vector.load %arg8[%c0_1, %c0_2] : memref<128x384xbf16, #tpu.memory_space<vmem>>, vector<128x384xbf16>
    %c0_3 = arith.constant 0 : index
    %c0_4 = arith.constant 0 : index
    %2 = vector.load %arg9[%c0_3, %c0_4] : memref<1x384xf32, #tpu.memory_space<vmem>>, vector<1x384xf32>
    %c0_5 = arith.constant 0 : index
    %c0_6 = arith.constant 0 : index
    %3 = vector.load %arg10[%c0_5, %c0_6] : memref<1x384xf32, #tpu.memory_space<vmem>>, vector<1x384xf32>
    %c0_7 = arith.constant 0 : index
    %c0_8 = arith.constant 0 : index
    %4 = vector.load %arg1[%c0_7, %c0_8] : memref<256x256xbf16, #tpu.memory_space<vmem>>, vector<256x256xbf16>
    %c0_9 = arith.constant 0 : index
    %c0_10 = arith.constant 0 : index
    %5 = vector.load %arg0[%c0_9, %c0_10] : memref<256x16xbf16, #tpu.memory_space<vmem>>, vector<256x16xbf16>
    %c0_11 = arith.constant 0 : index
    %c0_12 = arith.constant 0 : index
    %6 = vector.load %arg3[%c0_11, %c0_12] : memref<16x128xbf16, #tpu.memory_space<vmem>>, vector<16x128xbf16>
    %cst = arith.constant dense<0.000000e+00> : vector<256x128xf32>
    %7 = tpu.matmul %5, %6, %cst {dimension_numbers = #tpu.dot_dimension_numbers<[1], [0], [0], [1], [0, 0, 1, 1], [], []>} : vector<256x16xbf16>, vector<16x128xbf16>, vector<256x128xf32> -> vector<256x128xf32>
    %c0_13 = arith.constant 0 : index
    %c0_14 = arith.constant 0 : index
    %8 = vector.load %arg4[%c0_13, %c0_14] : memref<1x128xf32, #tpu.memory_space<vmem>>, vector<1x128xf32>
    %9 = vector.broadcast %8 : vector<1x128xf32> to vector<256x128xf32>
    %10 = arith.addf %7, %9 : vector<256x128xf32>
    %cst_15 = arith.constant 0.000000e+00 : f32
    %11 = vector.broadcast %cst_15 : f32 to vector<256x128xf32>
    %12 = arith.maximumf %10, %11 : vector<256x128xf32>
    %13 = arith.truncf %12 : vector<256x128xf32> to vector<256x128xbf16>
    %c0_16 = arith.constant 0 : index
    %c0_17 = arith.constant 0 : index
    %14 = vector.load %arg2[%c0_16, %c0_17] : memref<256x128xf32, #tpu.memory_space<vmem>>, vector<256x128xf32>
    %cst_18 = arith.constant dense<0.000000e+00> : vector<256x384xf32>
    %15 = tpu.matmul %13, %0, %cst_18 {dimension_numbers = #tpu.dot_dimension_numbers<[1], [0], [0], [1], [0, 0, 1, 1], [], []>} : vector<256x128xbf16>, vector<128x384xbf16>, vector<256x384xf32> -> vector<256x384xf32>
    %16 = vector.broadcast %2 : vector<1x384xf32> to vector<256x384xf32>
    %17 = arith.addf %15, %16 : vector<256x384xf32>
    %18 = arith.truncf %14 : vector<256x128xf32> to vector<256x128xbf16>
    %cst_19 = arith.constant dense<0.000000e+00> : vector<256x384xf32>
    %19 = tpu.matmul %18, %1, %cst_19 {dimension_numbers = #tpu.dot_dimension_numbers<[1], [0], [0], [1], [0, 0, 1, 1], [], []>} : vector<256x128xbf16>, vector<128x384xbf16>, vector<256x384xf32> -> vector<256x384xf32>
    %20 = vector.broadcast %3 : vector<1x384xf32> to vector<256x384xf32>
    %21 = arith.addf %19, %20 : vector<256x384xf32>
    %22 = vector.extract_strided_slice %17 {offsets = [0, 0], sizes = [256, 128], strides = [1, 1]} : vector<256x384xf32> to vector<256x128xf32>
    %23 = vector.extract_strided_slice %21 {offsets = [0, 0], sizes = [256, 128], strides = [1, 1]} : vector<256x384xf32> to vector<256x128xf32>
    %24 = arith.addf %22, %23 : vector<256x128xf32>
    %25 = arith.negf %24 : vector<256x128xf32>
    %26 = math.exp %25 : vector<256x128xf32>
    %cst_20 = arith.constant 1.000000e+00 : f32
    %27 = vector.broadcast %cst_20 : f32 to vector<256x128xf32>
    %28 = arith.addf %27, %26 : vector<256x128xf32>
    %29 = arith.divf %27, %28 : vector<256x128xf32>
    %30 = vector.extract_strided_slice %17 {offsets = [0, 128], sizes = [256, 128], strides = [1, 1]} : vector<256x384xf32> to vector<256x128xf32>
    %31 = vector.extract_strided_slice %21 {offsets = [0, 128], sizes = [256, 128], strides = [1, 1]} : vector<256x384xf32> to vector<256x128xf32>
    %32 = arith.addf %30, %31 : vector<256x128xf32>
    %33 = arith.negf %32 : vector<256x128xf32>
    %34 = math.exp %33 : vector<256x128xf32>
    %cst_21 = arith.constant 1.000000e+00 : f32
    %35 = vector.broadcast %cst_21 : f32 to vector<256x128xf32>
    %36 = arith.addf %35, %34 : vector<256x128xf32>
    %37 = arith.divf %35, %36 : vector<256x128xf32>
    %38 = vector.extract_strided_slice %17 {offsets = [0, 256], sizes = [256, 128], strides = [1, 1]} : vector<256x384xf32> to vector<256x128xf32>
    %39 = vector.extract_strided_slice %21 {offsets = [0, 256], sizes = [256, 128], strides = [1, 1]} : vector<256x384xf32> to vector<256x128xf32>
    %40 = arith.mulf %29, %39 : vector<256x128xf32>
    %41 = arith.addf %38, %40 : vector<256x128xf32>
    %42 = math.tanh %41 : vector<256x128xf32>
    %cst_22 = arith.constant 1.000000e+00 : f32
    %43 = vector.broadcast %cst_22 : f32 to vector<256x128xf32>
    %44 = arith.subf %43, %37 : vector<256x128xf32>
    %45 = arith.mulf %44, %42 : vector<256x128xf32>
    %46 = arith.mulf %37, %14 : vector<256x128xf32>
    %47 = arith.addf %45, %46 : vector<256x128xf32>
    %cst_23 = arith.constant dense<0.000000e+00> : vector<256x128xf32>
    %48 = tpu.matmul %4, %13, %cst_23 {dimension_numbers = #tpu.dot_dimension_numbers<[1], [0], [0], [1], [0, 0, 1, 1], [], []>} : vector<256x256xbf16>, vector<256x128xbf16>, vector<256x128xf32> -> vector<256x128xf32>
    %49 = arith.truncf %48 : vector<256x128xf32> to vector<256x128xbf16>
    %c0_24 = arith.constant 0 : index
    %c0_25 = arith.constant 0 : index
    %c0_26 = arith.constant 0 : index
    %50 = vector.load %arg5[%c0_24, %c0_25, %c0_26] : memref<2x128x128xbf16, #tpu.memory_space<vmem>>, vector<1x128x128xbf16>
    %51 = vector.shape_cast %50 : vector<1x128x128xbf16> to vector<128x128xbf16>
    %cst_27 = arith.constant dense<0.000000e+00> : vector<256x128xf32>
    %52 = tpu.matmul %49, %51, %cst_27 {dimension_numbers = #tpu.dot_dimension_numbers<[1], [0], [0], [1], [0, 0, 1, 1], [], []>} : vector<256x128xbf16>, vector<128x128xbf16>, vector<256x128xf32> -> vector<256x128xf32>
    %c0_28 = arith.constant 0 : index
    %c0_29 = arith.constant 0 : index
    %c0_30 = arith.constant 0 : index
    %53 = vector.load %arg6[%c0_28, %c0_29, %c0_30] : memref<2x1x128xf32, #tpu.memory_space<vmem>>, vector<1x1x128xf32>
    %54 = vector.shape_cast %53 : vector<1x1x128xf32> to vector<1x128xf32>
    %55 = vector.broadcast %54 : vector<1x128xf32> to vector<256x128xf32>
    %56 = arith.addf %52, %55 : vector<256x128xf32>
    %cst_31 = arith.constant 0.000000e+00 : f32
    %57 = vector.broadcast %cst_31 : f32 to vector<256x128xf32>
    %58 = arith.maximumf %56, %57 : vector<256x128xf32>
    %59 = arith.truncf %58 : vector<256x128xf32> to vector<256x128xbf16>
    %cst_32 = arith.constant dense<0.000000e+00> : vector<256x384xf32>
    %60 = tpu.matmul %59, %0, %cst_32 {dimension_numbers = #tpu.dot_dimension_numbers<[1], [0], [0], [1], [0, 0, 1, 1], [], []>} : vector<256x128xbf16>, vector<128x384xbf16>, vector<256x384xf32> -> vector<256x384xf32>
    %61 = vector.broadcast %2 : vector<1x384xf32> to vector<256x384xf32>
    %62 = arith.addf %60, %61 : vector<256x384xf32>
    %63 = arith.truncf %47 : vector<256x128xf32> to vector<256x128xbf16>
    %cst_33 = arith.constant dense<0.000000e+00> : vector<256x384xf32>
    %64 = tpu.matmul %63, %1, %cst_33 {dimension_numbers = #tpu.dot_dimension_numbers<[1], [0], [0], [1], [0, 0, 1, 1], [], []>} : vector<256x128xbf16>, vector<128x384xbf16>, vector<256x384xf32> -> vector<256x384xf32>
    %65 = vector.broadcast %3 : vector<1x384xf32> to vector<256x384xf32>
    %66 = arith.addf %64, %65 : vector<256x384xf32>
    %67 = vector.extract_strided_slice %62 {offsets = [0, 0], sizes = [256, 128], strides = [1, 1]} : vector<256x384xf32> to vector<256x128xf32>
    %68 = vector.extract_strided_slice %66 {offsets = [0, 0], sizes = [256, 128], strides = [1, 1]} : vector<256x384xf32> to vector<256x128xf32>
    %69 = arith.addf %67, %68 : vector<256x128xf32>
    %70 = arith.negf %69 : vector<256x128xf32>
    %71 = math.exp %70 : vector<256x128xf32>
    %cst_34 = arith.constant 1.000000e+00 : f32
    %72 = vector.broadcast %cst_34 : f32 to vector<256x128xf32>
    %73 = arith.addf %72, %71 : vector<256x128xf32>
    %74 = arith.divf %72, %73 : vector<256x128xf32>
    %75 = vector.extract_strided_slice %62 {offsets = [0, 128], sizes = [256, 128], strides = [1, 1]} : vector<256x384xf32> to vector<256x128xf32>
    %76 = vector.extract_strided_slice %66 {offsets = [0, 128], sizes = [256, 128], strides = [1, 1]} : vector<256x384xf32> to vector<256x128xf32>
    %77 = arith.addf %75, %76 : vector<256x128xf32>
    %78 = arith.negf %77 : vector<256x128xf32>
    %79 = math.exp %78 : vector<256x128xf32>
    %cst_35 = arith.constant 1.000000e+00 : f32
    %80 = vector.broadcast %cst_35 : f32 to vector<256x128xf32>
    %81 = arith.addf %80, %79 : vector<256x128xf32>
    %82 = arith.divf %80, %81 : vector<256x128xf32>
    %83 = vector.extract_strided_slice %62 {offsets = [0, 256], sizes = [256, 128], strides = [1, 1]} : vector<256x384xf32> to vector<256x128xf32>
    %84 = vector.extract_strided_slice %66 {offsets = [0, 256], sizes = [256, 128], strides = [1, 1]} : vector<256x384xf32> to vector<256x128xf32>
    %85 = arith.mulf %74, %84 : vector<256x128xf32>
    %86 = arith.addf %83, %85 : vector<256x128xf32>
    %87 = math.tanh %86 : vector<256x128xf32>
    %cst_36 = arith.constant 1.000000e+00 : f32
    %88 = vector.broadcast %cst_36 : f32 to vector<256x128xf32>
    %89 = arith.subf %88, %82 : vector<256x128xf32>
    %90 = arith.mulf %89, %87 : vector<256x128xf32>
    %91 = arith.mulf %82, %47 : vector<256x128xf32>
    %92 = arith.addf %90, %91 : vector<256x128xf32>
    %cst_37 = arith.constant dense<0.000000e+00> : vector<256x128xf32>
    %93 = tpu.matmul %4, %59, %cst_37 {dimension_numbers = #tpu.dot_dimension_numbers<[1], [0], [0], [1], [0, 0, 1, 1], [], []>} : vector<256x256xbf16>, vector<256x128xbf16>, vector<256x128xf32> -> vector<256x128xf32>
    %94 = arith.truncf %93 : vector<256x128xf32> to vector<256x128xbf16>
    %c1 = arith.constant 1 : index
    %c0_38 = arith.constant 0 : index
    %c0_39 = arith.constant 0 : index
    %95 = vector.load %arg5[%c1, %c0_38, %c0_39] : memref<2x128x128xbf16, #tpu.memory_space<vmem>>, vector<1x128x128xbf16>
    %96 = vector.shape_cast %95 : vector<1x128x128xbf16> to vector<128x128xbf16>
    %cst_40 = arith.constant dense<0.000000e+00> : vector<256x128xf32>
    %97 = tpu.matmul %94, %96, %cst_40 {dimension_numbers = #tpu.dot_dimension_numbers<[1], [0], [0], [1], [0, 0, 1, 1], [], []>} : vector<256x128xbf16>, vector<128x128xbf16>, vector<256x128xf32> -> vector<256x128xf32>
    %c1_41 = arith.constant 1 : index
    %c0_42 = arith.constant 0 : index
    %c0_43 = arith.constant 0 : index
    %98 = vector.load %arg6[%c1_41, %c0_42, %c0_43] : memref<2x1x128xf32, #tpu.memory_space<vmem>>, vector<1x1x128xf32>
    %99 = vector.shape_cast %98 : vector<1x1x128xf32> to vector<1x128xf32>
    %100 = vector.broadcast %99 : vector<1x128xf32> to vector<256x128xf32>
    %101 = arith.addf %97, %100 : vector<256x128xf32>
    %cst_44 = arith.constant 0.000000e+00 : f32
    %102 = vector.broadcast %cst_44 : f32 to vector<256x128xf32>
    %103 = arith.maximumf %101, %102 : vector<256x128xf32>
    %104 = arith.truncf %103 : vector<256x128xf32> to vector<256x128xbf16>
    %cst_45 = arith.constant dense<0.000000e+00> : vector<256x384xf32>
    %105 = tpu.matmul %104, %0, %cst_45 {dimension_numbers = #tpu.dot_dimension_numbers<[1], [0], [0], [1], [0, 0, 1, 1], [], []>} : vector<256x128xbf16>, vector<128x384xbf16>, vector<256x384xf32> -> vector<256x384xf32>
    %106 = vector.broadcast %2 : vector<1x384xf32> to vector<256x384xf32>
    %107 = arith.addf %105, %106 : vector<256x384xf32>
    %108 = arith.truncf %92 : vector<256x128xf32> to vector<256x128xbf16>
    %cst_46 = arith.constant dense<0.000000e+00> : vector<256x384xf32>
    %109 = tpu.matmul %108, %1, %cst_46 {dimension_numbers = #tpu.dot_dimension_numbers<[1], [0], [0], [1], [0, 0, 1, 1], [], []>} : vector<256x128xbf16>, vector<128x384xbf16>, vector<256x384xf32> -> vector<256x384xf32>
    %110 = vector.broadcast %3 : vector<1x384xf32> to vector<256x384xf32>
    %111 = arith.addf %109, %110 : vector<256x384xf32>
    %112 = vector.extract_strided_slice %107 {offsets = [0, 0], sizes = [256, 128], strides = [1, 1]} : vector<256x384xf32> to vector<256x128xf32>
    %113 = vector.extract_strided_slice %111 {offsets = [0, 0], sizes = [256, 128], strides = [1, 1]} : vector<256x384xf32> to vector<256x128xf32>
    %114 = arith.addf %112, %113 : vector<256x128xf32>
    %115 = arith.negf %114 : vector<256x128xf32>
    %116 = math.exp %115 : vector<256x128xf32>
    %cst_47 = arith.constant 1.000000e+00 : f32
    %117 = vector.broadcast %cst_47 : f32 to vector<256x128xf32>
    %118 = arith.addf %117, %116 : vector<256x128xf32>
    %119 = arith.divf %117, %118 : vector<256x128xf32>
    %120 = vector.extract_strided_slice %107 {offsets = [0, 128], sizes = [256, 128], strides = [1, 1]} : vector<256x384xf32> to vector<256x128xf32>
    %121 = vector.extract_strided_slice %111 {offsets = [0, 128], sizes = [256, 128], strides = [1, 1]} : vector<256x384xf32> to vector<256x128xf32>
    %122 = arith.addf %120, %121 : vector<256x128xf32>
    %123 = arith.negf %122 : vector<256x128xf32>
    %124 = math.exp %123 : vector<256x128xf32>
    %cst_48 = arith.constant 1.000000e+00 : f32
    %125 = vector.broadcast %cst_48 : f32 to vector<256x128xf32>
    %126 = arith.addf %125, %124 : vector<256x128xf32>
    %127 = arith.divf %125, %126 : vector<256x128xf32>
    %128 = vector.extract_strided_slice %107 {offsets = [0, 256], sizes = [256, 128], strides = [1, 1]} : vector<256x384xf32> to vector<256x128xf32>
    %129 = vector.extract_strided_slice %111 {offsets = [0, 256], sizes = [256, 128], strides = [1, 1]} : vector<256x384xf32> to vector<256x128xf32>
    %130 = arith.mulf %119, %129 : vector<256x128xf32>
    %131 = arith.addf %128, %130 : vector<256x128xf32>
    %132 = math.tanh %131 : vector<256x128xf32>
    %cst_49 = arith.constant 1.000000e+00 : f32
    %133 = vector.broadcast %cst_49 : f32 to vector<256x128xf32>
    %134 = arith.subf %133, %127 : vector<256x128xf32>
    %135 = arith.mulf %134, %132 : vector<256x128xf32>
    %136 = arith.mulf %127, %92 : vector<256x128xf32>
    %137 = arith.addf %135, %136 : vector<256x128xf32>
    %138 = arith.truncf %137 : vector<256x128xf32> to vector<256x128xbf16>
    %c0_50 = arith.constant 0 : index
    %c0_51 = arith.constant 0 : index
    %139 = vector.load %arg11[%c0_50, %c0_51] : memref<128x128xbf16, #tpu.memory_space<vmem>>, vector<128x128xbf16>
    %cst_52 = arith.constant dense<0.000000e+00> : vector<256x128xf32>
    %140 = tpu.matmul %138, %139, %cst_52 {dimension_numbers = #tpu.dot_dimension_numbers<[1], [0], [0], [1], [0, 0, 1, 1], [], []>} : vector<256x128xbf16>, vector<128x128xbf16>, vector<256x128xf32> -> vector<256x128xf32>
    %c0_53 = arith.constant 0 : index
    %c0_54 = arith.constant 0 : index
    %141 = vector.load %arg12[%c0_53, %c0_54] : memref<1x128xf32, #tpu.memory_space<vmem>>, vector<1x128xf32>
    %142 = vector.broadcast %141 : vector<1x128xf32> to vector<256x128xf32>
    %143 = arith.addf %140, %142 : vector<256x128xf32>
    %c0_55 = arith.constant 0 : index
    %c0_56 = arith.constant 0 : index
    %144 = vector.load %arg13[%c0_55, %c0_56] : memref<256x128xf32, #tpu.memory_space<vmem>>, vector<256x128xf32>
    tpu.vector_store %arg13[%c0_55, %c0_56], %143 {strides = array<i32>} : memref<256x128xf32, #tpu.memory_space<vmem>>, vector<256x128xf32>,
    return
  }
}

</mosaic_0001>

<llo_original>
// kernel: gcn_forward.1
$region0: #{gcn_forward.1}
  #allocation0 [shape = 'u32[]', space=smem, size = 0x4, offset = 0x4, fixed_abs, tag = 'smem constant byte address 0x4 - core index']
  #allocation1 [shape = 'u32[72,128]{1,0:T(1,128)}', space=vmem, size = 0x9000, scoped, tag = 'internal scratch']
  %s0 = inlined_call_operand.vmem [shape: bf16[256,16], index: 0, kind: input, shape index: {}]
  %s1 = inlined_call_operand.vmem [shape: bf16[256,256], index: 1, kind: input, shape index: {}]
  %s2 = inlined_call_operand.vmem [shape: f32[256,128], index: 2, kind: input, shape index: {}]
  %s3 = inlined_call_operand.vmem [shape: bf16[16,128], index: 3, kind: input, shape index: {}]
  %s4 = inlined_call_operand.vmem [shape: f32[1,128], index: 4, kind: input, shape index: {}]
  %s5 = inlined_call_operand.vmem [shape: bf16[2,128,128], index: 5, kind: input, shape index: {}]
  %s6 = inlined_call_operand.vmem [shape: f32[2,1,128], index: 6, kind: input, shape index: {}]
  %s7 = inlined_call_operand.vmem [shape: bf16[128,384], index: 7, kind: input, shape index: {}]
  %s8 = inlined_call_operand.vmem [shape: bf16[128,384], index: 8, kind: input, shape index: {}]
  %s9 = inlined_call_operand.vmem [shape: f32[1,384], index: 9, kind: input, shape index: {}]
  %s10 = inlined_call_operand.vmem [shape: f32[1,384], index: 10, kind: input, shape index: {}]
  %s11 = inlined_call_operand.vmem [shape: bf16[128,128], index: 11, kind: input, shape index: {}]
  %s12 = inlined_call_operand.vmem [shape: f32[1,128], index: 12, kind: input, shape index: {}]
  %s13 = inlined_call_operand.vmem [shape: f32[256,128], index: 13, kind: output, shape index: {}]
  %s14 = sld [smem:[#allocation0]]
  $region62: #{gcn_forward.1} parent=0
    _
  %s16 = ssub.s32 1, %s14
  %s17 = scalar_select 0, %s16, %s14
  // Predicated region
  $region2: #{gcn_forward.1} parent=0 // pred_check
    _
  $region3: #{gcn_forward.1} parent=0 // pred_check_branch
    %19 = sbr.rel (0) target = $region5
  $region4: #{gcn_forward.1} parent=0 // pred_region
    _
  $region5: #{gcn_forward.1} parent=0 // pred_fallthru
    _
  // Predicated region
  $region6: #{gcn_forward.1} parent=0 // pred_check
    _
  $region7: #{gcn_forward.1} parent=0 // pred_check_branch
    %21 = sbr.rel (0) target = $region9
  $region8: #{gcn_forward.1} parent=0 // pred_region
    _
  $region9: #{gcn_forward.1} parent=0 // pred_fallthru
    _
  // Predicated region
  $region10: #{gcn_forward.1} parent=0 // pred_check
    _
  $region11: #{gcn_forward.1} parent=0 // pred_check_branch
    %23 = sbr.rel (0) target = $region13
  $region12: #{gcn_forward.1} parent=0 // pred_region
    _
  $region13: #{gcn_forward.1} parent=0 // pred_fallthru
    _
  // Predicated region
  $region14: #{gcn_forward.1} parent=0 // pred_check
    _
  $region15: #{gcn_forward.1} parent=0 // pred_check_branch
    %25 = sbr.rel (0) target = $region17
  $region16: #{gcn_forward.1} parent=0 // pred_region
    _
  $region17: #{gcn_forward.1} parent=0 // pred_fallthru
    _
  // Predicated region
  $region18: #{gcn_forward.1} parent=0 // pred_check
    _
  $region19: #{gcn_forward.1} parent=0 // pred_check_branch
    %27 = sbr.rel (0) target = $region21
  $region20: #{gcn_forward.1} parent=0 // pred_region
    _
  $region21: #{gcn_forward.1} parent=0 // pred_fallthru
    _
  // Predicated region
  $region22: #{gcn_forward.1} parent=0 // pred_check
    _
  $region23: #{gcn_forward.1} parent=0 // pred_check_branch
    %29 = sbr.rel (0) target = $region25
  $region24: #{gcn_forward.1} parent=0 // pred_region
    _
  $region25: #{gcn_forward.1} parent=0 // pred_fallthru
    _
  // Predicated region
  $region26: #{gcn_forward.1} parent=0 // pred_check
    _
  $region27: #{gcn_forward.1} parent=0 // pred_check_branch
    %31 = sbr.rel (0) target = $region29
  $region28: #{gcn_forward.1} parent=0 // pred_region
    _
  $region29: #{gcn_forward.1} parent=0 // pred_fallthru
    _
  // Predicated region
  $region30: #{gcn_forward.1} parent=0 // pred_check
    _
  $region31: #{gcn_forward.1} parent=0 // pred_check_branch
    %33 = sbr.rel (0) target = $region33
  $region32: #{gcn_forward.1} parent=0 // pred_region
    _
  $region33: #{gcn_forward.1} parent=0 // pred_fallthru
    _
  // Predicated region
  $region34: #{gcn_forward.1} parent=0 // pred_check
    _
  $region35: #{gcn_forward.1} parent=0 // pred_check_branch
    %35 = sbr.rel (0) target = $region37
  $region36: #{gcn_forward.1} parent=0 // pred_region
    _
  $region37: #{gcn_forward.1} parent=0 // pred_fallthru
    _
  // Predicated region
  $region38: #{gcn_forward.1} parent=0 // pred_check
    _
  $region39: #{gcn_forward.1} parent=0 // pred_check_branch
    %37 = sbr.rel (0) target = $region41
  $region40: #{gcn_forward.1} parent=0 // pred_region
    _
  $region41: #{gcn_forward.1} parent=0 // pred_fallthru
    _
  // Predicated region
  $region42: #{gcn_forward.1} parent=0 // pred_check
    _
  $region43: #{gcn_forward.1} parent=0 // pred_check_branch
    %39 = sbr.rel (0) target = $region45
  $region44: #{gcn_forward.1} parent=0 // pred_region
    _
  $region45: #{gcn_forward.1} parent=0 // pred_fallthru
    _
  // Predicated region
  $region46: #{gcn_forward.1} parent=0 // pred_check
    _
  $region47: #{gcn_forward.1} parent=0 // pred_check_branch
    %41 = sbr.rel (0) target = $region49
  $region48: #{gcn_forward.1} parent=0 // pred_region
    _
  $region49: #{gcn_forward.1} parent=0 // pred_fallthru
    _
  // Predicated region
  $region50: #{gcn_forward.1} parent=0 // pred_check
    _
  $region51: #{gcn_forward.1} parent=0 // pred_check_branch
    %43 = sbr.rel (0) target = $region53
  $region52: #{gcn_forward.1} parent=0 // pred_region
    _
  $region53: #{gcn_forward.1} parent=0 // pred_fallthru
    _
  %v45 = vld [vmem:[%s7] sm:$0xff]
  %v46 = vld [vmem:[%s7 + $0x8] sm:$0xf]
  %v47 = vld [vmem:[%s7 + $0xc] sm:$0xff]
  %v48 = vld [vmem:[%s7 + $0x14] sm:$0xf]
  %v49 = vld [vmem:[%s7 + $0x18] sm:$0xff]
  %v50 = vld [vmem:[%s7 + $0x20] sm:$0xf]
  %v51 = vld [vmem:[%s7 + $0x24] sm:$0xff]
  %v52 = vld [vmem:[%s7 + $0x2c] sm:$0xf]
  %v53 = vld [vmem:[%s7 + $0x30] sm:$0xff]
  %v54 = vld [vmem:[%s7 + $0x38] sm:$0xf]
  %v55 = vld [vmem:[%s7 + $0x3c] sm:$0xff]
  %v56 = vld [vmem:[%s7 + $0x44] sm:$0xf]
  %v57 = vld [vmem:[%s7 + $0x48] sm:$0xff]
  %v58 = vld [vmem:[%s7 + $0x50] sm:$0xf]
  %v59 = vld [vmem:[%s7 + $0x54] sm:$0xff]
  %v60 = vld [vmem:[%s7 + $0x5c] sm:$0xf]
  %v61 = vld [vmem:[%s7 + $0x60] sm:$0xff]
  %v62 = vld [vmem:[%s7 + $0x68] sm:$0xf]
  %v63 = vld [vmem:[%s7 + $0x6c] sm:$0xff]
  %v64 = vld [vmem:[%s7 + $0x74] sm:$0xf]
  %v65 = vld [vmem:[%s7 + $0x78] sm:$0xff]
  %v66 = vld [vmem:[%s7 + $0x80] sm:$0xf]
  %v67 = vld [vmem:[%s7 + $0x84] sm:$0xff]
  %v68 = vld [vmem:[%s7 + $0x8c] sm:$0xf]
  %v69 = vld [vmem:[%s7 + $0x90] sm:$0xff]
  %v70 = vld [vmem:[%s7 + $0x98] sm:$0xf]
  %v71 = vld [vmem:[%s7 + $0x9c] sm:$0xff]
  %v72 = vld [vmem:[%s7 + $0xa4] sm:$0xf]
  %v73 = vld [vmem:[%s7 + $0xa8] sm:$0xff]
  %v74 = vld [vmem:[%s7 + $0xb0] sm:$0xf]
  %v75 = vld [vmem:[%s7 + $0xb4] sm:$0xff]
  %v76 = vld [vmem:[%s7 + $0xbc] sm:$0xf]
  %v77 = vld [vmem:[%s8] sm:$0xff]
  %v78 = vld [vmem:[%s8 + $0x8] sm:$0xf]
  %v79 = vld [vmem:[%s8 + $0xc] sm:$0xff]
  %v80 = vld [vmem:[%s8 + $0x14] sm:$0xf]
  %v81 = vld [vmem:[%s8 + $0x18] sm:$0xff]
  %v82 = vld [vmem:[%s8 + $0x20] sm:$0xf]
  %v83 = vld [vmem:[%s8 + $0x24] sm:$0xff]
  %v84 = vld [vmem:[%s8 + $0x2c] sm:$0xf]
  %v85 = vld [vmem:[%s8 + $0x30] sm:$0xff]
  %v86 = vld [vmem:[%s8 + $0x38] sm:$0xf]
  %v87 = vld [vmem:[%s8 + $0x3c] sm:$0xff]
  %v88 = vld [vmem:[%s8 + $0x44] sm:$0xf]
  %v89 = vld [vmem:[%s8 + $0x48] sm:$0xff]
  %v90 = vld [vmem:[%s8 + $0x50] sm:$0xf]
  %v91 = vld [vmem:[%s8 + $0x54] sm:$0xff]
  %v92 = vld [vmem:[%s8 + $0x5c] sm:$0xf]
  %v93 = vld [vmem:[%s8 + $0x60] sm:$0xff]
  %v94 = vld [vmem:[%s8 + $0x68] sm:$0xf]
  %v95 = vld [vmem:[%s8 + $0x6c] sm:$0xff]
  %v96 = vld [vmem:[%s8 + $0x74] sm:$0xf]
  %v97 = vld [vmem:[%s8 + $0x78] sm:$0xff]
  %v98 = vld [vmem:[%s8 + $0x80] sm:$0xf]
  %v99 = vld [vmem:[%s8 + $0x84] sm:$0xff]
  %v100 = vld [vmem:[%s8 + $0x8c] sm:$0xf]
  %v101 = vld [vmem:[%s8 + $0x90] sm:$0xff]
  %v102 = vld [vmem:[%s8 + $0x98] sm:$0xf]
  %v103 = vld [vmem:[%s8 + $0x9c] sm:$0xff]
  %v104 = vld [vmem:[%s8 + $0xa4] sm:$0xf]
  %v105 = vld [vmem:[%s8 + $0xa8] sm:$0xff]
  %v106 = vld [vmem:[%s8 + $0xb0] sm:$0xf]
  %v107 = vld [vmem:[%s8 + $0xb4] sm:$0xff]
  %v108 = vld [vmem:[%s8 + $0xbc] sm:$0xf]
  %v109 = vld [vmem:[%s9] sm:$0x7]
  %v110 = vld [vmem:[%s10] sm:$0x7]
  %v111 = vld [vmem:[%s1] sm:$0xff]
  %v112 = vld [vmem:[%s1 + $0x8] sm:$0xff]
  %v113 = vld [vmem:[%s1 + $0x10] sm:$0xff]
  %v114 = vld [vmem:[%s1 + $0x18] sm:$0xff]
  %v115 = vld [vmem:[%s1 + $0x20] sm:$0xff]
  %v116 = vld [vmem:[%s1 + $0x28] sm:$0xff]
  %v117 = vld [vmem:[%s1 + $0x30] sm:$0xff]
  %v118 = vld [vmem:[%s1 + $0x38] sm:$0xff]
  %v119 = vld [vmem:[%s1 + $0x40] sm:$0xff]
  %v120 = vld [vmem:[%s1 + $0x48] sm:$0xff]
  %v121 = vld [vmem:[%s1 + $0x50] sm:$0xff]
  %v122 = vld [vmem:[%s1 + $0x58] sm:$0xff]
  %v123 = vld [vmem:[%s1 + $0x60] sm:$0xff]
  %v124 = vld [vmem:[%s1 + $0x68] sm:$0xff]
  %v125 = vld [vmem:[%s1 + $0x70] sm:$0xff]
  %v126 = vld [vmem:[%s1 + $0x78] sm:$0xff]
  %v127 = vld [vmem:[%s1 + $0x80] sm:$0xff]
  %v128 = vld [vmem:[%s1 + $0x88] sm:$0xff]
  %v129 = vld [vmem:[%s1 + $0x90] sm:$0xff]
  %v130 = vld [vmem:[%s1 + $0x98] sm:$0xff]
  %v131 = vld [vmem:[%s1 + $0xa0] sm:$0xff]
  %v132 = vld [vmem:[%s1 + $0xa8] sm:$0xff]
  %v133 = vld [vmem:[%s1 + $0xb0] sm:$0xff]
  %v134 = vld [vmem:[%s1 + $0xb8] sm:$0xff]
  %v135 = vld [vmem:[%s1 + $0xc0] sm:$0xff]
  %v136 = vld [vmem:[%s1 + $0xc8] sm:$0xff]
  %v137 = vld [vmem:[%s1 + $0xd0] sm:$0xff]
  %v138 = vld [vmem:[%s1 + $0xd8] sm:$0xff]
  %v139 = vld [vmem:[%s1 + $0xe0] sm:$0xff]
  %v140 = vld [vmem:[%s1 + $0xe8] sm:$0xff]
  %v141 = vld [vmem:[%s1 + $0xf0] sm:$0xff]
  %v142 = vld [vmem:[%s1 + $0xf8] sm:$0xff]
  %v143 = vld [vmem:[%s0] sm:$0xf]
  %v144 = vld [vmem:[%s0 + $0x4] sm:$0xf]
  %v145 = vld [vmem:[%s0 + $0x8] sm:$0xf]
  %v146 = vld [vmem:[%s0 + $0xc] sm:$0xf]
  %v147 = vld [vmem:[%s0 + $0x10] sm:$0xf]
  %v148 = vld [vmem:[%s0 + $0x14] sm:$0xf]
  %v149 = vld [vmem:[%s0 + $0x18] sm:$0xf]
  %v150 = vld [vmem:[%s0 + $0x1c] sm:$0xf]
  %v151 = vld [vmem:[%s0 + $0x20] sm:$0xf]
  %v152 = vld [vmem:[%s0 + $0x24] sm:$0xf]
  %v153 = vld [vmem:[%s0 + $0x28] sm:$0xf]
  %v154 = vld [vmem:[%s0 + $0x2c] sm:$0xf]
  %v155 = vld [vmem:[%s0 + $0x30] sm:$0xf]
  %v156 = vld [vmem:[%s0 + $0x34] sm:$0xf]
  %v157 = vld [vmem:[%s0 + $0x38] sm:$0xf]
  %v158 = vld [vmem:[%s0 + $0x3c] sm:$0xf]
  %v159 = vld [vmem:[%s0 + $0x40] sm:$0xf]
  %v160 = vld [vmem:[%s0 + $0x44] sm:$0xf]
  %v161 = vld [vmem:[%s0 + $0x48] sm:$0xf]
  %v162 = vld [vmem:[%s0 + $0x4c] sm:$0xf]
  %v163 = vld [vmem:[%s0 + $0x50] sm:$0xf]
  %v164 = vld [vmem:[%s0 + $0x54] sm:$0xf]
  %v165 = vld [vmem:[%s0 + $0x58] sm:$0xf]
  %v166 = vld [vmem:[%s0 + $0x5c] sm:$0xf]
  %v167 = vld [vmem:[%s0 + $0x60] sm:$0xf]
  %v168 = vld [vmem:[%s0 + $0x64] sm:$0xf]
  %v169 = vld [vmem:[%s0 + $0x68] sm:$0xf]
  %v170 = vld [vmem:[%s0 + $0x6c] sm:$0xf]
  %v171 = vld [vmem:[%s0 + $0x70] sm:$0xf]
  %v172 = vld [vmem:[%s0 + $0x74] sm:$0xf]
  %v173 = vld [vmem:[%s0 + $0x78] sm:$0xf]
  %v174 = vld [vmem:[%s0 + $0x7c] sm:$0xf]
  %v175 = vld [vmem:[%s3] sm:$0xf]
  %v176 = vld [vmem:[%s3 + $0x4] sm:$0xf]
  %v177 = vld [vmem:[%s4] sm:$0x1]
  %v179 = vperm.slane %v177, 0
  %v213 = vunpack.c.l.b16 %v143
  %v214 = vunpack.c.l.b16 %v144
  %v215 = vunpack.c.l.b16 %v145
  %v216 = vunpack.c.l.b16 %v146
  %v217 = vunpack.c.l.b16 %v147
  %v218 = vunpack.c.l.b16 %v148
  %v219 = vunpack.c.l.b16 %v149
  %v220 = vunpack.c.l.b16 %v150
  %v221 = vunpack.c.l.b16 %v151
  %v222 = vunpack.c.l.b16 %v152
  %v223 = vunpack.c.l.b16 %v153
  %v224 = vunpack.c.l.b16 %v154
  %v225 = vunpack.c.l.b16 %v155
  %v226 = vunpack.c.l.b16 %v156
  %v227 = vunpack.c.l.b16 %v157
  %v228 = vunpack.c.l.b16 %v158
  %v229 = vunpack.c.l.b16 %v159
  %v230 = vunpack.c.l.b16 %v160
  %v231 = vunpack.c.l.b16 %v161
  %v232 = vunpack.c.l.b16 %v162
  %v233 = vunpack.c.l.b16 %v163
  %v234 = vunpack.c.l.b16 %v164
  %v235 = vunpack.c.l.b16 %v165
  %v236 = vunpack.c.l.b16 %v166
  %v237 = vunpack.c.l.b16 %v167
  %v238 = vunpack.c.l.b16 %v168
  %v239 = vunpack.c.l.b16 %v169
  %v240 = vunpack.c.l.b16 %v170
  %v241 = vunpack.c.l.b16 %v171
  %v242 = vunpack.c.l.b16 %v172
  %v243 = vunpack.c.l.b16 %v173
  %v244 = vunpack.c.l.b16 %v174
  %v245 = vpack.c.b16 %v214, %v213
  %v246 = vpack.c.b16 %v216, %v215
  %v247 = vpack.c.b16 %v218, %v217
  %v248 = vpack.c.b16 %v220, %v219
  %v249 = vpack.c.b16 %v222, %v221
  %v250 = vpack.c.b16 %v224, %v223
  %v251 = vpack.c.b16 %v226, %v225
  %v252 = vpack.c.b16 %v228, %v227
  %v253 = vpack.c.b16 %v230, %v229
  %v254 = vpack.c.b16 %v232, %v231
  %v255 = vpack.c.b16 %v234, %v233
  %v256 = vpack.c.b16 %v236, %v235
  %v257 = vpack.c.b16 %v238, %v237
  %v258 = vpack.c.b16 %v240, %v239
  %v259 = vpack.c.b16 %v242, %v241
  %v260 = vpack.c.b16 %v244, %v243
  %v263 = vunpack.c.l.b16 %v175
  %v264 = vunpack.c.l.b16 %v176
  %v265 = vpack.c.b16 %v264, %v263
  %vm267 = vcmask 130048
  %v269 = vsel %vm267, %v245, 0
  %v272 = vsel %vm267, %v246, 0
  %v275 = vsel %vm267, %v247, 0
  %v278 = vsel %vm267, %v248, 0
  %v281 = vsel %vm267, %v249, 0
  %v284 = vsel %vm267, %v250, 0
  %v287 = vsel %vm267, %v251, 0
  %v290 = vsel %vm267, %v252, 0
  %v293 = vsel %vm267, %v253, 0
  %v296 = vsel %vm267, %v254, 0
  %v299 = vsel %vm267, %v255, 0
  %v302 = vsel %vm267, %v256, 0
  %v305 = vsel %vm267, %v257, 0
  %v308 = vsel %vm267, %v258, 0
  %v311 = vsel %vm267, %v259, 0
  %v314 = vsel %vm267, %v260, 0
  %316 = vmatpush.bf16.msra.mxu0 0
  %317 = vmatpush.bf16.msra.mxu0 0
  %318 = vmatpush.bf16.msra.mxu0 0
  %319 = vmatpush.bf16.msra.mxu0 0
  %320 = vmatpush.bf16.msra.mxu0 0
  %321 = vmatpush.bf16.msra.mxu0 0
  %322 = vmatpush.bf16.msra.mxu0 0
  %323 = vmatpush.bf16.msra.mxu0 %v265
  %324 = vmatmul.bf16.gmra.mxu0 %v269
  %v325 = vpop.f32.mrf.mxu0
  %v326 = vadd.f32 %v179, %v325
  %v327 = vpop.f32.mrf.mxu0
  %v328 = vadd.f32 %v179, %v327
  %329 = vmatmul.bf16.gmra.mxu0 %v272
  %v330 = vpop.f32.mrf.mxu0
  %v331 = vadd.f32 %v179, %v330
  %v332 = vpop.f32.mrf.mxu0
  %v333 = vadd.f32 %v179, %v332
  %334 = vmatmul.bf16.gmra.mxu0 %v275
  %v335 = vpop.f32.mrf.mxu0
  %v336 = vadd.f32 %v179, %v335
  %v337 = vpop.f32.mrf.mxu0
  %v338 = vadd.f32 %v179, %v337
  %339 = vmatmul.bf16.gmra.mxu0 %v278
  %v340 = vpop.f32.mrf.mxu0
  %v341 = vadd.f32 %v179, %v340
  %v342 = vpop.f32.mrf.mxu0
  %v343 = vadd.f32 %v179, %v342
  %344 = vmatmul.bf16.gmra.mxu0 %v281
  %v345 = vpop.f32.mrf.mxu0
  %v346 = vadd.f32 %v179, %v345
  %v347 = vpop.f32.mrf.mxu0
  %v348 = vadd.f32 %v179, %v347
  %349 = vmatmul.bf16.gmra.mxu0 %v284
  %v350 = vpop.f32.mrf.mxu0
  %v351 = vadd.f32 %v179, %v350
  %v352 = vpop.f32.mrf.mxu0
  %v353 = vadd.f32 %v179, %v352
  %354 = vmatmul.bf16.gmra.mxu0 %v287
  %v355 = vpop.f32.mrf.mxu0
  %v356 = vadd.f32 %v179, %v355
  %v357 = vpop.f32.mrf.mxu0
  %v358 = vadd.f32 %v179, %v357
  %359 = vmatmul.bf16.gmra.mxu0 %v290
  %v360 = vpop.f32.mrf.mxu0
  %v361 = vadd.f32 %v179, %v360
  %v362 = vpop.f32.mrf.mxu0
  %v363 = vadd.f32 %v179, %v362
  %364 = vmatmul.bf16.gmra.mxu0 %v293
  %v365 = vpop.f32.mrf.mxu0
  %v366 = vadd.f32 %v179, %v365
  %v367 = vpop.f32.mrf.mxu0
  %v368 = vadd.f32 %v179, %v367
  %369 = vmatmul.bf16.gmra.mxu0 %v296
  %v370 = vpop.f32.mrf.mxu0
  %v371 = vadd.f32 %v179, %v370
  %v372 = vpop.f32.mrf.mxu0
  %v373 = vadd.f32 %v179, %v372
  %374 = vmatmul.bf16.gmra.mxu0 %v299
  %v375 = vpop.f32.mrf.mxu0
  %v376 = vadd.f32 %v179, %v375
  %v377 = vpop.f32.mrf.mxu0
  %v378 = vadd.f32 %v179, %v377
  %379 = vmatmul.bf16.gmra.mxu0 %v302
  %v380 = vpop.f32.mrf.mxu0
  %v381 = vadd.f32 %v179, %v380
  %v382 = vpop.f32.mrf.mxu0
  %v383 = vadd.f32 %v179, %v382
  %384 = vmatmul.bf16.gmra.mxu0 %v305
  %v385 = vpop.f32.mrf.mxu0
  %v386 = vadd.f32 %v179, %v385
  %v387 = vpop.f32.mrf.mxu0
  %v388 = vadd.f32 %v179, %v387
  %389 = vmatmul.bf16.gmra.mxu0 %v308
  %v390 = vpop.f32.mrf.mxu0
  %v391 = vadd.f32 %v179, %v390
  %v392 = vpop.f32.mrf.mxu0
  %v393 = vadd.f32 %v179, %v392
  %394 = vmatmul.bf16.gmra.mxu0 %v311
  %v395 = vpop.f32.mrf.mxu0
  %v396 = vadd.f32 %v179, %v395
  %v397 = vpop.f32.mrf.mxu0
  %v398 = vadd.f32 %v179, %v397
  %399 = vmatmul.bf16.gmra.mxu0 %v314
  %v400 = vpop.f32.mrf.mxu0
  %v401 = vadd.f32 %v179, %v400
  %v402 = vpop.f32.mrf.mxu0
  %v403 = vadd.f32 %v179, %v402
  %404 = vdwg.mxu0
  %v405 = vmax.f32 %v326, 0.0
  %v406 = vmax.f32 %v328, 0.0
  %v407 = vmax.f32 %v331, 0.0
  %v408 = vmax.f32 %v333, 0.0
  %v409 = vmax.f32 %v336, 0.0
  %v410 = vmax.f32 %v338, 0.0
  %v411 = vmax.f32 %v341, 0.0
  %v412 = vmax.f32 %v343, 0.0
  %v413 = vmax.f32 %v346, 0.0
  %v414 = vmax.f32 %v348, 0.0
  %v415 = vmax.f32 %v351, 0.0
  %v416 = vmax.f32 %v353, 0.0
  %v417 = vmax.f32 %v356, 0.0
  %v418 = vmax.f32 %v358, 0.0
  %v419 = vmax.f32 %v361, 0.0
  %v420 = vmax.f32 %v363, 0.0
  %v421 = vmax.f32 %v366, 0.0
  %v422 = vmax.f32 %v368, 0.0
  %v423 = vmax.f32 %v371, 0.0
  %v424 = vmax.f32 %v373, 0.0
  %v425 = vmax.f32 %v376, 0.0
  %v426 = vmax.f32 %v378, 0.0
  %v427 = vmax.f32 %v381, 0.0
  %v428 = vmax.f32 %v383, 0.0
  %v429 = vmax.f32 %v386, 0.0
  %v430 = vmax.f32 %v388, 0.0
  %v431 = vmax.f32 %v391, 0.0
  %v432 = vmax.f32 %v393, 0.0
  %v433 = vmax.f32 %v396, 0.0
  %v434 = vmax.f32 %v398, 0.0
  %v435 = vmax.f32 %v401, 0.0
  %v436 = vmax.f32 %v403, 0.0
  %v437 = vpack.c.bf16 %v406, %v405
  %v438 = vpack.c.bf16 %v408, %v407
  %v439 = vpack.c.bf16 %v410, %v409
  %v440 = vpack.c.bf16 %v412, %v411
  %v441 = vpack.c.bf16 %v414, %v413
  %v442 = vpack.c.bf16 %v416, %v415
  %v443 = vpack.c.bf16 %v418, %v417
  %v444 = vpack.c.bf16 %v420, %v419
  %v445 = vpack.c.bf16 %v422, %v421
  %v446 = vpack.c.bf16 %v424, %v423
  %v447 = vpack.c.bf16 %v426, %v425
  %v448 = vpack.c.bf16 %v428, %v427
  %v449 = vpack.c.bf16 %v430, %v429
  %v450 = vpack.c.bf16 %v432, %v431
  %v451 = vpack.c.bf16 %v434, %v433
  %v452 = vpack.c.bf16 %v436, %v435
  %v453 = vld [vmem:[%s2] sm:$0xff]
  %v454 = vld [vmem:[%s2 + $0x8] sm:$0xff]
  %v455 = vld [vmem:[%s2 + $0x10] sm:$0xff]
  %v456 = vld [vmem:[%s2 + $0x18] sm:$0xff]
  %v457 = vld [vmem:[%s2 + $0x20] sm:$0xff]
  %v458 = vld [vmem:[%s2 + $0x28] sm:$0xff]
  %v459 = vld [vmem:[%s2 + $0x30] sm:$0xff]
  %v460 = vld [vmem:[%s2 + $0x38] sm:$0xff]
  %v461 = vld [vmem:[%s2 + $0x40] sm:$0xff]
  %v462 = vld [vmem:[%s2 + $0x48] sm:$0xff]
  %v463 = vld [vmem:[%s2 + $0x50] sm:$0xff]
  %v464 = vld [vmem:[%s2 + $0x58] sm:$0xff]
  %v465 = vld [vmem:[%s2 + $0x60] sm:$0xff]
  %v466 = vld [vmem:[%s2 + $0x68] sm:$0xff]
  %v467 = vld [vmem:[%s2 + $0x70] sm:$0xff]
  %v468 = vld [vmem:[%s2 + $0x78] sm:$0xff]
  %v469 = vld [vmem:[%s2 + $0x80] sm:$0xff]
  %v470 = vld [vmem:[%s2 + $0x88] sm:$0xff]
  %v471 = vld [vmem:[%s2 + $0x90] sm:$0xff]
  %v472 = vld [vmem:[%s2 + $0x98] sm:$0xff]
  %v473 = vld [vmem:[%s2 + $0xa0] sm:$0xff]
  %v474 = vld [vmem:[%s2 + $0xa8] sm:$0xff]
  %v475 = vld [vmem:[%s2 + $0xb0] sm:$0xff]
  %v476 = vld [vmem:[%s2 + $0xb8] sm:$0xff]
  %v477 = vld [vmem:[%s2 + $0xc0] sm:$0xff]
  %v478 = vld [vmem:[%s2 + $0xc8] sm:$0xff]
  %v479 = vld [vmem:[%s2 + $0xd0] sm:$0xff]
  %v480 = vld [vmem:[%s2 + $0xd8] sm:$0xff]
  %v481 = vld [vmem:[%s2 + $0xe0] sm:$0xff]
  %v482 = vld [vmem:[%s2 + $0xe8] sm:$0xff]
  %v483 = vld [vmem:[%s2 + $0xf0] sm:$0xff]
  %v484 = vld [vmem:[%s2 + $0xf8] sm:$0xff]
  %v486 = vperm.slane %v109, 0
  %v487 = vperm.slane %v109, 1
  %v488 = vperm.slane %v109, 2
  %v524 = vunpack.c.l.b16 %v45
  %v525 = vunpack.c.h.b16 %v45
  %v526 = vunpack.c.l.b16 %v46
  %v527 = vunpack.c.l.b16 %v47
  %v528 = vunpack.c.h.b16 %v47
  %v529 = vunpack.c.l.b16 %v48
  %v530 = vunpack.c.l.b16 %v49
  %v531 = vunpack.c.h.b16 %v49
  %v532 = vunpack.c.l.b16 %v50
  %v533 = vunpack.c.l.b16 %v51
  %v534 = vunpack.c.h.b16 %v51
  %v535 = vunpack.c.l.b16 %v52
  %v536 = vunpack.c.l.b16 %v53
  %v537 = vunpack.c.h.b16 %v53
  %v538 = vunpack.c.l.b16 %v54
  %v539 = vunpack.c.l.b16 %v55
  %v540 = vunpack.c.h.b16 %v55
  %v541 = vunpack.c.l.b16 %v56
  %v542 = vunpack.c.l.b16 %v57
  %v543 = vunpack.c.h.b16 %v57
  %v544 = vunpack.c.l.b16 %v58
  %v545 = vunpack.c.l.b16 %v59
  %v546 = vunpack.c.h.b16 %v59
  %v547 = vunpack.c.l.b16 %v60
  %v548 = vunpack.c.l.b16 %v61
  %v549 = vunpack.c.h.b16 %v61
  %v550 = vunpack.c.l.b16 %v62
  %v551 = vunpack.c.l.b16 %v63
  %v552 = vunpack.c.h.b16 %v63
  %v553 = vunpack.c.l.b16 %v64
  %v554 = vunpack.c.l.b16 %v65
  %v555 = vunpack.c.h.b16 %v65
  %v556 = vunpack.c.l.b16 %v66
  %v557 = vunpack.c.l.b16 %v67
  %v558 = vunpack.c.h.b16 %v67
  %v559 = vunpack.c.l.b16 %v68
  %v560 = vunpack.c.l.b16 %v69
  %v561 = vunpack.c.h.b16 %v69
  %v562 = vunpack.c.l.b16 %v70
  %v563 = vunpack.c.l.b16 %v71
  %v564 = vunpack.c.h.b16 %v71
  %v565 = vunpack.c.l.b16 %v72
  %v566 = vunpack.c.l.b16 %v73
  %v567 = vunpack.c.h.b16 %v73
  %v568 = vunpack.c.l.b16 %v74
  %v569 = vunpack.c.l.b16 %v75
  %v570 = vunpack.c.h.b16 %v75
  %v571 = vunpack.c.l.b16 %v76
  %v572 = vpack.c.b16 %v527, %v524
  %v573 = vpack.c.b16 %v528, %v525
  %v574 = vpack.c.b16 %v529, %v526
  %v575 = vpack.c.b16 %v533, %v530
  %v576 = vpack.c.b16 %v534, %v531
  %v577 = vpack.c.b16 %v535, %v532
  %v578 = vpack.c.b16 %v539, %v536
  %v579 = vpack.c.b16 %v540, %v537
  %v580 = vpack.c.b16 %v541, %v538
  %v581 = vpack.c.b16 %v545, %v542
  %v582 = vpack.c.b16 %v546, %v543
  %v583 = vpack.c.b16 %v547, %v544
  %v584 = vpack.c.b16 %v551, %v548
  %v585 = vpack.c.b16 %v552, %v549
  %v586 = vpack.c.b16 %v553, %v550
  %v587 = vpack.c.b16 %v557, %v554
  %v588 = vpack.c.b16 %v558, %v555
  %v589 = vpack.c.b16 %v559, %v556
  %v590 = vpack.c.b16 %v563, %v560
  %v591 = vpack.c.b16 %v564, %v561
  %v592 = vpack.c.b16 %v565, %v562
  %v593 = vpack.c.b16 %v569, %v566
  %v594 = vpack.c.b16 %v570, %v567
  %v595 = vpack.c.b16 %v571, %v568
  %620 = vmatpush.bf16.msra.mxu0 %v593
  %621 = vmatpush.bf16.msra.mxu0 %v590
  %622 = vmatpush.bf16.msra.mxu0 %v587
  %623 = vmatpush.bf16.msra.mxu0 %v584
  %624 = vmatpush.bf16.msra.mxu0 %v581
  %625 = vmatpush.bf16.msra.mxu0 %v578
  %626 = vmatpush.bf16.msra.mxu0 %v575
  %627 = vmatpush.bf16.msra.mxu0 %v572
  %628 = vmatmul.bf16.gmra.mxu0 %v437
  %v629 = vpop.f32.mrf.mxu0
  %v630 = vadd.f32 %v486, %v629
  %v631 = vpop.f32.mrf.mxu0
  %v632 = vadd.f32 %v486, %v631
  %633 = vmatmul.bf16.gmra.mxu0 %v438
  %v634 = vpop.f32.mrf.mxu0
  %v635 = vadd.f32 %v486, %v634
  %v636 = vpop.f32.mrf.mxu0
  %v637 = vadd.f32 %v486, %v636
  %638 = vmatmul.bf16.gmra.mxu0 %v439
  %v639 = vpop.f32.mrf.mxu0
  %v640 = vadd.f32 %v486, %v639
  %v641 = vpop.f32.mrf.mxu0
  %v642 = vadd.f32 %v486, %v641
  %643 = vmatmul.bf16.gmra.mxu0 %v440
  %v644 = vpop.f32.mrf.mxu0
  %v645 = vadd.f32 %v486, %v644
  %v646 = vpop.f32.mrf.mxu0
  %v647 = vadd.f32 %v486, %v646
  %648 = vmatmul.bf16.gmra.mxu0 %v441
  %v649 = vpop.f32.mrf.mxu0
  %v650 = vadd.f32 %v486, %v649
  %v651 = vpop.f32.mrf.mxu0
  %v652 = vadd.f32 %v486, %v651
  %653 = vmatmul.bf16.gmra.mxu0 %v442
  %v654 = vpop.f32.mrf.mxu0
  %v655 = vadd.f32 %v486, %v654
  %v656 = vpop.f32.mrf.mxu0
  %v657 = vadd.f32 %v486, %v656
  %658 = vmatmul.bf16.gmra.mxu0 %v443
  %v659 = vpop.f32.mrf.mxu0
  %v660 = vadd.f32 %v486, %v659
  %v661 = vpop.f32.mrf.mxu0
  %v662 = vadd.f32 %v486, %v661
  %663 = vmatmul.bf16.gmra.mxu0 %v444
  %v664 = vpop.f32.mrf.mxu0
  %v665 = vadd.f32 %v486, %v664
  %v666 = vpop.f32.mrf.mxu0
  %v667 = vadd.f32 %v486, %v666
  %668 = vmatmul.bf16.gmra.mxu0 %v445
  %v669 = vpop.f32.mrf.mxu0
  %v670 = vadd.f32 %v486, %v669
  %v671 = vpop.f32.mrf.mxu0
  %v672 = vadd.f32 %v486, %v671
  %673 = vmatmul.bf16.gmra.mxu0 %v446
  %v674 = vpop.f32.mrf.mxu0
  %v675 = vadd.f32 %v486, %v674
  %v676 = vpop.f32.mrf.mxu0
  %v677 = vadd.f32 %v486, %v676
  %678 = vmatmul.bf16.gmra.mxu0 %v447
  %v679 = vpop.f32.mrf.mxu0
  %v680 = vadd.f32 %v486, %v679
  %v681 = vpop.f32.mrf.mxu0
  %v682 = vadd.f32 %v486, %v681
  %683 = vmatmul.bf16.gmra.mxu0 %v448
  %v684 = vpop.f32.mrf.mxu0
  %v685 = vadd.f32 %v486, %v684
  %v686 = vpop.f32.mrf.mxu0
  %v687 = vadd.f32 %v486, %v686
  %688 = vmatmul.bf16.gmra.mxu0 %v449
  %v689 = vpop.f32.mrf.mxu0
  %v690 = vadd.f32 %v486, %v689
  %v691 = vpop.f32.mrf.mxu0
  %v692 = vadd.f32 %v486, %v691
  %693 = vmatmul.bf16.gmra.mxu0 %v450
  %v694 = vpop.f32.mrf.mxu0
  %v695 = vadd.f32 %v486, %v694
  %v696 = vpop.f32.mrf.mxu0
  %v697 = vadd.f32 %v486, %v696
  %698 = vmatmul.bf16.gmra.mxu0 %v451
  %v699 = vpop.f32.mrf.mxu0
  %v700 = vadd.f32 %v486, %v699
  %v701 = vpop.f32.mrf.mxu0
  %v702 = vadd.f32 %v486, %v701
  %703 = vmatmul.bf16.gmra.mxu0 %v452
  %v704 = vpop.f32.mrf.mxu0
  %v705 = vadd.f32 %v486, %v704
  %v706 = vpop.f32.mrf.mxu0
  %v707 = vadd.f32 %v486, %v706
  %708 = vdwg.mxu0
  %709 = vmatpush.bf16.msra.mxu0 %v594
  %710 = vmatpush.bf16.msra.mxu0 %v591
  %711 = vmatpush.bf16.msra.mxu0 %v588
  %712 = vmatpush.bf16.msra.mxu0 %v585
  %713 = vmatpush.bf16.msra.mxu0 %v582
  %714 = vmatpush.bf16.msra.mxu0 %v579
  %715 = vmatpush.bf16.msra.mxu0 %v576
  %716 = vmatpush.bf16.msra.mxu0 %v573
  %717 = vmatmul.bf16.gmra.mxu0 %v437
  %v718 = vpop.f32.mrf.mxu0
  %v719 = vadd.f32 %v487, %v718
  %v720 = vpop.f32.mrf.mxu0
  %v721 = vadd.f32 %v487, %v720
  %722 = vmatmul.bf16.gmra.mxu0 %v438
  %v723 = vpop.f32.mrf.mxu0
  %v724 = vadd.f32 %v487, %v723
  %v725 = vpop.f32.mrf.mxu0
  %v726 = vadd.f32 %v487, %v725
  %727 = vmatmul.bf16.gmra.mxu0 %v439
  %v728 = vpop.f32.mrf.mxu0
  %v729 = vadd.f32 %v487, %v728
  %v730 = vpop.f32.mrf.mxu0
  %v731 = vadd.f32 %v487, %v730
  %732 = vmatmul.bf16.gmra.mxu0 %v440
  %v733 = vpop.f32.mrf.mxu0
  %v734 = vadd.f32 %v487, %v733
  %v735 = vpop.f32.mrf.mxu0
  %v736 = vadd.f32 %v487, %v735
  %737 = vmatmul.bf16.gmra.mxu0 %v441
  %v738 = vpop.f32.mrf.mxu0
  %v739 = vadd.f32 %v487, %v738
  %v740 = vpop.f32.mrf.mxu0
  %v741 = vadd.f32 %v487, %v740
  %742 = vmatmul.bf16.gmra.mxu0 %v442
  %v743 = vpop.f32.mrf.mxu0
  %v744 = vadd.f32 %v487, %v743
  %v745 = vpop.f32.mrf.mxu0
  %v746 = vadd.f32 %v487, %v745
  %747 = vmatmul.bf16.gmra.mxu0 %v443
  %v748 = vpop.f32.mrf.mxu0
  %v749 = vadd.f32 %v487, %v748
  %v750 = vpop.f32.mrf.mxu0
  %v751 = vadd.f32 %v487, %v750
  %752 = vmatmul.bf16.gmra.mxu0 %v444
  %v753 = vpop.f32.mrf.mxu0
  %v754 = vadd.f32 %v487, %v753
  %v755 = vpop.f32.mrf.mxu0
  %v756 = vadd.f32 %v487, %v755
  %757 = vmatmul.bf16.gmra.mxu0 %v445
  %v758 = vpop.f32.mrf.mxu0
  %v759 = vadd.f32 %v487, %v758
  %v760 = vpop.f32.mrf.mxu0
  %v761 = vadd.f32 %v487, %v760
  %762 = vmatmul.bf16.gmra.mxu0 %v446
  %v763 = vpop.f32.mrf.mxu0
  %v764 = vadd.f32 %v487, %v763
  %v765 = vpop.f32.mrf.mxu0
  %v766 = vadd.f32 %v487, %v765
  %767 = vmatmul.bf16.gmra.mxu0 %v447
  %v768 = vpop.f32.mrf.mxu0
  %v769 = vadd.f32 %v487, %v768
  %v770 = vpop.f32.mrf.mxu0
  %v771 = vadd.f32 %v487, %v770
  %772 = vmatmul.bf16.gmra.mxu0 %v448
  %v773 = vpop.f32.mrf.mxu0
  %v774 = vadd.f32 %v487, %v773
  %v775 = vpop.f32.mrf.mxu0
  %v776 = vadd.f32 %v487, %v775
  %777 = vmatmul.bf16.gmra.mxu0 %v449
  %v778 = vpop.f32.mrf.mxu0
  %v779 = vadd.f32 %v487, %v778
  %v780 = vpop.f32.mrf.mxu0
  %v781 = vadd.f32 %v487, %v780
  %782 = vmatmul.bf16.gmra.mxu0 %v450
  %v783 = vpop.f32.mrf.mxu0
  %v784 = vadd.f32 %v487, %v783
  %v785 = vpop.f32.mrf.mxu0
  %v786 = vadd.f32 %v487, %v785
  %787 = vmatmul.bf16.gmra.mxu0 %v451
  %v788 = vpop.f32.mrf.mxu0
  %v789 = vadd.f32 %v487, %v788
  %v790 = vpop.f32.mrf.mxu0
  %v791 = vadd.f32 %v487, %v790
  %792 = vmatmul.bf16.gmra.mxu0 %v452
  %v793 = vpop.f32.mrf.mxu0
  %v794 = vadd.f32 %v487, %v793
  %v795 = vpop.f32.mrf.mxu0
  %v796 = vadd.f32 %v487, %v795
  %797 = vdwg.mxu0
  %798 = vmatpush.bf16.msra.mxu0 %v595
  %799 = vmatpush.bf16.msra.mxu0 %v592
  %800 = vmatpush.bf16.msra.mxu0 %v589
  %801 = vmatpush.bf16.msra.mxu0 %v586
  %802 = vmatpush.bf16.msra.mxu0 %v583
  %803 = vmatpush.bf16.msra.mxu0 %v580
  %804 = vmatpush.bf16.msra.mxu0 %v577
  %805 = vmatpush.bf16.msra.mxu0 %v574
  %806 = vmatmul.bf16.gmra.mxu0 %v437
  %v807 = vpop.f32.mrf.mxu0
  %v808 = vadd.f32 %v488, %v807
  %v809 = vpop.f32.mrf.mxu0
  %v810 = vadd.f32 %v488, %v809
  %811 = vmatmul.bf16.gmra.mxu0 %v438
  %v812 = vpop.f32.mrf.mxu0
  %v813 = vadd.f32 %v488, %v812
  %v814 = vpop.f32.mrf.mxu0
  %v815 = vadd.f32 %v488, %v814
  %816 = vmatmul.bf16.gmra.mxu0 %v439
  %v817 = vpop.f32.mrf.mxu0
  %v818 = vadd.f32 %v488, %v817
  %v819 = vpop.f32.mrf.mxu0
  %v820 = vadd.f32 %v488, %v819
  %821 = vmatmul.bf16.gmra.mxu0 %v440
  %v822 = vpop.f32.mrf.mxu0
  %v823 = vadd.f32 %v488, %v822
  %v824 = vpop.f32.mrf.mxu0
  %v825 = vadd.f32 %v488, %v824
  %826 = vmatmul.bf16.gmra.mxu0 %v441
  %v827 = vpop.f32.mrf.mxu0
  %v828 = vadd.f32 %v488, %v827
  %v829 = vpop.f32.mrf.mxu0
  %v830 = vadd.f32 %v488, %v829
  %831 = vmatmul.bf16.gmra.mxu0 %v442
  %v832 = vpop.f32.mrf.mxu0
  %v833 = vadd.f32 %v488, %v832
  %v834 = vpop.f32.mrf.mxu0
  %v835 = vadd.f32 %v488, %v834
  %836 = vmatmul.bf16.gmra.mxu0 %v443
  %v837 = vpop.f32.mrf.mxu0
  %v838 = vadd.f32 %v488, %v837
  %v839 = vpop.f32.mrf.mxu0
  %v840 = vadd.f32 %v488, %v839
  %841 = vmatmul.bf16.gmra.mxu0 %v444
  %v842 = vpop.f32.mrf.mxu0
  %v843 = vadd.f32 %v488, %v842
  %v844 = vpop.f32.mrf.mxu0
  %v845 = vadd.f32 %v488, %v844
  %846 = vmatmul.bf16.gmra.mxu0 %v445
  %v847 = vpop.f32.mrf.mxu0
  %v848 = vadd.f32 %v488, %v847
  %v849 = vpop.f32.mrf.mxu0
  %v850 = vadd.f32 %v488, %v849
  %851 = vmatmul.bf16.gmra.mxu0 %v446
  %v852 = vpop.f32.mrf.mxu0
  %v853 = vadd.f32 %v488, %v852
  %v854 = vpop.f32.mrf.mxu0
  %v855 = vadd.f32 %v488, %v854
  %856 = vmatmul.bf16.gmra.mxu0 %v447
  %v857 = vpop.f32.mrf.mxu0
  %v858 = vadd.f32 %v488, %v857
  %v859 = vpop.f32.mrf.mxu0
  %v860 = vadd.f32 %v488, %v859
  %861 = vmatmul.bf16.gmra.mxu0 %v448
  %v862 = vpop.f32.mrf.mxu0
  %v863 = vadd.f32 %v488, %v862
  %v864 = vpop.f32.mrf.mxu0
  %v865 = vadd.f32 %v488, %v864
  %866 = vmatmul.bf16.gmra.mxu0 %v449
  %v867 = vpop.f32.mrf.mxu0
  %v868 = vadd.f32 %v488, %v867
  %v869 = vpop.f32.mrf.mxu0
  %v870 = vadd.f32 %v488, %v869
  %871 = vmatmul.bf16.gmra.mxu0 %v450
  %v872 = vpop.f32.mrf.mxu0
  %v873 = vadd.f32 %v488, %v872
  %v874 = vpop.f32.mrf.mxu0
  %v875 = vadd.f32 %v488, %v874
  %876 = vmatmul.bf16.gmra.mxu0 %v451
  %v877 = vpop.f32.mrf.mxu0
  %v878 = vadd.f32 %v488, %v877
  %v879 = vpop.f32.mrf.mxu0
  %v880 = vadd.f32 %v488, %v879
  %881 = vmatmul.bf16.gmra.mxu0 %v452
  %v882 = vpop.f32.mrf.mxu0
  %v883 = vadd.f32 %v488, %v882
  %v884 = vpop.f32.mrf.mxu0
  %v885 = vadd.f32 %v488, %v884
  %886 = vdwg.mxu0
  %v887 = vpack.c.bf16 %v454, %v453
  %v888 = vpack.c.bf16 %v456, %v455
  %v889 = vpack.c.bf16 %v458, %v457
  %v890 = vpack.c.bf16 %v460, %v459
  %v891 = vpack.c.bf16 %v462, %v461
  %v892 = vpack.c.bf16 %v464, %v463
  %v893 = vpack.c.bf16 %v466, %v465
  %v894 = vpack.c.bf16 %v468, %v467
  %v895 = vpack.c.bf16 %v470, %v469
  %v896 = vpack.c.bf16 %v472, %v471
  %v897 = vpack.c.bf16 %v474, %v473
  %v898 = vpack.c.bf16 %v476, %v475
  %v899 = vpack.c.bf16 %v478, %v477
  %v900 = vpack.c.bf16 %v480, %v479
  %v901 = vpack.c.bf16 %v482, %v481
  %v902 = vpack.c.bf16 %v484, %v483
  %v904 = vperm.slane %v110, 0
  %v905 = vperm.slane %v110, 1
  %v906 = vperm.slane %v110, 2
  %v942 = vunpack.c.l.b16 %v77
  %v943 = vunpack.c.h.b16 %v77
  %v944 = vunpack.c.l.b16 %v78
  %v945 = vunpack.c.l.b16 %v79
  %v946 = vunpack.c.h.b16 %v79
  %v947 = vunpack.c.l.b16 %v80
  %v948 = vunpack.c.l.b16 %v81
  %v949 = vunpack.c.h.b16 %v81
  %v950 = vunpack.c.l.b16 %v82
  %v951 = vunpack.c.l.b16 %v83
  %v952 = vunpack.c.h.b16 %v83
  %v953 = vunpack.c.l.b16 %v84
  %v954 = vunpack.c.l.b16 %v85
  %v955 = vunpack.c.h.b16 %v85
  %v956 = vunpack.c.l.b16 %v86
  %v957 = vunpack.c.l.b16 %v87
  %v958 = vunpack.c.h.b16 %v87
  %v959 = vunpack.c.l.b16 %v88
  %v960 = vunpack.c.l.b16 %v89
  %v961 = vunpack.c.h.b16 %v89
  %v962 = vunpack.c.l.b16 %v90
  %v963 = vunpack.c.l.b16 %v91
  %v964 = vunpack.c.h.b16 %v91
  %v965 = vunpack.c.l.b16 %v92
  %v966 = vunpack.c.l.b16 %v93
  %v967 = vunpack.c.h.b16 %v93
  %v968 = vunpack.c.l.b16 %v94
  %v969 = vunpack.c.l.b16 %v95
  %v970 = vunpack.c.h.b16 %v95
  %v971 = vunpack.c.l.b16 %v96
  %v972 = vunpack.c.l.b16 %v97
  %v973 = vunpack.c.h.b16 %v97
  %v974 = vunpack.c.l.b16 %v98
  %v975 = vunpack.c.l.b16 %v99
  %v976 = vunpack.c.h.b16 %v99
  %v977 = vunpack.c.l.b16 %v100
  %v978 = vunpack.c.l.b16 %v101
  %v979 = vunpack.c.h.b16 %v101
  %v980 = vunpack.c.l.b16 %v102
  %v981 = vunpack.c.l.b16 %v103
  %v982 = vunpack.c.h.b16 %v103
  %v983 = vunpack.c.l.b16 %v104
  %v984 = vunpack.c.l.b16 %v105
  %v985 = vunpack.c.h.b16 %v105
  %v986 = vunpack.c.l.b16 %v106
  %v987 = vunpack.c.l.b16 %v107
  %v988 = vunpack.c.h.b16 %v107
  %v989 = vunpack.c.l.b16 %v108
  %v990 = vpack.c.b16 %v945, %v942
  %v991 = vpack.c.b16 %v946, %v943
  %v992 = vpack.c.b16 %v947, %v944
  %v993 = vpack.c.b16 %v951, %v948
  %v994 = vpack.c.b16 %v952, %v949
  %v995 = vpack.c.b16 %v953, %v950
  %v996 = vpack.c.b16 %v957, %v954
  %v997 = vpack.c.b16 %v958, %v955
  %v998 = vpack.c.b16 %v959, %v956
  %v999 = vpack.c.b16 %v963, %v960
  %v1000 = vpack.c.b16 %v964, %v961
  %v1001 = vpack.c.b16 %v965, %v962
  %v1002 = vpack.c.b16 %v969, %v966
  %v1003 = vpack.c.b16 %v970, %v967
  %v1004 = vpack.c.b16 %v971, %v968
  %v1005 = vpack.c.b16 %v975, %v972
  %v1006 = vpack.c.b16 %v976, %v973
  %v1007 = vpack.c.b16 %v977, %v974
  %v1008 = vpack.c.b16 %v981, %v978
  %v1009 = vpack.c.b16 %v982, %v979
  %v1010 = vpack.c.b16 %v983, %v980
  %v1011 = vpack.c.b16 %v987, %v984
  %v1012 = vpack.c.b16 %v988, %v985
  %v1013 = vpack.c.b16 %v989, %v986
  %1038 = vmatpush.bf16.msra.mxu0 %v1011
  %1039 = vmatpush.bf16.msra.mxu0 %v1008
  %1040 = vmatpush.bf16.msra.mxu0 %v1005
  %1041 = vmatpush.bf16.msra.mxu0 %v1002
  %1042 = vmatpush.bf16.msra.mxu0 %v999
  %1043 = vmatpush.bf16.msra.mxu0 %v996
  %1044 = vmatpush.bf16.msra.mxu0 %v993
  %1045 = vmatpush.bf16.msra.mxu0 %v990
  %1046 = vmatmul.bf16.gmra.mxu0 %v887
  %v1047 = vpop.f32.mrf.mxu0
  %v1048 = vadd.f32 %v904, %v1047
  %v1049 = vpop.f32.mrf.mxu0
  %v1050 = vadd.f32 %v904, %v1049
  %1051 = vmatmul.bf16.gmra.mxu0 %v888
  %v1052 = vpop.f32.mrf.mxu0
  %v1053 = vadd.f32 %v904, %v1052
  %v1054 = vpop.f32.mrf.mxu0
  %v1055 = vadd.f32 %v904, %v1054
  %1056 = vmatmul.bf16.gmra.mxu0 %v889
  %v1057 = vpop.f32.mrf.mxu0
  %v1058 = vadd.f32 %v904, %v1057
  %v1059 = vpop.f32.mrf.mxu0
  %v1060 = vadd.f32 %v904, %v1059
  %1061 = vmatmul.bf16.gmra.mxu0 %v890
  %v1062 = vpop.f32.mrf.mxu0
  %v1063 = vadd.f32 %v904, %v1062
  %v1064 = vpop.f32.mrf.mxu0
  %v1065 = vadd.f32 %v904, %v1064
  %1066 = vmatmul.bf16.gmra.mxu0 %v891
  %v1067 = vpop.f32.mrf.mxu0
  %v1068 = vadd.f32 %v904, %v1067
  %v1069 = vpop.f32.mrf.mxu0
  %v1070 = vadd.f32 %v904, %v1069
  %1071 = vmatmul.bf16.gmra.mxu0 %v892
  %v1072 = vpop.f32.mrf.mxu0
  %v1073 = vadd.f32 %v904, %v1072
  %v1074 = vpop.f32.mrf.mxu0
  %v1075 = vadd.f32 %v904, %v1074
  %1076 = vmatmul.bf16.gmra.mxu0 %v893
  %v1077 = vpop.f32.mrf.mxu0
  %v1078 = vadd.f32 %v904, %v1077
  %v1079 = vpop.f32.mrf.mxu0
  %v1080 = vadd.f32 %v904, %v1079
  %1081 = vmatmul.bf16.gmra.mxu0 %v894
  %v1082 = vpop.f32.mrf.mxu0
  %v1083 = vadd.f32 %v904, %v1082
  %v1084 = vpop.f32.mrf.mxu0
  %v1085 = vadd.f32 %v904, %v1084
  %1086 = vmatmul.bf16.gmra.mxu0 %v895
  %v1087 = vpop.f32.mrf.mxu0
  %v1088 = vadd.f32 %v904, %v1087
  %v1089 = vpop.f32.mrf.mxu0
  %v1090 = vadd.f32 %v904, %v1089
  %1091 = vmatmul.bf16.gmra.mxu0 %v896
  %v1092 = vpop.f32.mrf.mxu0
  %v1093 = vadd.f32 %v904, %v1092
  %v1094 = vpop.f32.mrf.mxu0
  %v1095 = vadd.f32 %v904, %v1094
  %1096 = vmatmul.bf16.gmra.mxu0 %v897
  %v1097 = vpop.f32.mrf.mxu0
  %v1098 = vadd.f32 %v904, %v1097
  %v1099 = vpop.f32.mrf.mxu0
  %v1100 = vadd.f32 %v904, %v1099
  %1101 = vmatmul.bf16.gmra.mxu0 %v898
  %v1102 = vpop.f32.mrf.mxu0
  %v1103 = vadd.f32 %v904, %v1102
  %v1104 = vpop.f32.mrf.mxu0
  %v1105 = vadd.f32 %v904, %v1104
  %1106 = vmatmul.bf16.gmra.mxu0 %v899
  %v1107 = vpop.f32.mrf.mxu0
  %v1108 = vadd.f32 %v904, %v1107
  %v1109 = vpop.f32.mrf.mxu0
  %v1110 = vadd.f32 %v904, %v1109
  %1111 = vmatmul.bf16.gmra.mxu0 %v900
  %v1112 = vpop.f32.mrf.mxu0
  %v1113 = vadd.f32 %v904, %v1112
  %v1114 = vpop.f32.mrf.mxu0
  %v1115 = vadd.f32 %v904, %v1114
  %1116 = vmatmul.bf16.gmra.mxu0 %v901
  %v1117 = vpop.f32.mrf.mxu0
  %v1118 = vadd.f32 %v904, %v1117
  %v1119 = vpop.f32.mrf.mxu0
  %v1120 = vadd.f32 %v904, %v1119
  %1121 = vmatmul.bf16.gmra.mxu0 %v902
  %v1122 = vpop.f32.mrf.mxu0
  %v1123 = vadd.f32 %v904, %v1122
  %v1124 = vpop.f32.mrf.mxu0
  %v1125 = vadd.f32 %v904, %v1124
  %1126 = vdwg.mxu0
  %1127 = vmatpush.bf16.msra.mxu0 %v1012
  %1128 = vmatpush.bf16.msra.mxu0 %v1009
  %1129 = vmatpush.bf16.msra.mxu0 %v1006
  %1130 = vmatpush.bf16.msra.mxu0 %v1003
  %1131 = vmatpush.bf16.msra.mxu0 %v1000
  %1132 = vmatpush.bf16.msra.mxu0 %v997
  %1133 = vmatpush.bf16.msra.mxu0 %v994
  %1134 = vmatpush.bf16.msra.mxu0 %v991
  %1135 = vmatmul.bf16.gmra.mxu0 %v887
  %v1136 = vpop.f32.mrf.mxu0
  %v1137 = vadd.f32 %v905, %v1136
  %v1138 = vpop.f32.mrf.mxu0
  %v1139 = vadd.f32 %v905, %v1138
  %1140 = vmatmul.bf16.gmra.mxu0 %v888
  %v1141 = vpop.f32.mrf.mxu0
  %v1142 = vadd.f32 %v905, %v1141
  %v1143 = vpop.f32.mrf.mxu0
  %v1144 = vadd.f32 %v905, %v1143
  %1145 = vmatmul.bf16.gmra.mxu0 %v889
  %v1146 = vpop.f32.mrf.mxu0
  %v1147 = vadd.f32 %v905, %v1146
  %v1148 = vpop.f32.mrf.mxu0
  %v1149 = vadd.f32 %v905, %v1148
  %1150 = vmatmul.bf16.gmra.mxu0 %v890
  %v1151 = vpop.f32.mrf.mxu0
  %v1152 = vadd.f32 %v905, %v1151
  %v1153 = vpop.f32.mrf.mxu0
  %v1154 = vadd.f32 %v905, %v1153
  %1155 = vmatmul.bf16.gmra.mxu0 %v891
  %v1156 = vpop.f32.mrf.mxu0
  %v1157 = vadd.f32 %v905, %v1156
  %v1158 = vpop.f32.mrf.mxu0
  %v1159 = vadd.f32 %v905, %v1158
  %1160 = vmatmul.bf16.gmra.mxu0 %v892
  %v1161 = vpop.f32.mrf.mxu0
  %v1162 = vadd.f32 %v905, %v1161
  %v1163 = vpop.f32.mrf.mxu0
  %v1164 = vadd.f32 %v905, %v1163
  %1165 = vmatmul.bf16.gmra.mxu0 %v893
  %v1166 = vpop.f32.mrf.mxu0
  %v1167 = vadd.f32 %v905, %v1166
  %v1168 = vpop.f32.mrf.mxu0
  %v1169 = vadd.f32 %v905, %v1168
  %1170 = vmatmul.bf16.gmra.mxu0 %v894
  %v1171 = vpop.f32.mrf.mxu0
  %v1172 = vadd.f32 %v905, %v1171
  %v1173 = vpop.f32.mrf.mxu0
  %v1174 = vadd.f32 %v905, %v1173
  %1175 = vmatmul.bf16.gmra.mxu0 %v895
  %v1176 = vpop.f32.mrf.mxu0
  %v1177 = vadd.f32 %v905, %v1176
  %v1178 = vpop.f32.mrf.mxu0
  %v1179 = vadd.f32 %v905, %v1178
  %1180 = vmatmul.bf16.gmra.mxu0 %v896
  %v1181 = vpop.f32.mrf.mxu0
  %v1182 = vadd.f32 %v905, %v1181
  %v1183 = vpop.f32.mrf.mxu0
  %v1184 = vadd.f32 %v905, %v1183
  %1185 = vmatmul.bf16.gmra.mxu0 %v897
  %v1186 = vpop.f32.mrf.mxu0
  %v1187 = vadd.f32 %v905, %v1186
  %v1188 = vpop.f32.mrf.mxu0
  %v1189 = vadd.f32 %v905, %v1188
  %1190 = vmatmul.bf16.gmra.mxu0 %v898
  %v1191 = vpop.f32.mrf.mxu0
  %v1192 = vadd.f32 %v905, %v1191
  %v1193 = vpop.f32.mrf.mxu0
  %v1194 = vadd.f32 %v905, %v1193
  %1195 = vmatmul.bf16.gmra.mxu0 %v899
  %v1196 = vpop.f32.mrf.mxu0
  %v1197 = vadd.f32 %v905, %v1196
  %v1198 = vpop.f32.mrf.mxu0
  %v1199 = vadd.f32 %v905, %v1198
  %1200 = vmatmul.bf16.gmra.mxu0 %v900
  %v1201 = vpop.f32.mrf.mxu0
  %v1202 = vadd.f32 %v905, %v1201
  %v1203 = vpop.f32.mrf.mxu0
  %v1204 = vadd.f32 %v905, %v1203
  %1205 = vmatmul.bf16.gmra.mxu0 %v901
  %v1206 = vpop.f32.mrf.mxu0
  %v1207 = vadd.f32 %v905, %v1206
  %v1208 = vpop.f32.mrf.mxu0
  %v1209 = vadd.f32 %v905, %v1208
  %1210 = vmatmul.bf16.gmra.mxu0 %v902
  %v1211 = vpop.f32.mrf.mxu0
  %v1212 = vadd.f32 %v905, %v1211
  %v1213 = vpop.f32.mrf.mxu0
  %v1214 = vadd.f32 %v905, %v1213
  %1215 = vdwg.mxu0
  %1216 = vmatpush.bf16.msra.mxu0 %v1013
  %1217 = vmatpush.bf16.msra.mxu0 %v1010
  %1218 = vmatpush.bf16.msra.mxu0 %v1007
  %1219 = vmatpush.bf16.msra.mxu0 %v1004
  %1220 = vmatpush.bf16.msra.mxu0 %v1001
  %1221 = vmatpush.bf16.msra.mxu0 %v998
  %1222 = vmatpush.bf16.msra.mxu0 %v995
  %1223 = vmatpush.bf16.msra.mxu0 %v992
  %1224 = vmatmul.bf16.gmra.mxu0 %v887
  %v1225 = vpop.f32.mrf.mxu0
  %v1226 = vadd.f32 %v906, %v1225
  %v1227 = vpop.f32.mrf.mxu0
  %v1228 = vadd.f32 %v906, %v1227
  %1229 = vmatmul.bf16.gmra.mxu0 %v888
  %v1230 = vpop.f32.mrf.mxu0
  %v1231 = vadd.f32 %v906, %v1230
  %v1232 = vpop.f32.mrf.mxu0
  %v1233 = vadd.f32 %v906, %v1232
  %1234 = vmatmul.bf16.gmra.mxu0 %v889
  %v1235 = vpop.f32.mrf.mxu0
  %v1236 = vadd.f32 %v906, %v1235
  %v1237 = vpop.f32.mrf.mxu0
  %v1238 = vadd.f32 %v906, %v1237
  %1239 = vmatmul.bf16.gmra.mxu0 %v890
  %v1240 = vpop.f32.mrf.mxu0
  %v1241 = vadd.f32 %v906, %v1240
  %v1242 = vpop.f32.mrf.mxu0
  %v1243 = vadd.f32 %v906, %v1242
  %1244 = vmatmul.bf16.gmra.mxu0 %v891
  %v1245 = vpop.f32.mrf.mxu0
  %v1246 = vadd.f32 %v906, %v1245
  %v1247 = vpop.f32.mrf.mxu0
  %v1248 = vadd.f32 %v906, %v1247
  %1249 = vmatmul.bf16.gmra.mxu0 %v892
  %v1250 = vpop.f32.mrf.mxu0
  %v1251 = vadd.f32 %v906, %v1250
  %v1252 = vpop.f32.mrf.mxu0
  %v1253 = vadd.f32 %v906, %v1252
  %1254 = vmatmul.bf16.gmra.mxu0 %v893
  %v1255 = vpop.f32.mrf.mxu0
  %v1256 = vadd.f32 %v906, %v1255
  %v1257 = vpop.f32.mrf.mxu0
  %v1258 = vadd.f32 %v906, %v1257
  %1259 = vmatmul.bf16.gmra.mxu0 %v894
  %v1260 = vpop.f32.mrf.mxu0
  %v1261 = vadd.f32 %v906, %v1260
  %v1262 = vpop.f32.mrf.mxu0
  %v1263 = vadd.f32 %v906, %v1262
  %1264 = vmatmul.bf16.gmra.mxu0 %v895
  %v1265 = vpop.f32.mrf.mxu0
  %v1266 = vadd.f32 %v906, %v1265
  %v1267 = vpop.f32.mrf.mxu0
  %v1268 = vadd.f32 %v906, %v1267
  %1269 = vmatmul.bf16.gmra.mxu0 %v896
  %v1270 = vpop.f32.mrf.mxu0
  %v1271 = vadd.f32 %v906, %v1270
  %v1272 = vpop.f32.mrf.mxu0
  %v1273 = vadd.f32 %v906, %v1272
  %1274 = vmatmul.bf16.gmra.mxu0 %v897
  %v1275 = vpop.f32.mrf.mxu0
  %v1276 = vadd.f32 %v906, %v1275
  %v1277 = vpop.f32.mrf.mxu0
  %v1278 = vadd.f32 %v906, %v1277
  %1279 = vmatmul.bf16.gmra.mxu0 %v898
  %v1280 = vpop.f32.mrf.mxu0
  %v1281 = vadd.f32 %v906, %v1280
  %v1282 = vpop.f32.mrf.mxu0
  %v1283 = vadd.f32 %v906, %v1282
  %1284 = vmatmul.bf16.gmra.mxu0 %v899
  %v1285 = vpop.f32.mrf.mxu0
  %v1286 = vadd.f32 %v906, %v1285
  %v1287 = vpop.f32.mrf.mxu0
  %v1288 = vadd.f32 %v906, %v1287
  %1289 = vmatmul.bf16.gmra.mxu0 %v900
  %v1290 = vpop.f32.mrf.mxu0
  %v1291 = vadd.f32 %v906, %v1290
  %v1292 = vpop.f32.mrf.mxu0
  %v1293 = vadd.f32 %v906, %v1292
  %1294 = vmatmul.bf16.gmra.mxu0 %v901
  %v1295 = vpop.f32.mrf.mxu0
  %v1296 = vadd.f32 %v906, %v1295
  %v1297 = vpop.f32.mrf.mxu0
  %v1298 = vadd.f32 %v906, %v1297
  %1299 = vmatmul.bf16.gmra.mxu0 %v902
  %v1300 = vpop.f32.mrf.mxu0
  %v1301 = vadd.f32 %v906, %v1300
  %v1302 = vpop.f32.mrf.mxu0
  %v1303 = vadd.f32 %v906, %v1302
  %1304 = vdwg.mxu0
  %v1305 = vadd.f32 %v630, %v1048
  %v1306 = vadd.f32 %v632, %v1050
  %v1307 = vadd.f32 %v635, %v1053
  %v1308 = vadd.f32 %v637, %v1055
  %v1309 = vadd.f32 %v640, %v1058
  %v1310 = vadd.f32 %v642, %v1060
  %v1311 = vadd.f32 %v645, %v1063
  %v1312 = vadd.f32 %v647, %v1065
  %v1313 = vadd.f32 %v650, %v1068
  %v1314 = vadd.f32 %v652, %v1070
  %v1315 = vadd.f32 %v655, %v1073
  %v1316 = vadd.f32 %v657, %v1075
  %v1317 = vadd.f32 %v660, %v1078
  %v1318 = vadd.f32 %v662, %v1080
  %v1319 = vadd.f32 %v665, %v1083
  %v1320 = vadd.f32 %v667, %v1085
  %v1321 = vadd.f32 %v670, %v1088
  %v1322 = vadd.f32 %v672, %v1090
  %v1323 = vadd.f32 %v675, %v1093
  %v1324 = vadd.f32 %v677, %v1095
  %v1325 = vadd.f32 %v680, %v1098
  %v1326 = vadd.f32 %v682, %v1100
  %v1327 = vadd.f32 %v685, %v1103
  %v1328 = vadd.f32 %v687, %v1105
  %v1329 = vadd.f32 %v690, %v1108
  %v1330 = vadd.f32 %v692, %v1110
  %v1331 = vadd.f32 %v695, %v1113
  %v1332 = vadd.f32 %v697, %v1115
  %v1333 = vadd.f32 %v700, %v1118
  %v1334 = vadd.f32 %v702, %v1120
  %v1335 = vadd.f32 %v705, %v1123
  %v1336 = vadd.f32 %v707, %v1125
  %v1337 = vxor.u32 %v1305, 2147483648
  %v1338 = vxor.u32 %v1306, 2147483648
  %v1339 = vxor.u32 %v1307, 2147483648
  %v1340 = vxor.u32 %v1308, 2147483648
  %v1341 = vxor.u32 %v1309, 2147483648
  %v1342 = vxor.u32 %v1310, 2147483648
  %v1343 = vxor.u32 %v1311, 2147483648
  %v1344 = vxor.u32 %v1312, 2147483648
  %v1345 = vxor.u32 %v1313, 2147483648
  %v1346 = vxor.u32 %v1314, 2147483648
  %v1347 = vxor.u32 %v1315, 2147483648
  %v1348 = vxor.u32 %v1316, 2147483648
  %v1349 = vxor.u32 %v1317, 2147483648
  %v1350 = vxor.u32 %v1318, 2147483648
  %v1351 = vxor.u32 %v1319, 2147483648
  %v1352 = vxor.u32 %v1320, 2147483648
  %v1353 = vxor.u32 %v1321, 2147483648
  %v1354 = vxor.u32 %v1322, 2147483648
  %v1355 = vxor.u32 %v1323, 2147483648
  %v1356 = vxor.u32 %v1324, 2147483648
  %v1357 = vxor.u32 %v1325, 2147483648
  %v1358 = vxor.u32 %v1326, 2147483648
  %v1359 = vxor.u32 %v1327, 2147483648
  %v1360 = vxor.u32 %v1328, 2147483648
  %v1361 = vxor.u32 %v1329, 2147483648
  %v1362 = vxor.u32 %v1330, 2147483648
  %v1363 = vxor.u32 %v1331, 2147483648
  %v1364 = vxor.u32 %v1332, 2147483648
  %v1365 = vxor.u32 %v1333, 2147483648
  %v1366 = vxor.u32 %v1334, 2147483648
  %v1367 = vxor.u32 %v1335, 2147483648
  %v1368 = vxor.u32 %v1336, 2147483648
  %v1369 = vmul.f32 %v1337, 1.442695
  %v1370 = vpow.pop %v1369
  %v1371 = vmul.f32 %v1338, 1.442695
  %v1372 = vpow.pop %v1371
  %v1373 = vmul.f32 %v1339, 1.442695
  %v1374 = vpow.pop %v1373
  %v1375 = vmul.f32 %v1340, 1.442695
  %v1376 = vpow.pop %v1375
  %v1377 = vmul.f32 %v1341, 1.442695
  %v1378 = vpow.pop %v1377
  %v1379 = vmul.f32 %v1342, 1.442695
  %v1380 = vpow.pop %v1379
  %v1381 = vmul.f32 %v1343, 1.442695
  %v1382 = vpow.pop %v1381
  %v1383 = vmul.f32 %v1344, 1.442695
  %v1384 = vpow.pop %v1383
  %v1385 = vmul.f32 %v1345, 1.442695
  %v1386 = vpow.pop %v1385
  %v1387 = vmul.f32 %v1346, 1.442695
  %v1388 = vpow.pop %v1387
  %v1389 = vmul.f32 %v1347, 1.442695
  %v1390 = vpow.pop %v1389
  %v1391 = vmul.f32 %v1348, 1.442695
  %v1392 = vpow.pop %v1391
  %v1393 = vmul.f32 %v1349, 1.442695
  %v1394 = vpow.pop %v1393
  %v1395 = vmul.f32 %v1350, 1.442695
  %v1396 = vpow.pop %v1395
  %v1397 = vmul.f32 %v1351, 1.442695
  %v1398 = vpow.pop %v1397
  %v1399 = vmul.f32 %v1352, 1.442695
  %v1400 = vpow.pop %v1399
  %v1401 = vmul.f32 %v1353, 1.442695
  %v1402 = vpow.pop %v1401
  %v1403 = vmul.f32 %v1354, 1.442695
  %v1404 = vpow.pop %v1403
  %v1405 = vmul.f32 %v1355, 1.442695
  %v1406 = vpow.pop %v1405
  %v1407 = vmul.f32 %v1356, 1.442695
  %v1408 = vpow.pop %v1407
  %v1409 = vmul.f32 %v1357, 1.442695
  %v1410 = vpow.pop %v1409
  %v1411 = vmul.f32 %v1358, 1.442695
  %v1412 = vpow.pop %v1411
  %v1413 = vmul.f32 %v1359, 1.442695
  %v1414 = vpow.pop %v1413
  %v1415 = vmul.f32 %v1360, 1.442695
  %v1416 = vpow.pop %v1415
  %v1417 = vmul.f32 %v1361, 1.442695
  %v1418 = vpow.pop %v1417
  %v1419 = vmul.f32 %v1362, 1.442695
  %v1420 = vpow.pop %v1419
  %v1421 = vmul.f32 %v1363, 1.442695
  %v1422 = vpow.pop %v1421
  %v1423 = vmul.f32 %v1364, 1.442695
  %v1424 = vpow.pop %v1423
  %v1425 = vmul.f32 %v1365, 1.442695
  %v1426 = vpow.pop %v1425
  %v1427 = vmul.f32 %v1366, 1.442695
  %v1428 = vpow.pop %v1427
  %v1429 = vmul.f32 %v1367, 1.442695
  %v1430 = vpow.pop %v1429
  %v1431 = vmul.f32 %v1368, 1.442695
  %v1432 = vpow.pop %v1431
  %v1433 = vadd.f32 %v1370, 1.0
  %v1434 = vadd.f32 %v1372, 1.0
  %v1435 = vadd.f32 %v1374, 1.0
  %v1436 = vadd.f32 %v1376, 1.0
  %v1437 = vadd.f32 %v1378, 1.0
  %v1438 = vadd.f32 %v1380, 1.0
  %v1439 = vadd.f32 %v1382, 1.0
  %v1440 = vadd.f32 %v1384, 1.0
  %v1441 = vadd.f32 %v1386, 1.0
  %v1442 = vadd.f32 %v1388, 1.0
  %v1443 = vadd.f32 %v1390, 1.0
  %v1444 = vadd.f32 %v1392, 1.0
  %v1445 = vadd.f32 %v1394, 1.0
  %v1446 = vadd.f32 %v1396, 1.0
  %v1447 = vadd.f32 %v1398, 1.0
  %v1448 = vadd.f32 %v1400, 1.0
  %v1449 = vadd.f32 %v1402, 1.0
  %v1450 = vadd.f32 %v1404, 1.0
  %v1451 = vadd.f32 %v1406, 1.0
  %v1452 = vadd.f32 %v1408, 1.0
  %v1453 = vadd.f32 %v1410, 1.0
  %v1454 = vadd.f32 %v1412, 1.0
  %v1455 = vadd.f32 %v1414, 1.0
  %v1456 = vadd.f32 %v1416, 1.0
  %v1457 = vadd.f32 %v1418, 1.0
  %v1458 = vadd.f32 %v1420, 1.0
  %v1459 = vadd.f32 %v1422, 1.0
  %v1460 = vadd.f32 %v1424, 1.0
  %v1461 = vadd.f32 %v1426, 1.0
  %v1462 = vadd.f32 %v1428, 1.0
  %v1463 = vadd.f32 %v1430, 1.0
  %v1464 = vadd.f32 %v1432, 1.0
  %v1465 = vrcp.pop %v1433
  %v1466 = vmul.f32 %v1433, %v1465
  %v1467 = vsub.f32 1.0, %v1466
  %v1468 = vmul.f32 %v1465, %v1467
  %v1469 = vadd.f32 %v1465, %v1468
  %vm1470 = vweird.f32 %v1433
  %vm1471 = vweird.f32 %v1465
  %vm1472 = vmor %vm1470, %vm1471
  %v1473 = vsel %vm1472, %v1465, %v1469
  %v1474 = vand.u32 2147483647, %v1433
  %vm1475 = vcmp.eq.f32.partialorder %v1474, 8.507059e+37
  %v1476 = vand.u32 %v1433, 2147483648
  %v1477 = vor.u32 1.1754944e-38, %v1476
  %v1478 = vsel %vm1475, %v1477, %v1473
  %v1479 = vmul.f32 1.0, %v1478
  %v1480 = vrcp.pop %v1434
  %v1481 = vmul.f32 %v1434, %v1480
  %v1482 = vsub.f32 1.0, %v1481
  %v1483 = vmul.f32 %v1480, %v1482
  %v1484 = vadd.f32 %v1480, %v1483
  %vm1485 = vweird.f32 %v1434
  %vm1486 = vweird.f32 %v1480
  %vm1487 = vmor %vm1485, %vm1486
  %v1488 = vsel %vm1487, %v1480, %v1484
  %v1489 = vand.u32 2147483647, %v1434
  %vm1490 = vcmp.eq.f32.partialorder %v1489, 8.507059e+37
  %v1491 = vand.u32 %v1434, 2147483648
  %v1492 = vor.u32 1.1754944e-38, %v1491
  %v1493 = vsel %vm1490, %v1492, %v1488
  %v1494 = vmul.f32 1.0, %v1493
  %v1495 = vrcp.pop %v1435
  %v1496 = vmul.f32 %v1435, %v1495
  %v1497 = vsub.f32 1.0, %v1496
  %v1498 = vmul.f32 %v1495, %v1497
  %v1499 = vadd.f32 %v1495, %v1498
  %vm1500 = vweird.f32 %v1435
  %vm1501 = vweird.f32 %v1495
  %vm1502 = vmor %vm1500, %vm1501
  %v1503 = vsel %vm1502, %v1495, %v1499
  %v1504 = vand.u32 2147483647, %v1435
  %vm1505 = vcmp.eq.f32.partialorder %v1504, 8.507059e+37
  %v1506 = vand.u32 %v1435, 2147483648
  %v1507 = vor.u32 1.1754944e-38, %v1506
  %v1508 = vsel %vm1505, %v1507, %v1503
  %v1509 = vmul.f32 1.0, %v1508
  %v1510 = vrcp.pop %v1436
  %v1511 = vmul.f32 %v1436, %v1510
  %v1512 = vsub.f32 1.0, %v1511
  %v1513 = vmul.f32 %v1510, %v1512
  %v1514 = vadd.f32 %v1510, %v1513
  %vm1515 = vweird.f32 %v1436
  %vm1516 = vweird.f32 %v1510
  %vm1517 = vmor %vm1515, %vm1516
  %v1518 = vsel %vm1517, %v1510, %v1514
  %v1519 = vand.u32 2147483647, %v1436
  %vm1520 = vcmp.eq.f32.partialorder %v1519, 8.507059e+37
  %v1521 = vand.u32 %v1436, 2147483648
  %v1522 = vor.u32 1.1754944e-38, %v1521
  %v1523 = vsel %vm1520, %v1522, %v1518
  %v1524 = vmul.f32 1.0, %v1523
  %v1525 = vrcp.pop %v1437
  %v1526 = vmul.f32 %v1437, %v1525
  %v1527 = vsub.f32 1.0, %v1526
  %v1528 = vmul.f32 %v1525, %v1527
  %v1529 = vadd.f32 %v1525, %v1528
  %vm1530 = vweird.f32 %v1437
  %vm1531 = vweird.f32 %v1525
  %vm1532 = vmor %vm1530, %vm1531
  %v1533 = vsel %vm1532, %v1525, %v1529
  %v1534 = vand.u32 2147483647, %v1437
  %vm1535 = vcmp.eq.f32.partialorder %v1534, 8.507059e+37
  %v1536 = vand.u32 %v1437, 2147483648
  %v1537 = vor.u32 1.1754944e-38, %v1536
  %v1538 = vsel %vm1535, %v1537, %v1533
  %v1539 = vmul.f32 1.0, %v1538
  %v1540 = vrcp.pop %v1438
  %v1541 = vmul.f32 %v1438, %v1540
  %v1542 = vsub.f32 1.0, %v1541
  %v1543 = vmul.f32 %v1540, %v1542
  %v1544 = vadd.f32 %v1540, %v1543
  %vm1545 = vweird.f32 %v1438
  %vm1546 = vweird.f32 %v1540
  %vm1547 = vmor %vm1545, %vm1546
  %v1548 = vsel %vm1547, %v1540, %v1544
  %v1549 = vand.u32 2147483647, %v1438
  %vm1550 = vcmp.eq.f32.partialorder %v1549, 8.507059e+37
  %v1551 = vand.u32 %v1438, 2147483648
  %v1552 = vor.u32 1.1754944e-38, %v1551
  %v1553 = vsel %vm1550, %v1552, %v1548
  %v1554 = vmul.f32 1.0, %v1553
  %v1555 = vrcp.pop %v1439
  %v1556 = vmul.f32 %v1439, %v1555
  %v1557 = vsub.f32 1.0, %v1556
  %v1558 = vmul.f32 %v1555, %v1557
  %v1559 = vadd.f32 %v1555, %v1558
  %vm1560 = vweird.f32 %v1439
  %vm1561 = vweird.f32 %v1555
  %vm1562 = vmor %vm1560, %vm1561
  %v1563 = vsel %vm1562, %v1555, %v1559
  %v1564 = vand.u32 2147483647, %v1439
  %vm1565 = vcmp.eq.f32.partialorder %v1564, 8.507059e+37
  %v1566 = vand.u32 %v1439, 2147483648
  %v1567 = vor.u32 1.1754944e-38, %v1566
  %v1568 = vsel %vm1565, %v1567, %v1563
  %v1569 = vmul.f32 1.0, %v1568
  %v1570 = vrcp.pop %v1440
  %v1571 = vmul.f32 %v1440, %v1570
  %v1572 = vsub.f32 1.0, %v1571
  %v1573 = vmul.f32 %v1570, %v1572
  %v1574 = vadd.f32 %v1570, %v1573
  %vm1575 = vweird.f32 %v1440
  %vm1576 = vweird.f32 %v1570
  %vm1577 = vmor %vm1575, %vm1576
  %v1578 = vsel %vm1577, %v1570, %v1574
  %v1579 = vand.u32 2147483647, %v1440
  %vm1580 = vcmp.eq.f32.partialorder %v1579, 8.507059e+37
  %v1581 = vand.u32 %v1440, 2147483648
  %v1582 = vor.u32 1.1754944e-38, %v1581
  %v1583 = vsel %vm1580, %v1582, %v1578
  %v1584 = vmul.f32 1.0, %v1583
  %v1585 = vrcp.pop %v1441
  %v1586 = vmul.f32 %v1441, %v1585
  %v1587 = vsub.f32 1.0, %v1586
  %v1588 = vmul.f32 %v1585, %v1587
  %v1589 = vadd.f32 %v1585, %v1588
  %vm1590 = vweird.f32 %v1441
  %vm1591 = vweird.f32 %v1585
  %vm1592 = vmor %vm1590, %vm1591
  %v1593 = vsel %vm1592, %v1585, %v1589
  %v1594 = vand.u32 2147483647, %v1441
  %vm1595 = vcmp.eq.f32.partialorder %v1594, 8.507059e+37
  %v1596 = vand.u32 %v1441, 2147483648
  %v1597 = vor.u32 1.1754944e-38, %v1596
  %v1598 = vsel %vm1595, %v1597, %v1593
  %v1599 = vmul.f32 1.0, %v1598
  %v1600 = vrcp.pop %v1442
  %v1601 = vmul.f32 %v1442, %v1600
  %v1602 = vsub.f32 1.0, %v1601
  %v1603 = vmul.f32 %v1600, %v1602
  %v1604 = vadd.f32 %v1600, %v1603
  %vm1605 = vweird.f32 %v1442
  %vm1606 = vweird.f32 %v1600
  %vm1607 = vmor %vm1605, %vm1606
  %v1608 = vsel %vm1607, %v1600, %v1604
  %v1609 = vand.u32 2147483647, %v1442
  %vm1610 = vcmp.eq.f32.partialorder %v1609, 8.507059e+37
  %v1611 = vand.u32 %v1442, 2147483648
  %v1612 = vor.u32 1.1754944e-38, %v1611
  %v1613 = vsel %vm1610, %v1612, %v1608
  %v1614 = vmul.f32 1.0, %v1613
  %v1615 = vrcp.pop %v1443
  %v1616 = vmul.f32 %v1443, %v1615
  %v1617 = vsub.f32 1.0, %v1616
  %v1618 = vmul.f32 %v1615, %v1617
  %v1619 = vadd.f32 %v1615, %v1618
  %vm1620 = vweird.f32 %v1443
  %vm1621 = vweird.f32 %v1615
  %vm1622 = vmor %vm1620, %vm1621
  %v1623 = vsel %vm1622, %v1615, %v1619
  %v1624 = vand.u32 2147483647, %v1443
  %vm1625 = vcmp.eq.f32.partialorder %v1624, 8.507059e+37
  %v1626 = vand.u32 %v1443, 2147483648
  %v1627 = vor.u32 1.1754944e-38, %v1626
  %v1628 = vsel %vm1625, %v1627, %v1623
  %v1629 = vmul.f32 1.0, %v1628
  %v1630 = vrcp.pop %v1444
  %v1631 = vmul.f32 %v1444, %v1630
  %v1632 = vsub.f32 1.0, %v1631
  %v1633 = vmul.f32 %v1630, %v1632
  %v1634 = vadd.f32 %v1630, %v1633
  %vm1635 = vweird.f32 %v1444
  %vm1636 = vweird.f32 %v1630
  %vm1637 = vmor %vm1635, %vm1636
  %v1638 = vsel %vm1637, %v1630, %v1634
  %v1639 = vand.u32 2147483647, %v1444
  %vm1640 = vcmp.eq.f32.partialorder %v1639, 8.507059e+37
  %v1641 = vand.u32 %v1444, 2147483648
  %v1642 = vor.u32 1.1754944e-38, %v1641
  %v1643 = vsel %vm1640, %v1642, %v1638
  %v1644 = vmul.f32 1.0, %v1643
  %v1645 = vrcp.pop %v1445
  %v1646 = vmul.f32 %v1445, %v1645
  %v1647 = vsub.f32 1.0, %v1646
  %v1648 = vmul.f32 %v1645, %v1647
  %v1649 = vadd.f32 %v1645, %v1648
  %vm1650 = vweird.f32 %v1445
  %vm1651 = vweird.f32 %v1645
  %vm1652 = vmor %vm1650, %vm1651
  %v1653 = vsel %vm1652, %v1645, %v1649
  %v1654 = vand.u32 2147483647, %v1445
  %vm1655 = vcmp.eq.f32.partialorder %v1654, 8.507059e+37
  %v1656 = vand.u32 %v1445, 2147483648
  %v1657 = vor.u32 1.1754944e-38, %v1656
  %v1658 = vsel %vm1655, %v1657, %v1653
  %v1659 = vmul.f32 1.0, %v1658
  %v1660 = vrcp.pop %v1446
  %v1661 = vmul.f32 %v1446, %v1660
  %v1662 = vsub.f32 1.0, %v1661
  %v1663 = vmul.f32 %v1660, %v1662
  %v1664 = vadd.f32 %v1660, %v1663
  %vm1665 = vweird.f32 %v1446
  %vm1666 = vweird.f32 %v1660
  %vm1667 = vmor %vm1665, %vm1666
  %v1668 = vsel %vm1667, %v1660, %v1664
  %v1669 = vand.u32 2147483647, %v1446
  %vm1670 = vcmp.eq.f32.partialorder %v1669, 8.507059e+37
  %v1671 = vand.u32 %v1446, 2147483648
  %v1672 = vor.u32 1.1754944e-38, %v1671
  %v1673 = vsel %vm1670, %v1672, %v1668
  %v1674 = vmul.f32 1.0, %v1673
  %v1675 = vrcp.pop %v1447
  %v1676 = vmul.f32 %v1447, %v1675
  %v1677 = vsub.f32 1.0, %v1676
  %v1678 = vmul.f32 %v1675, %v1677
  %v1679 = vadd.f32 %v1675, %v1678
  %vm1680 = vweird.f32 %v1447
  %vm1681 = vweird.f32 %v1675
  %vm1682 = vmor %vm1680, %vm1681
  %v1683 = vsel %vm1682, %v1675, %v1679
  %v1684 = vand.u32 2147483647, %v1447
  %vm1685 = vcmp.eq.f32.partialorder %v1684, 8.507059e+37
  %v1686 = vand.u32 %v1447, 2147483648
  %v1687 = vor.u32 1.1754944e-38, %v1686
  %v1688 = vsel %vm1685, %v1687, %v1683
  %v1689 = vmul.f32 1.0, %v1688
  %v1690 = vrcp.pop %v1448
  %v1691 = vmul.f32 %v1448, %v1690
  %v1692 = vsub.f32 1.0, %v1691
  %v1693 = vmul.f32 %v1690, %v1692
  %v1694 = vadd.f32 %v1690, %v1693
  %vm1695 = vweird.f32 %v1448
  %vm1696 = vweird.f32 %v1690
  %vm1697 = vmor %vm1695, %vm1696
  %v1698 = vsel %vm1697, %v1690, %v1694
  %v1699 = vand.u32 2147483647, %v1448
  %vm1700 = vcmp.eq.f32.partialorder %v1699, 8.507059e+37
  %v1701 = vand.u32 %v1448, 2147483648
  %v1702 = vor.u32 1.1754944e-38, %v1701
  %v1703 = vsel %vm1700, %v1702, %v1698
  %v1704 = vmul.f32 1.0, %v1703
  %v1705 = vrcp.pop %v1449
  %v1706 = vmul.f32 %v1449, %v1705
  %v1707 = vsub.f32 1.0, %v1706
  %v1708 = vmul.f32 %v1705, %v1707
  %v1709 = vadd.f32 %v1705, %v1708
  %vm1710 = vweird.f32 %v1449
  %vm1711 = vweird.f32 %v1705
  %vm1712 = vmor %vm1710, %vm1711
  %v1713 = vsel %vm1712, %v1705, %v1709
  %v1714 = vand.u32 2147483647, %v1449
  %vm1715 = vcmp.eq.f32.partialorder %v1714, 8.507059e+37
  %v1716 = vand.u32 %v1449, 2147483648
  %v1717 = vor.u32 1.1754944e-38, %v1716
  %v1718 = vsel %vm1715, %v1717, %v1713
  %v1719 = vmul.f32 1.0, %v1718
  %v1720 = vrcp.pop %v1450
  %v1721 = vmul.f32 %v1450, %v1720
  %v1722 = vsub.f32 1.0, %v1721
  %v1723 = vmul.f32 %v1720, %v1722
  %v1724 = vadd.f32 %v1720, %v1723
  %vm1725 = vweird.f32 %v1450
  %vm1726 = vweird.f32 %v1720
  %vm1727 = vmor %vm1725, %vm1726
  %v1728 = vsel %vm1727, %v1720, %v1724
  %v1729 = vand.u32 2147483647, %v1450
  %vm1730 = vcmp.eq.f32.partialorder %v1729, 8.507059e+37
  %v1731 = vand.u32 %v1450, 2147483648
  %v1732 = vor.u32 1.1754944e-38, %v1731
  %v1733 = vsel %vm1730, %v1732, %v1728
  %v1734 = vmul.f32 1.0, %v1733
  %v1735 = vrcp.pop %v1451
  %v1736 = vmul.f32 %v1451, %v1735
  %v1737 = vsub.f32 1.0, %v1736
  %v1738 = vmul.f32 %v1735, %v1737
  %v1739 = vadd.f32 %v1735, %v1738
  %vm1740 = vweird.f32 %v1451
  %vm1741 = vweird.f32 %v1735
  %vm1742 = vmor %vm1740, %vm1741
  %v1743 = vsel %vm1742, %v1735, %v1739
  %v1744 = vand.u32 2147483647, %v1451
  %vm1745 = vcmp.eq.f32.partialorder %v1744, 8.507059e+37
  %v1746 = vand.u32 %v1451, 2147483648
  %v1747 = vor.u32 1.1754944e-38, %v1746
  %v1748 = vsel %vm1745, %v1747, %v1743
  %v1749 = vmul.f32 1.0, %v1748
  %v1750 = vrcp.pop %v1452
  %v1751 = vmul.f32 %v1452, %v1750
  %v1752 = vsub.f32 1.0, %v1751
  %v1753 = vmul.f32 %v1750, %v1752
  %v1754 = vadd.f32 %v1750, %v1753
  %vm1755 = vweird.f32 %v1452
  %vm1756 = vweird.f32 %v1750
  %vm1757 = vmor %vm1755, %vm1756
  %v1758 = vsel %vm1757, %v1750, %v1754
  %v1759 = vand.u32 2147483647, %v1452
  %vm1760 = vcmp.eq.f32.partialorder %v1759, 8.507059e+37
  %v1761 = vand.u32 %v1452, 2147483648
  %v1762 = vor.u32 1.1754944e-38, %v1761
  %v1763 = vsel %vm1760, %v1762, %v1758
  %v1764 = vmul.f32 1.0, %v1763
  %v1765 = vrcp.pop %v1453
  %v1766 = vmul.f32 %v1453, %v1765
  %v1767 = vsub.f32 1.0, %v1766
  %v1768 = vmul.f32 %v1765, %v1767
  %v1769 = vadd.f32 %v1765, %v1768
  %vm1770 = vweird.f32 %v1453
  %vm1771 = vweird.f32 %v1765
  %vm1772 = vmor %vm1770, %vm1771
  %v1773 = vsel %vm1772, %v1765, %v1769
  %v1774 = vand.u32 2147483647, %v1453
  %vm1775 = vcmp.eq.f32.partialorder %v1774, 8.507059e+37
  %v1776 = vand.u32 %v1453, 2147483648
  %v1777 = vor.u32 1.1754944e-38, %v1776
  %v1778 = vsel %vm1775, %v1777, %v1773
  %v1779 = vmul.f32 1.0, %v1778
  %v1780 = vrcp.pop %v1454
  %v1781 = vmul.f32 %v1454, %v1780
  %v1782 = vsub.f32 1.0, %v1781
  %v1783 = vmul.f32 %v1780, %v1782
  %v1784 = vadd.f32 %v1780, %v1783
  %vm1785 = vweird.f32 %v1454
  %vm1786 = vweird.f32 %v1780
  %vm1787 = vmor %vm1785, %vm1786
  %v1788 = vsel %vm1787, %v1780, %v1784
  %v1789 = vand.u32 2147483647, %v1454
  %vm1790 = vcmp.eq.f32.partialorder %v1789, 8.507059e+37
  %v1791 = vand.u32 %v1454, 2147483648
  %v1792 = vor.u32 1.1754944e-38, %v1791
  %v1793 = vsel %vm1790, %v1792, %v1788
  %v1794 = vmul.f32 1.0, %v1793
  %v1795 = vrcp.pop %v1455
  %v1796 = vmul.f32 %v1455, %v1795
  %v1797 = vsub.f32 1.0, %v1796
  %v1798 = vmul.f32 %v1795, %v1797
  %v1799 = vadd.f32 %v1795, %v1798
  %vm1800 = vweird.f32 %v1455
  %vm1801 = vweird.f32 %v1795
  %vm1802 = vmor %vm1800, %vm1801
  %v1803 = vsel %vm1802, %v1795, %v1799
  %v1804 = vand.u32 2147483647, %v1455
  %vm1805 = vcmp.eq.f32.partialorder %v1804, 8.507059e+37
  %v1806 = vand.u32 %v1455, 2147483648
  %v1807 = vor.u32 1.1754944e-38, %v1806
  %v1808 = vsel %vm1805, %v1807, %v1803
  %v1809 = vmul.f32 1.0, %v1808
  %v1810 = vrcp.pop %v1456
  %v1811 = vmul.f32 %v1456, %v1810
  %v1812 = vsub.f32 1.0, %v1811
  %v1813 = vmul.f32 %v1810, %v1812
  %v1814 = vadd.f32 %v1810, %v1813
  %vm1815 = vweird.f32 %v1456
  %vm1816 = vweird.f32 %v1810
  %vm1817 = vmor %vm1815, %vm1816
  %v1818 = vsel %vm1817, %v1810, %v1814
  %v1819 = vand.u32 2147483647, %v1456
  %vm1820 = vcmp.eq.f32.partialorder %v1819, 8.507059e+37
  %v1821 = vand.u32 %v1456, 2147483648
  %v1822 = vor.u32 1.1754944e-38, %v1821
  %v1823 = vsel %vm1820, %v1822, %v1818
  %v1824 = vmul.f32 1.0, %v1823
  %v1825 = vrcp.pop %v1457
  %v1826 = vmul.f32 %v1457, %v1825
  %v1827 = vsub.f32 1.0, %v1826
  %v1828 = vmul.f32 %v1825, %v1827
  %v1829 = vadd.f32 %v1825, %v1828
  %vm1830 = vweird.f32 %v1457
  %vm1831 = vweird.f32 %v1825
  %vm1832 = vmor %vm1830, %vm1831
  %v1833 = vsel %vm1832, %v1825, %v1829
  %v1834 = vand.u32 2147483647, %v1457
  %vm1835 = vcmp.eq.f32.partialorder %v1834, 8.507059e+37
  %v1836 = vand.u32 %v1457, 2147483648
  %v1837 = vor.u32 1.1754944e-38, %v1836
  %v1838 = vsel %vm1835, %v1837, %v1833
  %v1839 = vmul.f32 1.0, %v1838
  %v1840 = vrcp.pop %v1458
  %v1841 = vmul.f32 %v1458, %v1840
  %v1842 = vsub.f32 1.0, %v1841
  %v1843 = vmul.f32 %v1840, %v1842
  %v1844 = vadd.f32 %v1840, %v1843
  %vm1845 = vweird.f32 %v1458
  %vm1846 = vweird.f32 %v1840
  %vm1847 = vmor %vm1845, %vm1846
  %v1848 = vsel %vm1847, %v1840, %v1844
  %v1849 = vand.u32 2147483647, %v1458
  %vm1850 = vcmp.eq.f32.partialorder %v1849, 8.507059e+37
  %v1851 = vand.u32 %v1458, 2147483648
  %v1852 = vor.u32 1.1754944e-38, %v1851
  %v1853 = vsel %vm1850, %v1852, %v1848
  %v1854 = vmul.f32 1.0, %v1853
  %v1855 = vrcp.pop %v1459
  %v1856 = vmul.f32 %v1459, %v1855
  %v1857 = vsub.f32 1.0, %v1856
  %v1858 = vmul.f32 %v1855, %v1857
  %v1859 = vadd.f32 %v1855, %v1858
  %vm1860 = vweird.f32 %v1459
  %vm1861 = vweird.f32 %v1855
  %vm1862 = vmor %vm1860, %vm1861
  %v1863 = vsel %vm1862, %v1855, %v1859
  %v1864 = vand.u32 2147483647, %v1459
  %vm1865 = vcmp.eq.f32.partialorder %v1864, 8.507059e+37
  %v1866 = vand.u32 %v1459, 2147483648
  %v1867 = vor.u32 1.1754944e-38, %v1866
  %v1868 = vsel %vm1865, %v1867, %v1863
  %v1869 = vmul.f32 1.0, %v1868
  %v1870 = vrcp.pop %v1460
  %v1871 = vmul.f32 %v1460, %v1870
  %v1872 = vsub.f32 1.0, %v1871
  %v1873 = vmul.f32 %v1870, %v1872
  %v1874 = vadd.f32 %v1870, %v1873
  %vm1875 = vweird.f32 %v1460
  %vm1876 = vweird.f32 %v1870
  %vm1877 = vmor %vm1875, %vm1876
  %v1878 = vsel %vm1877, %v1870, %v1874
  %v1879 = vand.u32 2147483647, %v1460
  %vm1880 = vcmp.eq.f32.partialorder %v1879, 8.507059e+37
  %v1881 = vand.u32 %v1460, 2147483648
  %v1882 = vor.u32 1.1754944e-38, %v1881
  %v1883 = vsel %vm1880, %v1882, %v1878
  %v1884 = vmul.f32 1.0, %v1883
  %v1885 = vrcp.pop %v1461
  %v1886 = vmul.f32 %v1461, %v1885
  %v1887 = vsub.f32 1.0, %v1886
  %v1888 = vmul.f32 %v1885, %v1887
  %v1889 = vadd.f32 %v1885, %v1888
  %vm1890 = vweird.f32 %v1461
  %vm1891 = vweird.f32 %v1885
  %vm1892 = vmor %vm1890, %vm1891
  %v1893 = vsel %vm1892, %v1885, %v1889
  %v1894 = vand.u32 2147483647, %v1461
  %vm1895 = vcmp.eq.f32.partialorder %v1894, 8.507059e+37
  %v1896 = vand.u32 %v1461, 2147483648
  %v1897 = vor.u32 1.1754944e-38, %v1896
  %v1898 = vsel %vm1895, %v1897, %v1893
  %v1899 = vmul.f32 1.0, %v1898
  %v1900 = vrcp.pop %v1462
  %v1901 = vmul.f32 %v1462, %v1900
  %v1902 = vsub.f32 1.0, %v1901
  %v1903 = vmul.f32 %v1900, %v1902
  %v1904 = vadd.f32 %v1900, %v1903
  %vm1905 = vweird.f32 %v1462
  %vm1906 = vweird.f32 %v1900
  %vm1907 = vmor %vm1905, %vm1906
  %v1908 = vsel %vm1907, %v1900, %v1904
  %v1909 = vand.u32 2147483647, %v1462
  %vm1910 = vcmp.eq.f32.partialorder %v1909, 8.507059e+37
  %v1911 = vand.u32 %v1462, 2147483648
  %v1912 = vor.u32 1.1754944e-38, %v1911
  %v1913 = vsel %vm1910, %v1912, %v1908
  %v1914 = vmul.f32 1.0, %v1913
  %v1915 = vrcp.pop %v1463
  %v1916 = vmul.f32 %v1463, %v1915
  %v1917 = vsub.f32 1.0, %v1916
  %v1918 = vmul.f32 %v1915, %v1917
  %v1919 = vadd.f32 %v1915, %v1918
  %vm1920 = vweird.f32 %v1463
  %vm1921 = vweird.f32 %v1915
  %vm1922 = vmor %vm1920, %vm1921
  %v1923 = vsel %vm1922, %v1915, %v1919
  %v1924 = vand.u32 2147483647, %v1463
  %vm1925 = vcmp.eq.f32.partialorder %v1924, 8.507059e+37
  %v1926 = vand.u32 %v1463, 2147483648
  %v1927 = vor.u32 1.1754944e-38, %v1926
  %v1928 = vsel %vm1925, %v1927, %v1923
  %v1929 = vmul.f32 1.0, %v1928
  %v1930 = vrcp.pop %v1464
  %v1931 = vmul.f32 %v1464, %v1930
  %v1932 = vsub.f32 1.0, %v1931
  %v1933 = vmul.f32 %v1930, %v1932
  %v1934 = vadd.f32 %v1930, %v1933
  %vm1935 = vweird.f32 %v1464
  %vm1936 = vweird.f32 %v1930
  %vm1937 = vmor %vm1935, %vm1936
  %v1938 = vsel %vm1937, %v1930, %v1934
  %v1939 = vand.u32 2147483647, %v1464
  %vm1940 = vcmp.eq.f32.partialorder %v1939, 8.507059e+37
  %v1941 = vand.u32 %v1464, 2147483648
  %v1942 = vor.u32 1.1754944e-38, %v1941
  %v1943 = vsel %vm1940, %v1942, %v1938
  %v1944 = vmul.f32 1.0, %v1943
  %v1945 = vadd.f32 %v719, %v1137
  %v1946 = vadd.f32 %v721, %v1139
  %v1947 = vadd.f32 %v724, %v1142
  %v1948 = vadd.f32 %v726, %v1144
  %v1949 = vadd.f32 %v729, %v1147
  %v1950 = vadd.f32 %v731, %v1149
  %v1951 = vadd.f32 %v734, %v1152
  %v1952 = vadd.f32 %v736, %v1154
  %v1953 = vadd.f32 %v739, %v1157
  %v1954 = vadd.f32 %v741, %v1159
  %v1955 = vadd.f32 %v744, %v1162
  %v1956 = vadd.f32 %v746, %v1164
  %v1957 = vadd.f32 %v749, %v1167
  %v1958 = vadd.f32 %v751, %v1169
  %v1959 = vadd.f32 %v754, %v1172
  %v1960 = vadd.f32 %v756, %v1174
  %v1961 = vadd.f32 %v759, %v1177
  %v1962 = vadd.f32 %v761, %v1179
  %v1963 = vadd.f32 %v764, %v1182
  %v1964 = vadd.f32 %v766, %v1184
  %v1965 = vadd.f32 %v769, %v1187
  %v1966 = vadd.f32 %v771, %v1189
  %v1967 = vadd.f32 %v774, %v1192
  %v1968 = vadd.f32 %v776, %v1194
  %v1969 = vadd.f32 %v779, %v1197
  %v1970 = vadd.f32 %v781, %v1199
  %v1971 = vadd.f32 %v784, %v1202
  %v1972 = vadd.f32 %v786, %v1204
  %v1973 = vadd.f32 %v789, %v1207
  %v1974 = vadd.f32 %v791, %v1209
  %v1975 = vadd.f32 %v794, %v1212
  %v1976 = vadd.f32 %v796, %v1214
  %v1977 = vxor.u32 %v1945, 2147483648
  %v1978 = vxor.u32 %v1946, 2147483648
  %v1979 = vxor.u32 %v1947, 2147483648
  %v1980 = vxor.u32 %v1948, 2147483648
  %v1981 = vxor.u32 %v1949, 2147483648
  %v1982 = vxor.u32 %v1950, 2147483648
  %v1983 = vxor.u32 %v1951, 2147483648
  %v1984 = vxor.u32 %v1952, 2147483648
  %v1985 = vxor.u32 %v1953, 2147483648
  %v1986 = vxor.u32 %v1954, 2147483648
  %v1987 = vxor.u32 %v1955, 2147483648
  %v1988 = vxor.u32 %v1956, 2147483648
  %v1989 = vxor.u32 %v1957, 2147483648
  %v1990 = vxor.u32 %v1958, 2147483648
  %v1991 = vxor.u32 %v1959, 2147483648
  %v1992 = vxor.u32 %v1960, 2147483648
  %v1993 = vxor.u32 %v1961, 2147483648
  %v1994 = vxor.u32 %v1962, 2147483648
  %v1995 = vxor.u32 %v1963, 2147483648
  %v1996 = vxor.u32 %v1964, 2147483648
  %v1997 = vxor.u32 %v1965, 2147483648
  %v1998 = vxor.u32 %v1966, 2147483648
  %v1999 = vxor.u32 %v1967, 2147483648
  %v2000 = vxor.u32 %v1968, 2147483648
  %v2001 = vxor.u32 %v1969, 2147483648
  %v2002 = vxor.u32 %v1970, 2147483648
  %v2003 = vxor.u32 %v1971, 2147483648
  %v2004 = vxor.u32 %v1972, 2147483648
  %v2005 = vxor.u32 %v1973, 2147483648
  %v2006 = vxor.u32 %v1974, 2147483648
  %v2007 = vxor.u32 %v1975, 2147483648
  %v2008 = vxor.u32 %v1976, 2147483648
  %v2009 = vmul.f32 %v1977, 1.442695
  %v2010 = vpow.pop %v2009
  %v2011 = vmul.f32 %v1978, 1.442695
  %v2012 = vpow.pop %v2011
  %v2013 = vmul.f32 %v1979, 1.442695
  %v2014 = vpow.pop %v2013
  %v2015 = vmul.f32 %v1980, 1.442695
  %v2016 = vpow.pop %v2015
  %v2017 = vmul.f32 %v1981, 1.442695
  %v2018 = vpow.pop %v2017
  %v2019 = vmul.f32 %v1982, 1.442695
  %v2020 = vpow.pop %v2019
  %v2021 = vmul.f32 %v1983, 1.442695
  %v2022 = vpow.pop %v2021
  %v2023 = vmul.f32 %v1984, 1.442695
  %v2024 = vpow.pop %v2023
  %v2025 = vmul.f32 %v1985, 1.442695
  %v2026 = vpow.pop %v2025
  %v2027 = vmul.f32 %v1986, 1.442695
  %v2028 = vpow.pop %v2027
  %v2029 = vmul.f32 %v1987, 1.442695
  %v2030 = vpow.pop %v2029
  %v2031 = vmul.f32 %v1988, 1.442695
  %v2032 = vpow.pop %v2031
  %v2033 = vmul.f32 %v1989, 1.442695
  %v2034 = vpow.pop %v2033
  %v2035 = vmul.f32 %v1990, 1.442695
  %v2036 = vpow.pop %v2035
  %v2037 = vmul.f32 %v1991, 1.442695
  %v2038 = vpow.pop %v2037
  %v2039 = vmul.f32 %v1992, 1.442695
  %v2040 = vpow.pop %v2039
  %v2041 = vmul.f32 %v1993, 1.442695
  %v2042 = vpow.pop %v2041
  %v2043 = vmul.f32 %v1994, 1.442695
  %v2044 = vpow.pop %v2043
  %v2045 = vmul.f32 %v1995, 1.442695
  %v2046 = vpow.pop %v2045
  %v2047 = vmul.f32 %v1996, 1.442695
  %v2048 = vpow.pop %v2047
  %v2049 = vmul.f32 %v1997, 1.442695
  %v2050 = vpow.pop %v2049
  %v2051 = vmul.f32 %v1998, 1.442695
  %v2052 = vpow.pop %v2051
  %v2053 = vmul.f32 %v1999, 1.442695
  %v2054 = vpow.pop %v2053
  %v2055 = vmul.f32 %v2000, 1.442695
  %v2056 = vpow.pop %v2055
  %v2057 = vmul.f32 %v2001, 1.442695
  %v2058 = vpow.pop %v2057
  %v2059 = vmul.f32 %v2002, 1.442695
  %v2060 = vpow.pop %v2059
  %v2061 = vmul.f32 %v2003, 1.442695
  %v2062 = vpow.pop %v2061
  %v2063 = vmul.f32 %v2004, 1.442695
  %v2064 = vpow.pop %v2063
  %v2065 = vmul.f32 %v2005, 1.442695
  %v2066 = vpow.pop %v2065
  %v2067 = vmul.f32 %v2006, 1.442695
  %v2068 = vpow.pop %v2067
  %v2069 = vmul.f32 %v2007, 1.442695
  %v2070 = vpow.pop %v2069
  %v2071 = vmul.f32 %v2008, 1.442695
  %v2072 = vpow.pop %v2071
  %v2073 = vadd.f32 %v2010, 1.0
  %v2074 = vadd.f32 %v2012, 1.0
  %v2075 = vadd.f32 %v2014, 1.0
  %v2076 = vadd.f32 %v2016, 1.0
  %v2077 = vadd.f32 %v2018, 1.0
  %v2078 = vadd.f32 %v2020, 1.0
  %v2079 = vadd.f32 %v2022, 1.0
  %v2080 = vadd.f32 %v2024, 1.0
  %v2081 = vadd.f32 %v2026, 1.0
  %v2082 = vadd.f32 %v2028, 1.0
  %v2083 = vadd.f32 %v2030, 1.0
  %v2084 = vadd.f32 %v2032, 1.0
  %v2085 = vadd.f32 %v2034, 1.0
  %v2086 = vadd.f32 %v2036, 1.0
  %v2087 = vadd.f32 %v2038, 1.0
  %v2088 = vadd.f32 %v2040, 1.0
  %v2089 = vadd.f32 %v2042, 1.0
  %v2090 = vadd.f32 %v2044, 1.0
  %v2091 = vadd.f32 %v2046, 1.0
  %v2092 = vadd.f32 %v2048, 1.0
  %v2093 = vadd.f32 %v2050, 1.0
  %v2094 = vadd.f32 %v2052, 1.0
  %v2095 = vadd.f32 %v2054, 1.0
  %v2096 = vadd.f32 %v2056, 1.0
  %v2097 = vadd.f32 %v2058, 1.0
  %v2098 = vadd.f32 %v2060, 1.0
  %v2099 = vadd.f32 %v2062, 1.0
  %v2100 = vadd.f32 %v2064, 1.0
  %v2101 = vadd.f32 %v2066, 1.0
  %v2102 = vadd.f32 %v2068, 1.0
  %v2103 = vadd.f32 %v2070, 1.0
  %v2104 = vadd.f32 %v2072, 1.0
  %v2105 = vrcp.pop %v2073
  %v2106 = vmul.f32 %v2073, %v2105
  %v2107 = vsub.f32 1.0, %v2106
  %v2108 = vmul.f32 %v2105, %v2107
  %v2109 = vadd.f32 %v2105, %v2108
  %vm2110 = vweird.f32 %v2073
  %vm2111 = vweird.f32 %v2105
  %vm2112 = vmor %vm2110, %vm2111
  %v2113 = vsel %vm2112, %v2105, %v2109
  %v2114 = vand.u32 2147483647, %v2073
  %vm2115 = vcmp.eq.f32.partialorder %v2114, 8.507059e+37
  %v2116 = vand.u32 %v2073, 2147483648
  %v2117 = vor.u32 1.1754944e-38, %v2116
  %v2118 = vsel %vm2115, %v2117, %v2113
  %v2119 = vmul.f32 1.0, %v2118
  %v2120 = vrcp.pop %v2074
  %v2121 = vmul.f32 %v2074, %v2120
  %v2122 = vsub.f32 1.0, %v2121
  %v2123 = vmul.f32 %v2120, %v2122
  %v2124 = vadd.f32 %v2120, %v2123
  %vm2125 = vweird.f32 %v2074
  %vm2126 = vweird.f32 %v2120
  %vm2127 = vmor %vm2125, %vm2126
  %v2128 = vsel %vm2127, %v2120, %v2124
  %v2129 = vand.u32 2147483647, %v2074
  %vm2130 = vcmp.eq.f32.partialorder %v2129, 8.507059e+37
  %v2131 = vand.u32 %v2074, 2147483648
  %v2132 = vor.u32 1.1754944e-38, %v2131
  %v2133 = vsel %vm2130, %v2132, %v2128
  %v2134 = vmul.f32 1.0, %v2133
  %v2135 = vrcp.pop %v2075
  %v2136 = vmul.f32 %v2075, %v2135
  %v2137 = vsub.f32 1.0, %v2136
  %v2138 = vmul.f32 %v2135, %v2137
  %v2139 = vadd.f32 %v2135, %v2138
  %vm2140 = vweird.f32 %v2075
  %vm2141 = vweird.f32 %v2135
  %vm2142 = vmor %vm2140, %vm2141
  %v2143 = vsel %vm2142, %v2135, %v2139
  %v2144 = vand.u32 2147483647, %v2075
  %vm2145 = vcmp.eq.f32.partialorder %v2144, 8.507059e+37
  %v2146 = vand.u32 %v2075, 2147483648
  %v2147 = vor.u32 1.1754944e-38, %v2146
  %v2148 = vsel %vm2145, %v2147, %v2143
  %v2149 = vmul.f32 1.0, %v2148
  %v2150 = vrcp.pop %v2076
  %v2151 = vmul.f32 %v2076, %v2150
  %v2152 = vsub.f32 1.0, %v2151
  %v2153 = vmul.f32 %v2150, %v2152
  %v2154 = vadd.f32 %v2150, %v2153
  %vm2155 = vweird.f32 %v2076
  %vm2156 = vweird.f32 %v2150
  %vm2157 = vmor %vm2155, %vm2156
  %v2158 = vsel %vm2157, %v2150, %v2154
  %v2159 = vand.u32 2147483647, %v2076
  %vm2160 = vcmp.eq.f32.partialorder %v2159, 8.507059e+37
  %v2161 = vand.u32 %v2076, 2147483648
  %v2162 = vor.u32 1.1754944e-38, %v2161
  %v2163 = vsel %vm2160, %v2162, %v2158
  %v2164 = vmul.f32 1.0, %v2163
  %v2165 = vrcp.pop %v2077
  %v2166 = vmul.f32 %v2077, %v2165
  %v2167 = vsub.f32 1.0, %v2166
  %v2168 = vmul.f32 %v2165, %v2167
  %v2169 = vadd.f32 %v2165, %v2168
  %vm2170 = vweird.f32 %v2077
  %vm2171 = vweird.f32 %v2165
  %vm2172 = vmor %vm2170, %vm2171
  %v2173 = vsel %vm2172, %v2165, %v2169
  %v2174 = vand.u32 2147483647, %v2077
  %vm2175 = vcmp.eq.f32.partialorder %v2174, 8.507059e+37
  %v2176 = vand.u32 %v2077, 2147483648
  %v2177 = vor.u32 1.1754944e-38, %v2176
  %v2178 = vsel %vm2175, %v2177, %v2173
  %v2179 = vmul.f32 1.0, %v2178
  %v2180 = vrcp.pop %v2078
  %v2181 = vmul.f32 %v2078, %v2180
  %v2182 = vsub.f32 1.0, %v2181
  %v2183 = vmul.f32 %v2180, %v2182
  %v2184 = vadd.f32 %v2180, %v2183
  %vm2185 = vweird.f32 %v2078
  %vm2186 = vweird.f32 %v2180
  %vm2187 = vmor %vm2185, %vm2186
  %v2188 = vsel %vm2187, %v2180, %v2184
  %v2189 = vand.u32 2147483647, %v2078
  %vm2190 = vcmp.eq.f32.partialorder %v2189, 8.507059e+37
  %v2191 = vand.u32 %v2078, 2147483648
  %v2192 = vor.u32 1.1754944e-38, %v2191
  %v2193 = vsel %vm2190, %v2192, %v2188
  %v2194 = vmul.f32 1.0, %v2193
  %v2195 = vrcp.pop %v2079
  %v2196 = vmul.f32 %v2079, %v2195
  %v2197 = vsub.f32 1.0, %v2196
  %v2198 = vmul.f32 %v2195, %v2197
  %v2199 = vadd.f32 %v2195, %v2198
  %vm2200 = vweird.f32 %v2079
  %vm2201 = vweird.f32 %v2195
  %vm2202 = vmor %vm2200, %vm2201
  %v2203 = vsel %vm2202, %v2195, %v2199
  %v2204 = vand.u32 2147483647, %v2079
  %vm2205 = vcmp.eq.f32.partialorder %v2204, 8.507059e+37
  %v2206 = vand.u32 %v2079, 2147483648
  %v2207 = vor.u32 1.1754944e-38, %v2206
  %v2208 = vsel %vm2205, %v2207, %v2203
  %v2209 = vmul.f32 1.0, %v2208
  %v2210 = vrcp.pop %v2080
  %v2211 = vmul.f32 %v2080, %v2210
  %v2212 = vsub.f32 1.0, %v2211
  %v2213 = vmul.f32 %v2210, %v2212
  %v2214 = vadd.f32 %v2210, %v2213
  %vm2215 = vweird.f32 %v2080
  %vm2216 = vweird.f32 %v2210
  %vm2217 = vmor %vm2215, %vm2216
  %v2218 = vsel %vm2217, %v2210, %v2214
  %v2219 = vand.u32 2147483647, %v2080
  %vm2220 = vcmp.eq.f32.partialorder %v2219, 8.507059e+37
  %v2221 = vand.u32 %v2080, 2147483648
  %v2222 = vor.u32 1.1754944e-38, %v2221
  %v2223 = vsel %vm2220, %v2222, %v2218
  %v2224 = vmul.f32 1.0, %v2223
  %v2225 = vrcp.pop %v2081
  %v2226 = vmul.f32 %v2081, %v2225
  %v2227 = vsub.f32 1.0, %v2226
  %v2228 = vmul.f32 %v2225, %v2227
  %v2229 = vadd.f32 %v2225, %v2228
  %vm2230 = vweird.f32 %v2081
  %vm2231 = vweird.f32 %v2225
  %vm2232 = vmor %vm2230, %vm2231
  %v2233 = vsel %vm2232, %v2225, %v2229
  %v2234 = vand.u32 2147483647, %v2081
  %vm2235 = vcmp.eq.f32.partialorder %v2234, 8.507059e+37
  %v2236 = vand.u32 %v2081, 2147483648
  %v2237 = vor.u32 1.1754944e-38, %v2236
  %v2238 = vsel %vm2235, %v2237, %v2233
  %v2239 = vmul.f32 1.0, %v2238
  %v2240 = vrcp.pop %v2082
  %v2241 = vmul.f32 %v2082, %v2240
  %v2242 = vsub.f32 1.0, %v2241
  %v2243 = vmul.f32 %v2240, %v2242
  %v2244 = vadd.f32 %v2240, %v2243
  %vm2245 = vweird.f32 %v2082
  %vm2246 = vweird.f32 %v2240
  %vm2247 = vmor %vm2245, %vm2246
  %v2248 = vsel %vm2247, %v2240, %v2244
  %v2249 = vand.u32 2147483647, %v2082
  %vm2250 = vcmp.eq.f32.partialorder %v2249, 8.507059e+37
  %v2251 = vand.u32 %v2082, 2147483648
  %v2252 = vor.u32 1.1754944e-38, %v2251
  %v2253 = vsel %vm2250, %v2252, %v2248
  %v2254 = vmul.f32 1.0, %v2253
  %v2255 = vrcp.pop %v2083
  %v2256 = vmul.f32 %v2083, %v2255
  %v2257 = vsub.f32 1.0, %v2256
  %v2258 = vmul.f32 %v2255, %v2257
  %v2259 = vadd.f32 %v2255, %v2258
  %vm2260 = vweird.f32 %v2083
  %vm2261 = vweird.f32 %v2255
  %vm2262 = vmor %vm2260, %vm2261
  %v2263 = vsel %vm2262, %v2255, %v2259
  %v2264 = vand.u32 2147483647, %v2083
  %vm2265 = vcmp.eq.f32.partialorder %v2264, 8.507059e+37
  %v2266 = vand.u32 %v2083, 2147483648
  %v2267 = vor.u32 1.1754944e-38, %v2266
  %v2268 = vsel %vm2265, %v2267, %v2263
  %v2269 = vmul.f32 1.0, %v2268
  %v2270 = vrcp.pop %v2084
  %v2271 = vmul.f32 %v2084, %v2270
  %v2272 = vsub.f32 1.0, %v2271
  %v2273 = vmul.f32 %v2270, %v2272
  %v2274 = vadd.f32 %v2270, %v2273
  %vm2275 = vweird.f32 %v2084
  %vm2276 = vweird.f32 %v2270
  %vm2277 = vmor %vm2275, %vm2276
  %v2278 = vsel %vm2277, %v2270, %v2274
  %v2279 = vand.u32 2147483647, %v2084
  %vm2280 = vcmp.eq.f32.partialorder %v2279, 8.507059e+37
  %v2281 = vand.u32 %v2084, 2147483648
  %v2282 = vor.u32 1.1754944e-38, %v2281
  %v2283 = vsel %vm2280, %v2282, %v2278
  %v2284 = vmul.f32 1.0, %v2283
  %v2285 = vrcp.pop %v2085
  %v2286 = vmul.f32 %v2085, %v2285
  %v2287 = vsub.f32 1.0, %v2286
  %v2288 = vmul.f32 %v2285, %v2287
  %v2289 = vadd.f32 %v2285, %v2288
  %vm2290 = vweird.f32 %v2085
  %vm2291 = vweird.f32 %v2285
  %vm2292 = vmor %vm2290, %vm2291
  %v2293 = vsel %vm2292, %v2285, %v2289
  %v2294 = vand.u32 2147483647, %v2085
  %vm2295 = vcmp.eq.f32.partialorder %v2294, 8.507059e+37
  %v2296 = vand.u32 %v2085, 2147483648
  %v2297 = vor.u32 1.1754944e-38, %v2296
  %v2298 = vsel %vm2295, %v2297, %v2293
  %v2299 = vmul.f32 1.0, %v2298
  %v2300 = vrcp.pop %v2086
  %v2301 = vmul.f32 %v2086, %v2300
  %v2302 = vsub.f32 1.0, %v2301
  %v2303 = vmul.f32 %v2300, %v2302
  %v2304 = vadd.f32 %v2300, %v2303
  %vm2305 = vweird.f32 %v2086
  %vm2306 = vweird.f32 %v2300
  %vm2307 = vmor %vm2305, %vm2306
  %v2308 = vsel %vm2307, %v2300, %v2304
  %v2309 = vand.u32 2147483647, %v2086
  %vm2310 = vcmp.eq.f32.partialorder %v2309, 8.507059e+37
  %v2311 = vand.u32 %v2086, 2147483648
  %v2312 = vor.u32 1.1754944e-38, %v2311
  %v2313 = vsel %vm2310, %v2312, %v2308
  %v2314 = vmul.f32 1.0, %v2313
  %v2315 = vrcp.pop %v2087
  %v2316 = vmul.f32 %v2087, %v2315
  %v2317 = vsub.f32 1.0, %v2316
  %v2318 = vmul.f32 %v2315, %v2317
  %v2319 = vadd.f32 %v2315, %v2318
  %vm2320 = vweird.f32 %v2087
  %vm2321 = vweird.f32 %v2315
  %vm2322 = vmor %vm2320, %vm2321
  %v2323 = vsel %vm2322, %v2315, %v2319
  %v2324 = vand.u32 2147483647, %v2087
  %vm2325 = vcmp.eq.f32.partialorder %v2324, 8.507059e+37
  %v2326 = vand.u32 %v2087, 2147483648
  %v2327 = vor.u32 1.1754944e-38, %v2326
  %v2328 = vsel %vm2325, %v2327, %v2323
  %v2329 = vmul.f32 1.0, %v2328
  %v2330 = vrcp.pop %v2088
  %v2331 = vmul.f32 %v2088, %v2330
  %v2332 = vsub.f32 1.0, %v2331
  %v2333 = vmul.f32 %v2330, %v2332
  %v2334 = vadd.f32 %v2330, %v2333
  %vm2335 = vweird.f32 %v2088
  %vm2336 = vweird.f32 %v2330
  %vm2337 = vmor %vm2335, %vm2336
  %v2338 = vsel %vm2337, %v2330, %v2334
  %v2339 = vand.u32 2147483647, %v2088
  %vm2340 = vcmp.eq.f32.partialorder %v2339, 8.507059e+37
  %v2341 = vand.u32 %v2088, 2147483648
  %v2342 = vor.u32 1.1754944e-38, %v2341
  %v2343 = vsel %vm2340, %v2342, %v2338
  %v2344 = vmul.f32 1.0, %v2343
  %v2345 = vrcp.pop %v2089
  %v2346 = vmul.f32 %v2089, %v2345
  %v2347 = vsub.f32 1.0, %v2346
  %v2348 = vmul.f32 %v2345, %v2347
  %v2349 = vadd.f32 %v2345, %v2348
  %vm2350 = vweird.f32 %v2089
  %vm2351 = vweird.f32 %v2345
  %vm2352 = vmor %vm2350, %vm2351
  %v2353 = vsel %vm2352, %v2345, %v2349
  %v2354 = vand.u32 2147483647, %v2089
  %vm2355 = vcmp.eq.f32.partialorder %v2354, 8.507059e+37
  %v2356 = vand.u32 %v2089, 2147483648
  %v2357 = vor.u32 1.1754944e-38, %v2356
  %v2358 = vsel %vm2355, %v2357, %v2353
  %v2359 = vmul.f32 1.0, %v2358
  %v2360 = vrcp.pop %v2090
  %v2361 = vmul.f32 %v2090, %v2360
  %v2362 = vsub.f32 1.0, %v2361
  %v2363 = vmul.f32 %v2360, %v2362
  %v2364 = vadd.f32 %v2360, %v2363
  %vm2365 = vweird.f32 %v2090
  %vm2366 = vweird.f32 %v2360
  %vm2367 = vmor %vm2365, %vm2366
  %v2368 = vsel %vm2367, %v2360, %v2364
  %v2369 = vand.u32 2147483647, %v2090
  %vm2370 = vcmp.eq.f32.partialorder %v2369, 8.507059e+37
  %v2371 = vand.u32 %v2090, 2147483648
  %v2372 = vor.u32 1.1754944e-38, %v2371
  %v2373 = vsel %vm2370, %v2372, %v2368
  %v2374 = vmul.f32 1.0, %v2373
  %v2375 = vrcp.pop %v2091
  %v2376 = vmul.f32 %v2091, %v2375
  %v2377 = vsub.f32 1.0, %v2376
  %v2378 = vmul.f32 %v2375, %v2377
  %v2379 = vadd.f32 %v2375, %v2378
  %vm2380 = vweird.f32 %v2091
  %vm2381 = vweird.f32 %v2375
  %vm2382 = vmor %vm2380, %vm2381
  %v2383 = vsel %vm2382, %v2375, %v2379
  %v2384 = vand.u32 2147483647, %v2091
  %vm2385 = vcmp.eq.f32.partialorder %v2384, 8.507059e+37
  %v2386 = vand.u32 %v2091, 2147483648
  %v2387 = vor.u32 1.1754944e-38, %v2386
  %v2388 = vsel %vm2385, %v2387, %v2383
  %v2389 = vmul.f32 1.0, %v2388
  %v2390 = vrcp.pop %v2092
  %v2391 = vmul.f32 %v2092, %v2390
  %v2392 = vsub.f32 1.0, %v2391
  %v2393 = vmul.f32 %v2390, %v2392
  %v2394 = vadd.f32 %v2390, %v2393
  %vm2395 = vweird.f32 %v2092
  %vm2396 = vweird.f32 %v2390
  %vm2397 = vmor %vm2395, %vm2396
  %v2398 = vsel %vm2397, %v2390, %v2394
  %v2399 = vand.u32 2147483647, %v2092
  %vm2400 = vcmp.eq.f32.partialorder %v2399, 8.507059e+37
  %v2401 = vand.u32 %v2092, 2147483648
  %v2402 = vor.u32 1.1754944e-38, %v2401
  %v2403 = vsel %vm2400, %v2402, %v2398
  %v2404 = vmul.f32 1.0, %v2403
  %v2405 = vrcp.pop %v2093
  %v2406 = vmul.f32 %v2093, %v2405
  %v2407 = vsub.f32 1.0, %v2406
  %v2408 = vmul.f32 %v2405, %v2407
  %v2409 = vadd.f32 %v2405, %v2408
  %vm2410 = vweird.f32 %v2093
  %vm2411 = vweird.f32 %v2405
  %vm2412 = vmor %vm2410, %vm2411
  %v2413 = vsel %vm2412, %v2405, %v2409
  %v2414 = vand.u32 2147483647, %v2093
  %vm2415 = vcmp.eq.f32.partialorder %v2414, 8.507059e+37
  %v2416 = vand.u32 %v2093, 2147483648
  %v2417 = vor.u32 1.1754944e-38, %v2416
  %v2418 = vsel %vm2415, %v2417, %v2413
  %v2419 = vmul.f32 1.0, %v2418
  %v2420 = vrcp.pop %v2094
  %v2421 = vmul.f32 %v2094, %v2420
  %v2422 = vsub.f32 1.0, %v2421
  %v2423 = vmul.f32 %v2420, %v2422
  %v2424 = vadd.f32 %v2420, %v2423
  %vm2425 = vweird.f32 %v2094
  %vm2426 = vweird.f32 %v2420
  %vm2427 = vmor %vm2425, %vm2426
  %v2428 = vsel %vm2427, %v2420, %v2424
  %v2429 = vand.u32 2147483647, %v2094
  %vm2430 = vcmp.eq.f32.partialorder %v2429, 8.507059e+37
  %v2431 = vand.u32 %v2094, 2147483648
  %v2432 = vor.u32 1.1754944e-38, %v2431
  %v2433 = vsel %vm2430, %v2432, %v2428
  %v2434 = vmul.f32 1.0, %v2433
  %v2435 = vrcp.pop %v2095
  %v2436 = vmul.f32 %v2095, %v2435
  %v2437 = vsub.f32 1.0, %v2436
  %v2438 = vmul.f32 %v2435, %v2437
  %v2439 = vadd.f32 %v2435, %v2438
  %vm2440 = vweird.f32 %v2095
  %vm2441 = vweird.f32 %v2435
  %vm2442 = vmor %vm2440, %vm2441
  %v2443 = vsel %vm2442, %v2435, %v2439
  %v2444 = vand.u32 2147483647, %v2095
  %vm2445 = vcmp.eq.f32.partialorder %v2444, 8.507059e+37
  %v2446 = vand.u32 %v2095, 2147483648
  %v2447 = vor.u32 1.1754944e-38, %v2446
  %v2448 = vsel %vm2445, %v2447, %v2443
  %v2449 = vmul.f32 1.0, %v2448
  %v2450 = vrcp.pop %v2096
  %v2451 = vmul.f32 %v2096, %v2450
  %v2452 = vsub.f32 1.0, %v2451
  %v2453 = vmul.f32 %v2450, %v2452
  %v2454 = vadd.f32 %v2450, %v2453
  %vm2455 = vweird.f32 %v2096
  %vm2456 = vweird.f32 %v2450
  %vm2457 = vmor %vm2455, %vm2456
  %v2458 = vsel %vm2457, %v2450, %v2454
  %v2459 = vand.u32 2147483647, %v2096
  %vm2460 = vcmp.eq.f32.partialorder %v2459, 8.507059e+37
  %v2461 = vand.u32 %v2096, 2147483648
  %v2462 = vor.u32 1.1754944e-38, %v2461
  %v2463 = vsel %vm2460, %v2462, %v2458
  %v2464 = vmul.f32 1.0, %v2463
  %v2465 = vrcp.pop %v2097
  %v2466 = vmul.f32 %v2097, %v2465
  %v2467 = vsub.f32 1.0, %v2466
  %v2468 = vmul.f32 %v2465, %v2467
  %v2469 = vadd.f32 %v2465, %v2468
  %vm2470 = vweird.f32 %v2097
  %vm2471 = vweird.f32 %v2465
  %vm2472 = vmor %vm2470, %vm2471
  %v2473 = vsel %vm2472, %v2465, %v2469
  %v2474 = vand.u32 2147483647, %v2097
  %vm2475 = vcmp.eq.f32.partialorder %v2474, 8.507059e+37
  %v2476 = vand.u32 %v2097, 2147483648
  %v2477 = vor.u32 1.1754944e-38, %v2476
  %v2478 = vsel %vm2475, %v2477, %v2473
  %v2479 = vmul.f32 1.0, %v2478
  %v2480 = vrcp.pop %v2098
  %v2481 = vmul.f32 %v2098, %v2480
  %v2482 = vsub.f32 1.0, %v2481
  %v2483 = vmul.f32 %v2480, %v2482
  %v2484 = vadd.f32 %v2480, %v2483
  %vm2485 = vweird.f32 %v2098
  %vm2486 = vweird.f32 %v2480
  %vm2487 = vmor %vm2485, %vm2486
  %v2488 = vsel %vm2487, %v2480, %v2484
  %v2489 = vand.u32 2147483647, %v2098
  %vm2490 = vcmp.eq.f32.partialorder %v2489, 8.507059e+37
  %v2491 = vand.u32 %v2098, 2147483648
  %v2492 = vor.u32 1.1754944e-38, %v2491
  %v2493 = vsel %vm2490, %v2492, %v2488
  %v2494 = vmul.f32 1.0, %v2493
  %v2495 = vrcp.pop %v2099
  %v2496 = vmul.f32 %v2099, %v2495
  %v2497 = vsub.f32 1.0, %v2496
  %v2498 = vmul.f32 %v2495, %v2497
  %v2499 = vadd.f32 %v2495, %v2498
  %vm2500 = vweird.f32 %v2099
  %vm2501 = vweird.f32 %v2495
  %vm2502 = vmor %vm2500, %vm2501
  %v2503 = vsel %vm2502, %v2495, %v2499
  %v2504 = vand.u32 2147483647, %v2099
  %vm2505 = vcmp.eq.f32.partialorder %v2504, 8.507059e+37
  %v2506 = vand.u32 %v2099, 2147483648
  %v2507 = vor.u32 1.1754944e-38, %v2506
  %v2508 = vsel %vm2505, %v2507, %v2503
  %v2509 = vmul.f32 1.0, %v2508
  %v2510 = vrcp.pop %v2100
  %v2511 = vmul.f32 %v2100, %v2510
  %v2512 = vsub.f32 1.0, %v2511
  %v2513 = vmul.f32 %v2510, %v2512
  %v2514 = vadd.f32 %v2510, %v2513
  %vm2515 = vweird.f32 %v2100
  %vm2516 = vweird.f32 %v2510
  %vm2517 = vmor %vm2515, %vm2516
  %v2518 = vsel %vm2517, %v2510, %v2514
  %v2519 = vand.u32 2147483647, %v2100
  %vm2520 = vcmp.eq.f32.partialorder %v2519, 8.507059e+37
  %v2521 = vand.u32 %v2100, 2147483648
  %v2522 = vor.u32 1.1754944e-38, %v2521
  %v2523 = vsel %vm2520, %v2522, %v2518
  %v2524 = vmul.f32 1.0, %v2523
  %v2525 = vrcp.pop %v2101
  %v2526 = vmul.f32 %v2101, %v2525
  %v2527 = vsub.f32 1.0, %v2526
  %v2528 = vmul.f32 %v2525, %v2527
  %v2529 = vadd.f32 %v2525, %v2528
  %vm2530 = vweird.f32 %v2101
  %vm2531 = vweird.f32 %v2525
  %vm2532 = vmor %vm2530, %vm2531
  %v2533 = vsel %vm2532, %v2525, %v2529
  %v2534 = vand.u32 2147483647, %v2101
  %vm2535 = vcmp.eq.f32.partialorder %v2534, 8.507059e+37
  %v2536 = vand.u32 %v2101, 2147483648
  %v2537 = vor.u32 1.1754944e-38, %v2536
  %v2538 = vsel %vm2535, %v2537, %v2533
  %v2539 = vmul.f32 1.0, %v2538
  %v2540 = vrcp.pop %v2102
  %v2541 = vmul.f32 %v2102, %v2540
  %v2542 = vsub.f32 1.0, %v2541
  %v2543 = vmul.f32 %v2540, %v2542
  %v2544 = vadd.f32 %v2540, %v2543
  %vm2545 = vweird.f32 %v2102
  %vm2546 = vweird.f32 %v2540
  %vm2547 = vmor %vm2545, %vm2546
  %v2548 = vsel %vm2547, %v2540, %v2544
  %v2549 = vand.u32 2147483647, %v2102
  %vm2550 = vcmp.eq.f32.partialorder %v2549, 8.507059e+37
  %v2551 = vand.u32 %v2102, 2147483648
  %v2552 = vor.u32 1.1754944e-38, %v2551
  %v2553 = vsel %vm2550, %v2552, %v2548
  %v2554 = vmul.f32 1.0, %v2553
  %v2555 = vrcp.pop %v2103
  %v2556 = vmul.f32 %v2103, %v2555
  %v2557 = vsub.f32 1.0, %v2556
  %v2558 = vmul.f32 %v2555, %v2557
  %v2559 = vadd.f32 %v2555, %v2558
  %vm2560 = vweird.f32 %v2103
  %vm2561 = vweird.f32 %v2555
  %vm2562 = vmor %vm2560, %vm2561
  %v2563 = vsel %vm2562, %v2555, %v2559
  %v2564 = vand.u32 2147483647, %v2103
  %vm2565 = vcmp.eq.f32.partialorder %v2564, 8.507059e+37
  %v2566 = vand.u32 %v2103, 2147483648
  %v2567 = vor.u32 1.1754944e-38, %v2566
  %v2568 = vsel %vm2565, %v2567, %v2563
  %v2569 = vmul.f32 1.0, %v2568
  %v2570 = vrcp.pop %v2104
  %v2571 = vmul.f32 %v2104, %v2570
  %v2572 = vsub.f32 1.0, %v2571
  %v2573 = vmul.f32 %v2570, %v2572
  %v2574 = vadd.f32 %v2570, %v2573
  %vm2575 = vweird.f32 %v2104
  %vm2576 = vweird.f32 %v2570
  %vm2577 = vmor %vm2575, %vm2576
  %v2578 = vsel %vm2577, %v2570, %v2574
  %v2579 = vand.u32 2147483647, %v2104
  %vm2580 = vcmp.eq.f32.partialorder %v2579, 8.507059e+37
  %v2581 = vand.u32 %v2104, 2147483648
  %v2582 = vor.u32 1.1754944e-38, %v2581
  %v2583 = vsel %vm2580, %v2582, %v2578
  %v2584 = vmul.f32 1.0, %v2583
  %v2585 = vmul.f32 %v1479, %v1226
  %v2586 = vmul.f32 %v1494, %v1228
  %v2587 = vmul.f32 %v1509, %v1231
  %v2588 = vmul.f32 %v1524, %v1233
  %v2589 = vmul.f32 %v1539, %v1236
  %v2590 = vmul.f32 %v1554, %v1238
  %v2591 = vmul.f32 %v1569, %v1241
  %v2592 = vmul.f32 %v1584, %v1243
  %v2593 = vmul.f32 %v1599, %v1246
  %v2594 = vmul.f32 %v1614, %v1248
  %v2595 = vmul.f32 %v1629, %v1251
  %v2596 = vmul.f32 %v1644, %v1253
  %v2597 = vmul.f32 %v1659, %v1256
  %v2598 = vmul.f32 %v1674, %v1258
  %v2599 = vmul.f32 %v1689, %v1261
  %v2600 = vmul.f32 %v1704, %v1263
  %v2601 = vmul.f32 %v1719, %v1266
  %v2602 = vmul.f32 %v1734, %v1268
  %v2603 = vmul.f32 %v1749, %v1271
  %v2604 = vmul.f32 %v1764, %v1273
  %v2605 = vmul.f32 %v1779, %v1276
  %v2606 = vmul.f32 %v1794, %v1278
  %v2607 = vmul.f32 %v1809, %v1281
  %v2608 = vmul.f32 %v1824, %v1283
  %v2609 = vmul.f32 %v1839, %v1286
  %v2610 = vmul.f32 %v1854, %v1288
  %v2611 = vmul.f32 %v1869, %v1291
  %v2612 = vmul.f32 %v1884, %v1293
  %v2613 = vmul.f32 %v1899, %v1296
  %v2614 = vmul.f32 %v1914, %v1298
  %v2615 = vmul.f32 %v1929, %v1301
  %v2616 = vmul.f32 %v1944, %v1303
  %v2617 = vadd.f32 %v808, %v2585
  %v2618 = vadd.f32 %v810, %v2586
  %v2619 = vadd.f32 %v813, %v2587
  %v2620 = vadd.f32 %v815, %v2588
  %v2621 = vadd.f32 %v818, %v2589
  %v2622 = vadd.f32 %v820, %v2590
  %v2623 = vadd.f32 %v823, %v2591
  %v2624 = vadd.f32 %v825, %v2592
  %v2625 = vadd.f32 %v828, %v2593
  %v2626 = vadd.f32 %v830, %v2594
  %v2627 = vadd.f32 %v833, %v2595
  %v2628 = vadd.f32 %v835, %v2596
  %v2629 = vadd.f32 %v838, %v2597
  %v2630 = vadd.f32 %v840, %v2598
  %v2631 = vadd.f32 %v843, %v2599
  %v2632 = vadd.f32 %v845, %v2600
  %v2633 = vadd.f32 %v848, %v2601
  %v2634 = vadd.f32 %v850, %v2602
  %v2635 = vadd.f32 %v853, %v2603
  %v2636 = vadd.f32 %v855, %v2604
  %v2637 = vadd.f32 %v858, %v2605
  %v2638 = vadd.f32 %v860, %v2606
  %v2639 = vadd.f32 %v863, %v2607
  %v2640 = vadd.f32 %v865, %v2608
  %v2641 = vadd.f32 %v868, %v2609
  %v2642 = vadd.f32 %v870, %v2610
  %v2643 = vadd.f32 %v873, %v2611
  %v2644 = vadd.f32 %v875, %v2612
  %v2645 = vadd.f32 %v878, %v2613
  %v2646 = vadd.f32 %v880, %v2614
  %v2647 = vadd.f32 %v883, %v2615
  %v2648 = vadd.f32 %v885, %v2616
  %v2649 = vtanh.pop %v2617
  %v2650 = vtanh.pop %v2618
  %v2651 = vtanh.pop %v2619
  %v2652 = vtanh.pop %v2620
  %v2653 = vtanh.pop %v2621
  %v2654 = vtanh.pop %v2622
  %v2655 = vtanh.pop %v2623
  %v2656 = vtanh.pop %v2624
  %v2657 = vtanh.pop %v2625
  %v2658 = vtanh.pop %v2626
  %v2659 = vtanh.pop %v2627
  %v2660 = vtanh.pop %v2628
  %v2661 = vtanh.pop %v2629
  %v2662 = vtanh.pop %v2630
  %v2663 = vtanh.pop %v2631
  %v2664 = vtanh.pop %v2632
  %v2665 = vtanh.pop %v2633
  %v2666 = vtanh.pop %v2634
  %v2667 = vtanh.pop %v2635
  %v2668 = vtanh.pop %v2636
  %v2669 = vtanh.pop %v2637
  %v2670 = vtanh.pop %v2638
  %v2671 = vtanh.pop %v2639
  %v2672 = vtanh.pop %v2640
  %v2673 = vtanh.pop %v2641
  %v2674 = vtanh.pop %v2642
  %v2675 = vtanh.pop %v2643
  %v2676 = vtanh.pop %v2644
  %v2677 = vtanh.pop %v2645
  %v2678 = vtanh.pop %v2646
  %v2679 = vtanh.pop %v2647
  %v2680 = vtanh.pop %v2648
  %v2681 = vsub.f32 1.0, %v2119
  %v2682 = vsub.f32 1.0, %v2134
  %v2683 = vsub.f32 1.0, %v2149
  %v2684 = vsub.f32 1.0, %v2164
  %v2685 = vsub.f32 1.0, %v2179
  %v2686 = vsub.f32 1.0, %v2194
  %v2687 = vsub.f32 1.0, %v2209
  %v2688 = vsub.f32 1.0, %v2224
  %v2689 = vsub.f32 1.0, %v2239
  %v2690 = vsub.f32 1.0, %v2254
  %v2691 = vsub.f32 1.0, %v2269
  %v2692 = vsub.f32 1.0, %v2284
  %v2693 = vsub.f32 1.0, %v2299
  %v2694 = vsub.f32 1.0, %v2314
  %v2695 = vsub.f32 1.0, %v2329
  %v2696 = vsub.f32 1.0, %v2344
  %v2697 = vsub.f32 1.0, %v2359
  %v2698 = vsub.f32 1.0, %v2374
  %v2699 = vsub.f32 1.0, %v2389
  %v2700 = vsub.f32 1.0, %v2404
  %v2701 = vsub.f32 1.0, %v2419
  %v2702 = vsub.f32 1.0, %v2434
  %v2703 = vsub.f32 1.0, %v2449
  %v2704 = vsub.f32 1.0, %v2464
  %v2705 = vsub.f32 1.0, %v2479
  %v2706 = vsub.f32 1.0, %v2494
  %v2707 = vsub.f32 1.0, %v2509
  %v2708 = vsub.f32 1.0, %v2524
  %v2709 = vsub.f32 1.0, %v2539
  %v2710 = vsub.f32 1.0, %v2554
  %v2711 = vsub.f32 1.0, %v2569
  %v2712 = vsub.f32 1.0, %v2584
  %v2713 = vmul.f32 %v2681, %v2649
  %v2714 = vmul.f32 %v2682, %v2650
  %v2715 = vmul.f32 %v2683, %v2651
  %v2716 = vmul.f32 %v2684, %v2652
  %v2717 = vmul.f32 %v2685, %v2653
  %v2718 = vmul.f32 %v2686, %v2654
  %v2719 = vmul.f32 %v2687, %v2655
  %v2720 = vmul.f32 %v2688, %v2656
  %v2721 = vmul.f32 %v2689, %v2657
  %v2722 = vmul.f32 %v2690, %v2658
  %v2723 = vmul.f32 %v2691, %v2659
  %v2724 = vmul.f32 %v2692, %v2660
  %v2725 = vmul.f32 %v2693, %v2661
  %v2726 = vmul.f32 %v2694, %v2662
  %v2727 = vmul.f32 %v2695, %v2663
  %v2728 = vmul.f32 %v2696, %v2664
  %v2729 = vmul.f32 %v2697, %v2665
  %v2730 = vmul.f32 %v2698, %v2666
  %v2731 = vmul.f32 %v2699, %v2667
  %v2732 = vmul.f32 %v2700, %v2668
  %v2733 = vmul.f32 %v2701, %v2669
  %v2734 = vmul.f32 %v2702, %v2670
  %v2735 = vmul.f32 %v2703, %v2671
  %v2736 = vmul.f32 %v2704, %v2672
  %v2737 = vmul.f32 %v2705, %v2673
  %v2738 = vmul.f32 %v2706, %v2674
  %v2739 = vmul.f32 %v2707, %v2675
  %v2740 = vmul.f32 %v2708, %v2676
  %v2741 = vmul.f32 %v2709, %v2677
  %v2742 = vmul.f32 %v2710, %v2678
  %v2743 = vmul.f32 %v2711, %v2679
  %v2744 = vmul.f32 %v2712, %v2680
  %v2745 = vmul.f32 %v2119, %v453
  %v2746 = vmul.f32 %v2134, %v454
  %v2747 = vmul.f32 %v2149, %v455
  %v2748 = vmul.f32 %v2164, %v456
  %v2749 = vmul.f32 %v2179, %v457
  %v2750 = vmul.f32 %v2194, %v458
  %v2751 = vmul.f32 %v2209, %v459
  %v2752 = vmul.f32 %v2224, %v460
  %v2753 = vmul.f32 %v2239, %v461
  %v2754 = vmul.f32 %v2254, %v462
  %v2755 = vmul.f32 %v2269, %v463
  %v2756 = vmul.f32 %v2284, %v464
  %v2757 = vmul.f32 %v2299, %v465
  %v2758 = vmul.f32 %v2314, %v466
  %v2759 = vmul.f32 %v2329, %v467
  %v2760 = vmul.f32 %v2344, %v468
  %v2761 = vmul.f32 %v2359, %v469
  %v2762 = vmul.f32 %v2374, %v470
  %v2763 = vmul.f32 %v2389, %v471
  %v2764 = vmul.f32 %v2404, %v472
  %v2765 = vmul.f32 %v2419, %v473
  %v2766 = vmul.f32 %v2434, %v474
  %v2767 = vmul.f32 %v2449, %v475
  %v2768 = vmul.f32 %v2464, %v476
  %v2769 = vmul.f32 %v2479, %v477
  %v2770 = vmul.f32 %v2494, %v478
  %v2771 = vmul.f32 %v2509, %v479
  %v2772 = vmul.f32 %v2524, %v480
  %v2773 = vmul.f32 %v2539, %v481
  %v2774 = vmul.f32 %v2554, %v482
  %v2775 = vmul.f32 %v2569, %v483
  %v2776 = vmul.f32 %v2584, %v484
  %v2777 = vadd.f32 %v2713, %v2745
  %v2778 = vadd.f32 %v2714, %v2746
  %v2779 = vadd.f32 %v2715, %v2747
  %v2780 = vadd.f32 %v2716, %v2748
  %v2781 = vadd.f32 %v2717, %v2749
  %v2782 = vadd.f32 %v2718, %v2750
  %v2783 = vadd.f32 %v2719, %v2751
  %v2784 = vadd.f32 %v2720, %v2752
  %v2785 = vadd.f32 %v2721, %v2753
  %v2786 = vadd.f32 %v2722, %v2754
  %v2787 = vadd.f32 %v2723, %v2755
  %v2788 = vadd.f32 %v2724, %v2756
  %v2789 = vadd.f32 %v2725, %v2757
  %v2790 = vadd.f32 %v2726, %v2758
  %v2791 = vadd.f32 %v2727, %v2759
  %v2792 = vadd.f32 %v2728, %v2760
  %v2793 = vadd.f32 %v2729, %v2761
  %v2794 = vadd.f32 %v2730, %v2762
  %v2795 = vadd.f32 %v2731, %v2763
  %v2796 = vadd.f32 %v2732, %v2764
  %v2797 = vadd.f32 %v2733, %v2765
  %v2798 = vadd.f32 %v2734, %v2766
  %v2799 = vadd.f32 %v2735, %v2767
  %v2800 = vadd.f32 %v2736, %v2768
  %v2801 = vadd.f32 %v2737, %v2769
  %v2802 = vadd.f32 %v2738, %v2770
  %v2803 = vadd.f32 %v2739, %v2771
  %v2804 = vadd.f32 %v2740, %v2772
  %v2805 = vadd.f32 %v2741, %v2773
  %v2806 = vadd.f32 %v2742, %v2774
  %v2807 = vadd.f32 %v2743, %v2775
  %v2808 = vadd.f32 %v2744, %v2776
  %v2841 = vunpack.c.l.b16 %v111
  %v2842 = vunpack.c.h.b16 %v111
  %v2843 = vunpack.c.l.b16 %v112
  %v2844 = vunpack.c.h.b16 %v112
  %v2845 = vunpack.c.l.b16 %v113
  %v2846 = vunpack.c.h.b16 %v113
  %v2847 = vunpack.c.l.b16 %v114
  %v2848 = vunpack.c.h.b16 %v114
  %v2849 = vunpack.c.l.b16 %v115
  %v2850 = vunpack.c.h.b16 %v115
  %v2851 = vunpack.c.l.b16 %v116
  %v2852 = vunpack.c.h.b16 %v116
  %v2853 = vunpack.c.l.b16 %v117
  %v2854 = vunpack.c.h.b16 %v117
  %v2855 = vunpack.c.l.b16 %v118
  %v2856 = vunpack.c.h.b16 %v118
  %v2857 = vunpack.c.l.b16 %v119
  %v2858 = vunpack.c.h.b16 %v119
  %v2859 = vunpack.c.l.b16 %v120
  %v2860 = vunpack.c.h.b16 %v120
  %v2861 = vunpack.c.l.b16 %v121
  %v2862 = vunpack.c.h.b16 %v121
  %v2863 = vunpack.c.l.b16 %v122
  %v2864 = vunpack.c.h.b16 %v122
  %v2865 = vunpack.c.l.b16 %v123
  %v2866 = vunpack.c.h.b16 %v123
  %v2867 = vunpack.c.l.b16 %v124
  %v2868 = vunpack.c.h.b16 %v124
  %v2869 = vunpack.c.l.b16 %v125
  %v2870 = vunpack.c.h.b16 %v125
  %v2871 = vunpack.c.l.b16 %v126
  %v2872 = vunpack.c.h.b16 %v126
  %v2873 = vunpack.c.l.b16 %v127
  %v2874 = vunpack.c.h.b16 %v127
  %v2875 = vunpack.c.l.b16 %v128
  %v2876 = vunpack.c.h.b16 %v128
  %v2877 = vunpack.c.l.b16 %v129
  %v2878 = vunpack.c.h.b16 %v129
  %v2879 = vunpack.c.l.b16 %v130
  %v2880 = vunpack.c.h.b16 %v130
  %v2881 = vunpack.c.l.b16 %v131
  %v2882 = vunpack.c.h.b16 %v131
  %v2883 = vunpack.c.l.b16 %v132
  %v2884 = vunpack.c.h.b16 %v132
  %v2885 = vunpack.c.l.b16 %v133
  %v2886 = vunpack.c.h.b16 %v133
  %v2887 = vunpack.c.l.b16 %v134
  %v2888 = vunpack.c.h.b16 %v134
  %v2889 = vunpack.c.l.b16 %v135
  %v2890 = vunpack.c.h.b16 %v135
  %v2891 = vunpack.c.l.b16 %v136
  %v2892 = vunpack.c.h.b16 %v136
  %v2893 = vunpack.c.l.b16 %v137
  %v2894 = vunpack.c.h.b16 %v137
  %v2895 = vunpack.c.l.b16 %v138
  %v2896 = vunpack.c.h.b16 %v138
  %v2897 = vunpack.c.l.b16 %v139
  %v2898 = vunpack.c.h.b16 %v139
  %v2899 = vunpack.c.l.b16 %v140
  %v2900 = vunpack.c.h.b16 %v140
  %v2901 = vunpack.c.l.b16 %v141
  %v2902 = vunpack.c.h.b16 %v141
  %v2903 = vunpack.c.l.b16 %v142
  %v2904 = vunpack.c.h.b16 %v142
  %v2905 = vpack.c.b16 %v2843, %v2841
  %v2906 = vpack.c.b16 %v2844, %v2842
  %v2907 = vpack.c.b16 %v2847, %v2845
  %v2908 = vpack.c.b16 %v2848, %v2846
  %v2909 = vpack.c.b16 %v2851, %v2849
  %v2910 = vpack.c.b16 %v2852, %v2850
  %v2911 = vpack.c.b16 %v2855, %v2853
  %v2912 = vpack.c.b16 %v2856, %v2854
  %v2913 = vpack.c.b16 %v2859, %v2857
  %v2914 = vpack.c.b16 %v2860, %v2858
  %v2915 = vpack.c.b16 %v2863, %v2861
  %v2916 = vpack.c.b16 %v2864, %v2862
  %v2917 = vpack.c.b16 %v2867, %v2865
  %v2918 = vpack.c.b16 %v2868, %v2866
  %v2919 = vpack.c.b16 %v2871, %v2869
  %v2920 = vpack.c.b16 %v2872, %v2870
  %v2921 = vpack.c.b16 %v2875, %v2873
  %v2922 = vpack.c.b16 %v2876, %v2874
  %v2923 = vpack.c.b16 %v2879, %v2877
  %v2924 = vpack.c.b16 %v2880, %v2878
  %v2925 = vpack.c.b16 %v2883, %v2881
  %v2926 = vpack.c.b16 %v2884, %v2882
  %v2927 = vpack.c.b16 %v2887, %v2885
  %v2928 = vpack.c.b16 %v2888, %v2886
  %v2929 = vpack.c.b16 %v2891, %v2889
  %v2930 = vpack.c.b16 %v2892, %v2890
  %v2931 = vpack.c.b16 %v2895, %v2893
  %v2932 = vpack.c.b16 %v2896, %v2894
  %v2933 = vpack.c.b16 %v2899, %v2897
  %v2934 = vpack.c.b16 %v2900, %v2898
  %v2935 = vpack.c.b16 %v2903, %v2901
  %v2936 = vpack.c.b16 %v2904, %v2902
  %2969 = vmatpush.bf16.msra.mxu0 %v444
  %2970 = vmatpush.bf16.msra.mxu0 %v443
  %2971 = vmatpush.bf16.msra.mxu0 %v442
  %2972 = vmatpush.bf16.msra.mxu0 %v441
  %2973 = vmatpush.bf16.msra.mxu0 %v440
  %2974 = vmatpush.bf16.msra.mxu0 %v439
  %2975 = vmatpush.bf16.msra.mxu0 %v438
  %2976 = vmatpush.bf16.msra.mxu0 %v437
  %2977 = vmatmul.bf16.gmra.mxu0 %v2905
  %v2978 = vpop.f32.mrf.mxu0
  %v2979 = vadd.f32 0.0, %v2978
  %v2980 = vpop.f32.mrf.mxu0
  %v2981 = vadd.f32 0.0, %v2980
  %2982 = vmatmul.bf16.gmra.mxu0 %v2907
  %v2983 = vpop.f32.mrf.mxu0
  %v2984 = vadd.f32 0.0, %v2983
  %v2985 = vpop.f32.mrf.mxu0
  %v2986 = vadd.f32 0.0, %v2985
  %2987 = vmatmul.bf16.gmra.mxu0 %v2909
  %v2988 = vpop.f32.mrf.mxu0
  %v2989 = vadd.f32 0.0, %v2988
  %v2990 = vpop.f32.mrf.mxu0
  %v2991 = vadd.f32 0.0, %v2990
  %2992 = vmatmul.bf16.gmra.mxu0 %v2911
  %v2993 = vpop.f32.mrf.mxu0
  %v2994 = vadd.f32 0.0, %v2993
  %v2995 = vpop.f32.mrf.mxu0
  %v2996 = vadd.f32 0.0, %v2995
  %2997 = vmatmul.bf16.gmra.mxu0 %v2913
  %v2998 = vpop.f32.mrf.mxu0
  %v2999 = vadd.f32 0.0, %v2998
  %v3000 = vpop.f32.mrf.mxu0
  %v3001 = vadd.f32 0.0, %v3000
  %3002 = vmatmul.bf16.gmra.mxu0 %v2915
  %v3003 = vpop.f32.mrf.mxu0
  %v3004 = vadd.f32 0.0, %v3003
  %v3005 = vpop.f32.mrf.mxu0
  %v3006 = vadd.f32 0.0, %v3005
  %3007 = vmatmul.bf16.gmra.mxu0 %v2917
  %v3008 = vpop.f32.mrf.mxu0
  %v3009 = vadd.f32 0.0, %v3008
  %v3010 = vpop.f32.mrf.mxu0
  %v3011 = vadd.f32 0.0, %v3010
  %3012 = vmatmul.bf16.gmra.mxu0 %v2919
  %v3013 = vpop.f32.mrf.mxu0
  %v3014 = vadd.f32 0.0, %v3013
  %v3015 = vpop.f32.mrf.mxu0
  %v3016 = vadd.f32 0.0, %v3015
  %3017 = vmatmul.bf16.gmra.mxu0 %v2921
  %v3018 = vpop.f32.mrf.mxu0
  %v3019 = vadd.f32 0.0, %v3018
  %v3020 = vpop.f32.mrf.mxu0
  %v3021 = vadd.f32 0.0, %v3020
  %3022 = vmatmul.bf16.gmra.mxu0 %v2923
  %v3023 = vpop.f32.mrf.mxu0
  %v3024 = vadd.f32 0.0, %v3023
  %v3025 = vpop.f32.mrf.mxu0
  %v3026 = vadd.f32 0.0, %v3025
  %3027 = vmatmul.bf16.gmra.mxu0 %v2925
  %v3028 = vpop.f32.mrf.mxu0
  %v3029 = vadd.f32 0.0, %v3028
  %v3030 = vpop.f32.mrf.mxu0
  %v3031 = vadd.f32 0.0, %v3030
  %3032 = vmatmul.bf16.gmra.mxu0 %v2927
  %v3033 = vpop.f32.mrf.mxu0
  %v3034 = vadd.f32 0.0, %v3033
  %v3035 = vpop.f32.mrf.mxu0
  %v3036 = vadd.f32 0.0, %v3035
  %3037 = vmatmul.bf16.gmra.mxu0 %v2929
  %v3038 = vpop.f32.mrf.mxu0
  %v3039 = vadd.f32 0.0, %v3038
  %v3040 = vpop.f32.mrf.mxu0
  %v3041 = vadd.f32 0.0, %v3040
  %3042 = vmatmul.bf16.gmra.mxu0 %v2931
  %v3043 = vpop.f32.mrf.mxu0
  %v3044 = vadd.f32 0.0, %v3043
  %v3045 = vpop.f32.mrf.mxu0
  %v3046 = vadd.f32 0.0, %v3045
  %3047 = vmatmul.bf16.gmra.mxu0 %v2933
  %v3048 = vpop.f32.mrf.mxu0
  %v3049 = vadd.f32 0.0, %v3048
  %v3050 = vpop.f32.mrf.mxu0
  %v3051 = vadd.f32 0.0, %v3050
  %3052 = vmatmul.bf16.gmra.mxu0 %v2935
  %v3053 = vpop.f32.mrf.mxu0
  %v3054 = vadd.f32 0.0, %v3053
  %v3055 = vpop.f32.mrf.mxu0
  %v3056 = vadd.f32 0.0, %v3055
  %3057 = vdwg.mxu0
  %3058 = vmatpush.bf16.msra.mxu0 %v452
  %3059 = vmatpush.bf16.msra.mxu0 %v451
  %3060 = vmatpush.bf16.msra.mxu0 %v450
  %3061 = vmatpush.bf16.msra.mxu0 %v449
  %3062 = vmatpush.bf16.msra.mxu0 %v448
  %3063 = vmatpush.bf16.msra.mxu0 %v447
  %3064 = vmatpush.bf16.msra.mxu0 %v446
  %3065 = vmatpush.bf16.msra.mxu0 %v445
  %3066 = vmatmul.bf16.gmra.mxu0 %v2906
  %v3067 = vpop.f32.mrf.mxu0
  %v3068 = vadd.f32 %v2979, %v3067
  %v3069 = vpop.f32.mrf.mxu0
  %v3070 = vadd.f32 %v2981, %v3069
  %3071 = vmatmul.bf16.gmra.mxu0 %v2908
  %v3072 = vpop.f32.mrf.mxu0
  %v3073 = vadd.f32 %v2984, %v3072
  %v3074 = vpop.f32.mrf.mxu0
  %v3075 = vadd.f32 %v2986, %v3074
  %3076 = vmatmul.bf16.gmra.mxu0 %v2910
  %v3077 = vpop.f32.mrf.mxu0
  %v3078 = vadd.f32 %v2989, %v3077
  %v3079 = vpop.f32.mrf.mxu0
  %v3080 = vadd.f32 %v2991, %v3079
  %3081 = vmatmul.bf16.gmra.mxu0 %v2912
  %v3082 = vpop.f32.mrf.mxu0
  %v3083 = vadd.f32 %v2994, %v3082
  %v3084 = vpop.f32.mrf.mxu0
  %v3085 = vadd.f32 %v2996, %v3084
  %3086 = vmatmul.bf16.gmra.mxu0 %v2914
  %v3087 = vpop.f32.mrf.mxu0
  %v3088 = vadd.f32 %v2999, %v3087
  %v3089 = vpop.f32.mrf.mxu0
  %v3090 = vadd.f32 %v3001, %v3089
  %3091 = vmatmul.bf16.gmra.mxu0 %v2916
  %v3092 = vpop.f32.mrf.mxu0
  %v3093 = vadd.f32 %v3004, %v3092
  %v3094 = vpop.f32.mrf.mxu0
  %v3095 = vadd.f32 %v3006, %v3094
  %3096 = vmatmul.bf16.gmra.mxu0 %v2918
  %v3097 = vpop.f32.mrf.mxu0
  %v3098 = vadd.f32 %v3009, %v3097
  %v3099 = vpop.f32.mrf.mxu0
  %v3100 = vadd.f32 %v3011, %v3099
  %3101 = vmatmul.bf16.gmra.mxu0 %v2920
  %v3102 = vpop.f32.mrf.mxu0
  %v3103 = vadd.f32 %v3014, %v3102
  %v3104 = vpop.f32.mrf.mxu0
  %v3105 = vadd.f32 %v3016, %v3104
  %3106 = vmatmul.bf16.gmra.mxu0 %v2922
  %v3107 = vpop.f32.mrf.mxu0
  %v3108 = vadd.f32 %v3019, %v3107
  %v3109 = vpop.f32.mrf.mxu0
  %v3110 = vadd.f32 %v3021, %v3109
  %3111 = vmatmul.bf16.gmra.mxu0 %v2924
  %v3112 = vpop.f32.mrf.mxu0
  %v3113 = vadd.f32 %v3024, %v3112
  %v3114 = vpop.f32.mrf.mxu0
  %v3115 = vadd.f32 %v3026, %v3114
  %3116 = vmatmul.bf16.gmra.mxu0 %v2926
  %v3117 = vpop.f32.mrf.mxu0
  %v3118 = vadd.f32 %v3029, %v3117
  %v3119 = vpop.f32.mrf.mxu0
  %v3120 = vadd.f32 %v3031, %v3119
  %3121 = vmatmul.bf16.gmra.mxu0 %v2928
  %v3122 = vpop.f32.mrf.mxu0
  %v3123 = vadd.f32 %v3034, %v3122
  %v3124 = vpop.f32.mrf.mxu0
  %v3125 = vadd.f32 %v3036, %v3124
  %3126 = vmatmul.bf16.gmra.mxu0 %v2930
  %v3127 = vpop.f32.mrf.mxu0
  %v3128 = vadd.f32 %v3039, %v3127
  %v3129 = vpop.f32.mrf.mxu0
  %v3130 = vadd.f32 %v3041, %v3129
  %3131 = vmatmul.bf16.gmra.mxu0 %v2932
  %v3132 = vpop.f32.mrf.mxu0
  %v3133 = vadd.f32 %v3044, %v3132
  %v3134 = vpop.f32.mrf.mxu0
  %v3135 = vadd.f32 %v3046, %v3134
  %3136 = vmatmul.bf16.gmra.mxu0 %v2934
  %v3137 = vpop.f32.mrf.mxu0
  %v3138 = vadd.f32 %v3049, %v3137
  %v3139 = vpop.f32.mrf.mxu0
  %v3140 = vadd.f32 %v3051, %v3139
  %3141 = vmatmul.bf16.gmra.mxu0 %v2936
  %v3142 = vpop.f32.mrf.mxu0
  %v3143 = vadd.f32 %v3054, %v3142
  %v3144 = vpop.f32.mrf.mxu0
  %v3145 = vadd.f32 %v3056, %v3144
  %3146 = vdwg.mxu0
  %v3147 = vpack.c.bf16 %v3070, %v3068
  %v3148 = vpack.c.bf16 %v3075, %v3073
  %v3149 = vpack.c.bf16 %v3080, %v3078
  %v3150 = vpack.c.bf16 %v3085, %v3083
  %v3151 = vpack.c.bf16 %v3090, %v3088
  %v3152 = vpack.c.bf16 %v3095, %v3093
  %v3153 = vpack.c.bf16 %v3100, %v3098
  %v3154 = vpack.c.bf16 %v3105, %v3103
  %v3155 = vpack.c.bf16 %v3110, %v3108
  %v3156 = vpack.c.bf16 %v3115, %v3113
  %v3157 = vpack.c.bf16 %v3120, %v3118
  %v3158 = vpack.c.bf16 %v3125, %v3123
  %v3159 = vpack.c.bf16 %v3130, %v3128
  %v3160 = vpack.c.bf16 %v3135, %v3133
  %v3161 = vpack.c.bf16 %v3140, %v3138
  %v3162 = vpack.c.bf16 %v3145, %v3143
  %v3163 = vld [vmem:[%s5] sm:$0xf]
  %v3164 = vld [vmem:[%s5 + $0x4] sm:$0xf]
  %v3165 = vld [vmem:[%s5 + $0x8] sm:$0xf]
  %v3166 = vld [vmem:[%s5 + $0xc] sm:$0xf]
  %v3167 = vld [vmem:[%s5 + $0x10] sm:$0xf]
  %v3168 = vld [vmem:[%s5 + $0x14] sm:$0xf]
  %v3169 = vld [vmem:[%s5 + $0x18] sm:$0xf]
  %v3170 = vld [vmem:[%s5 + $0x1c] sm:$0xf]
  %v3171 = vld [vmem:[%s5 + $0x20] sm:$0xf]
  %v3172 = vld [vmem:[%s5 + $0x24] sm:$0xf]
  %v3173 = vld [vmem:[%s5 + $0x28] sm:$0xf]
  %v3174 = vld [vmem:[%s5 + $0x2c] sm:$0xf]
  %v3175 = vld [vmem:[%s5 + $0x30] sm:$0xf]
  %v3176 = vld [vmem:[%s5 + $0x34] sm:$0xf]
  %v3177 = vld [vmem:[%s5 + $0x38] sm:$0xf]
  %v3178 = vld [vmem:[%s5 + $0x3c] sm:$0xf]
  %v3179 = vld [vmem:[%s6] sm:$0x1]
  %v3181 = vperm.slane %v3179, 0
  %v3199 = vunpack.c.l.b16 %v3163
  %v3200 = vunpack.c.l.b16 %v3164
  %v3201 = vunpack.c.l.b16 %v3165
  %v3202 = vunpack.c.l.b16 %v3166
  %v3203 = vunpack.c.l.b16 %v3167
  %v3204 = vunpack.c.l.b16 %v3168
  %v3205 = vunpack.c.l.b16 %v3169
  %v3206 = vunpack.c.l.b16 %v3170
  %v3207 = vunpack.c.l.b16 %v3171
  %v3208 = vunpack.c.l.b16 %v3172
  %v3209 = vunpack.c.l.b16 %v3173
  %v3210 = vunpack.c.l.b16 %v3174
  %v3211 = vunpack.c.l.b16 %v3175
  %v3212 = vunpack.c.l.b16 %v3176
  %v3213 = vunpack.c.l.b16 %v3177
  %v3214 = vunpack.c.l.b16 %v3178
  %v3215 = vpack.c.b16 %v3200, %v3199
  %v3216 = vpack.c.b16 %v3202, %v3201
  %v3217 = vpack.c.b16 %v3204, %v3203
  %v3218 = vpack.c.b16 %v3206, %v3205
  %v3219 = vpack.c.b16 %v3208, %v3207
  %v3220 = vpack.c.b16 %v3210, %v3209
  %v3221 = vpack.c.b16 %v3212, %v3211
  %v3222 = vpack.c.b16 %v3214, %v3213
  %3231 = vmatpush.bf16.msra.mxu0 %v3222
  %3232 = vmatpush.bf16.msra.mxu0 %v3221
  %3233 = vmatpush.bf16.msra.mxu0 %v3220
  %3234 = vmatpush.bf16.msra.mxu0 %v3219
  %3235 = vmatpush.bf16.msra.mxu0 %v3218
  %3236 = vmatpush.bf16.msra.mxu0 %v3217
  %3237 = vmatpush.bf16.msra.mxu0 %v3216
  %3238 = vmatpush.bf16.msra.mxu0 %v3215
  %3239 = vmatmul.bf16.gmra.mxu0 %v3147
  %v3240 = vpop.f32.mrf.mxu0
  %v3241 = vadd.f32 %v3181, %v3240
  %v3242 = vpop.f32.mrf.mxu0
  %v3243 = vadd.f32 %v3181, %v3242
  %3244 = vmatmul.bf16.gmra.mxu0 %v3148
  %v3245 = vpop.f32.mrf.mxu0
  %v3246 = vadd.f32 %v3181, %v3245
  %v3247 = vpop.f32.mrf.mxu0
  %v3248 = vadd.f32 %v3181, %v3247
  %3249 = vmatmul.bf16.gmra.mxu0 %v3149
  %v3250 = vpop.f32.mrf.mxu0
  %v3251 = vadd.f32 %v3181, %v3250
  %v3252 = vpop.f32.mrf.mxu0
  %v3253 = vadd.f32 %v3181, %v3252
  %3254 = vmatmul.bf16.gmra.mxu0 %v3150
  %v3255 = vpop.f32.mrf.mxu0
  %v3256 = vadd.f32 %v3181, %v3255
  %v3257 = vpop.f32.mrf.mxu0
  %v3258 = vadd.f32 %v3181, %v3257
  %3259 = vmatmul.bf16.gmra.mxu0 %v3151
  %v3260 = vpop.f32.mrf.mxu0
  %v3261 = vadd.f32 %v3181, %v3260
  %v3262 = vpop.f32.mrf.mxu0
  %v3263 = vadd.f32 %v3181, %v3262
  %3264 = vmatmul.bf16.gmra.mxu0 %v3152
  %v3265 = vpop.f32.mrf.mxu0
  %v3266 = vadd.f32 %v3181, %v3265
  %v3267 = vpop.f32.mrf.mxu0
  %v3268 = vadd.f32 %v3181, %v3267
  %3269 = vmatmul.bf16.gmra.mxu0 %v3153
  %v3270 = vpop.f32.mrf.mxu0
  %v3271 = vadd.f32 %v3181, %v3270
  %v3272 = vpop.f32.mrf.mxu0
  %v3273 = vadd.f32 %v3181, %v3272
  %3274 = vmatmul.bf16.gmra.mxu0 %v3154
  %v3275 = vpop.f32.mrf.mxu0
  %v3276 = vadd.f32 %v3181, %v3275
  %v3277 = vpop.f32.mrf.mxu0
  %v3278 = vadd.f32 %v3181, %v3277
  %3279 = vmatmul.bf16.gmra.mxu0 %v3155
  %v3280 = vpop.f32.mrf.mxu0
  %v3281 = vadd.f32 %v3181, %v3280
  %v3282 = vpop.f32.mrf.mxu0
  %v3283 = vadd.f32 %v3181, %v3282
  %3284 = vmatmul.bf16.gmra.mxu0 %v3156
  %v3285 = vpop.f32.mrf.mxu0
  %v3286 = vadd.f32 %v3181, %v3285
  %v3287 = vpop.f32.mrf.mxu0
  %v3288 = vadd.f32 %v3181, %v3287
  %3289 = vmatmul.bf16.gmra.mxu0 %v3157
  %v3290 = vpop.f32.mrf.mxu0
  %v3291 = vadd.f32 %v3181, %v3290
  %v3292 = vpop.f32.mrf.mxu0
  %v3293 = vadd.f32 %v3181, %v3292
  %3294 = vmatmul.bf16.gmra.mxu0 %v3158
  %v3295 = vpop.f32.mrf.mxu0
  %v3296 = vadd.f32 %v3181, %v3295
  %v3297 = vpop.f32.mrf.mxu0
  %v3298 = vadd.f32 %v3181, %v3297
  %3299 = vmatmul.bf16.gmra.mxu0 %v3159
  %v3300 = vpop.f32.mrf.mxu0
  %v3301 = vadd.f32 %v3181, %v3300
  %v3302 = vpop.f32.mrf.mxu0
  %v3303 = vadd.f32 %v3181, %v3302
  %3304 = vmatmul.bf16.gmra.mxu0 %v3160
  %v3305 = vpop.f32.mrf.mxu0
  %v3306 = vadd.f32 %v3181, %v3305
  %v3307 = vpop.f32.mrf.mxu0
  %v3308 = vadd.f32 %v3181, %v3307
  %3309 = vmatmul.bf16.gmra.mxu0 %v3161
  %v3310 = vpop.f32.mrf.mxu0
  %v3311 = vadd.f32 %v3181, %v3310
  %v3312 = vpop.f32.mrf.mxu0
  %v3313 = vadd.f32 %v3181, %v3312
  %3314 = vmatmul.bf16.gmra.mxu0 %v3162
  %v3315 = vpop.f32.mrf.mxu0
  %v3316 = vadd.f32 %v3181, %v3315
  %v3317 = vpop.f32.mrf.mxu0
  %v3318 = vadd.f32 %v3181, %v3317
  %3319 = vdwg.mxu0
  %v3320 = vmax.f32 %v3241, 0.0
  %v3321 = vmax.f32 %v3243, 0.0
  %v3322 = vmax.f32 %v3246, 0.0
  %v3323 = vmax.f32 %v3248, 0.0
  %v3324 = vmax.f32 %v3251, 0.0
  %v3325 = vmax.f32 %v3253, 0.0
  %v3326 = vmax.f32 %v3256, 0.0
  %v3327 = vmax.f32 %v3258, 0.0
  %v3328 = vmax.f32 %v3261, 0.0
  %v3329 = vmax.f32 %v3263, 0.0
  %v3330 = vmax.f32 %v3266, 0.0
  %v3331 = vmax.f32 %v3268, 0.0
  %v3332 = vmax.f32 %v3271, 0.0
  %v3333 = vmax.f32 %v3273, 0.0
  %v3334 = vmax.f32 %v3276, 0.0
  %v3335 = vmax.f32 %v3278, 0.0
  %v3336 = vmax.f32 %v3281, 0.0
  %v3337 = vmax.f32 %v3283, 0.0
  %v3338 = vmax.f32 %v3286, 0.0
  %v3339 = vmax.f32 %v3288, 0.0
  %v3340 = vmax.f32 %v3291, 0.0
  %v3341 = vmax.f32 %v3293, 0.0
  %v3342 = vmax.f32 %v3296, 0.0
  %v3343 = vmax.f32 %v3298, 0.0
  %v3344 = vmax.f32 %v3301, 0.0
  %v3345 = vmax.f32 %v3303, 0.0
  %v3346 = vmax.f32 %v3306, 0.0
  %v3347 = vmax.f32 %v3308, 0.0
  %v3348 = vmax.f32 %v3311, 0.0
  %v3349 = vmax.f32 %v3313, 0.0
  %v3350 = vmax.f32 %v3316, 0.0
  %v3351 = vmax.f32 %v3318, 0.0
  %v3352 = vpack.c.bf16 %v3321, %v3320
  %v3353 = vpack.c.bf16 %v3323, %v3322
  %v3354 = vpack.c.bf16 %v3325, %v3324
  %v3355 = vpack.c.bf16 %v3327, %v3326
  %v3356 = vpack.c.bf16 %v3329, %v3328
  %v3357 = vpack.c.bf16 %v3331, %v3330
  %v3358 = vpack.c.bf16 %v3333, %v3332
  %v3359 = vpack.c.bf16 %v3335, %v3334
  %v3360 = vpack.c.bf16 %v3337, %v3336
  %v3361 = vpack.c.bf16 %v3339, %v3338
  %v3362 = vpack.c.bf16 %v3341, %v3340
  %v3363 = vpack.c.bf16 %v3343, %v3342
  %v3364 = vpack.c.bf16 %v3345, %v3344
  %v3365 = vpack.c.bf16 %v3347, %v3346
  %v3366 = vpack.c.bf16 %v3349, %v3348
  %v3367 = vpack.c.bf16 %v3351, %v3350
  %3368 = vmatpush.bf16.msra.mxu0 %v593
  %3369 = vmatpush.bf16.msra.mxu0 %v590
  %3370 = vmatpush.bf16.msra.mxu0 %v587
  %3371 = vmatpush.bf16.msra.mxu0 %v584
  %3372 = vmatpush.bf16.msra.mxu0 %v581
  %3373 = vmatpush.bf16.msra.mxu0 %v578
  %3374 = vmatpush.bf16.msra.mxu0 %v575
  %3375 = vmatpush.bf16.msra.mxu0 %v572
  %3376 = vmatmul.bf16.gmra.mxu0 %v3352
  %v3377 = vpop.f32.mrf.mxu0
  %v3378 = vadd.f32 %v486, %v3377
  %v3379 = vpop.f32.mrf.mxu0
  %v3380 = vadd.f32 %v486, %v3379
  %3381 = vmatmul.bf16.gmra.mxu0 %v3353
  %v3382 = vpop.f32.mrf.mxu0
  %v3383 = vadd.f32 %v486, %v3382
  %v3384 = vpop.f32.mrf.mxu0
  %v3385 = vadd.f32 %v486, %v3384
  %3386 = vmatmul.bf16.gmra.mxu0 %v3354
  %v3387 = vpop.f32.mrf.mxu0
  %v3388 = vadd.f32 %v486, %v3387
  %v3389 = vpop.f32.mrf.mxu0
  %v3390 = vadd.f32 %v486, %v3389
  %3391 = vmatmul.bf16.gmra.mxu0 %v3355
  %v3392 = vpop.f32.mrf.mxu0
  %v3393 = vadd.f32 %v486, %v3392
  %v3394 = vpop.f32.mrf.mxu0
  %v3395 = vadd.f32 %v486, %v3394
  %3396 = vmatmul.bf16.gmra.mxu0 %v3356
  %v3397 = vpop.f32.mrf.mxu0
  %v3398 = vadd.f32 %v486, %v3397
  %v3399 = vpop.f32.mrf.mxu0
  %v3400 = vadd.f32 %v486, %v3399
  %3401 = vmatmul.bf16.gmra.mxu0 %v3357
  %v3402 = vpop.f32.mrf.mxu0
  %v3403 = vadd.f32 %v486, %v3402
  %v3404 = vpop.f32.mrf.mxu0
  %v3405 = vadd.f32 %v486, %v3404
  %3406 = vmatmul.bf16.gmra.mxu0 %v3358
  %v3407 = vpop.f32.mrf.mxu0
  %v3408 = vadd.f32 %v486, %v3407
  %v3409 = vpop.f32.mrf.mxu0
  %v3410 = vadd.f32 %v486, %v3409
  %3411 = vmatmul.bf16.gmra.mxu0 %v3359
  %v3412 = vpop.f32.mrf.mxu0
  %v3413 = vadd.f32 %v486, %v3412
  %v3414 = vpop.f32.mrf.mxu0
  %v3415 = vadd.f32 %v486, %v3414
  %3416 = vmatmul.bf16.gmra.mxu0 %v3360
  %v3417 = vpop.f32.mrf.mxu0
  %v3418 = vadd.f32 %v486, %v3417
  %v3419 = vpop.f32.mrf.mxu0
  %v3420 = vadd.f32 %v486, %v3419
  %3421 = vmatmul.bf16.gmra.mxu0 %v3361
  %v3422 = vpop.f32.mrf.mxu0
  %v3423 = vadd.f32 %v486, %v3422
  %v3424 = vpop.f32.mrf.mxu0
  %v3425 = vadd.f32 %v486, %v3424
  %3426 = vmatmul.bf16.gmra.mxu0 %v3362
  %v3427 = vpop.f32.mrf.mxu0
  %v3428 = vadd.f32 %v486, %v3427
  %v3429 = vpop.f32.mrf.mxu0
  %v3430 = vadd.f32 %v486, %v3429
  %3431 = vmatmul.bf16.gmra.mxu0 %v3363
  %v3432 = vpop.f32.mrf.mxu0
  %v3433 = vadd.f32 %v486, %v3432
  %v3434 = vpop.f32.mrf.mxu0
  %v3435 = vadd.f32 %v486, %v3434
  %3436 = vmatmul.bf16.gmra.mxu0 %v3364
  %v3437 = vpop.f32.mrf.mxu0
  %v3438 = vadd.f32 %v486, %v3437
  %v3439 = vpop.f32.mrf.mxu0
  %v3440 = vadd.f32 %v486, %v3439
  %3441 = vmatmul.bf16.gmra.mxu0 %v3365
  %v3442 = vpop.f32.mrf.mxu0
  %v3443 = vadd.f32 %v486, %v3442
  %v3444 = vpop.f32.mrf.mxu0
  %v3445 = vadd.f32 %v486, %v3444
  %3446 = vmatmul.bf16.gmra.mxu0 %v3366
  %v3447 = vpop.f32.mrf.mxu0
  %v3448 = vadd.f32 %v486, %v3447
  %v3449 = vpop.f32.mrf.mxu0
  %v3450 = vadd.f32 %v486, %v3449
  %3451 = vmatmul.bf16.gmra.mxu0 %v3367
  %v3452 = vpop.f32.mrf.mxu0
  %v3453 = vadd.f32 %v486, %v3452
  %v3454 = vpop.f32.mrf.mxu0
  %v3455 = vadd.f32 %v486, %v3454
  %3456 = vdwg.mxu0
  %3457 = vmatpush.bf16.msra.mxu0 %v594
  %3458 = vmatpush.bf16.msra.mxu0 %v591
  %3459 = vmatpush.bf16.msra.mxu0 %v588
  %3460 = vmatpush.bf16.msra.mxu0 %v585
  %3461 = vmatpush.bf16.msra.mxu0 %v582
  %3462 = vmatpush.bf16.msra.mxu0 %v579
  %3463 = vmatpush.bf16.msra.mxu0 %v576
  %3464 = vmatpush.bf16.msra.mxu0 %v573
  %3465 = vmatmul.bf16.gmra.mxu0 %v3352
  %v3466 = vpop.f32.mrf.mxu0
  %v3467 = vadd.f32 %v487, %v3466
  %v3468 = vpop.f32.mrf.mxu0
  %v3469 = vadd.f32 %v487, %v3468
  %3470 = vmatmul.bf16.gmra.mxu0 %v3353
  %v3471 = vpop.f32.mrf.mxu0
  %v3472 = vadd.f32 %v487, %v3471
  %v3473 = vpop.f32.mrf.mxu0
  %v3474 = vadd.f32 %v487, %v3473
  %3475 = vmatmul.bf16.gmra.mxu0 %v3354
  %v3476 = vpop.f32.mrf.mxu0
  %v3477 = vadd.f32 %v487, %v3476
  %v3478 = vpop.f32.mrf.mxu0
  %v3479 = vadd.f32 %v487, %v3478
  %3480 = vmatmul.bf16.gmra.mxu0 %v3355
  %v3481 = vpop.f32.mrf.mxu0
  %v3482 = vadd.f32 %v487, %v3481
  %v3483 = vpop.f32.mrf.mxu0
  %v3484 = vadd.f32 %v487, %v3483
  %3485 = vmatmul.bf16.gmra.mxu0 %v3356
  %v3486 = vpop.f32.mrf.mxu0
  %v3487 = vadd.f32 %v487, %v3486
  %v3488 = vpop.f32.mrf.mxu0
  %v3489 = vadd.f32 %v487, %v3488
  %3490 = vmatmul.bf16.gmra.mxu0 %v3357
  %v3491 = vpop.f32.mrf.mxu0
  %v3492 = vadd.f32 %v487, %v3491
  %v3493 = vpop.f32.mrf.mxu0
  %v3494 = vadd.f32 %v487, %v3493
  %3495 = vmatmul.bf16.gmra.mxu0 %v3358
  %v3496 = vpop.f32.mrf.mxu0
  %v3497 = vadd.f32 %v487, %v3496
  %v3498 = vpop.f32.mrf.mxu0
  %v3499 = vadd.f32 %v487, %v3498
  %3500 = vmatmul.bf16.gmra.mxu0 %v3359
  %v3501 = vpop.f32.mrf.mxu0
  %v3502 = vadd.f32 %v487, %v3501
  %v3503 = vpop.f32.mrf.mxu0
  %v3504 = vadd.f32 %v487, %v3503
  %3505 = vmatmul.bf16.gmra.mxu0 %v3360
  %v3506 = vpop.f32.mrf.mxu0
  %v3507 = vadd.f32 %v487, %v3506
  %v3508 = vpop.f32.mrf.mxu0
  %v3509 = vadd.f32 %v487, %v3508
  %3510 = vmatmul.bf16.gmra.mxu0 %v3361
  %v3511 = vpop.f32.mrf.mxu0
  %v3512 = vadd.f32 %v487, %v3511
  %v3513 = vpop.f32.mrf.mxu0
  %v3514 = vadd.f32 %v487, %v3513
  %3515 = vmatmul.bf16.gmra.mxu0 %v3362
  %v3516 = vpop.f32.mrf.mxu0
  %v3517 = vadd.f32 %v487, %v3516
  %v3518 = vpop.f32.mrf.mxu0
  %v3519 = vadd.f32 %v487, %v3518
  %3520 = vmatmul.bf16.gmra.mxu0 %v3363
  %v3521 = vpop.f32.mrf.mxu0
  %v3522 = vadd.f32 %v487, %v3521
  %v3523 = vpop.f32.mrf.mxu0
  %v3524 = vadd.f32 %v487, %v3523
  %3525 = vmatmul.bf16.gmra.mxu0 %v3364
  %v3526 = vpop.f32.mrf.mxu0
  %v3527 = vadd.f32 %v487, %v3526
  %v3528 = vpop.f32.mrf.mxu0
  %v3529 = vadd.f32 %v487, %v3528
  %3530 = vmatmul.bf16.gmra.mxu0 %v3365
  %v3531 = vpop.f32.mrf.mxu0
  %v3532 = vadd.f32 %v487, %v3531
  %v3533 = vpop.f32.mrf.mxu0
  %v3534 = vadd.f32 %v487, %v3533
  %3535 = vmatmul.bf16.gmra.mxu0 %v3366
  %v3536 = vpop.f32.mrf.mxu0
  %v3537 = vadd.f32 %v487, %v3536
  %v3538 = vpop.f32.mrf.mxu0
  %v3539 = vadd.f32 %v487, %v3538
  %3540 = vmatmul.bf16.gmra.mxu0 %v3367
  %v3541 = vpop.f32.mrf.mxu0
  %v3542 = vadd.f32 %v487, %v3541
  %v3543 = vpop.f32.mrf.mxu0
  %v3544 = vadd.f32 %v487, %v3543
  %3545 = vdwg.mxu0
  %3546 = vmatpush.bf16.msra.mxu0 %v595
  %3547 = vmatpush.bf16.msra.mxu0 %v592
  %3548 = vmatpush.bf16.msra.mxu0 %v589
  %3549 = vmatpush.bf16.msra.mxu0 %v586
  %3550 = vmatpush.bf16.msra.mxu0 %v583
  %3551 = vmatpush.bf16.msra.mxu0 %v580
  %3552 = vmatpush.bf16.msra.mxu0 %v577
  %3553 = vmatpush.bf16.msra.mxu0 %v574
  %3554 = vmatmul.bf16.gmra.mxu0 %v3352
  %v3555 = vpop.f32.mrf.mxu0
  %v3556 = vadd.f32 %v488, %v3555
  %v3557 = vpop.f32.mrf.mxu0
  %v3558 = vadd.f32 %v488, %v3557
  %3559 = vmatmul.bf16.gmra.mxu0 %v3353
  %v3560 = vpop.f32.mrf.mxu0
  %v3561 = vadd.f32 %v488, %v3560
  %v3562 = vpop.f32.mrf.mxu0
  %v3563 = vadd.f32 %v488, %v3562
  %3564 = vmatmul.bf16.gmra.mxu0 %v3354
  %v3565 = vpop.f32.mrf.mxu0
  %v3566 = vadd.f32 %v488, %v3565
  %v3567 = vpop.f32.mrf.mxu0
  %v3568 = vadd.f32 %v488, %v3567
  %3569 = vmatmul.bf16.gmra.mxu0 %v3355
  %v3570 = vpop.f32.mrf.mxu0
  %v3571 = vadd.f32 %v488, %v3570
  %v3572 = vpop.f32.mrf.mxu0
  %v3573 = vadd.f32 %v488, %v3572
  %3574 = vmatmul.bf16.gmra.mxu0 %v3356
  %v3575 = vpop.f32.mrf.mxu0
  %v3576 = vadd.f32 %v488, %v3575
  %v3577 = vpop.f32.mrf.mxu0
  %v3578 = vadd.f32 %v488, %v3577
  %3579 = vmatmul.bf16.gmra.mxu0 %v3357
  %v3580 = vpop.f32.mrf.mxu0
  %v3581 = vadd.f32 %v488, %v3580
  %v3582 = vpop.f32.mrf.mxu0
  %v3583 = vadd.f32 %v488, %v3582
  %3584 = vmatmul.bf16.gmra.mxu0 %v3358
  %v3585 = vpop.f32.mrf.mxu0
  %v3586 = vadd.f32 %v488, %v3585
  %v3587 = vpop.f32.mrf.mxu0
  %v3588 = vadd.f32 %v488, %v3587
  %3589 = vmatmul.bf16.gmra.mxu0 %v3359
  %v3590 = vpop.f32.mrf.mxu0
  %v3591 = vadd.f32 %v488, %v3590
  %v3592 = vpop.f32.mrf.mxu0
  %v3593 = vadd.f32 %v488, %v3592
  %3594 = vmatmul.bf16.gmra.mxu0 %v3360
  %v3595 = vpop.f32.mrf.mxu0
  %v3596 = vadd.f32 %v488, %v3595
  %v3597 = vpop.f32.mrf.mxu0
  %v3598 = vadd.f32 %v488, %v3597
  %3599 = vmatmul.bf16.gmra.mxu0 %v3361
  %v3600 = vpop.f32.mrf.mxu0
  %v3601 = vadd.f32 %v488, %v3600
  %v3602 = vpop.f32.mrf.mxu0
  %v3603 = vadd.f32 %v488, %v3602
  %3604 = vmatmul.bf16.gmra.mxu0 %v3362
  %v3605 = vpop.f32.mrf.mxu0
  %v3606 = vadd.f32 %v488, %v3605
  %v3607 = vpop.f32.mrf.mxu0
  %v3608 = vadd.f32 %v488, %v3607
  %3609 = vmatmul.bf16.gmra.mxu0 %v3363
  %v3610 = vpop.f32.mrf.mxu0
  %v3611 = vadd.f32 %v488, %v3610
  %v3612 = vpop.f32.mrf.mxu0
  %v3613 = vadd.f32 %v488, %v3612
  %3614 = vmatmul.bf16.gmra.mxu0 %v3364
  %v3615 = vpop.f32.mrf.mxu0
  %v3616 = vadd.f32 %v488, %v3615
  %v3617 = vpop.f32.mrf.mxu0
  %v3618 = vadd.f32 %v488, %v3617
  %3619 = vmatmul.bf16.gmra.mxu0 %v3365
  %v3620 = vpop.f32.mrf.mxu0
  %v3621 = vadd.f32 %v488, %v3620
  %v3622 = vpop.f32.mrf.mxu0
  %v3623 = vadd.f32 %v488, %v3622
  %3624 = vmatmul.bf16.gmra.mxu0 %v3366
  %v3625 = vpop.f32.mrf.mxu0
  %v3626 = vadd.f32 %v488, %v3625
  %v3627 = vpop.f32.mrf.mxu0
  %v3628 = vadd.f32 %v488, %v3627
  %3629 = vmatmul.bf16.gmra.mxu0 %v3367
  %v3630 = vpop.f32.mrf.mxu0
  %v3631 = vadd.f32 %v488, %v3630
  %v3632 = vpop.f32.mrf.mxu0
  %v3633 = vadd.f32 %v488, %v3632
  %3634 = vdwg.mxu0
  %v3635 = vpack.c.bf16 %v2778, %v2777
  %v3636 = vpack.c.bf16 %v2780, %v2779
  %v3637 = vpack.c.bf16 %v2782, %v2781
  %v3638 = vpack.c.bf16 %v2784, %v2783
  %v3639 = vpack.c.bf16 %v2786, %v2785
  %v3640 = vpack.c.bf16 %v2788, %v2787
  %v3641 = vpack.c.bf16 %v2790, %v2789
  %v3642 = vpack.c.bf16 %v2792, %v2791
  %v3643 = vpack.c.bf16 %v2794, %v2793
  %v3644 = vpack.c.bf16 %v2796, %v2795
  %v3645 = vpack.c.bf16 %v2798, %v2797
  %v3646 = vpack.c.bf16 %v2800, %v2799
  %v3647 = vpack.c.bf16 %v2802, %v2801
  %v3648 = vpack.c.bf16 %v2804, %v2803
  %v3649 = vpack.c.bf16 %v2806, %v2805
  %v3650 = vpack.c.bf16 %v2808, %v2807
  %3651 = vmatpush.bf16.msra.mxu0 %v1011
  %3652 = vmatpush.bf16.msra.mxu0 %v1008
  %3653 = vmatpush.bf16.msra.mxu0 %v1005
  %3654 = vmatpush.bf16.msra.mxu0 %v1002
  %3655 = vmatpush.bf16.msra.mxu0 %v999
  %3656 = vmatpush.bf16.msra.mxu0 %v996
  %3657 = vmatpush.bf16.msra.mxu0 %v993
  %3658 = vmatpush.bf16.msra.mxu0 %v990
  %3659 = vmatmul.bf16.gmra.mxu0 %v3635
  %v3660 = vpop.f32.mrf.mxu0
  %v3661 = vadd.f32 %v904, %v3660
  %v3662 = vpop.f32.mrf.mxu0
  %v3663 = vadd.f32 %v904, %v3662
  %3664 = vmatmul.bf16.gmra.mxu0 %v3636
  %v3665 = vpop.f32.mrf.mxu0
  %v3666 = vadd.f32 %v904, %v3665
  %v3667 = vpop.f32.mrf.mxu0
  %v3668 = vadd.f32 %v904, %v3667
  %3669 = vmatmul.bf16.gmra.mxu0 %v3637
  %v3670 = vpop.f32.mrf.mxu0
  %v3671 = vadd.f32 %v904, %v3670
  %v3672 = vpop.f32.mrf.mxu0
  %v3673 = vadd.f32 %v904, %v3672
  %3674 = vmatmul.bf16.gmra.mxu0 %v3638
  %v3675 = vpop.f32.mrf.mxu0
  %v3676 = vadd.f32 %v904, %v3675
  %v3677 = vpop.f32.mrf.mxu0
  %v3678 = vadd.f32 %v904, %v3677
  %3679 = vmatmul.bf16.gmra.mxu0 %v3639
  %v3680 = vpop.f32.mrf.mxu0
  %v3681 = vadd.f32 %v904, %v3680
  %v3682 = vpop.f32.mrf.mxu0
  %v3683 = vadd.f32 %v904, %v3682
  %3684 = vmatmul.bf16.gmra.mxu0 %v3640
  %v3685 = vpop.f32.mrf.mxu0
  %v3686 = vadd.f32 %v904, %v3685
  %v3687 = vpop.f32.mrf.mxu0
  %v3688 = vadd.f32 %v904, %v3687
  %3689 = vmatmul.bf16.gmra.mxu0 %v3641
  %v3690 = vpop.f32.mrf.mxu0
  %v3691 = vadd.f32 %v904, %v3690
  %v3692 = vpop.f32.mrf.mxu0
  %v3693 = vadd.f32 %v904, %v3692
  %3694 = vmatmul.bf16.gmra.mxu0 %v3642
  %v3695 = vpop.f32.mrf.mxu0
  %v3696 = vadd.f32 %v904, %v3695
  %v3697 = vpop.f32.mrf.mxu0
  %v3698 = vadd.f32 %v904, %v3697
  %3699 = vmatmul.bf16.gmra.mxu0 %v3643
  %v3700 = vpop.f32.mrf.mxu0
  %v3701 = vadd.f32 %v904, %v3700
  %v3702 = vpop.f32.mrf.mxu0
  %v3703 = vadd.f32 %v904, %v3702
  %3704 = vmatmul.bf16.gmra.mxu0 %v3644
  %v3705 = vpop.f32.mrf.mxu0
  %v3706 = vadd.f32 %v904, %v3705
  %v3707 = vpop.f32.mrf.mxu0
  %v3708 = vadd.f32 %v904, %v3707
  %3709 = vmatmul.bf16.gmra.mxu0 %v3645
  %v3710 = vpop.f32.mrf.mxu0
  %v3711 = vadd.f32 %v904, %v3710
  %v3712 = vpop.f32.mrf.mxu0
  %v3713 = vadd.f32 %v904, %v3712
  %3714 = vmatmul.bf16.gmra.mxu0 %v3646
  %v3715 = vpop.f32.mrf.mxu0
  %v3716 = vadd.f32 %v904, %v3715
  %v3717 = vpop.f32.mrf.mxu0
  %v3718 = vadd.f32 %v904, %v3717
  %3719 = vmatmul.bf16.gmra.mxu0 %v3647
  %v3720 = vpop.f32.mrf.mxu0
  %v3721 = vadd.f32 %v904, %v3720
  %v3722 = vpop.f32.mrf.mxu0
  %v3723 = vadd.f32 %v904, %v3722
  %3724 = vmatmul.bf16.gmra.mxu0 %v3648
  %v3725 = vpop.f32.mrf.mxu0
  %v3726 = vadd.f32 %v904, %v3725
  %v3727 = vpop.f32.mrf.mxu0
  %v3728 = vadd.f32 %v904, %v3727
  %3729 = vmatmul.bf16.gmra.mxu0 %v3649
  %v3730 = vpop.f32.mrf.mxu0
  %v3731 = vadd.f32 %v904, %v3730
  %v3732 = vpop.f32.mrf.mxu0
  %v3733 = vadd.f32 %v904, %v3732
  %3734 = vmatmul.bf16.gmra.mxu0 %v3650
  %v3735 = vpop.f32.mrf.mxu0
  %v3736 = vadd.f32 %v904, %v3735
  %v3737 = vpop.f32.mrf.mxu0
  %v3738 = vadd.f32 %v904, %v3737
  %3739 = vdwg.mxu0
  %3740 = vmatpush.bf16.msra.mxu0 %v1012
  %3741 = vmatpush.bf16.msra.mxu0 %v1009
  %3742 = vmatpush.bf16.msra.mxu0 %v1006
  %3743 = vmatpush.bf16.msra.mxu0 %v1003
  %3744 = vmatpush.bf16.msra.mxu0 %v1000
  %3745 = vmatpush.bf16.msra.mxu0 %v997
  %3746 = vmatpush.bf16.msra.mxu0 %v994
  %3747 = vmatpush.bf16.msra.mxu0 %v991
  %3748 = vmatmul.bf16.gmra.mxu0 %v3635
  %v3749 = vpop.f32.mrf.mxu0
  %v3750 = vadd.f32 %v905, %v3749
  %v3751 = vpop.f32.mrf.mxu0
  %v3752 = vadd.f32 %v905, %v3751
  %3753 = vmatmul.bf16.gmra.mxu0 %v3636
  %v3754 = vpop.f32.mrf.mxu0
  %v3755 = vadd.f32 %v905, %v3754
  %v3756 = vpop.f32.mrf.mxu0
  %v3757 = vadd.f32 %v905, %v3756
  %3758 = vmatmul.bf16.gmra.mxu0 %v3637
  %v3759 = vpop.f32.mrf.mxu0
  %v3760 = vadd.f32 %v905, %v3759
  %v3761 = vpop.f32.mrf.mxu0
  %v3762 = vadd.f32 %v905, %v3761
  %3763 = vmatmul.bf16.gmra.mxu0 %v3638
  %v3764 = vpop.f32.mrf.mxu0
  %v3765 = vadd.f32 %v905, %v3764
  %v3766 = vpop.f32.mrf.mxu0
  %v3767 = vadd.f32 %v905, %v3766
  %3768 = vmatmul.bf16.gmra.mxu0 %v3639
  %v3769 = vpop.f32.mrf.mxu0
  %v3770 = vadd.f32 %v905, %v3769
  %v3771 = vpop.f32.mrf.mxu0
  %v3772 = vadd.f32 %v905, %v3771
  %3773 = vmatmul.bf16.gmra.mxu0 %v3640
  %v3774 = vpop.f32.mrf.mxu0
  %v3775 = vadd.f32 %v905, %v3774
  %v3776 = vpop.f32.mrf.mxu0
  %v3777 = vadd.f32 %v905, %v3776
  %3778 = vmatmul.bf16.gmra.mxu0 %v3641
  %v3779 = vpop.f32.mrf.mxu0
  %v3780 = vadd.f32 %v905, %v3779
  %v3781 = vpop.f32.mrf.mxu0
  %v3782 = vadd.f32 %v905, %v3781
  %3783 = vmatmul.bf16.gmra.mxu0 %v3642
  %v3784 = vpop.f32.mrf.mxu0
  %v3785 = vadd.f32 %v905, %v3784
  %v3786 = vpop.f32.mrf.mxu0
  %v3787 = vadd.f32 %v905, %v3786
  %3788 = vmatmul.bf16.gmra.mxu0 %v3643
  %v3789 = vpop.f32.mrf.mxu0
  %v3790 = vadd.f32 %v905, %v3789
  %v3791 = vpop.f32.mrf.mxu0
  %v3792 = vadd.f32 %v905, %v3791
  %3793 = vmatmul.bf16.gmra.mxu0 %v3644
  %v3794 = vpop.f32.mrf.mxu0
  %v3795 = vadd.f32 %v905, %v3794
  %v3796 = vpop.f32.mrf.mxu0
  %v3797 = vadd.f32 %v905, %v3796
  %3798 = vmatmul.bf16.gmra.mxu0 %v3645
  %v3799 = vpop.f32.mrf.mxu0
  %v3800 = vadd.f32 %v905, %v3799
  %v3801 = vpop.f32.mrf.mxu0
  %v3802 = vadd.f32 %v905, %v3801
  %3803 = vmatmul.bf16.gmra.mxu0 %v3646
  %v3804 = vpop.f32.mrf.mxu0
  %v3805 = vadd.f32 %v905, %v3804
  %v3806 = vpop.f32.mrf.mxu0
  %v3807 = vadd.f32 %v905, %v3806
  %3808 = vmatmul.bf16.gmra.mxu0 %v3647
  %v3809 = vpop.f32.mrf.mxu0
  %v3810 = vadd.f32 %v905, %v3809
  %v3811 = vpop.f32.mrf.mxu0
  %v3812 = vadd.f32 %v905, %v3811
  %3813 = vmatmul.bf16.gmra.mxu0 %v3648
  %v3814 = vpop.f32.mrf.mxu0
  %v3815 = vadd.f32 %v905, %v3814
  %v3816 = vpop.f32.mrf.mxu0
  %v3817 = vadd.f32 %v905, %v3816
  %3818 = vmatmul.bf16.gmra.mxu0 %v3649
  %v3819 = vpop.f32.mrf.mxu0
  %v3820 = vadd.f32 %v905, %v3819
  %v3821 = vpop.f32.mrf.mxu0
  %v3822 = vadd.f32 %v905, %v3821
  %3823 = vmatmul.bf16.gmra.mxu0 %v3650
  %v3824 = vpop.f32.mrf.mxu0
  %v3825 = vadd.f32 %v905, %v3824
  %v3826 = vpop.f32.mrf.mxu0
  %v3827 = vadd.f32 %v905, %v3826
  %3828 = vdwg.mxu0
  %3829 = vmatpush.bf16.msra.mxu0 %v1013
  %3830 = vmatpush.bf16.msra.mxu0 %v1010
  %3831 = vmatpush.bf16.msra.mxu0 %v1007
  %3832 = vmatpush.bf16.msra.mxu0 %v1004
  %3833 = vmatpush.bf16.msra.mxu0 %v1001
  %3834 = vmatpush.bf16.msra.mxu0 %v998
  %3835 = vmatpush.bf16.msra.mxu0 %v995
  %3836 = vmatpush.bf16.msra.mxu0 %v992
  %3837 = vmatmul.bf16.gmra.mxu0 %v3635
  %v3838 = vpop.f32.mrf.mxu0
  %v3839 = vadd.f32 %v906, %v3838
  %v3840 = vpop.f32.mrf.mxu0
  %v3841 = vadd.f32 %v906, %v3840
  %3842 = vmatmul.bf16.gmra.mxu0 %v3636
  %v3843 = vpop.f32.mrf.mxu0
  %v3844 = vadd.f32 %v906, %v3843
  %v3845 = vpop.f32.mrf.mxu0
  %v3846 = vadd.f32 %v906, %v3845
  %3847 = vmatmul.bf16.gmra.mxu0 %v3637
  %v3848 = vpop.f32.mrf.mxu0
  %v3849 = vadd.f32 %v906, %v3848
  %v3850 = vpop.f32.mrf.mxu0
  %v3851 = vadd.f32 %v906, %v3850
  %3852 = vmatmul.bf16.gmra.mxu0 %v3638
  %v3853 = vpop.f32.mrf.mxu0
  %v3854 = vadd.f32 %v906, %v3853
  %v3855 = vpop.f32.mrf.mxu0
  %v3856 = vadd.f32 %v906, %v3855
  %3857 = vmatmul.bf16.gmra.mxu0 %v3639
  %v3858 = vpop.f32.mrf.mxu0
  %v3859 = vadd.f32 %v906, %v3858
  %v3860 = vpop.f32.mrf.mxu0
  %v3861 = vadd.f32 %v906, %v3860
  %3862 = vmatmul.bf16.gmra.mxu0 %v3640
  %v3863 = vpop.f32.mrf.mxu0
  %v3864 = vadd.f32 %v906, %v3863
  %v3865 = vpop.f32.mrf.mxu0
  %v3866 = vadd.f32 %v906, %v3865
  %3867 = vmatmul.bf16.gmra.mxu0 %v3641
  %v3868 = vpop.f32.mrf.mxu0
  %v3869 = vadd.f32 %v906, %v3868
  %v3870 = vpop.f32.mrf.mxu0
  %v3871 = vadd.f32 %v906, %v3870
  %3872 = vmatmul.bf16.gmra.mxu0 %v3642
  %v3873 = vpop.f32.mrf.mxu0
  %v3874 = vadd.f32 %v906, %v3873
  %v3875 = vpop.f32.mrf.mxu0
  %v3876 = vadd.f32 %v906, %v3875
  %3877 = vmatmul.bf16.gmra.mxu0 %v3643
  %v3878 = vpop.f32.mrf.mxu0
  %v3879 = vadd.f32 %v906, %v3878
  %v3880 = vpop.f32.mrf.mxu0
  %v3881 = vadd.f32 %v906, %v3880
  %3882 = vmatmul.bf16.gmra.mxu0 %v3644
  %v3883 = vpop.f32.mrf.mxu0
  %v3884 = vadd.f32 %v906, %v3883
  %v3885 = vpop.f32.mrf.mxu0
  %v3886 = vadd.f32 %v906, %v3885
  %3887 = vmatmul.bf16.gmra.mxu0 %v3645
  %v3888 = vpop.f32.mrf.mxu0
  %v3889 = vadd.f32 %v906, %v3888
  %v3890 = vpop.f32.mrf.mxu0
  %v3891 = vadd.f32 %v906, %v3890
  %3892 = vmatmul.bf16.gmra.mxu0 %v3646
  %v3893 = vpop.f32.mrf.mxu0
  %v3894 = vadd.f32 %v906, %v3893
  %v3895 = vpop.f32.mrf.mxu0
  %v3896 = vadd.f32 %v906, %v3895
  %3897 = vmatmul.bf16.gmra.mxu0 %v3647
  %v3898 = vpop.f32.mrf.mxu0
  %v3899 = vadd.f32 %v906, %v3898
  %v3900 = vpop.f32.mrf.mxu0
  %v3901 = vadd.f32 %v906, %v3900
  %3902 = vmatmul.bf16.gmra.mxu0 %v3648
  %v3903 = vpop.f32.mrf.mxu0
  %v3904 = vadd.f32 %v906, %v3903
  %v3905 = vpop.f32.mrf.mxu0
  %v3906 = vadd.f32 %v906, %v3905
  %3907 = vmatmul.bf16.gmra.mxu0 %v3649
  %v3908 = vpop.f32.mrf.mxu0
  %v3909 = vadd.f32 %v906, %v3908
  %v3910 = vpop.f32.mrf.mxu0
  %v3911 = vadd.f32 %v906, %v3910
  %3912 = vmatmul.bf16.gmra.mxu0 %v3650
  %v3913 = vpop.f32.mrf.mxu0
  %v3914 = vadd.f32 %v906, %v3913
  %v3915 = vpop.f32.mrf.mxu0
  %v3916 = vadd.f32 %v906, %v3915
  %3917 = vdwg.mxu0
  %v3918 = vadd.f32 %v3378, %v3661
  %v3919 = vadd.f32 %v3380, %v3663
  %v3920 = vadd.f32 %v3383, %v3666
  %v3921 = vadd.f32 %v3385, %v3668
  %v3922 = vadd.f32 %v3388, %v3671
  %v3923 = vadd.f32 %v3390, %v3673
  %v3924 = vadd.f32 %v3393, %v3676
  %v3925 = vadd.f32 %v3395, %v3678
  %v3926 = vadd.f32 %v3398, %v3681
  %v3927 = vadd.f32 %v3400, %v3683
  %v3928 = vadd.f32 %v3403, %v3686
  %v3929 = vadd.f32 %v3405, %v3688
  %v3930 = vadd.f32 %v3408, %v3691
  %v3931 = vadd.f32 %v3410, %v3693
  %v3932 = vadd.f32 %v3413, %v3696
  %v3933 = vadd.f32 %v3415, %v3698
  %v3934 = vadd.f32 %v3418, %v3701
  %v3935 = vadd.f32 %v3420, %v3703
  %v3936 = vadd.f32 %v3423, %v3706
  %v3937 = vadd.f32 %v3425, %v3708
  %v3938 = vadd.f32 %v3428, %v3711
  %v3939 = vadd.f32 %v3430, %v3713
  %v3940 = vadd.f32 %v3433, %v3716
  %v3941 = vadd.f32 %v3435, %v3718
  %v3942 = vadd.f32 %v3438, %v3721
  %v3943 = vadd.f32 %v3440, %v3723
  %v3944 = vadd.f32 %v3443, %v3726
  %v3945 = vadd.f32 %v3445, %v3728
  %v3946 = vadd.f32 %v3448, %v3731
  %v3947 = vadd.f32 %v3450, %v3733
  %v3948 = vadd.f32 %v3453, %v3736
  %v3949 = vadd.f32 %v3455, %v3738
  %v3950 = vxor.u32 %v3918, 2147483648
  %v3951 = vxor.u32 %v3919, 2147483648
  %v3952 = vxor.u32 %v3920, 2147483648
  %v3953 = vxor.u32 %v3921, 2147483648
  %v3954 = vxor.u32 %v3922, 2147483648
  %v3955 = vxor.u32 %v3923, 2147483648
  %v3956 = vxor.u32 %v3924, 2147483648
  %v3957 = vxor.u32 %v3925, 2147483648
  %v3958 = vxor.u32 %v3926, 2147483648
  %v3959 = vxor.u32 %v3927, 2147483648
  %v3960 = vxor.u32 %v3928, 2147483648
  %v3961 = vxor.u32 %v3929, 2147483648
  %v3962 = vxor.u32 %v3930, 2147483648
  %v3963 = vxor.u32 %v3931, 2147483648
  %v3964 = vxor.u32 %v3932, 2147483648
  %v3965 = vxor.u32 %v3933, 2147483648
  %v3966 = vxor.u32 %v3934, 2147483648
  %v3967 = vxor.u32 %v3935, 2147483648
  %v3968 = vxor.u32 %v3936, 2147483648
  %v3969 = vxor.u32 %v3937, 2147483648
  %v3970 = vxor.u32 %v3938, 2147483648
  %v3971 = vxor.u32 %v3939, 2147483648
  %v3972 = vxor.u32 %v3940, 2147483648
  %v3973 = vxor.u32 %v3941, 2147483648
  %v3974 = vxor.u32 %v3942, 2147483648
  %v3975 = vxor.u32 %v3943, 2147483648
  %v3976 = vxor.u32 %v3944, 2147483648
  %v3977 = vxor.u32 %v3945, 2147483648
  %v3978 = vxor.u32 %v3946, 2147483648
  %v3979 = vxor.u32 %v3947, 2147483648
  %v3980 = vxor.u32 %v3948, 2147483648
  %v3981 = vxor.u32 %v3949, 2147483648
  %v3982 = vmul.f32 %v3950, 1.442695
  %v3983 = vpow.pop %v3982
  %v3984 = vmul.f32 %v3951, 1.442695
  %v3985 = vpow.pop %v3984
  %v3986 = vmul.f32 %v3952, 1.442695
  %v3987 = vpow.pop %v3986
  %v3988 = vmul.f32 %v3953, 1.442695
  %v3989 = vpow.pop %v3988
  %v3990 = vmul.f32 %v3954, 1.442695
  %v3991 = vpow.pop %v3990
  %v3992 = vmul.f32 %v3955, 1.442695
  %v3993 = vpow.pop %v3992
  %v3994 = vmul.f32 %v3956, 1.442695
  %v3995 = vpow.pop %v3994
  %v3996 = vmul.f32 %v3957, 1.442695
  %v3997 = vpow.pop %v3996
  %v3998 = vmul.f32 %v3958, 1.442695
  %v3999 = vpow.pop %v3998
  %v4000 = vmul.f32 %v3959, 1.442695
  %v4001 = vpow.pop %v4000
  %v4002 = vmul.f32 %v3960, 1.442695
  %v4003 = vpow.pop %v4002
  %v4004 = vmul.f32 %v3961, 1.442695
  %v4005 = vpow.pop %v4004
  %v4006 = vmul.f32 %v3962, 1.442695
  %v4007 = vpow.pop %v4006
  %v4008 = vmul.f32 %v3963, 1.442695
  %v4009 = vpow.pop %v4008
  %v4010 = vmul.f32 %v3964, 1.442695
  %v4011 = vpow.pop %v4010
  %v4012 = vmul.f32 %v3965, 1.442695
  %v4013 = vpow.pop %v4012
  %v4014 = vmul.f32 %v3966, 1.442695
  %v4015 = vpow.pop %v4014
  %v4016 = vmul.f32 %v3967, 1.442695
  %v4017 = vpow.pop %v4016
  %v4018 = vmul.f32 %v3968, 1.442695
  %v4019 = vpow.pop %v4018
  %v4020 = vmul.f32 %v3969, 1.442695
  %v4021 = vpow.pop %v4020
  %v4022 = vmul.f32 %v3970, 1.442695
  %v4023 = vpow.pop %v4022
  %v4024 = vmul.f32 %v3971, 1.442695
  %v4025 = vpow.pop %v4024
  %v4026 = vmul.f32 %v3972, 1.442695
  %v4027 = vpow.pop %v4026
  %v4028 = vmul.f32 %v3973, 1.442695
  %v4029 = vpow.pop %v4028
  %v4030 = vmul.f32 %v3974, 1.442695
  %v4031 = vpow.pop %v4030
  %v4032 = vmul.f32 %v3975, 1.442695
  %v4033 = vpow.pop %v4032
  %v4034 = vmul.f32 %v3976, 1.442695
  %v4035 = vpow.pop %v4034
  %v4036 = vmul.f32 %v3977, 1.442695
  %v4037 = vpow.pop %v4036
  %v4038 = vmul.f32 %v3978, 1.442695
  %v4039 = vpow.pop %v4038
  %v4040 = vmul.f32 %v3979, 1.442695
  %v4041 = vpow.pop %v4040
  %v4042 = vmul.f32 %v3980, 1.442695
  %v4043 = vpow.pop %v4042
  %v4044 = vmul.f32 %v3981, 1.442695
  %v4045 = vpow.pop %v4044
  %v4046 = vadd.f32 %v3983, 1.0
  %v4047 = vadd.f32 %v3985, 1.0
  %v4048 = vadd.f32 %v3987, 1.0
  %v4049 = vadd.f32 %v3989, 1.0
  %v4050 = vadd.f32 %v3991, 1.0
  %v4051 = vadd.f32 %v3993, 1.0
  %v4052 = vadd.f32 %v3995, 1.0
  %v4053 = vadd.f32 %v3997, 1.0
  %v4054 = vadd.f32 %v3999, 1.0
  %v4055 = vadd.f32 %v4001, 1.0
  %v4056 = vadd.f32 %v4003, 1.0
  %v4057 = vadd.f32 %v4005, 1.0
  %v4058 = vadd.f32 %v4007, 1.0
  %v4059 = vadd.f32 %v4009, 1.0
  %v4060 = vadd.f32 %v4011, 1.0
  %v4061 = vadd.f32 %v4013, 1.0
  %v4062 = vadd.f32 %v4015, 1.0
  %v4063 = vadd.f32 %v4017, 1.0
  %v4064 = vadd.f32 %v4019, 1.0
  %v4065 = vadd.f32 %v4021, 1.0
  %v4066 = vadd.f32 %v4023, 1.0
  %v4067 = vadd.f32 %v4025, 1.0
  %v4068 = vadd.f32 %v4027, 1.0
  %v4069 = vadd.f32 %v4029, 1.0
  %v4070 = vadd.f32 %v4031, 1.0
  %v4071 = vadd.f32 %v4033, 1.0
  %v4072 = vadd.f32 %v4035, 1.0
  %v4073 = vadd.f32 %v4037, 1.0
  %v4074 = vadd.f32 %v4039, 1.0
  %v4075 = vadd.f32 %v4041, 1.0
  %v4076 = vadd.f32 %v4043, 1.0
  %v4077 = vadd.f32 %v4045, 1.0
  %v4078 = vrcp.pop %v4046
  %v4079 = vmul.f32 %v4046, %v4078
  %v4080 = vsub.f32 1.0, %v4079
  %v4081 = vmul.f32 %v4078, %v4080
  %v4082 = vadd.f32 %v4078, %v4081
  %vm4083 = vweird.f32 %v4046
  %vm4084 = vweird.f32 %v4078
  %vm4085 = vmor %vm4083, %vm4084
  %v4086 = vsel %vm4085, %v4078, %v4082
  %v4087 = vand.u32 2147483647, %v4046
  %vm4088 = vcmp.eq.f32.partialorder %v4087, 8.507059e+37
  %v4089 = vand.u32 %v4046, 2147483648
  %v4090 = vor.u32 1.1754944e-38, %v4089
  %v4091 = vsel %vm4088, %v4090, %v4086
  %v4092 = vmul.f32 1.0, %v4091
  %v4093 = vrcp.pop %v4047
  %v4094 = vmul.f32 %v4047, %v4093
  %v4095 = vsub.f32 1.0, %v4094
  %v4096 = vmul.f32 %v4093, %v4095
  %v4097 = vadd.f32 %v4093, %v4096
  %vm4098 = vweird.f32 %v4047
  %vm4099 = vweird.f32 %v4093
  %vm4100 = vmor %vm4098, %vm4099
  %v4101 = vsel %vm4100, %v4093, %v4097
  %v4102 = vand.u32 2147483647, %v4047
  %vm4103 = vcmp.eq.f32.partialorder %v4102, 8.507059e+37
  %v4104 = vand.u32 %v4047, 2147483648
  %v4105 = vor.u32 1.1754944e-38, %v4104
  %v4106 = vsel %vm4103, %v4105, %v4101
  %v4107 = vmul.f32 1.0, %v4106
  %v4108 = vrcp.pop %v4048
  %v4109 = vmul.f32 %v4048, %v4108
  %v4110 = vsub.f32 1.0, %v4109
  %v4111 = vmul.f32 %v4108, %v4110
  %v4112 = vadd.f32 %v4108, %v4111
  %vm4113 = vweird.f32 %v4048
  %vm4114 = vweird.f32 %v4108
  %vm4115 = vmor %vm4113, %vm4114
  %v4116 = vsel %vm4115, %v4108, %v4112
  %v4117 = vand.u32 2147483647, %v4048
  %vm4118 = vcmp.eq.f32.partialorder %v4117, 8.507059e+37
  %v4119 = vand.u32 %v4048, 2147483648
  %v4120 = vor.u32 1.1754944e-38, %v4119
  %v4121 = vsel %vm4118, %v4120, %v4116
  %v4122 = vmul.f32 1.0, %v4121
  %v4123 = vrcp.pop %v4049
  %v4124 = vmul.f32 %v4049, %v4123
  %v4125 = vsub.f32 1.0, %v4124
  %v4126 = vmul.f32 %v4123, %v4125
  %v4127 = vadd.f32 %v4123, %v4126
  %vm4128 = vweird.f32 %v4049
  %vm4129 = vweird.f32 %v4123
  %vm4130 = vmor %vm4128, %vm4129
  %v4131 = vsel %vm4130, %v4123, %v4127
  %v4132 = vand.u32 2147483647, %v4049
  %vm4133 = vcmp.eq.f32.partialorder %v4132, 8.507059e+37
  %v4134 = vand.u32 %v4049, 2147483648
  %v4135 = vor.u32 1.1754944e-38, %v4134
  %v4136 = vsel %vm4133, %v4135, %v4131
  %v4137 = vmul.f32 1.0, %v4136
  %v4138 = vrcp.pop %v4050
  %v4139 = vmul.f32 %v4050, %v4138
  %v4140 = vsub.f32 1.0, %v4139
  %v4141 = vmul.f32 %v4138, %v4140
  %v4142 = vadd.f32 %v4138, %v4141
  %vm4143 = vweird.f32 %v4050
  %vm4144 = vweird.f32 %v4138
  %vm4145 = vmor %vm4143, %vm4144
  %v4146 = vsel %vm4145, %v4138, %v4142
  %v4147 = vand.u32 2147483647, %v4050
  %vm4148 = vcmp.eq.f32.partialorder %v4147, 8.507059e+37
  %v4149 = vand.u32 %v4050, 2147483648
  %v4150 = vor.u32 1.1754944e-38, %v4149
  %v4151 = vsel %vm4148, %v4150, %v4146
  %v4152 = vmul.f32 1.0, %v4151
  %v4153 = vrcp.pop %v4051
  %v4154 = vmul.f32 %v4051, %v4153
  %v4155 = vsub.f32 1.0, %v4154
  %v4156 = vmul.f32 %v4153, %v4155
  %v4157 = vadd.f32 %v4153, %v4156
  %vm4158 = vweird.f32 %v4051
  %vm4159 = vweird.f32 %v4153
  %vm4160 = vmor %vm4158, %vm4159
  %v4161 = vsel %vm4160, %v4153, %v4157
  %v4162 = vand.u32 2147483647, %v4051
  %vm4163 = vcmp.eq.f32.partialorder %v4162, 8.507059e+37
  %v4164 = vand.u32 %v4051, 2147483648
  %v4165 = vor.u32 1.1754944e-38, %v4164
  %v4166 = vsel %vm4163, %v4165, %v4161
  %v4167 = vmul.f32 1.0, %v4166
  %v4168 = vrcp.pop %v4052
  %v4169 = vmul.f32 %v4052, %v4168
  %v4170 = vsub.f32 1.0, %v4169
  %v4171 = vmul.f32 %v4168, %v4170
  %v4172 = vadd.f32 %v4168, %v4171
  %vm4173 = vweird.f32 %v4052
  %vm4174 = vweird.f32 %v4168
  %vm4175 = vmor %vm4173, %vm4174
  %v4176 = vsel %vm4175, %v4168, %v4172
  %v4177 = vand.u32 2147483647, %v4052
  %vm4178 = vcmp.eq.f32.partialorder %v4177, 8.507059e+37
  %v4179 = vand.u32 %v4052, 2147483648
  %v4180 = vor.u32 1.1754944e-38, %v4179
  %v4181 = vsel %vm4178, %v4180, %v4176
  %v4182 = vmul.f32 1.0, %v4181
  %v4183 = vrcp.pop %v4053
  %v4184 = vmul.f32 %v4053, %v4183
  %v4185 = vsub.f32 1.0, %v4184
  %v4186 = vmul.f32 %v4183, %v4185
  %v4187 = vadd.f32 %v4183, %v4186
  %vm4188 = vweird.f32 %v4053
  %vm4189 = vweird.f32 %v4183
  %vm4190 = vmor %vm4188, %vm4189
  %v4191 = vsel %vm4190, %v4183, %v4187
  %v4192 = vand.u32 2147483647, %v4053
  %vm4193 = vcmp.eq.f32.partialorder %v4192, 8.507059e+37
  %v4194 = vand.u32 %v4053, 2147483648
  %v4195 = vor.u32 1.1754944e-38, %v4194
  %v4196 = vsel %vm4193, %v4195, %v4191
  %v4197 = vmul.f32 1.0, %v4196
  %v4198 = vrcp.pop %v4054
  %v4199 = vmul.f32 %v4054, %v4198
  %v4200 = vsub.f32 1.0, %v4199
  %v4201 = vmul.f32 %v4198, %v4200
  %v4202 = vadd.f32 %v4198, %v4201
  %vm4203 = vweird.f32 %v4054
  %vm4204 = vweird.f32 %v4198
  %vm4205 = vmor %vm4203, %vm4204
  %v4206 = vsel %vm4205, %v4198, %v4202
  %v4207 = vand.u32 2147483647, %v4054
  %vm4208 = vcmp.eq.f32.partialorder %v4207, 8.507059e+37
  %v4209 = vand.u32 %v4054, 2147483648
  %v4210 = vor.u32 1.1754944e-38, %v4209
  %v4211 = vsel %vm4208, %v4210, %v4206
  %v4212 = vmul.f32 1.0, %v4211
  %v4213 = vrcp.pop %v4055
  %v4214 = vmul.f32 %v4055, %v4213
  %v4215 = vsub.f32 1.0, %v4214
  %v4216 = vmul.f32 %v4213, %v4215
  %v4217 = vadd.f32 %v4213, %v4216
  %vm4218 = vweird.f32 %v4055
  %vm4219 = vweird.f32 %v4213
  %vm4220 = vmor %vm4218, %vm4219
  %v4221 = vsel %vm4220, %v4213, %v4217
  %v4222 = vand.u32 2147483647, %v4055
  %vm4223 = vcmp.eq.f32.partialorder %v4222, 8.507059e+37
  %v4224 = vand.u32 %v4055, 2147483648
  %v4225 = vor.u32 1.1754944e-38, %v4224
  %v4226 = vsel %vm4223, %v4225, %v4221
  %v4227 = vmul.f32 1.0, %v4226
  %v4228 = vrcp.pop %v4056
  %v4229 = vmul.f32 %v4056, %v4228
  %v4230 = vsub.f32 1.0, %v4229
  %v4231 = vmul.f32 %v4228, %v4230
  %v4232 = vadd.f32 %v4228, %v4231
  %vm4233 = vweird.f32 %v4056
  %vm4234 = vweird.f32 %v4228
  %vm4235 = vmor %vm4233, %vm4234
  %v4236 = vsel %vm4235, %v4228, %v4232
  %v4237 = vand.u32 2147483647, %v4056
  %vm4238 = vcmp.eq.f32.partialorder %v4237, 8.507059e+37
  %v4239 = vand.u32 %v4056, 2147483648
  %v4240 = vor.u32 1.1754944e-38, %v4239
  %v4241 = vsel %vm4238, %v4240, %v4236
  %v4242 = vmul.f32 1.0, %v4241
  %v4243 = vrcp.pop %v4057
  %v4244 = vmul.f32 %v4057, %v4243
  %v4245 = vsub.f32 1.0, %v4244
  %v4246 = vmul.f32 %v4243, %v4245
  %v4247 = vadd.f32 %v4243, %v4246
  %vm4248 = vweird.f32 %v4057
  %vm4249 = vweird.f32 %v4243
  %vm4250 = vmor %vm4248, %vm4249
  %v4251 = vsel %vm4250, %v4243, %v4247
  %v4252 = vand.u32 2147483647, %v4057
  %vm4253 = vcmp.eq.f32.partialorder %v4252, 8.507059e+37
  %v4254 = vand.u32 %v4057, 2147483648
  %v4255 = vor.u32 1.1754944e-38, %v4254
  %v4256 = vsel %vm4253, %v4255, %v4251
  %v4257 = vmul.f32 1.0, %v4256
  %v4258 = vrcp.pop %v4058
  %v4259 = vmul.f32 %v4058, %v4258
  %v4260 = vsub.f32 1.0, %v4259
  %v4261 = vmul.f32 %v4258, %v4260
  %v4262 = vadd.f32 %v4258, %v4261
  %vm4263 = vweird.f32 %v4058
  %vm4264 = vweird.f32 %v4258
  %vm4265 = vmor %vm4263, %vm4264
  %v4266 = vsel %vm4265, %v4258, %v4262
  %v4267 = vand.u32 2147483647, %v4058
  %vm4268 = vcmp.eq.f32.partialorder %v4267, 8.507059e+37
  %v4269 = vand.u32 %v4058, 2147483648
  %v4270 = vor.u32 1.1754944e-38, %v4269
  %v4271 = vsel %vm4268, %v4270, %v4266
  %v4272 = vmul.f32 1.0, %v4271
  %v4273 = vrcp.pop %v4059
  %v4274 = vmul.f32 %v4059, %v4273
  %v4275 = vsub.f32 1.0, %v4274
  %v4276 = vmul.f32 %v4273, %v4275
  %v4277 = vadd.f32 %v4273, %v4276
  %vm4278 = vweird.f32 %v4059
  %vm4279 = vweird.f32 %v4273
  %vm4280 = vmor %vm4278, %vm4279
  %v4281 = vsel %vm4280, %v4273, %v4277
  %v4282 = vand.u32 2147483647, %v4059
  %vm4283 = vcmp.eq.f32.partialorder %v4282, 8.507059e+37
  %v4284 = vand.u32 %v4059, 2147483648
  %v4285 = vor.u32 1.1754944e-38, %v4284
  %v4286 = vsel %vm4283, %v4285, %v4281
  %v4287 = vmul.f32 1.0, %v4286
  %v4288 = vrcp.pop %v4060
  %v4289 = vmul.f32 %v4060, %v4288
  %v4290 = vsub.f32 1.0, %v4289
  %v4291 = vmul.f32 %v4288, %v4290
  %v4292 = vadd.f32 %v4288, %v4291
  %vm4293 = vweird.f32 %v4060
  %vm4294 = vweird.f32 %v4288
  %vm4295 = vmor %vm4293, %vm4294
  %v4296 = vsel %vm4295, %v4288, %v4292
  %v4297 = vand.u32 2147483647, %v4060
  %vm4298 = vcmp.eq.f32.partialorder %v4297, 8.507059e+37
  %v4299 = vand.u32 %v4060, 2147483648
  %v4300 = vor.u32 1.1754944e-38, %v4299
  %v4301 = vsel %vm4298, %v4300, %v4296
  %v4302 = vmul.f32 1.0, %v4301
  %v4303 = vrcp.pop %v4061
  %v4304 = vmul.f32 %v4061, %v4303
  %v4305 = vsub.f32 1.0, %v4304
  %v4306 = vmul.f32 %v4303, %v4305
  %v4307 = vadd.f32 %v4303, %v4306
  %vm4308 = vweird.f32 %v4061
  %vm4309 = vweird.f32 %v4303
  %vm4310 = vmor %vm4308, %vm4309
  %v4311 = vsel %vm4310, %v4303, %v4307
  %v4312 = vand.u32 2147483647, %v4061
  %vm4313 = vcmp.eq.f32.partialorder %v4312, 8.507059e+37
  %v4314 = vand.u32 %v4061, 2147483648
  %v4315 = vor.u32 1.1754944e-38, %v4314
  %v4316 = vsel %vm4313, %v4315, %v4311
  %v4317 = vmul.f32 1.0, %v4316
  %v4318 = vrcp.pop %v4062
  %v4319 = vmul.f32 %v4062, %v4318
  %v4320 = vsub.f32 1.0, %v4319
  %v4321 = vmul.f32 %v4318, %v4320
  %v4322 = vadd.f32 %v4318, %v4321
  %vm4323 = vweird.f32 %v4062
  %vm4324 = vweird.f32 %v4318
  %vm4325 = vmor %vm4323, %vm4324
  %v4326 = vsel %vm4325, %v4318, %v4322
  %v4327 = vand.u32 2147483647, %v4062
  %vm4328 = vcmp.eq.f32.partialorder %v4327, 8.507059e+37
  %v4329 = vand.u32 %v4062, 2147483648
  %v4330 = vor.u32 1.1754944e-38, %v4329
  %v4331 = vsel %vm4328, %v4330, %v4326
  %v4332 = vmul.f32 1.0, %v4331
  %v4333 = vrcp.pop %v4063
  %v4334 = vmul.f32 %v4063, %v4333
  %v4335 = vsub.f32 1.0, %v4334
  %v4336 = vmul.f32 %v4333, %v4335
  %v4337 = vadd.f32 %v4333, %v4336
  %vm4338 = vweird.f32 %v4063
  %vm4339 = vweird.f32 %v4333
  %vm4340 = vmor %vm4338, %vm4339
  %v4341 = vsel %vm4340, %v4333, %v4337
  %v4342 = vand.u32 2147483647, %v4063
  %vm4343 = vcmp.eq.f32.partialorder %v4342, 8.507059e+37
  %v4344 = vand.u32 %v4063, 2147483648
  %v4345 = vor.u32 1.1754944e-38, %v4344
  %v4346 = vsel %vm4343, %v4345, %v4341
  %v4347 = vmul.f32 1.0, %v4346
  %v4348 = vrcp.pop %v4064
  %v4349 = vmul.f32 %v4064, %v4348
  %v4350 = vsub.f32 1.0, %v4349
  %v4351 = vmul.f32 %v4348, %v4350
  %v4352 = vadd.f32 %v4348, %v4351
  %vm4353 = vweird.f32 %v4064
  %vm4354 = vweird.f32 %v4348
  %vm4355 = vmor %vm4353, %vm4354
  %v4356 = vsel %vm4355, %v4348, %v4352
  %v4357 = vand.u32 2147483647, %v4064
  %vm4358 = vcmp.eq.f32.partialorder %v4357, 8.507059e+37
  %v4359 = vand.u32 %v4064, 2147483648
  %v4360 = vor.u32 1.1754944e-38, %v4359
  %v4361 = vsel %vm4358, %v4360, %v4356
  %v4362 = vmul.f32 1.0, %v4361
  %v4363 = vrcp.pop %v4065
  %v4364 = vmul.f32 %v4065, %v4363
  %v4365 = vsub.f32 1.0, %v4364
  %v4366 = vmul.f32 %v4363, %v4365
  %v4367 = vadd.f32 %v4363, %v4366
  %vm4368 = vweird.f32 %v4065
  %vm4369 = vweird.f32 %v4363
  %vm4370 = vmor %vm4368, %vm4369
  %v4371 = vsel %vm4370, %v4363, %v4367
  %v4372 = vand.u32 2147483647, %v4065
  %vm4373 = vcmp.eq.f32.partialorder %v4372, 8.507059e+37
  %v4374 = vand.u32 %v4065, 2147483648
  %v4375 = vor.u32 1.1754944e-38, %v4374
  %v4376 = vsel %vm4373, %v4375, %v4371
  %v4377 = vmul.f32 1.0, %v4376
  %v4378 = vrcp.pop %v4066
  %v4379 = vmul.f32 %v4066, %v4378
  %v4380 = vsub.f32 1.0, %v4379
  %v4381 = vmul.f32 %v4378, %v4380
  %v4382 = vadd.f32 %v4378, %v4381
  %vm4383 = vweird.f32 %v4066
  %vm4384 = vweird.f32 %v4378
  %vm4385 = vmor %vm4383, %vm4384
  %v4386 = vsel %vm4385, %v4378, %v4382
  %v4387 = vand.u32 2147483647, %v4066
  %vm4388 = vcmp.eq.f32.partialorder %v4387, 8.507059e+37
  %v4389 = vand.u32 %v4066, 2147483648
  %v4390 = vor.u32 1.1754944e-38, %v4389
  %v4391 = vsel %vm4388, %v4390, %v4386
  %v4392 = vmul.f32 1.0, %v4391
  %v4393 = vrcp.pop %v4067
  %v4394 = vmul.f32 %v4067, %v4393
  %v4395 = vsub.f32 1.0, %v4394
  %v4396 = vmul.f32 %v4393, %v4395
  %v4397 = vadd.f32 %v4393, %v4396
  %vm4398 = vweird.f32 %v4067
  %vm4399 = vweird.f32 %v4393
  %vm4400 = vmor %vm4398, %vm4399
  %v4401 = vsel %vm4400, %v4393, %v4397
  %v4402 = vand.u32 2147483647, %v4067
  %vm4403 = vcmp.eq.f32.partialorder %v4402, 8.507059e+37
  %v4404 = vand.u32 %v4067, 2147483648
  %v4405 = vor.u32 1.1754944e-38, %v4404
  %v4406 = vsel %vm4403, %v4405, %v4401
  %v4407 = vmul.f32 1.0, %v4406
  %v4408 = vrcp.pop %v4068
  %v4409 = vmul.f32 %v4068, %v4408
  %v4410 = vsub.f32 1.0, %v4409
  %v4411 = vmul.f32 %v4408, %v4410
  %v4412 = vadd.f32 %v4408, %v4411
  %vm4413 = vweird.f32 %v4068
  %vm4414 = vweird.f32 %v4408
  %vm4415 = vmor %vm4413, %vm4414
  %v4416 = vsel %vm4415, %v4408, %v4412
  %v4417 = vand.u32 2147483647, %v4068
  %vm4418 = vcmp.eq.f32.partialorder %v4417, 8.507059e+37
  %v4419 = vand.u32 %v4068, 2147483648
  %v4420 = vor.u32 1.1754944e-38, %v4419
  %v4421 = vsel %vm4418, %v4420, %v4416
  %v4422 = vmul.f32 1.0, %v4421
  %v4423 = vrcp.pop %v4069
  %v4424 = vmul.f32 %v4069, %v4423
  %v4425 = vsub.f32 1.0, %v4424
  %v4426 = vmul.f32 %v4423, %v4425
  %v4427 = vadd.f32 %v4423, %v4426
  %vm4428 = vweird.f32 %v4069
  %vm4429 = vweird.f32 %v4423
  %vm4430 = vmor %vm4428, %vm4429
  %v4431 = vsel %vm4430, %v4423, %v4427
  %v4432 = vand.u32 2147483647, %v4069
  %vm4433 = vcmp.eq.f32.partialorder %v4432, 8.507059e+37
  %v4434 = vand.u32 %v4069, 2147483648
  %v4435 = vor.u32 1.1754944e-38, %v4434
  %v4436 = vsel %vm4433, %v4435, %v4431
  %v4437 = vmul.f32 1.0, %v4436
  %v4438 = vrcp.pop %v4070
  %v4439 = vmul.f32 %v4070, %v4438
  %v4440 = vsub.f32 1.0, %v4439
  %v4441 = vmul.f32 %v4438, %v4440
  %v4442 = vadd.f32 %v4438, %v4441
  %vm4443 = vweird.f32 %v4070
  %vm4444 = vweird.f32 %v4438
  %vm4445 = vmor %vm4443, %vm4444
  %v4446 = vsel %vm4445, %v4438, %v4442
  %v4447 = vand.u32 2147483647, %v4070
  %vm4448 = vcmp.eq.f32.partialorder %v4447, 8.507059e+37
  %v4449 = vand.u32 %v4070, 2147483648
  %v4450 = vor.u32 1.1754944e-38, %v4449
  %v4451 = vsel %vm4448, %v4450, %v4446
  %v4452 = vmul.f32 1.0, %v4451
  %v4453 = vrcp.pop %v4071
  %v4454 = vmul.f32 %v4071, %v4453
  %v4455 = vsub.f32 1.0, %v4454
  %v4456 = vmul.f32 %v4453, %v4455
  %v4457 = vadd.f32 %v4453, %v4456
  %vm4458 = vweird.f32 %v4071
  %vm4459 = vweird.f32 %v4453
  %vm4460 = vmor %vm4458, %vm4459
  %v4461 = vsel %vm4460, %v4453, %v4457
  %v4462 = vand.u32 2147483647, %v4071
  %vm4463 = vcmp.eq.f32.partialorder %v4462, 8.507059e+37
  %v4464 = vand.u32 %v4071, 2147483648
  %v4465 = vor.u32 1.1754944e-38, %v4464
  %v4466 = vsel %vm4463, %v4465, %v4461
  %v4467 = vmul.f32 1.0, %v4466
  %v4468 = vrcp.pop %v4072
  %v4469 = vmul.f32 %v4072, %v4468
  %v4470 = vsub.f32 1.0, %v4469
  %v4471 = vmul.f32 %v4468, %v4470
  %v4472 = vadd.f32 %v4468, %v4471
  %vm4473 = vweird.f32 %v4072
  %vm4474 = vweird.f32 %v4468
  %vm4475 = vmor %vm4473, %vm4474
  %v4476 = vsel %vm4475, %v4468, %v4472
  %v4477 = vand.u32 2147483647, %v4072
  %vm4478 = vcmp.eq.f32.partialorder %v4477, 8.507059e+37
  %v4479 = vand.u32 %v4072, 2147483648
  %v4480 = vor.u32 1.1754944e-38, %v4479
  %v4481 = vsel %vm4478, %v4480, %v4476
  %v4482 = vmul.f32 1.0, %v4481
  %v4483 = vrcp.pop %v4073
  %v4484 = vmul.f32 %v4073, %v4483
  %v4485 = vsub.f32 1.0, %v4484
  %v4486 = vmul.f32 %v4483, %v4485
  %v4487 = vadd.f32 %v4483, %v4486
  %vm4488 = vweird.f32 %v4073
  %vm4489 = vweird.f32 %v4483
  %vm4490 = vmor %vm4488, %vm4489
  %v4491 = vsel %vm4490, %v4483, %v4487
  %v4492 = vand.u32 2147483647, %v4073
  %vm4493 = vcmp.eq.f32.partialorder %v4492, 8.507059e+37
  %v4494 = vand.u32 %v4073, 2147483648
  %v4495 = vor.u32 1.1754944e-38, %v4494
  %v4496 = vsel %vm4493, %v4495, %v4491
  %v4497 = vmul.f32 1.0, %v4496
  %v4498 = vrcp.pop %v4074
  %v4499 = vmul.f32 %v4074, %v4498
  %v4500 = vsub.f32 1.0, %v4499
  %v4501 = vmul.f32 %v4498, %v4500
  %v4502 = vadd.f32 %v4498, %v4501
  %vm4503 = vweird.f32 %v4074
  %vm4504 = vweird.f32 %v4498
  %vm4505 = vmor %vm4503, %vm4504
  %v4506 = vsel %vm4505, %v4498, %v4502
  %v4507 = vand.u32 2147483647, %v4074
  %vm4508 = vcmp.eq.f32.partialorder %v4507, 8.507059e+37
  %v4509 = vand.u32 %v4074, 2147483648
  %v4510 = vor.u32 1.1754944e-38, %v4509
  %v4511 = vsel %vm4508, %v4510, %v4506
  %v4512 = vmul.f32 1.0, %v4511
  %v4513 = vrcp.pop %v4075
  %v4514 = vmul.f32 %v4075, %v4513
  %v4515 = vsub.f32 1.0, %v4514
  %v4516 = vmul.f32 %v4513, %v4515
  %v4517 = vadd.f32 %v4513, %v4516
  %vm4518 = vweird.f32 %v4075
  %vm4519 = vweird.f32 %v4513
  %vm4520 = vmor %vm4518, %vm4519
  %v4521 = vsel %vm4520, %v4513, %v4517
  %v4522 = vand.u32 2147483647, %v4075
  %vm4523 = vcmp.eq.f32.partialorder %v4522, 8.507059e+37
  %v4524 = vand.u32 %v4075, 2147483648
  %v4525 = vor.u32 1.1754944e-38, %v4524
  %v4526 = vsel %vm4523, %v4525, %v4521
  %v4527 = vmul.f32 1.0, %v4526
  %v4528 = vrcp.pop %v4076
  %v4529 = vmul.f32 %v4076, %v4528
  %v4530 = vsub.f32 1.0, %v4529
  %v4531 = vmul.f32 %v4528, %v4530
  %v4532 = vadd.f32 %v4528, %v4531
  %vm4533 = vweird.f32 %v4076
  %vm4534 = vweird.f32 %v4528
  %vm4535 = vmor %vm4533, %vm4534
  %v4536 = vsel %vm4535, %v4528, %v4532
  %v4537 = vand.u32 2147483647, %v4076
  %vm4538 = vcmp.eq.f32.partialorder %v4537, 8.507059e+37
  %v4539 = vand.u32 %v4076, 2147483648
  %v4540 = vor.u32 1.1754944e-38, %v4539
  %v4541 = vsel %vm4538, %v4540, %v4536
  %v4542 = vmul.f32 1.0, %v4541
  %v4543 = vrcp.pop %v4077
  %v4544 = vmul.f32 %v4077, %v4543
  %v4545 = vsub.f32 1.0, %v4544
  %v4546 = vmul.f32 %v4543, %v4545
  %v4547 = vadd.f32 %v4543, %v4546
  %vm4548 = vweird.f32 %v4077
  %vm4549 = vweird.f32 %v4543
  %vm4550 = vmor %vm4548, %vm4549
  %v4551 = vsel %vm4550, %v4543, %v4547
  %v4552 = vand.u32 2147483647, %v4077
  %vm4553 = vcmp.eq.f32.partialorder %v4552, 8.507059e+37
  %v4554 = vand.u32 %v4077, 2147483648
  %v4555 = vor.u32 1.1754944e-38, %v4554
  %v4556 = vsel %vm4553, %v4555, %v4551
  %v4557 = vmul.f32 1.0, %v4556
  %v4558 = vadd.f32 %v3467, %v3750
  %v4559 = vadd.f32 %v3469, %v3752
  %v4560 = vadd.f32 %v3472, %v3755
  %v4561 = vadd.f32 %v3474, %v3757
  %v4562 = vadd.f32 %v3477, %v3760
  %v4563 = vadd.f32 %v3479, %v3762
  %v4564 = vadd.f32 %v3482, %v3765
  %v4565 = vadd.f32 %v3484, %v3767
  %v4566 = vadd.f32 %v3487, %v3770
  %v4567 = vadd.f32 %v3489, %v3772
  %v4568 = vadd.f32 %v3492, %v3775
  %v4569 = vadd.f32 %v3494, %v3777
  %v4570 = vadd.f32 %v3497, %v3780
  %v4571 = vadd.f32 %v3499, %v3782
  %v4572 = vadd.f32 %v3502, %v3785
  %v4573 = vadd.f32 %v3504, %v3787
  %v4574 = vadd.f32 %v3507, %v3790
  %v4575 = vadd.f32 %v3509, %v3792
  %v4576 = vadd.f32 %v3512, %v3795
  %v4577 = vadd.f32 %v3514, %v3797
  %v4578 = vadd.f32 %v3517, %v3800
  %v4579 = vadd.f32 %v3519, %v3802
  %v4580 = vadd.f32 %v3522, %v3805
  %v4581 = vadd.f32 %v3524, %v3807
  %v4582 = vadd.f32 %v3527, %v3810
  %v4583 = vadd.f32 %v3529, %v3812
  %v4584 = vadd.f32 %v3532, %v3815
  %v4585 = vadd.f32 %v3534, %v3817
  %v4586 = vadd.f32 %v3537, %v3820
  %v4587 = vadd.f32 %v3539, %v3822
  %v4588 = vadd.f32 %v3542, %v3825
  %v4589 = vadd.f32 %v3544, %v3827
  %v4590 = vxor.u32 %v4558, 2147483648
  %v4591 = vxor.u32 %v4559, 2147483648
  %v4592 = vxor.u32 %v4560, 2147483648
  %v4593 = vxor.u32 %v4561, 2147483648
  %v4594 = vxor.u32 %v4562, 2147483648
  %v4595 = vxor.u32 %v4563, 2147483648
  %v4596 = vxor.u32 %v4564, 2147483648
  %v4597 = vxor.u32 %v4565, 2147483648
  %v4598 = vxor.u32 %v4566, 2147483648
  %v4599 = vxor.u32 %v4567, 2147483648
  %v4600 = vxor.u32 %v4568, 2147483648
  %v4601 = vxor.u32 %v4569, 2147483648
  %v4602 = vxor.u32 %v4570, 2147483648
  %v4603 = vxor.u32 %v4571, 2147483648
  %v4604 = vxor.u32 %v4572, 2147483648
  %v4605 = vxor.u32 %v4573, 2147483648
  %v4606 = vxor.u32 %v4574, 2147483648
  %v4607 = vxor.u32 %v4575, 2147483648
  %v4608 = vxor.u32 %v4576, 2147483648
  %v4609 = vxor.u32 %v4577, 2147483648
  %v4610 = vxor.u32 %v4578, 2147483648
  %v4611 = vxor.u32 %v4579, 2147483648
  %v4612 = vxor.u32 %v4580, 2147483648
  %v4613 = vxor.u32 %v4581, 2147483648
  %v4614 = vxor.u32 %v4582, 2147483648
  %v4615 = vxor.u32 %v4583, 2147483648
  %v4616 = vxor.u32 %v4584, 2147483648
  %v4617 = vxor.u32 %v4585, 2147483648
  %v4618 = vxor.u32 %v4586, 2147483648
  %v4619 = vxor.u32 %v4587, 2147483648
  %v4620 = vxor.u32 %v4588, 2147483648
  %v4621 = vxor.u32 %v4589, 2147483648
  %v4622 = vmul.f32 %v4590, 1.442695
  %v4623 = vpow.pop %v4622
  %v4624 = vmul.f32 %v4591, 1.442695
  %v4625 = vpow.pop %v4624
  %v4626 = vmul.f32 %v4592, 1.442695
  %v4627 = vpow.pop %v4626
  %v4628 = vmul.f32 %v4593, 1.442695
  %v4629 = vpow.pop %v4628
  %v4630 = vmul.f32 %v4594, 1.442695
  %v4631 = vpow.pop %v4630
  %v4632 = vmul.f32 %v4595, 1.442695
  %v4633 = vpow.pop %v4632
  %v4634 = vmul.f32 %v4596, 1.442695
  %v4635 = vpow.pop %v4634
  %v4636 = vmul.f32 %v4597, 1.442695
  %v4637 = vpow.pop %v4636
  %v4638 = vmul.f32 %v4598, 1.442695
  %v4639 = vpow.pop %v4638
  %v4640 = vmul.f32 %v4599, 1.442695
  %v4641 = vpow.pop %v4640
  %v4642 = vmul.f32 %v4600, 1.442695
  %v4643 = vpow.pop %v4642
  %v4644 = vmul.f32 %v4601, 1.442695
  %v4645 = vpow.pop %v4644
  %v4646 = vmul.f32 %v4602, 1.442695
  %v4647 = vpow.pop %v4646
  %v4648 = vmul.f32 %v4603, 1.442695
  %v4649 = vpow.pop %v4648
  %v4650 = vmul.f32 %v4604, 1.442695
  %v4651 = vpow.pop %v4650
  %v4652 = vmul.f32 %v4605, 1.442695
  %v4653 = vpow.pop %v4652
  %v4654 = vmul.f32 %v4606, 1.442695
  %v4655 = vpow.pop %v4654
  %v4656 = vmul.f32 %v4607, 1.442695
  %v4657 = vpow.pop %v4656
  %v4658 = vmul.f32 %v4608, 1.442695
  %v4659 = vpow.pop %v4658
  %v4660 = vmul.f32 %v4609, 1.442695
  %v4661 = vpow.pop %v4660
  %v4662 = vmul.f32 %v4610, 1.442695
  %v4663 = vpow.pop %v4662
  %v4664 = vmul.f32 %v4611, 1.442695
  %v4665 = vpow.pop %v4664
  %v4666 = vmul.f32 %v4612, 1.442695
  %v4667 = vpow.pop %v4666
  %v4668 = vmul.f32 %v4613, 1.442695
  %v4669 = vpow.pop %v4668
  %v4670 = vmul.f32 %v4614, 1.442695
  %v4671 = vpow.pop %v4670
  %v4672 = vmul.f32 %v4615, 1.442695
  %v4673 = vpow.pop %v4672
  %v4674 = vmul.f32 %v4616, 1.442695
  %v4675 = vpow.pop %v4674
  %v4676 = vmul.f32 %v4617, 1.442695
  %v4677 = vpow.pop %v4676
  %v4678 = vmul.f32 %v4618, 1.442695
  %v4679 = vpow.pop %v4678
  %v4680 = vmul.f32 %v4619, 1.442695
  %v4681 = vpow.pop %v4680
  %v4682 = vmul.f32 %v4620, 1.442695
  %v4683 = vpow.pop %v4682
  %v4684 = vmul.f32 %v4621, 1.442695
  %v4685 = vpow.pop %v4684
  %v4686 = vadd.f32 %v4623, 1.0
  %v4687 = vadd.f32 %v4625, 1.0
  %v4688 = vadd.f32 %v4627, 1.0
  %v4689 = vadd.f32 %v4629, 1.0
  %v4690 = vadd.f32 %v4631, 1.0
  %v4691 = vadd.f32 %v4633, 1.0
  %v4692 = vadd.f32 %v4635, 1.0
  %v4693 = vadd.f32 %v4637, 1.0
  %v4694 = vadd.f32 %v4639, 1.0
  %v4695 = vadd.f32 %v4641, 1.0
  %v4696 = vadd.f32 %v4643, 1.0
  %v4697 = vadd.f32 %v4645, 1.0
  %v4698 = vadd.f32 %v4647, 1.0
  %v4699 = vadd.f32 %v4649, 1.0
  %v4700 = vadd.f32 %v4651, 1.0
  %v4701 = vadd.f32 %v4653, 1.0
  %v4702 = vadd.f32 %v4655, 1.0
  %v4703 = vadd.f32 %v4657, 1.0
  %v4704 = vadd.f32 %v4659, 1.0
  %v4705 = vadd.f32 %v4661, 1.0
  %v4706 = vadd.f32 %v4663, 1.0
  %v4707 = vadd.f32 %v4665, 1.0
  %v4708 = vadd.f32 %v4667, 1.0
  %v4709 = vadd.f32 %v4669, 1.0
  %v4710 = vadd.f32 %v4671, 1.0
  %v4711 = vadd.f32 %v4673, 1.0
  %v4712 = vadd.f32 %v4675, 1.0
  %v4713 = vadd.f32 %v4677, 1.0
  %v4714 = vadd.f32 %v4679, 1.0
  %v4715 = vadd.f32 %v4681, 1.0
  %v4716 = vadd.f32 %v4683, 1.0
  %v4717 = vadd.f32 %v4685, 1.0
  %v4718 = vrcp.pop %v4686
  %v4719 = vmul.f32 %v4686, %v4718
  %v4720 = vsub.f32 1.0, %v4719
  %v4721 = vmul.f32 %v4718, %v4720
  %v4722 = vadd.f32 %v4718, %v4721
  %vm4723 = vweird.f32 %v4686
  %vm4724 = vweird.f32 %v4718
  %vm4725 = vmor %vm4723, %vm4724
  %v4726 = vsel %vm4725, %v4718, %v4722
  %v4727 = vand.u32 2147483647, %v4686
  %vm4728 = vcmp.eq.f32.partialorder %v4727, 8.507059e+37
  %v4729 = vand.u32 %v4686, 2147483648
  %v4730 = vor.u32 1.1754944e-38, %v4729
  %v4731 = vsel %vm4728, %v4730, %v4726
  %v4732 = vmul.f32 1.0, %v4731
  %v4733 = vrcp.pop %v4687
  %v4734 = vmul.f32 %v4687, %v4733
  %v4735 = vsub.f32 1.0, %v4734
  %v4736 = vmul.f32 %v4733, %v4735
  %v4737 = vadd.f32 %v4733, %v4736
  %vm4738 = vweird.f32 %v4687
  %vm4739 = vweird.f32 %v4733
  %vm4740 = vmor %vm4738, %vm4739
  %v4741 = vsel %vm4740, %v4733, %v4737
  %v4742 = vand.u32 2147483647, %v4687
  %vm4743 = vcmp.eq.f32.partialorder %v4742, 8.507059e+37
  %v4744 = vand.u32 %v4687, 2147483648
  %v4745 = vor.u32 1.1754944e-38, %v4744
  %v4746 = vsel %vm4743, %v4745, %v4741
  %v4747 = vmul.f32 1.0, %v4746
  %v4748 = vrcp.pop %v4688
  %v4749 = vmul.f32 %v4688, %v4748
  %v4750 = vsub.f32 1.0, %v4749
  %v4751 = vmul.f32 %v4748, %v4750
  %v4752 = vadd.f32 %v4748, %v4751
  %vm4753 = vweird.f32 %v4688
  %vm4754 = vweird.f32 %v4748
  %vm4755 = vmor %vm4753, %vm4754
  %v4756 = vsel %vm4755, %v4748, %v4752
  %v4757 = vand.u32 2147483647, %v4688
  %vm4758 = vcmp.eq.f32.partialorder %v4757, 8.507059e+37
  %v4759 = vand.u32 %v4688, 2147483648
  %v4760 = vor.u32 1.1754944e-38, %v4759
  %v4761 = vsel %vm4758, %v4760, %v4756
  %v4762 = vmul.f32 1.0, %v4761
  %v4763 = vrcp.pop %v4689
  %v4764 = vmul.f32 %v4689, %v4763
  %v4765 = vsub.f32 1.0, %v4764
  %v4766 = vmul.f32 %v4763, %v4765
  %v4767 = vadd.f32 %v4763, %v4766
  %vm4768 = vweird.f32 %v4689
  %vm4769 = vweird.f32 %v4763
  %vm4770 = vmor %vm4768, %vm4769
  %v4771 = vsel %vm4770, %v4763, %v4767
  %v4772 = vand.u32 2147483647, %v4689
  %vm4773 = vcmp.eq.f32.partialorder %v4772, 8.507059e+37
  %v4774 = vand.u32 %v4689, 2147483648
  %v4775 = vor.u32 1.1754944e-38, %v4774
  %v4776 = vsel %vm4773, %v4775, %v4771
  %v4777 = vmul.f32 1.0, %v4776
  %v4778 = vrcp.pop %v4690
  %v4779 = vmul.f32 %v4690, %v4778
  %v4780 = vsub.f32 1.0, %v4779
  %v4781 = vmul.f32 %v4778, %v4780
  %v4782 = vadd.f32 %v4778, %v4781
  %vm4783 = vweird.f32 %v4690
  %vm4784 = vweird.f32 %v4778
  %vm4785 = vmor %vm4783, %vm4784
  %v4786 = vsel %vm4785, %v4778, %v4782
  %v4787 = vand.u32 2147483647, %v4690
  %vm4788 = vcmp.eq.f32.partialorder %v4787, 8.507059e+37
  %v4789 = vand.u32 %v4690, 2147483648
  %v4790 = vor.u32 1.1754944e-38, %v4789
  %v4791 = vsel %vm4788, %v4790, %v4786
  %v4792 = vmul.f32 1.0, %v4791
  %v4793 = vrcp.pop %v4691
  %v4794 = vmul.f32 %v4691, %v4793
  %v4795 = vsub.f32 1.0, %v4794
  %v4796 = vmul.f32 %v4793, %v4795
  %v4797 = vadd.f32 %v4793, %v4796
  %vm4798 = vweird.f32 %v4691
  %vm4799 = vweird.f32 %v4793
  %vm4800 = vmor %vm4798, %vm4799
  %v4801 = vsel %vm4800, %v4793, %v4797
  %v4802 = vand.u32 2147483647, %v4691
  %vm4803 = vcmp.eq.f32.partialorder %v4802, 8.507059e+37
  %v4804 = vand.u32 %v4691, 2147483648
  %v4805 = vor.u32 1.1754944e-38, %v4804
  %v4806 = vsel %vm4803, %v4805, %v4801
  %v4807 = vmul.f32 1.0, %v4806
  %v4808 = vrcp.pop %v4692
  %v4809 = vmul.f32 %v4692, %v4808
  %v4810 = vsub.f32 1.0, %v4809
  %v4811 = vmul.f32 %v4808, %v4810
  %v4812 = vadd.f32 %v4808, %v4811
  %vm4813 = vweird.f32 %v4692
  %vm4814 = vweird.f32 %v4808
  %vm4815 = vmor %vm4813, %vm4814
  %v4816 = vsel %vm4815, %v4808, %v4812
  %v4817 = vand.u32 2147483647, %v4692
  %vm4818 = vcmp.eq.f32.partialorder %v4817, 8.507059e+37
  %v4819 = vand.u32 %v4692, 2147483648
  %v4820 = vor.u32 1.1754944e-38, %v4819
  %v4821 = vsel %vm4818, %v4820, %v4816
  %v4822 = vmul.f32 1.0, %v4821
  %v4823 = vrcp.pop %v4693
  %v4824 = vmul.f32 %v4693, %v4823
  %v4825 = vsub.f32 1.0, %v4824
  %v4826 = vmul.f32 %v4823, %v4825
  %v4827 = vadd.f32 %v4823, %v4826
  %vm4828 = vweird.f32 %v4693
  %vm4829 = vweird.f32 %v4823
  %vm4830 = vmor %vm4828, %vm4829
  %v4831 = vsel %vm4830, %v4823, %v4827
  %v4832 = vand.u32 2147483647, %v4693
  %vm4833 = vcmp.eq.f32.partialorder %v4832, 8.507059e+37
  %v4834 = vand.u32 %v4693, 2147483648
  %v4835 = vor.u32 1.1754944e-38, %v4834
  %v4836 = vsel %vm4833, %v4835, %v4831
  %v4837 = vmul.f32 1.0, %v4836
  %v4838 = vrcp.pop %v4694
  %v4839 = vmul.f32 %v4694, %v4838
  %v4840 = vsub.f32 1.0, %v4839
  %v4841 = vmul.f32 %v4838, %v4840
  %v4842 = vadd.f32 %v4838, %v4841
  %vm4843 = vweird.f32 %v4694
  %vm4844 = vweird.f32 %v4838
  %vm4845 = vmor %vm4843, %vm4844
  %v4846 = vsel %vm4845, %v4838, %v4842
  %v4847 = vand.u32 2147483647, %v4694
  %vm4848 = vcmp.eq.f32.partialorder %v4847, 8.507059e+37
  %v4849 = vand.u32 %v4694, 2147483648
  %v4850 = vor.u32 1.1754944e-38, %v4849
  %v4851 = vsel %vm4848, %v4850, %v4846
  %v4852 = vmul.f32 1.0, %v4851
  %v4853 = vrcp.pop %v4695
  %v4854 = vmul.f32 %v4695, %v4853
  %v4855 = vsub.f32 1.0, %v4854
  %v4856 = vmul.f32 %v4853, %v4855
  %v4857 = vadd.f32 %v4853, %v4856
  %vm4858 = vweird.f32 %v4695
  %vm4859 = vweird.f32 %v4853
  %vm4860 = vmor %vm4858, %vm4859
  %v4861 = vsel %vm4860, %v4853, %v4857
  %v4862 = vand.u32 2147483647, %v4695
  %vm4863 = vcmp.eq.f32.partialorder %v4862, 8.507059e+37
  %v4864 = vand.u32 %v4695, 2147483648
  %v4865 = vor.u32 1.1754944e-38, %v4864
  %v4866 = vsel %vm4863, %v4865, %v4861
  %v4867 = vmul.f32 1.0, %v4866
  %v4868 = vrcp.pop %v4696
  %v4869 = vmul.f32 %v4696, %v4868
  %v4870 = vsub.f32 1.0, %v4869
  %v4871 = vmul.f32 %v4868, %v4870
  %v4872 = vadd.f32 %v4868, %v4871
  %vm4873 = vweird.f32 %v4696
  %vm4874 = vweird.f32 %v4868
  %vm4875 = vmor %vm4873, %vm4874
  %v4876 = vsel %vm4875, %v4868, %v4872
  %v4877 = vand.u32 2147483647, %v4696
  %vm4878 = vcmp.eq.f32.partialorder %v4877, 8.507059e+37
  %v4879 = vand.u32 %v4696, 2147483648
  %v4880 = vor.u32 1.1754944e-38, %v4879
  %v4881 = vsel %vm4878, %v4880, %v4876
  %v4882 = vmul.f32 1.0, %v4881
  %v4883 = vrcp.pop %v4697
  %v4884 = vmul.f32 %v4697, %v4883
  %v4885 = vsub.f32 1.0, %v4884
  %v4886 = vmul.f32 %v4883, %v4885
  %v4887 = vadd.f32 %v4883, %v4886
  %vm4888 = vweird.f32 %v4697
  %vm4889 = vweird.f32 %v4883
  %vm4890 = vmor %vm4888, %vm4889
  %v4891 = vsel %vm4890, %v4883, %v4887
  %v4892 = vand.u32 2147483647, %v4697
  %vm4893 = vcmp.eq.f32.partialorder %v4892, 8.507059e+37
  %v4894 = vand.u32 %v4697, 2147483648
  %v4895 = vor.u32 1.1754944e-38, %v4894
  %v4896 = vsel %vm4893, %v4895, %v4891
  %v4897 = vmul.f32 1.0, %v4896
  %v4898 = vrcp.pop %v4698
  %v4899 = vmul.f32 %v4698, %v4898
  %v4900 = vsub.f32 1.0, %v4899
  %v4901 = vmul.f32 %v4898, %v4900
  %v4902 = vadd.f32 %v4898, %v4901
  %vm4903 = vweird.f32 %v4698
  %vm4904 = vweird.f32 %v4898
  %vm4905 = vmor %vm4903, %vm4904
  %v4906 = vsel %vm4905, %v4898, %v4902
  %v4907 = vand.u32 2147483647, %v4698
  %vm4908 = vcmp.eq.f32.partialorder %v4907, 8.507059e+37
  %v4909 = vand.u32 %v4698, 2147483648
  %v4910 = vor.u32 1.1754944e-38, %v4909
  %v4911 = vsel %vm4908, %v4910, %v4906
  %v4912 = vmul.f32 1.0, %v4911
  %v4913 = vrcp.pop %v4699
  %v4914 = vmul.f32 %v4699, %v4913
  %v4915 = vsub.f32 1.0, %v4914
  %v4916 = vmul.f32 %v4913, %v4915
  %v4917 = vadd.f32 %v4913, %v4916
  %vm4918 = vweird.f32 %v4699
  %vm4919 = vweird.f32 %v4913
  %vm4920 = vmor %vm4918, %vm4919
  %v4921 = vsel %vm4920, %v4913, %v4917
  %v4922 = vand.u32 2147483647, %v4699
  %vm4923 = vcmp.eq.f32.partialorder %v4922, 8.507059e+37
  %v4924 = vand.u32 %v4699, 2147483648
  %v4925 = vor.u32 1.1754944e-38, %v4924
  %v4926 = vsel %vm4923, %v4925, %v4921
  %v4927 = vmul.f32 1.0, %v4926
  %v4928 = vrcp.pop %v4700
  %v4929 = vmul.f32 %v4700, %v4928
  %v4930 = vsub.f32 1.0, %v4929
  %v4931 = vmul.f32 %v4928, %v4930
  %v4932 = vadd.f32 %v4928, %v4931
  %vm4933 = vweird.f32 %v4700
  %vm4934 = vweird.f32 %v4928
  %vm4935 = vmor %vm4933, %vm4934
  %v4936 = vsel %vm4935, %v4928, %v4932
  %v4937 = vand.u32 2147483647, %v4700
  %vm4938 = vcmp.eq.f32.partialorder %v4937, 8.507059e+37
  %v4939 = vand.u32 %v4700, 2147483648
  %v4940 = vor.u32 1.1754944e-38, %v4939
  %v4941 = vsel %vm4938, %v4940, %v4936
  %v4942 = vmul.f32 1.0, %v4941
  %v4943 = vrcp.pop %v4701
  %v4944 = vmul.f32 %v4701, %v4943
  %v4945 = vsub.f32 1.0, %v4944
  %v4946 = vmul.f32 %v4943, %v4945
  %v4947 = vadd.f32 %v4943, %v4946
  %vm4948 = vweird.f32 %v4701
  %vm4949 = vweird.f32 %v4943
  %vm4950 = vmor %vm4948, %vm4949
  %v4951 = vsel %vm4950, %v4943, %v4947
  %v4952 = vand.u32 2147483647, %v4701
  %vm4953 = vcmp.eq.f32.partialorder %v4952, 8.507059e+37
  %v4954 = vand.u32 %v4701, 2147483648
  %v4955 = vor.u32 1.1754944e-38, %v4954
  %v4956 = vsel %vm4953, %v4955, %v4951
  %v4957 = vmul.f32 1.0, %v4956
  %v4958 = vrcp.pop %v4702
  %v4959 = vmul.f32 %v4702, %v4958
  %v4960 = vsub.f32 1.0, %v4959
  %v4961 = vmul.f32 %v4958, %v4960
  %v4962 = vadd.f32 %v4958, %v4961
  %vm4963 = vweird.f32 %v4702
  %vm4964 = vweird.f32 %v4958
  %vm4965 = vmor %vm4963, %vm4964
  %v4966 = vsel %vm4965, %v4958, %v4962
  %v4967 = vand.u32 2147483647, %v4702
  %vm4968 = vcmp.eq.f32.partialorder %v4967, 8.507059e+37
  %v4969 = vand.u32 %v4702, 2147483648
  %v4970 = vor.u32 1.1754944e-38, %v4969
  %v4971 = vsel %vm4968, %v4970, %v4966
  %v4972 = vmul.f32 1.0, %v4971
  %v4973 = vrcp.pop %v4703
  %v4974 = vmul.f32 %v4703, %v4973
  %v4975 = vsub.f32 1.0, %v4974
  %v4976 = vmul.f32 %v4973, %v4975
  %v4977 = vadd.f32 %v4973, %v4976
  %vm4978 = vweird.f32 %v4703
  %vm4979 = vweird.f32 %v4973
  %vm4980 = vmor %vm4978, %vm4979
  %v4981 = vsel %vm4980, %v4973, %v4977
  %v4982 = vand.u32 2147483647, %v4703
  %vm4983 = vcmp.eq.f32.partialorder %v4982, 8.507059e+37
  %v4984 = vand.u32 %v4703, 2147483648
  %v4985 = vor.u32 1.1754944e-38, %v4984
  %v4986 = vsel %vm4983, %v4985, %v4981
  %v4987 = vmul.f32 1.0, %v4986
  %v4988 = vrcp.pop %v4704
  %v4989 = vmul.f32 %v4704, %v4988
  %v4990 = vsub.f32 1.0, %v4989
  %v4991 = vmul.f32 %v4988, %v4990
  %v4992 = vadd.f32 %v4988, %v4991
  %vm4993 = vweird.f32 %v4704
  %vm4994 = vweird.f32 %v4988
  %vm4995 = vmor %vm4993, %vm4994
  %v4996 = vsel %vm4995, %v4988, %v4992
  %v4997 = vand.u32 2147483647, %v4704
  %vm4998 = vcmp.eq.f32.partialorder %v4997, 8.507059e+37
  %v4999 = vand.u32 %v4704, 2147483648
  %v5000 = vor.u32 1.1754944e-38, %v4999
  %v5001 = vsel %vm4998, %v5000, %v4996
  %v5002 = vmul.f32 1.0, %v5001
  %v5003 = vrcp.pop %v4705
  %v5004 = vmul.f32 %v4705, %v5003
  %v5005 = vsub.f32 1.0, %v5004
  %v5006 = vmul.f32 %v5003, %v5005
  %v5007 = vadd.f32 %v5003, %v5006
  %vm5008 = vweird.f32 %v4705
  %vm5009 = vweird.f32 %v5003
  %vm5010 = vmor %vm5008, %vm5009
  %v5011 = vsel %vm5010, %v5003, %v5007
  %v5012 = vand.u32 2147483647, %v4705
  %vm5013 = vcmp.eq.f32.partialorder %v5012, 8.507059e+37
  %v5014 = vand.u32 %v4705, 2147483648
  %v5015 = vor.u32 1.1754944e-38, %v5014
  %v5016 = vsel %vm5013, %v5015, %v5011
  %v5017 = vmul.f32 1.0, %v5016
  %v5018 = vrcp.pop %v4706
  %v5019 = vmul.f32 %v4706, %v5018
  %v5020 = vsub.f32 1.0, %v5019
  %v5021 = vmul.f32 %v5018, %v5020
  %v5022 = vadd.f32 %v5018, %v5021
  %vm5023 = vweird.f32 %v4706
  %vm5024 = vweird.f32 %v5018
  %vm5025 = vmor %vm5023, %vm5024
  %v5026 = vsel %vm5025, %v5018, %v5022
  %v5027 = vand.u32 2147483647, %v4706
  %vm5028 = vcmp.eq.f32.partialorder %v5027, 8.507059e+37
  %v5029 = vand.u32 %v4706, 2147483648
  %v5030 = vor.u32 1.1754944e-38, %v5029
  %v5031 = vsel %vm5028, %v5030, %v5026
  %v5032 = vmul.f32 1.0, %v5031
  %v5033 = vrcp.pop %v4707
  %v5034 = vmul.f32 %v4707, %v5033
  %v5035 = vsub.f32 1.0, %v5034
  %v5036 = vmul.f32 %v5033, %v5035
  %v5037 = vadd.f32 %v5033, %v5036
  %vm5038 = vweird.f32 %v4707
  %vm5039 = vweird.f32 %v5033
  %vm5040 = vmor %vm5038, %vm5039
  %v5041 = vsel %vm5040, %v5033, %v5037
  %v5042 = vand.u32 2147483647, %v4707
  %vm5043 = vcmp.eq.f32.partialorder %v5042, 8.507059e+37
  %v5044 = vand.u32 %v4707, 2147483648
  %v5045 = vor.u32 1.1754944e-38, %v5044
  %v5046 = vsel %vm5043, %v5045, %v5041
  %v5047 = vmul.f32 1.0, %v5046
  %v5048 = vrcp.pop %v4708
  %v5049 = vmul.f32 %v4708, %v5048
  %v5050 = vsub.f32 1.0, %v5049
  %v5051 = vmul.f32 %v5048, %v5050
  %v5052 = vadd.f32 %v5048, %v5051
  %vm5053 = vweird.f32 %v4708
  %vm5054 = vweird.f32 %v5048
  %vm5055 = vmor %vm5053, %vm5054
  %v5056 = vsel %vm5055, %v5048, %v5052
  %v5057 = vand.u32 2147483647, %v4708
  %vm5058 = vcmp.eq.f32.partialorder %v5057, 8.507059e+37
  %v5059 = vand.u32 %v4708, 2147483648
  %v5060 = vor.u32 1.1754944e-38, %v5059
  %v5061 = vsel %vm5058, %v5060, %v5056
  %v5062 = vmul.f32 1.0, %v5061
  %v5063 = vrcp.pop %v4709
  %v5064 = vmul.f32 %v4709, %v5063
  %v5065 = vsub.f32 1.0, %v5064
  %v5066 = vmul.f32 %v5063, %v5065
  %v5067 = vadd.f32 %v5063, %v5066
  %vm5068 = vweird.f32 %v4709
  %vm5069 = vweird.f32 %v5063
  %vm5070 = vmor %vm5068, %vm5069
  %v5071 = vsel %vm5070, %v5063, %v5067
  %v5072 = vand.u32 2147483647, %v4709
  %vm5073 = vcmp.eq.f32.partialorder %v5072, 8.507059e+37
  %v5074 = vand.u32 %v4709, 2147483648
  %v5075 = vor.u32 1.1754944e-38, %v5074
  %v5076 = vsel %vm5073, %v5075, %v5071
  %v5077 = vmul.f32 1.0, %v5076
  %v5078 = vrcp.pop %v4710
  %v5079 = vmul.f32 %v4710, %v5078
  %v5080 = vsub.f32 1.0, %v5079
  %v5081 = vmul.f32 %v5078, %v5080
  %v5082 = vadd.f32 %v5078, %v5081
  %vm5083 = vweird.f32 %v4710
  %vm5084 = vweird.f32 %v5078
  %vm5085 = vmor %vm5083, %vm5084
  %v5086 = vsel %vm5085, %v5078, %v5082
  %v5087 = vand.u32 2147483647, %v4710
  %vm5088 = vcmp.eq.f32.partialorder %v5087, 8.507059e+37
  %v5089 = vand.u32 %v4710, 2147483648
  %v5090 = vor.u32 1.1754944e-38, %v5089
  %v5091 = vsel %vm5088, %v5090, %v5086
  %v5092 = vmul.f32 1.0, %v5091
  %v5093 = vrcp.pop %v4711
  %v5094 = vmul.f32 %v4711, %v5093
  %v5095 = vsub.f32 1.0, %v5094
  %v5096 = vmul.f32 %v5093, %v5095
  %v5097 = vadd.f32 %v5093, %v5096
  %vm5098 = vweird.f32 %v4711
  %vm5099 = vweird.f32 %v5093
  %vm5100 = vmor %vm5098, %vm5099
  %v5101 = vsel %vm5100, %v5093, %v5097
  %v5102 = vand.u32 2147483647, %v4711
  %vm5103 = vcmp.eq.f32.partialorder %v5102, 8.507059e+37
  %v5104 = vand.u32 %v4711, 2147483648
  %v5105 = vor.u32 1.1754944e-38, %v5104
  %v5106 = vsel %vm5103, %v5105, %v5101
  %v5107 = vmul.f32 1.0, %v5106
  %v5108 = vrcp.pop %v4712
  %v5109 = vmul.f32 %v4712, %v5108
  %v5110 = vsub.f32 1.0, %v5109
  %v5111 = vmul.f32 %v5108, %v5110
  %v5112 = vadd.f32 %v5108, %v5111
  %vm5113 = vweird.f32 %v4712
  %vm5114 = vweird.f32 %v5108
  %vm5115 = vmor %vm5113, %vm5114
  %v5116 = vsel %vm5115, %v5108, %v5112
  %v5117 = vand.u32 2147483647, %v4712
  %vm5118 = vcmp.eq.f32.partialorder %v5117, 8.507059e+37
  %v5119 = vand.u32 %v4712, 2147483648
  %v5120 = vor.u32 1.1754944e-38, %v5119
  %v5121 = vsel %vm5118, %v5120, %v5116
  %v5122 = vmul.f32 1.0, %v5121
  %v5123 = vrcp.pop %v4713
  %v5124 = vmul.f32 %v4713, %v5123
  %v5125 = vsub.f32 1.0, %v5124
  %v5126 = vmul.f32 %v5123, %v5125
  %v5127 = vadd.f32 %v5123, %v5126
  %vm5128 = vweird.f32 %v4713
  %vm5129 = vweird.f32 %v5123
  %vm5130 = vmor %vm5128, %vm5129
  %v5131 = vsel %vm5130, %v5123, %v5127
  %v5132 = vand.u32 2147483647, %v4713
  %vm5133 = vcmp.eq.f32.partialorder %v5132, 8.507059e+37
  %v5134 = vand.u32 %v4713, 2147483648
  %v5135 = vor.u32 1.1754944e-38, %v5134
  %v5136 = vsel %vm5133, %v5135, %v5131
  %v5137 = vmul.f32 1.0, %v5136
  %v5138 = vrcp.pop %v4714
  %v5139 = vmul.f32 %v4714, %v5138
  %v5140 = vsub.f32 1.0, %v5139
  %v5141 = vmul.f32 %v5138, %v5140
  %v5142 = vadd.f32 %v5138, %v5141
  %vm5143 = vweird.f32 %v4714
  %vm5144 = vweird.f32 %v5138
  %vm5145 = vmor %vm5143, %vm5144
  %v5146 = vsel %vm5145, %v5138, %v5142
  %v5147 = vand.u32 2147483647, %v4714
  %vm5148 = vcmp.eq.f32.partialorder %v5147, 8.507059e+37
  %v5149 = vand.u32 %v4714, 2147483648
  %v5150 = vor.u32 1.1754944e-38, %v5149
  %v5151 = vsel %vm5148, %v5150, %v5146
  %v5152 = vmul.f32 1.0, %v5151
  %v5153 = vrcp.pop %v4715
  %v5154 = vmul.f32 %v4715, %v5153
  %v5155 = vsub.f32 1.0, %v5154
  %v5156 = vmul.f32 %v5153, %v5155
  %v5157 = vadd.f32 %v5153, %v5156
  %vm5158 = vweird.f32 %v4715
  %vm5159 = vweird.f32 %v5153
  %vm5160 = vmor %vm5158, %vm5159
  %v5161 = vsel %vm5160, %v5153, %v5157
  %v5162 = vand.u32 2147483647, %v4715
  %vm5163 = vcmp.eq.f32.partialorder %v5162, 8.507059e+37
  %v5164 = vand.u32 %v4715, 2147483648
  %v5165 = vor.u32 1.1754944e-38, %v5164
  %v5166 = vsel %vm5163, %v5165, %v5161
  %v5167 = vmul.f32 1.0, %v5166
  %v5168 = vrcp.pop %v4716
  %v5169 = vmul.f32 %v4716, %v5168
  %v5170 = vsub.f32 1.0, %v5169
  %v5171 = vmul.f32 %v5168, %v5170
  %v5172 = vadd.f32 %v5168, %v5171
  %vm5173 = vweird.f32 %v4716
  %vm5174 = vweird.f32 %v5168
  %vm5175 = vmor %vm5173, %vm5174
  %v5176 = vsel %vm5175, %v5168, %v5172
  %v5177 = vand.u32 2147483647, %v4716
  %vm5178 = vcmp.eq.f32.partialorder %v5177, 8.507059e+37
  %v5179 = vand.u32 %v4716, 2147483648
  %v5180 = vor.u32 1.1754944e-38, %v5179
  %v5181 = vsel %vm5178, %v5180, %v5176
  %v5182 = vmul.f32 1.0, %v5181
  %v5183 = vrcp.pop %v4717
  %v5184 = vmul.f32 %v4717, %v5183
  %v5185 = vsub.f32 1.0, %v5184
  %v5186 = vmul.f32 %v5183, %v5185
  %v5187 = vadd.f32 %v5183, %v5186
  %vm5188 = vweird.f32 %v4717
  %vm5189 = vweird.f32 %v5183
  %vm5190 = vmor %vm5188, %vm5189
  %v5191 = vsel %vm5190, %v5183, %v5187
  %v5192 = vand.u32 2147483647, %v4717
  %vm5193 = vcmp.eq.f32.partialorder %v5192, 8.507059e+37
  %v5194 = vand.u32 %v4717, 2147483648
  %v5195 = vor.u32 1.1754944e-38, %v5194
  %v5196 = vsel %vm5193, %v5195, %v5191
  %v5197 = vmul.f32 1.0, %v5196
  %v5198 = vmul.f32 %v4092, %v3839
  %v5199 = vmul.f32 %v4107, %v3841
  %v5200 = vmul.f32 %v4122, %v3844
  %v5201 = vmul.f32 %v4137, %v3846
  %v5202 = vmul.f32 %v4152, %v3849
  %v5203 = vmul.f32 %v4167, %v3851
  %v5204 = vmul.f32 %v4182, %v3854
  %v5205 = vmul.f32 %v4197, %v3856
  %v5206 = vmul.f32 %v4212, %v3859
  %v5207 = vmul.f32 %v4227, %v3861
  %v5208 = vmul.f32 %v4242, %v3864
  %v5209 = vmul.f32 %v4257, %v3866
  %v5210 = vmul.f32 %v4272, %v3869
  %v5211 = vmul.f32 %v4287, %v3871
  %v5212 = vmul.f32 %v4302, %v3874
  %v5213 = vmul.f32 %v4317, %v3876
  %v5214 = vmul.f32 %v4332, %v3879
  %v5215 = vmul.f32 %v4347, %v3881
  %v5216 = vmul.f32 %v4362, %v3884
  %v5217 = vmul.f32 %v4377, %v3886
  %v5218 = vmul.f32 %v4392, %v3889
  %v5219 = vmul.f32 %v4407, %v3891
  %v5220 = vmul.f32 %v4422, %v3894
  %v5221 = vmul.f32 %v4437, %v3896
  %v5222 = vmul.f32 %v4452, %v3899
  %v5223 = vmul.f32 %v4467, %v3901
  %v5224 = vmul.f32 %v4482, %v3904
  %v5225 = vmul.f32 %v4497, %v3906
  %v5226 = vmul.f32 %v4512, %v3909
  %v5227 = vmul.f32 %v4527, %v3911
  %v5228 = vmul.f32 %v4542, %v3914
  %v5229 = vmul.f32 %v4557, %v3916
  %v5230 = vadd.f32 %v3556, %v5198
  %v5231 = vadd.f32 %v3558, %v5199
  %v5232 = vadd.f32 %v3561, %v5200
  %v5233 = vadd.f32 %v3563, %v5201
  %v5234 = vadd.f32 %v3566, %v5202
  %v5235 = vadd.f32 %v3568, %v5203
  %v5236 = vadd.f32 %v3571, %v5204
  %v5237 = vadd.f32 %v3573, %v5205
  %v5238 = vadd.f32 %v3576, %v5206
  %v5239 = vadd.f32 %v3578, %v5207
  %v5240 = vadd.f32 %v3581, %v5208
  %v5241 = vadd.f32 %v3583, %v5209
  %v5242 = vadd.f32 %v3586, %v5210
  %v5243 = vadd.f32 %v3588, %v5211
  %v5244 = vadd.f32 %v3591, %v5212
  %v5245 = vadd.f32 %v3593, %v5213
  %v5246 = vadd.f32 %v3596, %v5214
  %v5247 = vadd.f32 %v3598, %v5215
  %v5248 = vadd.f32 %v3601, %v5216
  %v5249 = vadd.f32 %v3603, %v5217
  %v5250 = vadd.f32 %v3606, %v5218
  %v5251 = vadd.f32 %v3608, %v5219
  %v5252 = vadd.f32 %v3611, %v5220
  %v5253 = vadd.f32 %v3613, %v5221
  %v5254 = vadd.f32 %v3616, %v5222
  %v5255 = vadd.f32 %v3618, %v5223
  %v5256 = vadd.f32 %v3621, %v5224
  %v5257 = vadd.f32 %v3623, %v5225
  %v5258 = vadd.f32 %v3626, %v5226
  %v5259 = vadd.f32 %v3628, %v5227
  %v5260 = vadd.f32 %v3631, %v5228
  %v5261 = vadd.f32 %v3633, %v5229
  %v5262 = vtanh.pop %v5230
  %v5263 = vtanh.pop %v5231
  %v5264 = vtanh.pop %v5232
  %v5265 = vtanh.pop %v5233
  %v5266 = vtanh.pop %v5234
  %v5267 = vtanh.pop %v5235
  %v5268 = vtanh.pop %v5236
  %v5269 = vtanh.pop %v5237
  %v5270 = vtanh.pop %v5238
  %v5271 = vtanh.pop %v5239
  %v5272 = vtanh.pop %v5240
  %v5273 = vtanh.pop %v5241
  %v5274 = vtanh.pop %v5242
  %v5275 = vtanh.pop %v5243
  %v5276 = vtanh.pop %v5244
  %v5277 = vtanh.pop %v5245
  %v5278 = vtanh.pop %v5246
  %v5279 = vtanh.pop %v5247
  %v5280 = vtanh.pop %v5248
  %v5281 = vtanh.pop %v5249
  %v5282 = vtanh.pop %v5250
  %v5283 = vtanh.pop %v5251
  %v5284 = vtanh.pop %v5252
  %v5285 = vtanh.pop %v5253
  %v5286 = vtanh.pop %v5254
  %v5287 = vtanh.pop %v5255
  %v5288 = vtanh.pop %v5256
  %v5289 = vtanh.pop %v5257
  %v5290 = vtanh.pop %v5258
  %v5291 = vtanh.pop %v5259
  %v5292 = vtanh.pop %v5260
  %v5293 = vtanh.pop %v5261
  %v5294 = vsub.f32 1.0, %v4732
  %v5295 = vsub.f32 1.0, %v4747
  %v5296 = vsub.f32 1.0, %v4762
  %v5297 = vsub.f32 1.0, %v4777
  %v5298 = vsub.f32 1.0, %v4792
  %v5299 = vsub.f32 1.0, %v4807
  %v5300 = vsub.f32 1.0, %v4822
  %v5301 = vsub.f32 1.0, %v4837
  %v5302 = vsub.f32 1.0, %v4852
  %v5303 = vsub.f32 1.0, %v4867
  %v5304 = vsub.f32 1.0, %v4882
  %v5305 = vsub.f32 1.0, %v4897
  %v5306 = vsub.f32 1.0, %v4912
  %v5307 = vsub.f32 1.0, %v4927
  %v5308 = vsub.f32 1.0, %v4942
  %v5309 = vsub.f32 1.0, %v4957
  %v5310 = vsub.f32 1.0, %v4972
  %v5311 = vsub.f32 1.0, %v4987
  %v5312 = vsub.f32 1.0, %v5002
  %v5313 = vsub.f32 1.0, %v5017
  %v5314 = vsub.f32 1.0, %v5032
  %v5315 = vsub.f32 1.0, %v5047
  %v5316 = vsub.f32 1.0, %v5062
  %v5317 = vsub.f32 1.0, %v5077
  %v5318 = vsub.f32 1.0, %v5092
  %v5319 = vsub.f32 1.0, %v5107
  %v5320 = vsub.f32 1.0, %v5122
  %v5321 = vsub.f32 1.0, %v5137
  %v5322 = vsub.f32 1.0, %v5152
  %v5323 = vsub.f32 1.0, %v5167
  %v5324 = vsub.f32 1.0, %v5182
  %v5325 = vsub.f32 1.0, %v5197
  %v5326 = vmul.f32 %v5294, %v5262
  %v5327 = vmul.f32 %v5295, %v5263
  %v5328 = vmul.f32 %v5296, %v5264
  %v5329 = vmul.f32 %v5297, %v5265
  %v5330 = vmul.f32 %v5298, %v5266
  %v5331 = vmul.f32 %v5299, %v5267
  %v5332 = vmul.f32 %v5300, %v5268
  %v5333 = vmul.f32 %v5301, %v5269
  %v5334 = vmul.f32 %v5302, %v5270
  %v5335 = vmul.f32 %v5303, %v5271
  %v5336 = vmul.f32 %v5304, %v5272
  %v5337 = vmul.f32 %v5305, %v5273
  %v5338 = vmul.f32 %v5306, %v5274
  %v5339 = vmul.f32 %v5307, %v5275
  %v5340 = vmul.f32 %v5308, %v5276
  %v5341 = vmul.f32 %v5309, %v5277
  %v5342 = vmul.f32 %v5310, %v5278
  %v5343 = vmul.f32 %v5311, %v5279
  %v5344 = vmul.f32 %v5312, %v5280
  %v5345 = vmul.f32 %v5313, %v5281
  %v5346 = vmul.f32 %v5314, %v5282
  %v5347 = vmul.f32 %v5315, %v5283
  %v5348 = vmul.f32 %v5316, %v5284
  %v5349 = vmul.f32 %v5317, %v5285
  %v5350 = vmul.f32 %v5318, %v5286
  %v5351 = vmul.f32 %v5319, %v5287
  %v5352 = vmul.f32 %v5320, %v5288
  %v5353 = vmul.f32 %v5321, %v5289
  %v5354 = vmul.f32 %v5322, %v5290
  %v5355 = vmul.f32 %v5323, %v5291
  %v5356 = vmul.f32 %v5324, %v5292
  %v5357 = vmul.f32 %v5325, %v5293
  %v5358 = vmul.f32 %v4732, %v2777
  %v5359 = vmul.f32 %v4747, %v2778
  %v5360 = vmul.f32 %v4762, %v2779
  %v5361 = vmul.f32 %v4777, %v2780
  %v5362 = vmul.f32 %v4792, %v2781
  %v5363 = vmul.f32 %v4807, %v2782
  %v5364 = vmul.f32 %v4822, %v2783
  %v5365 = vmul.f32 %v4837, %v2784
  %v5366 = vmul.f32 %v4852, %v2785
  %v5367 = vmul.f32 %v4867, %v2786
  %v5368 = vmul.f32 %v4882, %v2787
  %v5369 = vmul.f32 %v4897, %v2788
  %v5370 = vmul.f32 %v4912, %v2789
  %v5371 = vmul.f32 %v4927, %v2790
  %v5372 = vmul.f32 %v4942, %v2791
  %v5373 = vmul.f32 %v4957, %v2792
  %v5374 = vmul.f32 %v4972, %v2793
  %v5375 = vmul.f32 %v4987, %v2794
  %v5376 = vmul.f32 %v5002, %v2795
  %v5377 = vmul.f32 %v5017, %v2796
  %v5378 = vmul.f32 %v5032, %v2797
  %v5379 = vmul.f32 %v5047, %v2798
  %v5380 = vmul.f32 %v5062, %v2799
  %v5381 = vmul.f32 %v5077, %v2800
  %v5382 = vmul.f32 %v5092, %v2801
  %v5383 = vmul.f32 %v5107, %v2802
  %v5384 = vmul.f32 %v5122, %v2803
  %v5385 = vmul.f32 %v5137, %v2804
  %v5386 = vmul.f32 %v5152, %v2805
  %v5387 = vmul.f32 %v5167, %v2806
  %v5388 = vmul.f32 %v5182, %v2807
  %v5389 = vmul.f32 %v5197, %v2808
  %v5390 = vadd.f32 %v5326, %v5358
  %v5391 = vadd.f32 %v5327, %v5359
  %v5392 = vadd.f32 %v5328, %v5360
  %v5393 = vadd.f32 %v5329, %v5361
  %v5394 = vadd.f32 %v5330, %v5362
  %v5395 = vadd.f32 %v5331, %v5363
  %v5396 = vadd.f32 %v5332, %v5364
  %v5397 = vadd.f32 %v5333, %v5365
  %v5398 = vadd.f32 %v5334, %v5366
  %v5399 = vadd.f32 %v5335, %v5367
  %v5400 = vadd.f32 %v5336, %v5368
  %v5401 = vadd.f32 %v5337, %v5369
  %v5402 = vadd.f32 %v5338, %v5370
  %v5403 = vadd.f32 %v5339, %v5371
  %v5404 = vadd.f32 %v5340, %v5372
  %v5405 = vadd.f32 %v5341, %v5373
  %v5406 = vadd.f32 %v5342, %v5374
  %v5407 = vadd.f32 %v5343, %v5375
  %v5408 = vadd.f32 %v5344, %v5376
  %v5409 = vadd.f32 %v5345, %v5377
  %v5410 = vadd.f32 %v5346, %v5378
  %v5411 = vadd.f32 %v5347, %v5379
  %v5412 = vadd.f32 %v5348, %v5380
  %v5413 = vadd.f32 %v5349, %v5381
  %v5414 = vadd.f32 %v5350, %v5382
  %v5415 = vadd.f32 %v5351, %v5383
  %v5416 = vadd.f32 %v5352, %v5384
  %v5417 = vadd.f32 %v5353, %v5385
  %v5418 = vadd.f32 %v5354, %v5386
  %v5419 = vadd.f32 %v5355, %v5387
  %v5420 = vadd.f32 %v5356, %v5388
  %v5421 = vadd.f32 %v5357, %v5389
  %5422 = vmatpush.bf16.msra.mxu0 %v3359
  %5423 = vmatpush.bf16.msra.mxu0 %v3358
  %5424 = vmatpush.bf16.msra.mxu0 %v3357
  %5425 = vmatpush.bf16.msra.mxu0 %v3356
  %5426 = vmatpush.bf16.msra.mxu0 %v3355
  %5427 = vmatpush.bf16.msra.mxu0 %v3354
  %5428 = vmatpush.bf16.msra.mxu0 %v3353
  %5429 = vmatpush.bf16.msra.mxu0 %v3352
  %5430 = vmatmul.bf16.gmra.mxu0 %v2905
  %v5431 = vpop.f32.mrf.mxu0
  %v5432 = vadd.f32 0.0, %v5431
  %v5433 = vpop.f32.mrf.mxu0
  %v5434 = vadd.f32 0.0, %v5433
  %5435 = vmatmul.bf16.gmra.mxu0 %v2907
  %v5436 = vpop.f32.mrf.mxu0
  %v5437 = vadd.f32 0.0, %v5436
  %v5438 = vpop.f32.mrf.mxu0
  %v5439 = vadd.f32 0.0, %v5438
  %5440 = vmatmul.bf16.gmra.mxu0 %v2909
  %v5441 = vpop.f32.mrf.mxu0
  %v5442 = vadd.f32 0.0, %v5441
  %v5443 = vpop.f32.mrf.mxu0
  %v5444 = vadd.f32 0.0, %v5443
  %5445 = vmatmul.bf16.gmra.mxu0 %v2911
  %v5446 = vpop.f32.mrf.mxu0
  %v5447 = vadd.f32 0.0, %v5446
  %v5448 = vpop.f32.mrf.mxu0
  %v5449 = vadd.f32 0.0, %v5448
  %5450 = vmatmul.bf16.gmra.mxu0 %v2913
  %v5451 = vpop.f32.mrf.mxu0
  %v5452 = vadd.f32 0.0, %v5451
  %v5453 = vpop.f32.mrf.mxu0
  %v5454 = vadd.f32 0.0, %v5453
  %5455 = vmatmul.bf16.gmra.mxu0 %v2915
  %v5456 = vpop.f32.mrf.mxu0
  %v5457 = vadd.f32 0.0, %v5456
  %v5458 = vpop.f32.mrf.mxu0
  %v5459 = vadd.f32 0.0, %v5458
  %5460 = vmatmul.bf16.gmra.mxu0 %v2917
  %v5461 = vpop.f32.mrf.mxu0
  %v5462 = vadd.f32 0.0, %v5461
  %v5463 = vpop.f32.mrf.mxu0
  %v5464 = vadd.f32 0.0, %v5463
  %5465 = vmatmul.bf16.gmra.mxu0 %v2919
  %v5466 = vpop.f32.mrf.mxu0
  %v5467 = vadd.f32 0.0, %v5466
  %v5468 = vpop.f32.mrf.mxu0
  %v5469 = vadd.f32 0.0, %v5468
  %5470 = vmatmul.bf16.gmra.mxu0 %v2921
  %v5471 = vpop.f32.mrf.mxu0
  %v5472 = vadd.f32 0.0, %v5471
  %v5473 = vpop.f32.mrf.mxu0
  %v5474 = vadd.f32 0.0, %v5473
  %5475 = vmatmul.bf16.gmra.mxu0 %v2923
  %v5476 = vpop.f32.mrf.mxu0
  %v5477 = vadd.f32 0.0, %v5476
  %v5478 = vpop.f32.mrf.mxu0
  %v5479 = vadd.f32 0.0, %v5478
  %5480 = vmatmul.bf16.gmra.mxu0 %v2925
  %v5481 = vpop.f32.mrf.mxu0
  %v5482 = vadd.f32 0.0, %v5481
  %v5483 = vpop.f32.mrf.mxu0
  %v5484 = vadd.f32 0.0, %v5483
  %5485 = vmatmul.bf16.gmra.mxu0 %v2927
  %v5486 = vpop.f32.mrf.mxu0
  %v5487 = vadd.f32 0.0, %v5486
  %v5488 = vpop.f32.mrf.mxu0
  %v5489 = vadd.f32 0.0, %v5488
  %5490 = vmatmul.bf16.gmra.mxu0 %v2929
  %v5491 = vpop.f32.mrf.mxu0
  %v5492 = vadd.f32 0.0, %v5491
  %v5493 = vpop.f32.mrf.mxu0
  %v5494 = vadd.f32 0.0, %v5493
  %5495 = vmatmul.bf16.gmra.mxu0 %v2931
  %v5496 = vpop.f32.mrf.mxu0
  %v5497 = vadd.f32 0.0, %v5496
  %v5498 = vpop.f32.mrf.mxu0
  %v5499 = vadd.f32 0.0, %v5498
  %5500 = vmatmul.bf16.gmra.mxu0 %v2933
  %v5501 = vpop.f32.mrf.mxu0
  %v5502 = vadd.f32 0.0, %v5501
  %v5503 = vpop.f32.mrf.mxu0
  %v5504 = vadd.f32 0.0, %v5503
  %5505 = vmatmul.bf16.gmra.mxu0 %v2935
  %v5506 = vpop.f32.mrf.mxu0
  %v5507 = vadd.f32 0.0, %v5506
  %v5508 = vpop.f32.mrf.mxu0
  %v5509 = vadd.f32 0.0, %v5508
  %5510 = vdwg.mxu0
  %5511 = vmatpush.bf16.msra.mxu0 %v3367
  %5512 = vmatpush.bf16.msra.mxu0 %v3366
  %5513 = vmatpush.bf16.msra.mxu0 %v3365
  %5514 = vmatpush.bf16.msra.mxu0 %v3364
  %5515 = vmatpush.bf16.msra.mxu0 %v3363
  %5516 = vmatpush.bf16.msra.mxu0 %v3362
  %5517 = vmatpush.bf16.msra.mxu0 %v3361
  %5518 = vmatpush.bf16.msra.mxu0 %v3360
  %5519 = vmatmul.bf16.gmra.mxu0 %v2906
  %v5520 = vpop.f32.mrf.mxu0
  %v5521 = vadd.f32 %v5432, %v5520
  %v5522 = vpop.f32.mrf.mxu0
  %v5523 = vadd.f32 %v5434, %v5522
  %5524 = vmatmul.bf16.gmra.mxu0 %v2908
  %v5525 = vpop.f32.mrf.mxu0
  %v5526 = vadd.f32 %v5437, %v5525
  %v5527 = vpop.f32.mrf.mxu0
  %v5528 = vadd.f32 %v5439, %v5527
  %5529 = vmatmul.bf16.gmra.mxu0 %v2910
  %v5530 = vpop.f32.mrf.mxu0
  %v5531 = vadd.f32 %v5442, %v5530
  %v5532 = vpop.f32.mrf.mxu0
  %v5533 = vadd.f32 %v5444, %v5532
  %5534 = vmatmul.bf16.gmra.mxu0 %v2912
  %v5535 = vpop.f32.mrf.mxu0
  %v5536 = vadd.f32 %v5447, %v5535
  %v5537 = vpop.f32.mrf.mxu0
  %v5538 = vadd.f32 %v5449, %v5537
  %5539 = vmatmul.bf16.gmra.mxu0 %v2914
  %v5540 = vpop.f32.mrf.mxu0
  %v5541 = vadd.f32 %v5452, %v5540
  %v5542 = vpop.f32.mrf.mxu0
  %v5543 = vadd.f32 %v5454, %v5542
  %5544 = vmatmul.bf16.gmra.mxu0 %v2916
  %v5545 = vpop.f32.mrf.mxu0
  %v5546 = vadd.f32 %v5457, %v5545
  %v5547 = vpop.f32.mrf.mxu0
  %v5548 = vadd.f32 %v5459, %v5547
  %5549 = vmatmul.bf16.gmra.mxu0 %v2918
  %v5550 = vpop.f32.mrf.mxu0
  %v5551 = vadd.f32 %v5462, %v5550
  %v5552 = vpop.f32.mrf.mxu0
  %v5553 = vadd.f32 %v5464, %v5552
  %5554 = vmatmul.bf16.gmra.mxu0 %v2920
  %v5555 = vpop.f32.mrf.mxu0
  %v5556 = vadd.f32 %v5467, %v5555
  %v5557 = vpop.f32.mrf.mxu0
  %v5558 = vadd.f32 %v5469, %v5557
  %5559 = vmatmul.bf16.gmra.mxu0 %v2922
  %v5560 = vpop.f32.mrf.mxu0
  %v5561 = vadd.f32 %v5472, %v5560
  %v5562 = vpop.f32.mrf.mxu0
  %v5563 = vadd.f32 %v5474, %v5562
  %5564 = vmatmul.bf16.gmra.mxu0 %v2924
  %v5565 = vpop.f32.mrf.mxu0
  %v5566 = vadd.f32 %v5477, %v5565
  %v5567 = vpop.f32.mrf.mxu0
  %v5568 = vadd.f32 %v5479, %v5567
  %5569 = vmatmul.bf16.gmra.mxu0 %v2926
  %v5570 = vpop.f32.mrf.mxu0
  %v5571 = vadd.f32 %v5482, %v5570
  %v5572 = vpop.f32.mrf.mxu0
  %v5573 = vadd.f32 %v5484, %v5572
  %5574 = vmatmul.bf16.gmra.mxu0 %v2928
  %v5575 = vpop.f32.mrf.mxu0
  %v5576 = vadd.f32 %v5487, %v5575
  %v5577 = vpop.f32.mrf.mxu0
  %v5578 = vadd.f32 %v5489, %v5577
  %5579 = vmatmul.bf16.gmra.mxu0 %v2930
  %v5580 = vpop.f32.mrf.mxu0
  %v5581 = vadd.f32 %v5492, %v5580
  %v5582 = vpop.f32.mrf.mxu0
  %v5583 = vadd.f32 %v5494, %v5582
  %5584 = vmatmul.bf16.gmra.mxu0 %v2932
  %v5585 = vpop.f32.mrf.mxu0
  %v5586 = vadd.f32 %v5497, %v5585
  %v5587 = vpop.f32.mrf.mxu0
  %v5588 = vadd.f32 %v5499, %v5587
  %5589 = vmatmul.bf16.gmra.mxu0 %v2934
  %v5590 = vpop.f32.mrf.mxu0
  %v5591 = vadd.f32 %v5502, %v5590
  %v5592 = vpop.f32.mrf.mxu0
  %v5593 = vadd.f32 %v5504, %v5592
  %5594 = vmatmul.bf16.gmra.mxu0 %v2936
  %v5595 = vpop.f32.mrf.mxu0
  %v5596 = vadd.f32 %v5507, %v5595
  %v5597 = vpop.f32.mrf.mxu0
  %v5598 = vadd.f32 %v5509, %v5597
  %5599 = vdwg.mxu0
  %v5600 = vpack.c.bf16 %v5523, %v5521
  %v5601 = vpack.c.bf16 %v5528, %v5526
  %v5602 = vpack.c.bf16 %v5533, %v5531
  %v5603 = vpack.c.bf16 %v5538, %v5536
  %v5604 = vpack.c.bf16 %v5543, %v5541
  %v5605 = vpack.c.bf16 %v5548, %v5546
  %v5606 = vpack.c.bf16 %v5553, %v5551
  %v5607 = vpack.c.bf16 %v5558, %v5556
  %v5608 = vpack.c.bf16 %v5563, %v5561
  %v5609 = vpack.c.bf16 %v5568, %v5566
  %v5610 = vpack.c.bf16 %v5573, %v5571
  %v5611 = vpack.c.bf16 %v5578, %v5576
  %v5612 = vpack.c.bf16 %v5583, %v5581
  %v5613 = vpack.c.bf16 %v5588, %v5586
  %v5614 = vpack.c.bf16 %v5593, %v5591
  %v5615 = vpack.c.bf16 %v5598, %v5596
  %s5616 = scalar_lea.vmem %s5, 64
  %v5617 = vld [vmem:[%s5616] sm:$0xf]
  %v5618 = vld [vmem:[%s5616 + $0x4] sm:$0xf]
  %v5619 = vld [vmem:[%s5616 + $0x8] sm:$0xf]
  %v5620 = vld [vmem:[%s5616 + $0xc] sm:$0xf]
  %v5621 = vld [vmem:[%s5616 + $0x10] sm:$0xf]
  %v5622 = vld [vmem:[%s5616 + $0x14] sm:$0xf]
  %v5623 = vld [vmem:[%s5616 + $0x18] sm:$0xf]
  %v5624 = vld [vmem:[%s5616 + $0x1c] sm:$0xf]
  %v5625 = vld [vmem:[%s5616 + $0x20] sm:$0xf]
  %v5626 = vld [vmem:[%s5616 + $0x24] sm:$0xf]
  %v5627 = vld [vmem:[%s5616 + $0x28] sm:$0xf]
  %v5628 = vld [vmem:[%s5616 + $0x2c] sm:$0xf]
  %v5629 = vld [vmem:[%s5616 + $0x30] sm:$0xf]
  %v5630 = vld [vmem:[%s5616 + $0x34] sm:$0xf]
  %v5631 = vld [vmem:[%s5616 + $0x38] sm:$0xf]
  %v5632 = vld [vmem:[%s5616 + $0x3c] sm:$0xf]
  %s5633 = scalar_lea.vmem %s6, 1
  %v5634 = vld [vmem:[%s5633] sm:$0x1]
  %v5636 = vperm.slane %v5634, 0
  %v5654 = vunpack.c.l.b16 %v5617
  %v5655 = vunpack.c.l.b16 %v5618
  %v5656 = vunpack.c.l.b16 %v5619
  %v5657 = vunpack.c.l.b16 %v5620
  %v5658 = vunpack.c.l.b16 %v5621
  %v5659 = vunpack.c.l.b16 %v5622
  %v5660 = vunpack.c.l.b16 %v5623
  %v5661 = vunpack.c.l.b16 %v5624
  %v5662 = vunpack.c.l.b16 %v5625
  %v5663 = vunpack.c.l.b16 %v5626
  %v5664 = vunpack.c.l.b16 %v5627
  %v5665 = vunpack.c.l.b16 %v5628
  %v5666 = vunpack.c.l.b16 %v5629
  %v5667 = vunpack.c.l.b16 %v5630
  %v5668 = vunpack.c.l.b16 %v5631
  %v5669 = vunpack.c.l.b16 %v5632
  %v5670 = vpack.c.b16 %v5655, %v5654
  %v5671 = vpack.c.b16 %v5657, %v5656
  %v5672 = vpack.c.b16 %v5659, %v5658
  %v5673 = vpack.c.b16 %v5661, %v5660
  %v5674 = vpack.c.b16 %v5663, %v5662
  %v5675 = vpack.c.b16 %v5665, %v5664
  %v5676 = vpack.c.b16 %v5667, %v5666
  %v5677 = vpack.c.b16 %v5669, %v5668
  %5686 = vmatpush.bf16.msra.mxu0 %v5677
  %5687 = vmatpush.bf16.msra.mxu0 %v5676
  %5688 = vmatpush.bf16.msra.mxu0 %v5675
  %5689 = vmatpush.bf16.msra.mxu0 %v5674
  %5690 = vmatpush.bf16.msra.mxu0 %v5673
  %5691 = vmatpush.bf16.msra.mxu0 %v5672
  %5692 = vmatpush.bf16.msra.mxu0 %v5671
  %5693 = vmatpush.bf16.msra.mxu0 %v5670
  %5694 = vmatmul.bf16.gmra.mxu0 %v5600
  %v5695 = vpop.f32.mrf.mxu0
  %v5696 = vadd.f32 %v5636, %v5695
  %v5697 = vpop.f32.mrf.mxu0
  %v5698 = vadd.f32 %v5636, %v5697
  %5699 = vmatmul.bf16.gmra.mxu0 %v5601
  %v5700 = vpop.f32.mrf.mxu0
  %v5701 = vadd.f32 %v5636, %v5700
  %v5702 = vpop.f32.mrf.mxu0
  %v5703 = vadd.f32 %v5636, %v5702
  %5704 = vmatmul.bf16.gmra.mxu0 %v5602
  %v5705 = vpop.f32.mrf.mxu0
  %v5706 = vadd.f32 %v5636, %v5705
  %v5707 = vpop.f32.mrf.mxu0
  %v5708 = vadd.f32 %v5636, %v5707
  %5709 = vmatmul.bf16.gmra.mxu0 %v5603
  %v5710 = vpop.f32.mrf.mxu0
  %v5711 = vadd.f32 %v5636, %v5710
  %v5712 = vpop.f32.mrf.mxu0
  %v5713 = vadd.f32 %v5636, %v5712
  %5714 = vmatmul.bf16.gmra.mxu0 %v5604
  %v5715 = vpop.f32.mrf.mxu0
  %v5716 = vadd.f32 %v5636, %v5715
  %v5717 = vpop.f32.mrf.mxu0
  %v5718 = vadd.f32 %v5636, %v5717
  %5719 = vmatmul.bf16.gmra.mxu0 %v5605
  %v5720 = vpop.f32.mrf.mxu0
  %v5721 = vadd.f32 %v5636, %v5720
  %v5722 = vpop.f32.mrf.mxu0
  %v5723 = vadd.f32 %v5636, %v5722
  %5724 = vmatmul.bf16.gmra.mxu0 %v5606
  %v5725 = vpop.f32.mrf.mxu0
  %v5726 = vadd.f32 %v5636, %v5725
  %v5727 = vpop.f32.mrf.mxu0
  %v5728 = vadd.f32 %v5636, %v5727
  %5729 = vmatmul.bf16.gmra.mxu0 %v5607
  %v5730 = vpop.f32.mrf.mxu0
  %v5731 = vadd.f32 %v5636, %v5730
  %v5732 = vpop.f32.mrf.mxu0
  %v5733 = vadd.f32 %v5636, %v5732
  %5734 = vmatmul.bf16.gmra.mxu0 %v5608
  %v5735 = vpop.f32.mrf.mxu0
  %v5736 = vadd.f32 %v5636, %v5735
  %v5737 = vpop.f32.mrf.mxu0
  %v5738 = vadd.f32 %v5636, %v5737
  %5739 = vmatmul.bf16.gmra.mxu0 %v5609
  %v5740 = vpop.f32.mrf.mxu0
  %v5741 = vadd.f32 %v5636, %v5740
  %v5742 = vpop.f32.mrf.mxu0
  %v5743 = vadd.f32 %v5636, %v5742
  %5744 = vmatmul.bf16.gmra.mxu0 %v5610
  %v5745 = vpop.f32.mrf.mxu0
  %v5746 = vadd.f32 %v5636, %v5745
  %v5747 = vpop.f32.mrf.mxu0
  %v5748 = vadd.f32 %v5636, %v5747
  %5749 = vmatmul.bf16.gmra.mxu0 %v5611
  %v5750 = vpop.f32.mrf.mxu0
  %v5751 = vadd.f32 %v5636, %v5750
  %v5752 = vpop.f32.mrf.mxu0
  %v5753 = vadd.f32 %v5636, %v5752
  %5754 = vmatmul.bf16.gmra.mxu0 %v5612
  %v5755 = vpop.f32.mrf.mxu0
  %v5756 = vadd.f32 %v5636, %v5755
  %v5757 = vpop.f32.mrf.mxu0
  %v5758 = vadd.f32 %v5636, %v5757
  %5759 = vmatmul.bf16.gmra.mxu0 %v5613
  %v5760 = vpop.f32.mrf.mxu0
  %v5761 = vadd.f32 %v5636, %v5760
  %v5762 = vpop.f32.mrf.mxu0
  %v5763 = vadd.f32 %v5636, %v5762
  %5764 = vmatmul.bf16.gmra.mxu0 %v5614
  %v5765 = vpop.f32.mrf.mxu0
  %v5766 = vadd.f32 %v5636, %v5765
  %v5767 = vpop.f32.mrf.mxu0
  %v5768 = vadd.f32 %v5636, %v5767
  %5769 = vmatmul.bf16.gmra.mxu0 %v5615
  %v5770 = vpop.f32.mrf.mxu0
  %v5771 = vadd.f32 %v5636, %v5770
  %v5772 = vpop.f32.mrf.mxu0
  %v5773 = vadd.f32 %v5636, %v5772
  %5774 = vdwg.mxu0
  %v5775 = vmax.f32 %v5696, 0.0
  %v5776 = vmax.f32 %v5698, 0.0
  %v5777 = vmax.f32 %v5701, 0.0
  %v5778 = vmax.f32 %v5703, 0.0
  %v5779 = vmax.f32 %v5706, 0.0
  %v5780 = vmax.f32 %v5708, 0.0
  %v5781 = vmax.f32 %v5711, 0.0
  %v5782 = vmax.f32 %v5713, 0.0
  %v5783 = vmax.f32 %v5716, 0.0
  %v5784 = vmax.f32 %v5718, 0.0
  %v5785 = vmax.f32 %v5721, 0.0
  %v5786 = vmax.f32 %v5723, 0.0
  %v5787 = vmax.f32 %v5726, 0.0
  %v5788 = vmax.f32 %v5728, 0.0
  %v5789 = vmax.f32 %v5731, 0.0
  %v5790 = vmax.f32 %v5733, 0.0
  %v5791 = vmax.f32 %v5736, 0.0
  %v5792 = vmax.f32 %v5738, 0.0
  %v5793 = vmax.f32 %v5741, 0.0
  %v5794 = vmax.f32 %v5743, 0.0
  %v5795 = vmax.f32 %v5746, 0.0
  %v5796 = vmax.f32 %v5748, 0.0
  %v5797 = vmax.f32 %v5751, 0.0
  %v5798 = vmax.f32 %v5753, 0.0
  %v5799 = vmax.f32 %v5756, 0.0
  %v5800 = vmax.f32 %v5758, 0.0
  %v5801 = vmax.f32 %v5761, 0.0
  %v5802 = vmax.f32 %v5763, 0.0
  %v5803 = vmax.f32 %v5766, 0.0
  %v5804 = vmax.f32 %v5768, 0.0
  %v5805 = vmax.f32 %v5771, 0.0
  %v5806 = vmax.f32 %v5773, 0.0
  %v5807 = vpack.c.bf16 %v5776, %v5775
  %v5808 = vpack.c.bf16 %v5778, %v5777
  %v5809 = vpack.c.bf16 %v5780, %v5779
  %v5810 = vpack.c.bf16 %v5782, %v5781
  %v5811 = vpack.c.bf16 %v5784, %v5783
  %v5812 = vpack.c.bf16 %v5786, %v5785
  %v5813 = vpack.c.bf16 %v5788, %v5787
  %v5814 = vpack.c.bf16 %v5790, %v5789
  %v5815 = vpack.c.bf16 %v5792, %v5791
  %v5816 = vpack.c.bf16 %v5794, %v5793
  %v5817 = vpack.c.bf16 %v5796, %v5795
  %v5818 = vpack.c.bf16 %v5798, %v5797
  %v5819 = vpack.c.bf16 %v5800, %v5799
  %v5820 = vpack.c.bf16 %v5802, %v5801
  %v5821 = vpack.c.bf16 %v5804, %v5803
  %v5822 = vpack.c.bf16 %v5806, %v5805
  %5823 = vmatpush.bf16.msra.mxu0 %v593
  %5824 = vmatpush.bf16.msra.mxu0 %v590
  %5825 = vmatpush.bf16.msra.mxu0 %v587
  %5826 = vmatpush.bf16.msra.mxu0 %v584
  %5827 = vmatpush.bf16.msra.mxu0 %v581
  %5828 = vmatpush.bf16.msra.mxu0 %v578
  %5829 = vmatpush.bf16.msra.mxu0 %v575
  %5830 = vmatpush.bf16.msra.mxu0 %v572
  %5831 = vmatmul.bf16.gmra.mxu0 %v5807
  %v5832 = vpop.f32.mrf.mxu0
  %v5833 = vadd.f32 %v486, %v5832
  %v5834 = vpop.f32.mrf.mxu0
  %v5835 = vadd.f32 %v486, %v5834
  %5836 = vmatmul.bf16.gmra.mxu0 %v5808
  %v5837 = vpop.f32.mrf.mxu0
  %v5838 = vadd.f32 %v486, %v5837
  %v5839 = vpop.f32.mrf.mxu0
  %v5840 = vadd.f32 %v486, %v5839
  %5841 = vmatmul.bf16.gmra.mxu0 %v5809
  %v5842 = vpop.f32.mrf.mxu0
  %v5843 = vadd.f32 %v486, %v5842
  %v5844 = vpop.f32.mrf.mxu0
  %v5845 = vadd.f32 %v486, %v5844
  %5846 = vmatmul.bf16.gmra.mxu0 %v5810
  %v5847 = vpop.f32.mrf.mxu0
  %v5848 = vadd.f32 %v486, %v5847
  %v5849 = vpop.f32.mrf.mxu0
  %v5850 = vadd.f32 %v486, %v5849
  %5851 = vmatmul.bf16.gmra.mxu0 %v5811
  %v5852 = vpop.f32.mrf.mxu0
  %v5853 = vadd.f32 %v486, %v5852
  %v5854 = vpop.f32.mrf.mxu0
  %v5855 = vadd.f32 %v486, %v5854
  %5856 = vmatmul.bf16.gmra.mxu0 %v5812
  %v5857 = vpop.f32.mrf.mxu0
  %v5858 = vadd.f32 %v486, %v5857
  %v5859 = vpop.f32.mrf.mxu0
  %v5860 = vadd.f32 %v486, %v5859
  %5861 = vmatmul.bf16.gmra.mxu0 %v5813
  %v5862 = vpop.f32.mrf.mxu0
  %v5863 = vadd.f32 %v486, %v5862
  %v5864 = vpop.f32.mrf.mxu0
  %v5865 = vadd.f32 %v486, %v5864
  %5866 = vmatmul.bf16.gmra.mxu0 %v5814
  %v5867 = vpop.f32.mrf.mxu0
  %v5868 = vadd.f32 %v486, %v5867
  %v5869 = vpop.f32.mrf.mxu0
  %v5870 = vadd.f32 %v486, %v5869
  %5871 = vmatmul.bf16.gmra.mxu0 %v5815
  %v5872 = vpop.f32.mrf.mxu0
  %v5873 = vadd.f32 %v486, %v5872
  %v5874 = vpop.f32.mrf.mxu0
  %v5875 = vadd.f32 %v486, %v5874
  %5876 = vmatmul.bf16.gmra.mxu0 %v5816
  %v5877 = vpop.f32.mrf.mxu0
  %v5878 = vadd.f32 %v486, %v5877
  %v5879 = vpop.f32.mrf.mxu0
  %v5880 = vadd.f32 %v486, %v5879
  %5881 = vmatmul.bf16.gmra.mxu0 %v5817
  %v5882 = vpop.f32.mrf.mxu0
  %v5883 = vadd.f32 %v486, %v5882
  %v5884 = vpop.f32.mrf.mxu0
  %v5885 = vadd.f32 %v486, %v5884
  %5886 = vmatmul.bf16.gmra.mxu0 %v5818
  %v5887 = vpop.f32.mrf.mxu0
  %v5888 = vadd.f32 %v486, %v5887
  %v5889 = vpop.f32.mrf.mxu0
  %v5890 = vadd.f32 %v486, %v5889
  %5891 = vmatmul.bf16.gmra.mxu0 %v5819
  %v5892 = vpop.f32.mrf.mxu0
  %v5893 = vadd.f32 %v486, %v5892
  %v5894 = vpop.f32.mrf.mxu0
  %v5895 = vadd.f32 %v486, %v5894
  %5896 = vmatmul.bf16.gmra.mxu0 %v5820
  %v5897 = vpop.f32.mrf.mxu0
  %v5898 = vadd.f32 %v486, %v5897
  %v5899 = vpop.f32.mrf.mxu0
  %v5900 = vadd.f32 %v486, %v5899
  %5901 = vmatmul.bf16.gmra.mxu0 %v5821
  %v5902 = vpop.f32.mrf.mxu0
  %v5903 = vadd.f32 %v486, %v5902
  %v5904 = vpop.f32.mrf.mxu0
  %v5905 = vadd.f32 %v486, %v5904
  %5906 = vmatmul.bf16.gmra.mxu0 %v5822
  %v5907 = vpop.f32.mrf.mxu0
  %v5908 = vadd.f32 %v486, %v5907
  %v5909 = vpop.f32.mrf.mxu0
  %v5910 = vadd.f32 %v486, %v5909
  %5911 = vdwg.mxu0
  %5912 = vmatpush.bf16.msra.mxu0 %v594
  %5913 = vmatpush.bf16.msra.mxu0 %v591
  %5914 = vmatpush.bf16.msra.mxu0 %v588
  %5915 = vmatpush.bf16.msra.mxu0 %v585
  %5916 = vmatpush.bf16.msra.mxu0 %v582
  %5917 = vmatpush.bf16.msra.mxu0 %v579
  %5918 = vmatpush.bf16.msra.mxu0 %v576
  %5919 = vmatpush.bf16.msra.mxu0 %v573
  %5920 = vmatmul.bf16.gmra.mxu0 %v5807
  %v5921 = vpop.f32.mrf.mxu0
  %v5922 = vadd.f32 %v487, %v5921
  %v5923 = vpop.f32.mrf.mxu0
  %v5924 = vadd.f32 %v487, %v5923
  %5925 = vmatmul.bf16.gmra.mxu0 %v5808
  %v5926 = vpop.f32.mrf.mxu0
  %v5927 = vadd.f32 %v487, %v5926
  %v5928 = vpop.f32.mrf.mxu0
  %v5929 = vadd.f32 %v487, %v5928
  %5930 = vmatmul.bf16.gmra.mxu0 %v5809
  %v5931 = vpop.f32.mrf.mxu0
  %v5932 = vadd.f32 %v487, %v5931
  %v5933 = vpop.f32.mrf.mxu0
  %v5934 = vadd.f32 %v487, %v5933
  %5935 = vmatmul.bf16.gmra.mxu0 %v5810
  %v5936 = vpop.f32.mrf.mxu0
  %v5937 = vadd.f32 %v487, %v5936
  %v5938 = vpop.f32.mrf.mxu0
  %v5939 = vadd.f32 %v487, %v5938
  %5940 = vmatmul.bf16.gmra.mxu0 %v5811
  %v5941 = vpop.f32.mrf.mxu0
  %v5942 = vadd.f32 %v487, %v5941
  %v5943 = vpop.f32.mrf.mxu0
  %v5944 = vadd.f32 %v487, %v5943
  %5945 = vmatmul.bf16.gmra.mxu0 %v5812
  %v5946 = vpop.f32.mrf.mxu0
  %v5947 = vadd.f32 %v487, %v5946
  %v5948 = vpop.f32.mrf.mxu0
  %v5949 = vadd.f32 %v487, %v5948
  %5950 = vmatmul.bf16.gmra.mxu0 %v5813
  %v5951 = vpop.f32.mrf.mxu0
  %v5952 = vadd.f32 %v487, %v5951
  %v5953 = vpop.f32.mrf.mxu0
  %v5954 = vadd.f32 %v487, %v5953
  %5955 = vmatmul.bf16.gmra.mxu0 %v5814
  %v5956 = vpop.f32.mrf.mxu0
  %v5957 = vadd.f32 %v487, %v5956
  %v5958 = vpop.f32.mrf.mxu0
  %v5959 = vadd.f32 %v487, %v5958
  %5960 = vmatmul.bf16.gmra.mxu0 %v5815
  %v5961 = vpop.f32.mrf.mxu0
  %v5962 = vadd.f32 %v487, %v5961
  %v5963 = vpop.f32.mrf.mxu0
  %v5964 = vadd.f32 %v487, %v5963
  %5965 = vmatmul.bf16.gmra.mxu0 %v5816
  %v5966 = vpop.f32.mrf.mxu0
  %v5967 = vadd.f32 %v487, %v5966
  %v5968 = vpop.f32.mrf.mxu0
  %v5969 = vadd.f32 %v487, %v5968
  %5970 = vmatmul.bf16.gmra.mxu0 %v5817
  %v5971 = vpop.f32.mrf.mxu0
  %v5972 = vadd.f32 %v487, %v5971
  %v5973 = vpop.f32.mrf.mxu0
  %v5974 = vadd.f32 %v487, %v5973
  %5975 = vmatmul.bf16.gmra.mxu0 %v5818
  %v5976 = vpop.f32.mrf.mxu0
  %v5977 = vadd.f32 %v487, %v5976
  %v5978 = vpop.f32.mrf.mxu0
  %v5979 = vadd.f32 %v487, %v5978
  %5980 = vmatmul.bf16.gmra.mxu0 %v5819
  %v5981 = vpop.f32.mrf.mxu0
  %v5982 = vadd.f32 %v487, %v5981
  %v5983 = vpop.f32.mrf.mxu0
  %v5984 = vadd.f32 %v487, %v5983
  %5985 = vmatmul.bf16.gmra.mxu0 %v5820
  %v5986 = vpop.f32.mrf.mxu0
  %v5987 = vadd.f32 %v487, %v5986
  %v5988 = vpop.f32.mrf.mxu0
  %v5989 = vadd.f32 %v487, %v5988
  %5990 = vmatmul.bf16.gmra.mxu0 %v5821
  %v5991 = vpop.f32.mrf.mxu0
  %v5992 = vadd.f32 %v487, %v5991
  %v5993 = vpop.f32.mrf.mxu0
  %v5994 = vadd.f32 %v487, %v5993
  %5995 = vmatmul.bf16.gmra.mxu0 %v5822
  %v5996 = vpop.f32.mrf.mxu0
  %v5997 = vadd.f32 %v487, %v5996
  %v5998 = vpop.f32.mrf.mxu0
  %v5999 = vadd.f32 %v487, %v5998
  %6000 = vdwg.mxu0
  %6001 = vmatpush.bf16.msra.mxu0 %v595
  %6002 = vmatpush.bf16.msra.mxu0 %v592
  %6003 = vmatpush.bf16.msra.mxu0 %v589
  %6004 = vmatpush.bf16.msra.mxu0 %v586
  %6005 = vmatpush.bf16.msra.mxu0 %v583
  %6006 = vmatpush.bf16.msra.mxu0 %v580
  %6007 = vmatpush.bf16.msra.mxu0 %v577
  %6008 = vmatpush.bf16.msra.mxu0 %v574
  %6009 = vmatmul.bf16.gmra.mxu0 %v5807
  %v6010 = vpop.f32.mrf.mxu0
  %v6011 = vadd.f32 %v488, %v6010
  %v6012 = vpop.f32.mrf.mxu0
  %v6013 = vadd.f32 %v488, %v6012
  %6014 = vmatmul.bf16.gmra.mxu0 %v5808
  %v6015 = vpop.f32.mrf.mxu0
  %v6016 = vadd.f32 %v488, %v6015
  %v6017 = vpop.f32.mrf.mxu0
  %v6018 = vadd.f32 %v488, %v6017
  %6019 = vmatmul.bf16.gmra.mxu0 %v5809
  %v6020 = vpop.f32.mrf.mxu0
  %v6021 = vadd.f32 %v488, %v6020
  %v6022 = vpop.f32.mrf.mxu0
  %v6023 = vadd.f32 %v488, %v6022
  %6024 = vmatmul.bf16.gmra.mxu0 %v5810
  %v6025 = vpop.f32.mrf.mxu0
  %v6026 = vadd.f32 %v488, %v6025
  %v6027 = vpop.f32.mrf.mxu0
  %v6028 = vadd.f32 %v488, %v6027
  %6029 = vmatmul.bf16.gmra.mxu0 %v5811
  %v6030 = vpop.f32.mrf.mxu0
  %v6031 = vadd.f32 %v488, %v6030
  %v6032 = vpop.f32.mrf.mxu0
  %v6033 = vadd.f32 %v488, %v6032
  %6034 = vmatmul.bf16.gmra.mxu0 %v5812
  %v6035 = vpop.f32.mrf.mxu0
  %v6036 = vadd.f32 %v488, %v6035
  %v6037 = vpop.f32.mrf.mxu0
  %v6038 = vadd.f32 %v488, %v6037
  %6039 = vmatmul.bf16.gmra.mxu0 %v5813
  %v6040 = vpop.f32.mrf.mxu0
  %v6041 = vadd.f32 %v488, %v6040
  %v6042 = vpop.f32.mrf.mxu0
  %v6043 = vadd.f32 %v488, %v6042
  %6044 = vmatmul.bf16.gmra.mxu0 %v5814
  %v6045 = vpop.f32.mrf.mxu0
  %v6046 = vadd.f32 %v488, %v6045
  %v6047 = vpop.f32.mrf.mxu0
  %v6048 = vadd.f32 %v488, %v6047
  %6049 = vmatmul.bf16.gmra.mxu0 %v5815
  %v6050 = vpop.f32.mrf.mxu0
  %v6051 = vadd.f32 %v488, %v6050
  %v6052 = vpop.f32.mrf.mxu0
  %v6053 = vadd.f32 %v488, %v6052
  %6054 = vmatmul.bf16.gmra.mxu0 %v5816
  %v6055 = vpop.f32.mrf.mxu0
  %v6056 = vadd.f32 %v488, %v6055
  %v6057 = vpop.f32.mrf.mxu0
  %v6058 = vadd.f32 %v488, %v6057
  %6059 = vmatmul.bf16.gmra.mxu0 %v5817
  %v6060 = vpop.f32.mrf.mxu0
  %v6061 = vadd.f32 %v488, %v6060
  %v6062 = vpop.f32.mrf.mxu0
  %v6063 = vadd.f32 %v488, %v6062
  %6064 = vmatmul.bf16.gmra.mxu0 %v5818
  %v6065 = vpop.f32.mrf.mxu0
  %v6066 = vadd.f32 %v488, %v6065
  %v6067 = vpop.f32.mrf.mxu0
  %v6068 = vadd.f32 %v488, %v6067
  %6069 = vmatmul.bf16.gmra.mxu0 %v5819
  %v6070 = vpop.f32.mrf.mxu0
  %v6071 = vadd.f32 %v488, %v6070
  %v6072 = vpop.f32.mrf.mxu0
  %v6073 = vadd.f32 %v488, %v6072
  %6074 = vmatmul.bf16.gmra.mxu0 %v5820
  %v6075 = vpop.f32.mrf.mxu0
  %v6076 = vadd.f32 %v488, %v6075
  %v6077 = vpop.f32.mrf.mxu0
  %v6078 = vadd.f32 %v488, %v6077
  %6079 = vmatmul.bf16.gmra.mxu0 %v5821
  %v6080 = vpop.f32.mrf.mxu0
  %v6081 = vadd.f32 %v488, %v6080
  %v6082 = vpop.f32.mrf.mxu0
  %v6083 = vadd.f32 %v488, %v6082
  %6084 = vmatmul.bf16.gmra.mxu0 %v5822
  %v6085 = vpop.f32.mrf.mxu0
  %v6086 = vadd.f32 %v488, %v6085
  %v6087 = vpop.f32.mrf.mxu0
  %v6088 = vadd.f32 %v488, %v6087
  %6089 = vdwg.mxu0
  %v6090 = vpack.c.bf16 %v5391, %v5390
  %v6091 = vpack.c.bf16 %v5393, %v5392
  %v6092 = vpack.c.bf16 %v5395, %v5394
  %v6093 = vpack.c.bf16 %v5397, %v5396
  %v6094 = vpack.c.bf16 %v5399, %v5398
  %v6095 = vpack.c.bf16 %v5401, %v5400
  %v6096 = vpack.c.bf16 %v5403, %v5402
  %v6097 = vpack.c.bf16 %v5405, %v5404
  %v6098 = vpack.c.bf16 %v5407, %v5406
  %v6099 = vpack.c.bf16 %v5409, %v5408
  %v6100 = vpack.c.bf16 %v5411, %v5410
  %v6101 = vpack.c.bf16 %v5413, %v5412
  %v6102 = vpack.c.bf16 %v5415, %v5414
  %v6103 = vpack.c.bf16 %v5417, %v5416
  %v6104 = vpack.c.bf16 %v5419, %v5418
  %v6105 = vpack.c.bf16 %v5421, %v5420
  %6106 = vmatpush.bf16.msra.mxu0 %v1011
  %6107 = vmatpush.bf16.msra.mxu0 %v1008
  %6108 = vmatpush.bf16.msra.mxu0 %v1005
  %6109 = vmatpush.bf16.msra.mxu0 %v1002
  %6110 = vmatpush.bf16.msra.mxu0 %v999
  %6111 = vmatpush.bf16.msra.mxu0 %v996
  %6112 = vmatpush.bf16.msra.mxu0 %v993
  %6113 = vmatpush.bf16.msra.mxu0 %v990
  %6114 = vmatmul.bf16.gmra.mxu0 %v6090
  %v6115 = vpop.f32.mrf.mxu0
  %v6116 = vadd.f32 %v904, %v6115
  %v6117 = vpop.f32.mrf.mxu0
  %v6118 = vadd.f32 %v904, %v6117
  %6119 = vmatmul.bf16.gmra.mxu0 %v6091
  %v6120 = vpop.f32.mrf.mxu0
  %v6121 = vadd.f32 %v904, %v6120
  %v6122 = vpop.f32.mrf.mxu0
  %v6123 = vadd.f32 %v904, %v6122
  %6124 = vmatmul.bf16.gmra.mxu0 %v6092
  %v6125 = vpop.f32.mrf.mxu0
  %v6126 = vadd.f32 %v904, %v6125
  %v6127 = vpop.f32.mrf.mxu0
  %v6128 = vadd.f32 %v904, %v6127
  %6129 = vmatmul.bf16.gmra.mxu0 %v6093
  %v6130 = vpop.f32.mrf.mxu0
  %v6131 = vadd.f32 %v904, %v6130
  %v6132 = vpop.f32.mrf.mxu0
  %v6133 = vadd.f32 %v904, %v6132
  %6134 = vmatmul.bf16.gmra.mxu0 %v6094
  %v6135 = vpop.f32.mrf.mxu0
  %v6136 = vadd.f32 %v904, %v6135
  %v6137 = vpop.f32.mrf.mxu0
  %v6138 = vadd.f32 %v904, %v6137
  %6139 = vmatmul.bf16.gmra.mxu0 %v6095
  %v6140 = vpop.f32.mrf.mxu0
  %v6141 = vadd.f32 %v904, %v6140
  %v6142 = vpop.f32.mrf.mxu0
  %v6143 = vadd.f32 %v904, %v6142
  %6144 = vmatmul.bf16.gmra.mxu0 %v6096
  %v6145 = vpop.f32.mrf.mxu0
  %v6146 = vadd.f32 %v904, %v6145
  %v6147 = vpop.f32.mrf.mxu0
  %v6148 = vadd.f32 %v904, %v6147
  %6149 = vmatmul.bf16.gmra.mxu0 %v6097
  %v6150 = vpop.f32.mrf.mxu0
  %v6151 = vadd.f32 %v904, %v6150
  %v6152 = vpop.f32.mrf.mxu0
  %v6153 = vadd.f32 %v904, %v6152
  %6154 = vmatmul.bf16.gmra.mxu0 %v6098
  %v6155 = vpop.f32.mrf.mxu0
  %v6156 = vadd.f32 %v904, %v6155
  %v6157 = vpop.f32.mrf.mxu0
  %v6158 = vadd.f32 %v904, %v6157
  %6159 = vmatmul.bf16.gmra.mxu0 %v6099
  %v6160 = vpop.f32.mrf.mxu0
  %v6161 = vadd.f32 %v904, %v6160
  %v6162 = vpop.f32.mrf.mxu0
  %v6163 = vadd.f32 %v904, %v6162
  %6164 = vmatmul.bf16.gmra.mxu0 %v6100
  %v6165 = vpop.f32.mrf.mxu0
  %v6166 = vadd.f32 %v904, %v6165
  %v6167 = vpop.f32.mrf.mxu0
  %v6168 = vadd.f32 %v904, %v6167
  %6169 = vmatmul.bf16.gmra.mxu0 %v6101
  %v6170 = vpop.f32.mrf.mxu0
  %v6171 = vadd.f32 %v904, %v6170
  %v6172 = vpop.f32.mrf.mxu0
  %v6173 = vadd.f32 %v904, %v6172
  %6174 = vmatmul.bf16.gmra.mxu0 %v6102
  %v6175 = vpop.f32.mrf.mxu0
  %v6176 = vadd.f32 %v904, %v6175
  %v6177 = vpop.f32.mrf.mxu0
  %v6178 = vadd.f32 %v904, %v6177
  %6179 = vmatmul.bf16.gmra.mxu0 %v6103
  %v6180 = vpop.f32.mrf.mxu0
  %v6181 = vadd.f32 %v904, %v6180
  %v6182 = vpop.f32.mrf.mxu0
  %v6183 = vadd.f32 %v904, %v6182
  %6184 = vmatmul.bf16.gmra.mxu0 %v6104
  %v6185 = vpop.f32.mrf.mxu0
  %v6186 = vadd.f32 %v904, %v6185
  %v6187 = vpop.f32.mrf.mxu0
  %v6188 = vadd.f32 %v904, %v6187
  %6189 = vmatmul.bf16.gmra.mxu0 %v6105
  %v6190 = vpop.f32.mrf.mxu0
  %v6191 = vadd.f32 %v904, %v6190
  %v6192 = vpop.f32.mrf.mxu0
  %v6193 = vadd.f32 %v904, %v6192
  %6194 = vdwg.mxu0
  %6195 = vmatpush.bf16.msra.mxu0 %v1012
  %6196 = vmatpush.bf16.msra.mxu0 %v1009
  %6197 = vmatpush.bf16.msra.mxu0 %v1006
  %6198 = vmatpush.bf16.msra.mxu0 %v1003
  %6199 = vmatpush.bf16.msra.mxu0 %v1000
  %6200 = vmatpush.bf16.msra.mxu0 %v997
  %6201 = vmatpush.bf16.msra.mxu0 %v994
  %6202 = vmatpush.bf16.msra.mxu0 %v991
  %6203 = vmatmul.bf16.gmra.mxu0 %v6090
  %v6204 = vpop.f32.mrf.mxu0
  %v6205 = vadd.f32 %v905, %v6204
  %v6206 = vpop.f32.mrf.mxu0
  %v6207 = vadd.f32 %v905, %v6206
  %6208 = vmatmul.bf16.gmra.mxu0 %v6091
  %v6209 = vpop.f32.mrf.mxu0
  %v6210 = vadd.f32 %v905, %v6209
  %v6211 = vpop.f32.mrf.mxu0
  %v6212 = vadd.f32 %v905, %v6211
  %6213 = vmatmul.bf16.gmra.mxu0 %v6092
  %v6214 = vpop.f32.mrf.mxu0
  %v6215 = vadd.f32 %v905, %v6214
  %v6216 = vpop.f32.mrf.mxu0
  %v6217 = vadd.f32 %v905, %v6216
  %6218 = vmatmul.bf16.gmra.mxu0 %v6093
  %v6219 = vpop.f32.mrf.mxu0
  %v6220 = vadd.f32 %v905, %v6219
  %v6221 = vpop.f32.mrf.mxu0
  %v6222 = vadd.f32 %v905, %v6221
  %6223 = vmatmul.bf16.gmra.mxu0 %v6094
  %v6224 = vpop.f32.mrf.mxu0
  %v6225 = vadd.f32 %v905, %v6224
  %v6226 = vpop.f32.mrf.mxu0
  %v6227 = vadd.f32 %v905, %v6226
  %6228 = vmatmul.bf16.gmra.mxu0 %v6095
  %v6229 = vpop.f32.mrf.mxu0
  %v6230 = vadd.f32 %v905, %v6229
  %v6231 = vpop.f32.mrf.mxu0
  %v6232 = vadd.f32 %v905, %v6231
  %6233 = vmatmul.bf16.gmra.mxu0 %v6096
  %v6234 = vpop.f32.mrf.mxu0
  %v6235 = vadd.f32 %v905, %v6234
  %v6236 = vpop.f32.mrf.mxu0
  %v6237 = vadd.f32 %v905, %v6236
  %6238 = vmatmul.bf16.gmra.mxu0 %v6097
  %v6239 = vpop.f32.mrf.mxu0
  %v6240 = vadd.f32 %v905, %v6239
  %v6241 = vpop.f32.mrf.mxu0
  %v6242 = vadd.f32 %v905, %v6241
  %6243 = vmatmul.bf16.gmra.mxu0 %v6098
  %v6244 = vpop.f32.mrf.mxu0
  %v6245 = vadd.f32 %v905, %v6244
  %v6246 = vpop.f32.mrf.mxu0
  %v6247 = vadd.f32 %v905, %v6246
  %6248 = vmatmul.bf16.gmra.mxu0 %v6099
  %v6249 = vpop.f32.mrf.mxu0
  %v6250 = vadd.f32 %v905, %v6249
  %v6251 = vpop.f32.mrf.mxu0
  %v6252 = vadd.f32 %v905, %v6251
  %6253 = vmatmul.bf16.gmra.mxu0 %v6100
  %v6254 = vpop.f32.mrf.mxu0
  %v6255 = vadd.f32 %v905, %v6254
  %v6256 = vpop.f32.mrf.mxu0
  %v6257 = vadd.f32 %v905, %v6256
  %6258 = vmatmul.bf16.gmra.mxu0 %v6101
  %v6259 = vpop.f32.mrf.mxu0
  %v6260 = vadd.f32 %v905, %v6259
  %v6261 = vpop.f32.mrf.mxu0
  %v6262 = vadd.f32 %v905, %v6261
  %6263 = vmatmul.bf16.gmra.mxu0 %v6102
  %v6264 = vpop.f32.mrf.mxu0
  %v6265 = vadd.f32 %v905, %v6264
  %v6266 = vpop.f32.mrf.mxu0
  %v6267 = vadd.f32 %v905, %v6266
  %6268 = vmatmul.bf16.gmra.mxu0 %v6103
  %v6269 = vpop.f32.mrf.mxu0
  %v6270 = vadd.f32 %v905, %v6269
  %v6271 = vpop.f32.mrf.mxu0
  %v6272 = vadd.f32 %v905, %v6271
  %6273 = vmatmul.bf16.gmra.mxu0 %v6104
  %v6274 = vpop.f32.mrf.mxu0
  %v6275 = vadd.f32 %v905, %v6274
  %v6276 = vpop.f32.mrf.mxu0
  %v6277 = vadd.f32 %v905, %v6276
  %6278 = vmatmul.bf16.gmra.mxu0 %v6105
  %v6279 = vpop.f32.mrf.mxu0
  %v6280 = vadd.f32 %v905, %v6279
  %v6281 = vpop.f32.mrf.mxu0
  %v6282 = vadd.f32 %v905, %v6281
  %6283 = vdwg.mxu0
  %6284 = vmatpush.bf16.msra.mxu0 %v1013
  %6285 = vmatpush.bf16.msra.mxu0 %v1010
  %6286 = vmatpush.bf16.msra.mxu0 %v1007
  %6287 = vmatpush.bf16.msra.mxu0 %v1004
  %6288 = vmatpush.bf16.msra.mxu0 %v1001
  %6289 = vmatpush.bf16.msra.mxu0 %v998
  %6290 = vmatpush.bf16.msra.mxu0 %v995
  %6291 = vmatpush.bf16.msra.mxu0 %v992
  %6292 = vmatmul.bf16.gmra.mxu0 %v6090
  %v6293 = vpop.f32.mrf.mxu0
  %v6294 = vadd.f32 %v906, %v6293
  %v6295 = vpop.f32.mrf.mxu0
  %v6296 = vadd.f32 %v906, %v6295
  %6297 = vmatmul.bf16.gmra.mxu0 %v6091
  %v6298 = vpop.f32.mrf.mxu0
  %v6299 = vadd.f32 %v906, %v6298
  %v6300 = vpop.f32.mrf.mxu0
  %v6301 = vadd.f32 %v906, %v6300
  %6302 = vmatmul.bf16.gmra.mxu0 %v6092
  %v6303 = vpop.f32.mrf.mxu0
  %v6304 = vadd.f32 %v906, %v6303
  %v6305 = vpop.f32.mrf.mxu0
  %v6306 = vadd.f32 %v906, %v6305
  %6307 = vmatmul.bf16.gmra.mxu0 %v6093
  %v6308 = vpop.f32.mrf.mxu0
  %v6309 = vadd.f32 %v906, %v6308
  %v6310 = vpop.f32.mrf.mxu0
  %v6311 = vadd.f32 %v906, %v6310
  %6312 = vmatmul.bf16.gmra.mxu0 %v6094
  %v6313 = vpop.f32.mrf.mxu0
  %v6314 = vadd.f32 %v906, %v6313
  %v6315 = vpop.f32.mrf.mxu0
  %v6316 = vadd.f32 %v906, %v6315
  %6317 = vmatmul.bf16.gmra.mxu0 %v6095
  %v6318 = vpop.f32.mrf.mxu0
  %v6319 = vadd.f32 %v906, %v6318
  %v6320 = vpop.f32.mrf.mxu0
  %v6321 = vadd.f32 %v906, %v6320
  %6322 = vmatmul.bf16.gmra.mxu0 %v6096
  %v6323 = vpop.f32.mrf.mxu0
  %v6324 = vadd.f32 %v906, %v6323
  %v6325 = vpop.f32.mrf.mxu0
  %v6326 = vadd.f32 %v906, %v6325
  %6327 = vmatmul.bf16.gmra.mxu0 %v6097
  %v6328 = vpop.f32.mrf.mxu0
  %v6329 = vadd.f32 %v906, %v6328
  %v6330 = vpop.f32.mrf.mxu0
  %v6331 = vadd.f32 %v906, %v6330
  %6332 = vmatmul.bf16.gmra.mxu0 %v6098
  %v6333 = vpop.f32.mrf.mxu0
  %v6334 = vadd.f32 %v906, %v6333
  %v6335 = vpop.f32.mrf.mxu0
  %v6336 = vadd.f32 %v906, %v6335
  %6337 = vmatmul.bf16.gmra.mxu0 %v6099
  %v6338 = vpop.f32.mrf.mxu0
  %v6339 = vadd.f32 %v906, %v6338
  %v6340 = vpop.f32.mrf.mxu0
  %v6341 = vadd.f32 %v906, %v6340
  %6342 = vmatmul.bf16.gmra.mxu0 %v6100
  %v6343 = vpop.f32.mrf.mxu0
  %v6344 = vadd.f32 %v906, %v6343
  %v6345 = vpop.f32.mrf.mxu0
  %v6346 = vadd.f32 %v906, %v6345
  %6347 = vmatmul.bf16.gmra.mxu0 %v6101
  %v6348 = vpop.f32.mrf.mxu0
  %v6349 = vadd.f32 %v906, %v6348
  %v6350 = vpop.f32.mrf.mxu0
  %v6351 = vadd.f32 %v906, %v6350
  %6352 = vmatmul.bf16.gmra.mxu0 %v6102
  %v6353 = vpop.f32.mrf.mxu0
  %v6354 = vadd.f32 %v906, %v6353
  %v6355 = vpop.f32.mrf.mxu0
  %v6356 = vadd.f32 %v906, %v6355
  %6357 = vmatmul.bf16.gmra.mxu0 %v6103
  %v6358 = vpop.f32.mrf.mxu0
  %v6359 = vadd.f32 %v906, %v6358
  %v6360 = vpop.f32.mrf.mxu0
  %v6361 = vadd.f32 %v906, %v6360
  %6362 = vmatmul.bf16.gmra.mxu0 %v6104
  %v6363 = vpop.f32.mrf.mxu0
  %v6364 = vadd.f32 %v906, %v6363
  %v6365 = vpop.f32.mrf.mxu0
  %v6366 = vadd.f32 %v906, %v6365
  %6367 = vmatmul.bf16.gmra.mxu0 %v6105
  %v6368 = vpop.f32.mrf.mxu0
  %v6369 = vadd.f32 %v906, %v6368
  %v6370 = vpop.f32.mrf.mxu0
  %v6371 = vadd.f32 %v906, %v6370
  %6372 = vdwg.mxu0
  %v6373 = vadd.f32 %v5833, %v6116
  %v6374 = vadd.f32 %v5835, %v6118
  %v6375 = vadd.f32 %v5838, %v6121
  %v6376 = vadd.f32 %v5840, %v6123
  %v6377 = vadd.f32 %v5843, %v6126
  %v6378 = vadd.f32 %v5845, %v6128
  %v6379 = vadd.f32 %v5848, %v6131
  %v6380 = vadd.f32 %v5850, %v6133
  %v6381 = vadd.f32 %v5853, %v6136
  %v6382 = vadd.f32 %v5855, %v6138
  %v6383 = vadd.f32 %v5858, %v6141
  %v6384 = vadd.f32 %v5860, %v6143
  %v6385 = vadd.f32 %v5863, %v6146
  %v6386 = vadd.f32 %v5865, %v6148
  %v6387 = vadd.f32 %v5868, %v6151
  %v6388 = vadd.f32 %v5870, %v6153
  %v6389 = vadd.f32 %v5873, %v6156
  %v6390 = vadd.f32 %v5875, %v6158
  %v6391 = vadd.f32 %v5878, %v6161
  %v6392 = vadd.f32 %v5880, %v6163
  %v6393 = vadd.f32 %v5883, %v6166
  %v6394 = vadd.f32 %v5885, %v6168
  %v6395 = vadd.f32 %v5888, %v6171
  %v6396 = vadd.f32 %v5890, %v6173
  %v6397 = vadd.f32 %v5893, %v6176
  %v6398 = vadd.f32 %v5895, %v6178
  %v6399 = vadd.f32 %v5898, %v6181
  %v6400 = vadd.f32 %v5900, %v6183
  %v6401 = vadd.f32 %v5903, %v6186
  %v6402 = vadd.f32 %v5905, %v6188
  %v6403 = vadd.f32 %v5908, %v6191
  %v6404 = vadd.f32 %v5910, %v6193
  %v6405 = vxor.u32 %v6373, 2147483648
  %v6406 = vxor.u32 %v6374, 2147483648
  %v6407 = vxor.u32 %v6375, 2147483648
  %v6408 = vxor.u32 %v6376, 2147483648
  %v6409 = vxor.u32 %v6377, 2147483648
  %v6410 = vxor.u32 %v6378, 2147483648
  %v6411 = vxor.u32 %v6379, 2147483648
  %v6412 = vxor.u32 %v6380, 2147483648
  %v6413 = vxor.u32 %v6381, 2147483648
  %v6414 = vxor.u32 %v6382, 2147483648
  %v6415 = vxor.u32 %v6383, 2147483648
  %v6416 = vxor.u32 %v6384, 2147483648
  %v6417 = vxor.u32 %v6385, 2147483648
  %v6418 = vxor.u32 %v6386, 2147483648
  %v6419 = vxor.u32 %v6387, 2147483648
  %v6420 = vxor.u32 %v6388, 2147483648
  %v6421 = vxor.u32 %v6389, 2147483648
  %v6422 = vxor.u32 %v6390, 2147483648
  %v6423 = vxor.u32 %v6391, 2147483648
  %v6424 = vxor.u32 %v6392, 2147483648
  %v6425 = vxor.u32 %v6393, 2147483648
  %v6426 = vxor.u32 %v6394, 2147483648
  %v6427 = vxor.u32 %v6395, 2147483648
  %v6428 = vxor.u32 %v6396, 2147483648
  %v6429 = vxor.u32 %v6397, 2147483648
  %v6430 = vxor.u32 %v6398, 2147483648
  %v6431 = vxor.u32 %v6399, 2147483648
  %v6432 = vxor.u32 %v6400, 2147483648
  %v6433 = vxor.u32 %v6401, 2147483648
  %v6434 = vxor.u32 %v6402, 2147483648
  %v6435 = vxor.u32 %v6403, 2147483648
  %v6436 = vxor.u32 %v6404, 2147483648
  %v6437 = vmul.f32 %v6405, 1.442695
  %v6438 = vpow.pop %v6437
  %v6439 = vmul.f32 %v6406, 1.442695
  %v6440 = vpow.pop %v6439
  %v6441 = vmul.f32 %v6407, 1.442695
  %v6442 = vpow.pop %v6441
  %v6443 = vmul.f32 %v6408, 1.442695
  %v6444 = vpow.pop %v6443
  %v6445 = vmul.f32 %v6409, 1.442695
  %v6446 = vpow.pop %v6445
  %v6447 = vmul.f32 %v6410, 1.442695
  %v6448 = vpow.pop %v6447
  %v6449 = vmul.f32 %v6411, 1.442695
  %v6450 = vpow.pop %v6449
  %v6451 = vmul.f32 %v6412, 1.442695
  %v6452 = vpow.pop %v6451
  %v6453 = vmul.f32 %v6413, 1.442695
  %v6454 = vpow.pop %v6453
  %v6455 = vmul.f32 %v6414, 1.442695
  %v6456 = vpow.pop %v6455
  %v6457 = vmul.f32 %v6415, 1.442695
  %v6458 = vpow.pop %v6457
  %v6459 = vmul.f32 %v6416, 1.442695
  %v6460 = vpow.pop %v6459
  %v6461 = vmul.f32 %v6417, 1.442695
  %v6462 = vpow.pop %v6461
  %v6463 = vmul.f32 %v6418, 1.442695
  %v6464 = vpow.pop %v6463
  %v6465 = vmul.f32 %v6419, 1.442695
  %v6466 = vpow.pop %v6465
  %v6467 = vmul.f32 %v6420, 1.442695
  %v6468 = vpow.pop %v6467
  %v6469 = vmul.f32 %v6421, 1.442695
  %v6470 = vpow.pop %v6469
  %v6471 = vmul.f32 %v6422, 1.442695
  %v6472 = vpow.pop %v6471
  %v6473 = vmul.f32 %v6423, 1.442695
  %v6474 = vpow.pop %v6473
  %v6475 = vmul.f32 %v6424, 1.442695
  %v6476 = vpow.pop %v6475
  %v6477 = vmul.f32 %v6425, 1.442695
  %v6478 = vpow.pop %v6477
  %v6479 = vmul.f32 %v6426, 1.442695
  %v6480 = vpow.pop %v6479
  %v6481 = vmul.f32 %v6427, 1.442695
  %v6482 = vpow.pop %v6481
  %v6483 = vmul.f32 %v6428, 1.442695
  %v6484 = vpow.pop %v6483
  %v6485 = vmul.f32 %v6429, 1.442695
  %v6486 = vpow.pop %v6485
  %v6487 = vmul.f32 %v6430, 1.442695
  %v6488 = vpow.pop %v6487
  %v6489 = vmul.f32 %v6431, 1.442695
  %v6490 = vpow.pop %v6489
  %v6491 = vmul.f32 %v6432, 1.442695
  %v6492 = vpow.pop %v6491
  %v6493 = vmul.f32 %v6433, 1.442695
  %v6494 = vpow.pop %v6493
  %v6495 = vmul.f32 %v6434, 1.442695
  %v6496 = vpow.pop %v6495
  %v6497 = vmul.f32 %v6435, 1.442695
  %v6498 = vpow.pop %v6497
  %v6499 = vmul.f32 %v6436, 1.442695
  %v6500 = vpow.pop %v6499
  %v6501 = vadd.f32 %v6438, 1.0
  %v6502 = vadd.f32 %v6440, 1.0
  %v6503 = vadd.f32 %v6442, 1.0
  %v6504 = vadd.f32 %v6444, 1.0
  %v6505 = vadd.f32 %v6446, 1.0
  %v6506 = vadd.f32 %v6448, 1.0
  %v6507 = vadd.f32 %v6450, 1.0
  %v6508 = vadd.f32 %v6452, 1.0
  %v6509 = vadd.f32 %v6454, 1.0
  %v6510 = vadd.f32 %v6456, 1.0
  %v6511 = vadd.f32 %v6458, 1.0
  %v6512 = vadd.f32 %v6460, 1.0
  %v6513 = vadd.f32 %v6462, 1.0
  %v6514 = vadd.f32 %v6464, 1.0
  %v6515 = vadd.f32 %v6466, 1.0
  %v6516 = vadd.f32 %v6468, 1.0
  %v6517 = vadd.f32 %v6470, 1.0
  %v6518 = vadd.f32 %v6472, 1.0
  %v6519 = vadd.f32 %v6474, 1.0
  %v6520 = vadd.f32 %v6476, 1.0
  %v6521 = vadd.f32 %v6478, 1.0
  %v6522 = vadd.f32 %v6480, 1.0
  %v6523 = vadd.f32 %v6482, 1.0
  %v6524 = vadd.f32 %v6484, 1.0
  %v6525 = vadd.f32 %v6486, 1.0
  %v6526 = vadd.f32 %v6488, 1.0
  %v6527 = vadd.f32 %v6490, 1.0
  %v6528 = vadd.f32 %v6492, 1.0
  %v6529 = vadd.f32 %v6494, 1.0
  %v6530 = vadd.f32 %v6496, 1.0
  %v6531 = vadd.f32 %v6498, 1.0
  %v6532 = vadd.f32 %v6500, 1.0
  %v6533 = vrcp.pop %v6501
  %v6534 = vmul.f32 %v6501, %v6533
  %v6535 = vsub.f32 1.0, %v6534
  %v6536 = vmul.f32 %v6533, %v6535
  %v6537 = vadd.f32 %v6533, %v6536
  %vm6538 = vweird.f32 %v6501
  %vm6539 = vweird.f32 %v6533
  %vm6540 = vmor %vm6538, %vm6539
  %v6541 = vsel %vm6540, %v6533, %v6537
  %v6542 = vand.u32 2147483647, %v6501
  %vm6543 = vcmp.eq.f32.partialorder %v6542, 8.507059e+37
  %v6544 = vand.u32 %v6501, 2147483648
  %v6545 = vor.u32 1.1754944e-38, %v6544
  %v6546 = vsel %vm6543, %v6545, %v6541
  %v6547 = vmul.f32 1.0, %v6546
  %v6548 = vrcp.pop %v6502
  %v6549 = vmul.f32 %v6502, %v6548
  %v6550 = vsub.f32 1.0, %v6549
  %v6551 = vmul.f32 %v6548, %v6550
  %v6552 = vadd.f32 %v6548, %v6551
  %vm6553 = vweird.f32 %v6502
  %vm6554 = vweird.f32 %v6548
  %vm6555 = vmor %vm6553, %vm6554
  %v6556 = vsel %vm6555, %v6548, %v6552
  %v6557 = vand.u32 2147483647, %v6502
  %vm6558 = vcmp.eq.f32.partialorder %v6557, 8.507059e+37
  %v6559 = vand.u32 %v6502, 2147483648
  %v6560 = vor.u32 1.1754944e-38, %v6559
  %v6561 = vsel %vm6558, %v6560, %v6556
  %v6562 = vmul.f32 1.0, %v6561
  %v6563 = vrcp.pop %v6503
  %v6564 = vmul.f32 %v6503, %v6563
  %v6565 = vsub.f32 1.0, %v6564
  %v6566 = vmul.f32 %v6563, %v6565
  %v6567 = vadd.f32 %v6563, %v6566
  %vm6568 = vweird.f32 %v6503
  %vm6569 = vweird.f32 %v6563
  %vm6570 = vmor %vm6568, %vm6569
  %v6571 = vsel %vm6570, %v6563, %v6567
  %v6572 = vand.u32 2147483647, %v6503
  %vm6573 = vcmp.eq.f32.partialorder %v6572, 8.507059e+37
  %v6574 = vand.u32 %v6503, 2147483648
  %v6575 = vor.u32 1.1754944e-38, %v6574
  %v6576 = vsel %vm6573, %v6575, %v6571
  %v6577 = vmul.f32 1.0, %v6576
  %v6578 = vrcp.pop %v6504
  %v6579 = vmul.f32 %v6504, %v6578
  %v6580 = vsub.f32 1.0, %v6579
  %v6581 = vmul.f32 %v6578, %v6580
  %v6582 = vadd.f32 %v6578, %v6581
  %vm6583 = vweird.f32 %v6504
  %vm6584 = vweird.f32 %v6578
  %vm6585 = vmor %vm6583, %vm6584
  %v6586 = vsel %vm6585, %v6578, %v6582
  %v6587 = vand.u32 2147483647, %v6504
  %vm6588 = vcmp.eq.f32.partialorder %v6587, 8.507059e+37
  %v6589 = vand.u32 %v6504, 2147483648
  %v6590 = vor.u32 1.1754944e-38, %v6589
  %v6591 = vsel %vm6588, %v6590, %v6586
  %v6592 = vmul.f32 1.0, %v6591
  %v6593 = vrcp.pop %v6505
  %v6594 = vmul.f32 %v6505, %v6593
  %v6595 = vsub.f32 1.0, %v6594
  %v6596 = vmul.f32 %v6593, %v6595
  %v6597 = vadd.f32 %v6593, %v6596
  %vm6598 = vweird.f32 %v6505
  %vm6599 = vweird.f32 %v6593
  %vm6600 = vmor %vm6598, %vm6599
  %v6601 = vsel %vm6600, %v6593, %v6597
  %v6602 = vand.u32 2147483647, %v6505
  %vm6603 = vcmp.eq.f32.partialorder %v6602, 8.507059e+37
  %v6604 = vand.u32 %v6505, 2147483648
  %v6605 = vor.u32 1.1754944e-38, %v6604
  %v6606 = vsel %vm6603, %v6605, %v6601
  %v6607 = vmul.f32 1.0, %v6606
  %v6608 = vrcp.pop %v6506
  %v6609 = vmul.f32 %v6506, %v6608
  %v6610 = vsub.f32 1.0, %v6609
  %v6611 = vmul.f32 %v6608, %v6610
  %v6612 = vadd.f32 %v6608, %v6611
  %vm6613 = vweird.f32 %v6506
  %vm6614 = vweird.f32 %v6608
  %vm6615 = vmor %vm6613, %vm6614
  %v6616 = vsel %vm6615, %v6608, %v6612
  %v6617 = vand.u32 2147483647, %v6506
  %vm6618 = vcmp.eq.f32.partialorder %v6617, 8.507059e+37
  %v6619 = vand.u32 %v6506, 2147483648
  %v6620 = vor.u32 1.1754944e-38, %v6619
  %v6621 = vsel %vm6618, %v6620, %v6616
  %v6622 = vmul.f32 1.0, %v6621
  %v6623 = vrcp.pop %v6507
  %v6624 = vmul.f32 %v6507, %v6623
  %v6625 = vsub.f32 1.0, %v6624
  %v6626 = vmul.f32 %v6623, %v6625
  %v6627 = vadd.f32 %v6623, %v6626
  %vm6628 = vweird.f32 %v6507
  %vm6629 = vweird.f32 %v6623
  %vm6630 = vmor %vm6628, %vm6629
  %v6631 = vsel %vm6630, %v6623, %v6627
  %v6632 = vand.u32 2147483647, %v6507
  %vm6633 = vcmp.eq.f32.partialorder %v6632, 8.507059e+37
  %v6634 = vand.u32 %v6507, 2147483648
  %v6635 = vor.u32 1.1754944e-38, %v6634
  %v6636 = vsel %vm6633, %v6635, %v6631
  %v6637 = vmul.f32 1.0, %v6636
  %v6638 = vrcp.pop %v6508
  %v6639 = vmul.f32 %v6508, %v6638
  %v6640 = vsub.f32 1.0, %v6639
  %v6641 = vmul.f32 %v6638, %v6640
  %v6642 = vadd.f32 %v6638, %v6641
  %vm6643 = vweird.f32 %v6508
  %vm6644 = vweird.f32 %v6638
  %vm6645 = vmor %vm6643, %vm6644
  %v6646 = vsel %vm6645, %v6638, %v6642
  %v6647 = vand.u32 2147483647, %v6508
  %vm6648 = vcmp.eq.f32.partialorder %v6647, 8.507059e+37
  %v6649 = vand.u32 %v6508, 2147483648
  %v6650 = vor.u32 1.1754944e-38, %v6649
  %v6651 = vsel %vm6648, %v6650, %v6646
  %v6652 = vmul.f32 1.0, %v6651
  %v6653 = vrcp.pop %v6509
  %v6654 = vmul.f32 %v6509, %v6653
  %v6655 = vsub.f32 1.0, %v6654
  %v6656 = vmul.f32 %v6653, %v6655
  %v6657 = vadd.f32 %v6653, %v6656
  %vm6658 = vweird.f32 %v6509
  %vm6659 = vweird.f32 %v6653
  %vm6660 = vmor %vm6658, %vm6659
  %v6661 = vsel %vm6660, %v6653, %v6657
  %v6662 = vand.u32 2147483647, %v6509
  %vm6663 = vcmp.eq.f32.partialorder %v6662, 8.507059e+37
  %v6664 = vand.u32 %v6509, 2147483648
  %v6665 = vor.u32 1.1754944e-38, %v6664
  %v6666 = vsel %vm6663, %v6665, %v6661
  %v6667 = vmul.f32 1.0, %v6666
  %v6668 = vrcp.pop %v6510
  %v6669 = vmul.f32 %v6510, %v6668
  %v6670 = vsub.f32 1.0, %v6669
  %v6671 = vmul.f32 %v6668, %v6670
  %v6672 = vadd.f32 %v6668, %v6671
  %vm6673 = vweird.f32 %v6510
  %vm6674 = vweird.f32 %v6668
  %vm6675 = vmor %vm6673, %vm6674
  %v6676 = vsel %vm6675, %v6668, %v6672
  %v6677 = vand.u32 2147483647, %v6510
  %vm6678 = vcmp.eq.f32.partialorder %v6677, 8.507059e+37
  %v6679 = vand.u32 %v6510, 2147483648
  %v6680 = vor.u32 1.1754944e-38, %v6679
  %v6681 = vsel %vm6678, %v6680, %v6676
  %v6682 = vmul.f32 1.0, %v6681
  %v6683 = vrcp.pop %v6511
  %v6684 = vmul.f32 %v6511, %v6683
  %v6685 = vsub.f32 1.0, %v6684
  %v6686 = vmul.f32 %v6683, %v6685
  %v6687 = vadd.f32 %v6683, %v6686
  %vm6688 = vweird.f32 %v6511
  %vm6689 = vweird.f32 %v6683
  %vm6690 = vmor %vm6688, %vm6689
  %v6691 = vsel %vm6690, %v6683, %v6687
  %v6692 = vand.u32 2147483647, %v6511
  %vm6693 = vcmp.eq.f32.partialorder %v6692, 8.507059e+37
  %v6694 = vand.u32 %v6511, 2147483648
  %v6695 = vor.u32 1.1754944e-38, %v6694
  %v6696 = vsel %vm6693, %v6695, %v6691
  %v6697 = vmul.f32 1.0, %v6696
  %v6698 = vrcp.pop %v6512
  %v6699 = vmul.f32 %v6512, %v6698
  %v6700 = vsub.f32 1.0, %v6699
  %v6701 = vmul.f32 %v6698, %v6700
  %v6702 = vadd.f32 %v6698, %v6701
  %vm6703 = vweird.f32 %v6512
  %vm6704 = vweird.f32 %v6698
  %vm6705 = vmor %vm6703, %vm6704
  %v6706 = vsel %vm6705, %v6698, %v6702
  %v6707 = vand.u32 2147483647, %v6512
  %vm6708 = vcmp.eq.f32.partialorder %v6707, 8.507059e+37
  %v6709 = vand.u32 %v6512, 2147483648
  %v6710 = vor.u32 1.1754944e-38, %v6709
  %v6711 = vsel %vm6708, %v6710, %v6706
  %v6712 = vmul.f32 1.0, %v6711
  %v6713 = vrcp.pop %v6513
  %v6714 = vmul.f32 %v6513, %v6713
  %v6715 = vsub.f32 1.0, %v6714
  %v6716 = vmul.f32 %v6713, %v6715
  %v6717 = vadd.f32 %v6713, %v6716
  %vm6718 = vweird.f32 %v6513
  %vm6719 = vweird.f32 %v6713
  %vm6720 = vmor %vm6718, %vm6719
  %v6721 = vsel %vm6720, %v6713, %v6717
  %v6722 = vand.u32 2147483647, %v6513
  %vm6723 = vcmp.eq.f32.partialorder %v6722, 8.507059e+37
  %v6724 = vand.u32 %v6513, 2147483648
  %v6725 = vor.u32 1.1754944e-38, %v6724
  %v6726 = vsel %vm6723, %v6725, %v6721
  %v6727 = vmul.f32 1.0, %v6726
  %v6728 = vrcp.pop %v6514
  %v6729 = vmul.f32 %v6514, %v6728
  %v6730 = vsub.f32 1.0, %v6729
  %v6731 = vmul.f32 %v6728, %v6730
  %v6732 = vadd.f32 %v6728, %v6731
  %vm6733 = vweird.f32 %v6514
  %vm6734 = vweird.f32 %v6728
  %vm6735 = vmor %vm6733, %vm6734
  %v6736 = vsel %vm6735, %v6728, %v6732
  %v6737 = vand.u32 2147483647, %v6514
  %vm6738 = vcmp.eq.f32.partialorder %v6737, 8.507059e+37
  %v6739 = vand.u32 %v6514, 2147483648
  %v6740 = vor.u32 1.1754944e-38, %v6739
  %v6741 = vsel %vm6738, %v6740, %v6736
  %v6742 = vmul.f32 1.0, %v6741
  %v6743 = vrcp.pop %v6515
  %v6744 = vmul.f32 %v6515, %v6743
  %v6745 = vsub.f32 1.0, %v6744
  %v6746 = vmul.f32 %v6743, %v6745
  %v6747 = vadd.f32 %v6743, %v6746
  %vm6748 = vweird.f32 %v6515
  %vm6749 = vweird.f32 %v6743
  %vm6750 = vmor %vm6748, %vm6749
  %v6751 = vsel %vm6750, %v6743, %v6747
  %v6752 = vand.u32 2147483647, %v6515
  %vm6753 = vcmp.eq.f32.partialorder %v6752, 8.507059e+37
  %v6754 = vand.u32 %v6515, 2147483648
  %v6755 = vor.u32 1.1754944e-38, %v6754
  %v6756 = vsel %vm6753, %v6755, %v6751
  %v6757 = vmul.f32 1.0, %v6756
  %v6758 = vrcp.pop %v6516
  %v6759 = vmul.f32 %v6516, %v6758
  %v6760 = vsub.f32 1.0, %v6759
  %v6761 = vmul.f32 %v6758, %v6760
  %v6762 = vadd.f32 %v6758, %v6761
  %vm6763 = vweird.f32 %v6516
  %vm6764 = vweird.f32 %v6758
  %vm6765 = vmor %vm6763, %vm6764
  %v6766 = vsel %vm6765, %v6758, %v6762
  %v6767 = vand.u32 2147483647, %v6516
  %vm6768 = vcmp.eq.f32.partialorder %v6767, 8.507059e+37
  %v6769 = vand.u32 %v6516, 2147483648
  %v6770 = vor.u32 1.1754944e-38, %v6769
  %v6771 = vsel %vm6768, %v6770, %v6766
  %v6772 = vmul.f32 1.0, %v6771
  %v6773 = vrcp.pop %v6517
  %v6774 = vmul.f32 %v6517, %v6773
  %v6775 = vsub.f32 1.0, %v6774
  %v6776 = vmul.f32 %v6773, %v6775
  %v6777 = vadd.f32 %v6773, %v6776
  %vm6778 = vweird.f32 %v6517
  %vm6779 = vweird.f32 %v6773
  %vm6780 = vmor %vm6778, %vm6779
  %v6781 = vsel %vm6780, %v6773, %v6777
  %v6782 = vand.u32 2147483647, %v6517
  %vm6783 = vcmp.eq.f32.partialorder %v6782, 8.507059e+37
  %v6784 = vand.u32 %v6517, 2147483648
  %v6785 = vor.u32 1.1754944e-38, %v6784
  %v6786 = vsel %vm6783, %v6785, %v6781
  %v6787 = vmul.f32 1.0, %v6786
  %v6788 = vrcp.pop %v6518
  %v6789 = vmul.f32 %v6518, %v6788
  %v6790 = vsub.f32 1.0, %v6789
  %v6791 = vmul.f32 %v6788, %v6790
  %v6792 = vadd.f32 %v6788, %v6791
  %vm6793 = vweird.f32 %v6518
  %vm6794 = vweird.f32 %v6788
  %vm6795 = vmor %vm6793, %vm6794
  %v6796 = vsel %vm6795, %v6788, %v6792
  %v6797 = vand.u32 2147483647, %v6518
  %vm6798 = vcmp.eq.f32.partialorder %v6797, 8.507059e+37
  %v6799 = vand.u32 %v6518, 2147483648
  %v6800 = vor.u32 1.1754944e-38, %v6799
  %v6801 = vsel %vm6798, %v6800, %v6796
  %v6802 = vmul.f32 1.0, %v6801
  %v6803 = vrcp.pop %v6519
  %v6804 = vmul.f32 %v6519, %v6803
  %v6805 = vsub.f32 1.0, %v6804
  %v6806 = vmul.f32 %v6803, %v6805
  %v6807 = vadd.f32 %v6803, %v6806
  %vm6808 = vweird.f32 %v6519
  %vm6809 = vweird.f32 %v6803
  %vm6810 = vmor %vm6808, %vm6809
  %v6811 = vsel %vm6810, %v6803, %v6807
  %v6812 = vand.u32 2147483647, %v6519
  %vm6813 = vcmp.eq.f32.partialorder %v6812, 8.507059e+37
  %v6814 = vand.u32 %v6519, 2147483648
  %v6815 = vor.u32 1.1754944e-38, %v6814
  %v6816 = vsel %vm6813, %v6815, %v6811
  %v6817 = vmul.f32 1.0, %v6816
  %v6818 = vrcp.pop %v6520
  %v6819 = vmul.f32 %v6520, %v6818
  %v6820 = vsub.f32 1.0, %v6819
  %v6821 = vmul.f32 %v6818, %v6820
  %v6822 = vadd.f32 %v6818, %v6821
  %vm6823 = vweird.f32 %v6520
  %vm6824 = vweird.f32 %v6818
  %vm6825 = vmor %vm6823, %vm6824
  %v6826 = vsel %vm6825, %v6818, %v6822
  %v6827 = vand.u32 2147483647, %v6520
  %vm6828 = vcmp.eq.f32.partialorder %v6827, 8.507059e+37
  %v6829 = vand.u32 %v6520, 2147483648
  %v6830 = vor.u32 1.1754944e-38, %v6829
  %v6831 = vsel %vm6828, %v6830, %v6826
  %v6832 = vmul.f32 1.0, %v6831
  %v6833 = vrcp.pop %v6521
  %v6834 = vmul.f32 %v6521, %v6833
  %v6835 = vsub.f32 1.0, %v6834
  %v6836 = vmul.f32 %v6833, %v6835
  %v6837 = vadd.f32 %v6833, %v6836
  %vm6838 = vweird.f32 %v6521
  %vm6839 = vweird.f32 %v6833
  %vm6840 = vmor %vm6838, %vm6839
  %v6841 = vsel %vm6840, %v6833, %v6837
  %v6842 = vand.u32 2147483647, %v6521
  %vm6843 = vcmp.eq.f32.partialorder %v6842, 8.507059e+37
  %v6844 = vand.u32 %v6521, 2147483648
  %v6845 = vor.u32 1.1754944e-38, %v6844
  %v6846 = vsel %vm6843, %v6845, %v6841
  %v6847 = vmul.f32 1.0, %v6846
  %v6848 = vrcp.pop %v6522
  %v6849 = vmul.f32 %v6522, %v6848
  %v6850 = vsub.f32 1.0, %v6849
  %v6851 = vmul.f32 %v6848, %v6850
  %v6852 = vadd.f32 %v6848, %v6851
  %vm6853 = vweird.f32 %v6522
  %vm6854 = vweird.f32 %v6848
  %vm6855 = vmor %vm6853, %vm6854
  %v6856 = vsel %vm6855, %v6848, %v6852
  %v6857 = vand.u32 2147483647, %v6522
  %vm6858 = vcmp.eq.f32.partialorder %v6857, 8.507059e+37
  %v6859 = vand.u32 %v6522, 2147483648
  %v6860 = vor.u32 1.1754944e-38, %v6859
  %v6861 = vsel %vm6858, %v6860, %v6856
  %v6862 = vmul.f32 1.0, %v6861
  %v6863 = vrcp.pop %v6523
  %v6864 = vmul.f32 %v6523, %v6863
  %v6865 = vsub.f32 1.0, %v6864
  %v6866 = vmul.f32 %v6863, %v6865
  %v6867 = vadd.f32 %v6863, %v6866
  %vm6868 = vweird.f32 %v6523
  %vm6869 = vweird.f32 %v6863
  %vm6870 = vmor %vm6868, %vm6869
  %v6871 = vsel %vm6870, %v6863, %v6867
  %v6872 = vand.u32 2147483647, %v6523
  %vm6873 = vcmp.eq.f32.partialorder %v6872, 8.507059e+37
  %v6874 = vand.u32 %v6523, 2147483648
  %v6875 = vor.u32 1.1754944e-38, %v6874
  %v6876 = vsel %vm6873, %v6875, %v6871
  %v6877 = vmul.f32 1.0, %v6876
  %v6878 = vrcp.pop %v6524
  %v6879 = vmul.f32 %v6524, %v6878
  %v6880 = vsub.f32 1.0, %v6879
  %v6881 = vmul.f32 %v6878, %v6880
  %v6882 = vadd.f32 %v6878, %v6881
  %vm6883 = vweird.f32 %v6524
  %vm6884 = vweird.f32 %v6878
  %vm6885 = vmor %vm6883, %vm6884
  %v6886 = vsel %vm6885, %v6878, %v6882
  %v6887 = vand.u32 2147483647, %v6524
  %vm6888 = vcmp.eq.f32.partialorder %v6887, 8.507059e+37
  %v6889 = vand.u32 %v6524, 2147483648
  %v6890 = vor.u32 1.1754944e-38, %v6889
  %v6891 = vsel %vm6888, %v6890, %v6886
  %v6892 = vmul.f32 1.0, %v6891
  %v6893 = vrcp.pop %v6525
  %v6894 = vmul.f32 %v6525, %v6893
  %v6895 = vsub.f32 1.0, %v6894
  %v6896 = vmul.f32 %v6893, %v6895
  %v6897 = vadd.f32 %v6893, %v6896
  %vm6898 = vweird.f32 %v6525
  %vm6899 = vweird.f32 %v6893
  %vm6900 = vmor %vm6898, %vm6899
  %v6901 = vsel %vm6900, %v6893, %v6897
  %v6902 = vand.u32 2147483647, %v6525
  %vm6903 = vcmp.eq.f32.partialorder %v6902, 8.507059e+37
  %v6904 = vand.u32 %v6525, 2147483648
  %v6905 = vor.u32 1.1754944e-38, %v6904
  %v6906 = vsel %vm6903, %v6905, %v6901
  %v6907 = vmul.f32 1.0, %v6906
  %v6908 = vrcp.pop %v6526
  %v6909 = vmul.f32 %v6526, %v6908
  %v6910 = vsub.f32 1.0, %v6909
  %v6911 = vmul.f32 %v6908, %v6910
  %v6912 = vadd.f32 %v6908, %v6911
  %vm6913 = vweird.f32 %v6526
  %vm6914 = vweird.f32 %v6908
  %vm6915 = vmor %vm6913, %vm6914
  %v6916 = vsel %vm6915, %v6908, %v6912
  %v6917 = vand.u32 2147483647, %v6526
  %vm6918 = vcmp.eq.f32.partialorder %v6917, 8.507059e+37
  %v6919 = vand.u32 %v6526, 2147483648
  %v6920 = vor.u32 1.1754944e-38, %v6919
  %v6921 = vsel %vm6918, %v6920, %v6916
  %v6922 = vmul.f32 1.0, %v6921
  %v6923 = vrcp.pop %v6527
  %v6924 = vmul.f32 %v6527, %v6923
  %v6925 = vsub.f32 1.0, %v6924
  %v6926 = vmul.f32 %v6923, %v6925
  %v6927 = vadd.f32 %v6923, %v6926
  %vm6928 = vweird.f32 %v6527
  %vm6929 = vweird.f32 %v6923
  %vm6930 = vmor %vm6928, %vm6929
  %v6931 = vsel %vm6930, %v6923, %v6927
  %v6932 = vand.u32 2147483647, %v6527
  %vm6933 = vcmp.eq.f32.partialorder %v6932, 8.507059e+37
  %v6934 = vand.u32 %v6527, 2147483648
  %v6935 = vor.u32 1.1754944e-38, %v6934
  %v6936 = vsel %vm6933, %v6935, %v6931
  %v6937 = vmul.f32 1.0, %v6936
  %v6938 = vrcp.pop %v6528
  %v6939 = vmul.f32 %v6528, %v6938
  %v6940 = vsub.f32 1.0, %v6939
  %v6941 = vmul.f32 %v6938, %v6940
  %v6942 = vadd.f32 %v6938, %v6941
  %vm6943 = vweird.f32 %v6528
  %vm6944 = vweird.f32 %v6938
  %vm6945 = vmor %vm6943, %vm6944
  %v6946 = vsel %vm6945, %v6938, %v6942
  %v6947 = vand.u32 2147483647, %v6528
  %vm6948 = vcmp.eq.f32.partialorder %v6947, 8.507059e+37
  %v6949 = vand.u32 %v6528, 2147483648
  %v6950 = vor.u32 1.1754944e-38, %v6949
  %v6951 = vsel %vm6948, %v6950, %v6946
  %v6952 = vmul.f32 1.0, %v6951
  %v6953 = vrcp.pop %v6529
  %v6954 = vmul.f32 %v6529, %v6953
  %v6955 = vsub.f32 1.0, %v6954
  %v6956 = vmul.f32 %v6953, %v6955
  %v6957 = vadd.f32 %v6953, %v6956
  %vm6958 = vweird.f32 %v6529
  %vm6959 = vweird.f32 %v6953
  %vm6960 = vmor %vm6958, %vm6959
  %v6961 = vsel %vm6960, %v6953, %v6957
  %v6962 = vand.u32 2147483647, %v6529
  %vm6963 = vcmp.eq.f32.partialorder %v6962, 8.507059e+37
  %v6964 = vand.u32 %v6529, 2147483648
  %v6965 = vor.u32 1.1754944e-38, %v6964
  %v6966 = vsel %vm6963, %v6965, %v6961
  %v6967 = vmul.f32 1.0, %v6966
  %v6968 = vrcp.pop %v6530
  %v6969 = vmul.f32 %v6530, %v6968
  %v6970 = vsub.f32 1.0, %v6969
  %v6971 = vmul.f32 %v6968, %v6970
  %v6972 = vadd.f32 %v6968, %v6971
  %vm6973 = vweird.f32 %v6530
  %vm6974 = vweird.f32 %v6968
  %vm6975 = vmor %vm6973, %vm6974
  %v6976 = vsel %vm6975, %v6968, %v6972
  %v6977 = vand.u32 2147483647, %v6530
  %vm6978 = vcmp.eq.f32.partialorder %v6977, 8.507059e+37
  %v6979 = vand.u32 %v6530, 2147483648
  %v6980 = vor.u32 1.1754944e-38, %v6979
  %v6981 = vsel %vm6978, %v6980, %v6976
  %v6982 = vmul.f32 1.0, %v6981
  %v6983 = vrcp.pop %v6531
  %v6984 = vmul.f32 %v6531, %v6983
  %v6985 = vsub.f32 1.0, %v6984
  %v6986 = vmul.f32 %v6983, %v6985
  %v6987 = vadd.f32 %v6983, %v6986
  %vm6988 = vweird.f32 %v6531
  %vm6989 = vweird.f32 %v6983
  %vm6990 = vmor %vm6988, %vm6989
  %v6991 = vsel %vm6990, %v6983, %v6987
  %v6992 = vand.u32 2147483647, %v6531
  %vm6993 = vcmp.eq.f32.partialorder %v6992, 8.507059e+37
  %v6994 = vand.u32 %v6531, 2147483648
  %v6995 = vor.u32 1.1754944e-38, %v6994
  %v6996 = vsel %vm6993, %v6995, %v6991
  %v6997 = vmul.f32 1.0, %v6996
  %v6998 = vrcp.pop %v6532
  %v6999 = vmul.f32 %v6532, %v6998
  %v7000 = vsub.f32 1.0, %v6999
  %v7001 = vmul.f32 %v6998, %v7000
  %v7002 = vadd.f32 %v6998, %v7001
  %vm7003 = vweird.f32 %v6532
  %vm7004 = vweird.f32 %v6998
  %vm7005 = vmor %vm7003, %vm7004
  %v7006 = vsel %vm7005, %v6998, %v7002
  %v7007 = vand.u32 2147483647, %v6532
  %vm7008 = vcmp.eq.f32.partialorder %v7007, 8.507059e+37
  %v7009 = vand.u32 %v6532, 2147483648
  %v7010 = vor.u32 1.1754944e-38, %v7009
  %v7011 = vsel %vm7008, %v7010, %v7006
  %v7012 = vmul.f32 1.0, %v7011
  %v7013 = vadd.f32 %v5922, %v6205
  %v7014 = vadd.f32 %v5924, %v6207
  %v7015 = vadd.f32 %v5927, %v6210
  %v7016 = vadd.f32 %v5929, %v6212
  %v7017 = vadd.f32 %v5932, %v6215
  %v7018 = vadd.f32 %v5934, %v6217
  %v7019 = vadd.f32 %v5937, %v6220
  %v7020 = vadd.f32 %v5939, %v6222
  %v7021 = vadd.f32 %v5942, %v6225
  %v7022 = vadd.f32 %v5944, %v6227
  %v7023 = vadd.f32 %v5947, %v6230
  %v7024 = vadd.f32 %v5949, %v6232
  %v7025 = vadd.f32 %v5952, %v6235
  %v7026 = vadd.f32 %v5954, %v6237
  %v7027 = vadd.f32 %v5957, %v6240
  %v7028 = vadd.f32 %v5959, %v6242
  %v7029 = vadd.f32 %v5962, %v6245
  %v7030 = vadd.f32 %v5964, %v6247
  %v7031 = vadd.f32 %v5967, %v6250
  %v7032 = vadd.f32 %v5969, %v6252
  %v7033 = vadd.f32 %v5972, %v6255
  %v7034 = vadd.f32 %v5974, %v6257
  %v7035 = vadd.f32 %v5977, %v6260
  %v7036 = vadd.f32 %v5979, %v6262
  %v7037 = vadd.f32 %v5982, %v6265
  %v7038 = vadd.f32 %v5984, %v6267
  %v7039 = vadd.f32 %v5987, %v6270
  %v7040 = vadd.f32 %v5989, %v6272
  %v7041 = vadd.f32 %v5992, %v6275
  %v7042 = vadd.f32 %v5994, %v6277
  %v7043 = vadd.f32 %v5997, %v6280
  %v7044 = vadd.f32 %v5999, %v6282
  %v7045 = vxor.u32 %v7013, 2147483648
  %v7046 = vxor.u32 %v7014, 2147483648
  %v7047 = vxor.u32 %v7015, 2147483648
  %v7048 = vxor.u32 %v7016, 2147483648
  %v7049 = vxor.u32 %v7017, 2147483648
  %v7050 = vxor.u32 %v7018, 2147483648
  %v7051 = vxor.u32 %v7019, 2147483648
  %v7052 = vxor.u32 %v7020, 2147483648
  %v7053 = vxor.u32 %v7021, 2147483648
  %v7054 = vxor.u32 %v7022, 2147483648
  %v7055 = vxor.u32 %v7023, 2147483648
  %v7056 = vxor.u32 %v7024, 2147483648
  %v7057 = vxor.u32 %v7025, 2147483648
  %v7058 = vxor.u32 %v7026, 2147483648
  %v7059 = vxor.u32 %v7027, 2147483648
  %v7060 = vxor.u32 %v7028, 2147483648
  %v7061 = vxor.u32 %v7029, 2147483648
  %v7062 = vxor.u32 %v7030, 2147483648
  %v7063 = vxor.u32 %v7031, 2147483648
  %v7064 = vxor.u32 %v7032, 2147483648
  %v7065 = vxor.u32 %v7033, 2147483648
  %v7066 = vxor.u32 %v7034, 2147483648
  %v7067 = vxor.u32 %v7035, 2147483648
  %v7068 = vxor.u32 %v7036, 2147483648
  %v7069 = vxor.u32 %v7037, 2147483648
  %v7070 = vxor.u32 %v7038, 2147483648
  %v7071 = vxor.u32 %v7039, 2147483648
  %v7072 = vxor.u32 %v7040, 2147483648
  %v7073 = vxor.u32 %v7041, 2147483648
  %v7074 = vxor.u32 %v7042, 2147483648
  %v7075 = vxor.u32 %v7043, 2147483648
  %v7076 = vxor.u32 %v7044, 2147483648
  %v7077 = vmul.f32 %v7045, 1.442695
  %v7078 = vpow.pop %v7077
  %v7079 = vmul.f32 %v7046, 1.442695
  %v7080 = vpow.pop %v7079
  %v7081 = vmul.f32 %v7047, 1.442695
  %v7082 = vpow.pop %v7081
  %v7083 = vmul.f32 %v7048, 1.442695
  %v7084 = vpow.pop %v7083
  %v7085 = vmul.f32 %v7049, 1.442695
  %v7086 = vpow.pop %v7085
  %v7087 = vmul.f32 %v7050, 1.442695
  %v7088 = vpow.pop %v7087
  %v7089 = vmul.f32 %v7051, 1.442695
  %v7090 = vpow.pop %v7089
  %v7091 = vmul.f32 %v7052, 1.442695
  %v7092 = vpow.pop %v7091
  %v7093 = vmul.f32 %v7053, 1.442695
  %v7094 = vpow.pop %v7093
  %v7095 = vmul.f32 %v7054, 1.442695
  %v7096 = vpow.pop %v7095
  %v7097 = vmul.f32 %v7055, 1.442695
  %v7098 = vpow.pop %v7097
  %v7099 = vmul.f32 %v7056, 1.442695
  %v7100 = vpow.pop %v7099
  %v7101 = vmul.f32 %v7057, 1.442695
  %v7102 = vpow.pop %v7101
  %v7103 = vmul.f32 %v7058, 1.442695
  %v7104 = vpow.pop %v7103
  %v7105 = vmul.f32 %v7059, 1.442695
  %v7106 = vpow.pop %v7105
  %v7107 = vmul.f32 %v7060, 1.442695
  %v7108 = vpow.pop %v7107
  %v7109 = vmul.f32 %v7061, 1.442695
  %v7110 = vpow.pop %v7109
  %v7111 = vmul.f32 %v7062, 1.442695
  %v7112 = vpow.pop %v7111
  %v7113 = vmul.f32 %v7063, 1.442695
  %v7114 = vpow.pop %v7113
  %v7115 = vmul.f32 %v7064, 1.442695
  %v7116 = vpow.pop %v7115
  %v7117 = vmul.f32 %v7065, 1.442695
  %v7118 = vpow.pop %v7117
  %v7119 = vmul.f32 %v7066, 1.442695
  %v7120 = vpow.pop %v7119
  %v7121 = vmul.f32 %v7067, 1.442695
  %v7122 = vpow.pop %v7121
  %v7123 = vmul.f32 %v7068, 1.442695
  %v7124 = vpow.pop %v7123
  %v7125 = vmul.f32 %v7069, 1.442695
  %v7126 = vpow.pop %v7125
  %v7127 = vmul.f32 %v7070, 1.442695
  %v7128 = vpow.pop %v7127
  %v7129 = vmul.f32 %v7071, 1.442695
  %v7130 = vpow.pop %v7129
  %v7131 = vmul.f32 %v7072, 1.442695
  %v7132 = vpow.pop %v7131
  %v7133 = vmul.f32 %v7073, 1.442695
  %v7134 = vpow.pop %v7133
  %v7135 = vmul.f32 %v7074, 1.442695
  %v7136 = vpow.pop %v7135
  %v7137 = vmul.f32 %v7075, 1.442695
  %v7138 = vpow.pop %v7137
  %v7139 = vmul.f32 %v7076, 1.442695
  %v7140 = vpow.pop %v7139
  %v7141 = vadd.f32 %v7078, 1.0
  %v7142 = vadd.f32 %v7080, 1.0
  %v7143 = vadd.f32 %v7082, 1.0
  %v7144 = vadd.f32 %v7084, 1.0
  %v7145 = vadd.f32 %v7086, 1.0
  %v7146 = vadd.f32 %v7088, 1.0
  %v7147 = vadd.f32 %v7090, 1.0
  %v7148 = vadd.f32 %v7092, 1.0
  %v7149 = vadd.f32 %v7094, 1.0
  %v7150 = vadd.f32 %v7096, 1.0
  %v7151 = vadd.f32 %v7098, 1.0
  %v7152 = vadd.f32 %v7100, 1.0
  %v7153 = vadd.f32 %v7102, 1.0
  %v7154 = vadd.f32 %v7104, 1.0
  %v7155 = vadd.f32 %v7106, 1.0
  %v7156 = vadd.f32 %v7108, 1.0
  %v7157 = vadd.f32 %v7110, 1.0
  %v7158 = vadd.f32 %v7112, 1.0
  %v7159 = vadd.f32 %v7114, 1.0
  %v7160 = vadd.f32 %v7116, 1.0
  %v7161 = vadd.f32 %v7118, 1.0
  %v7162 = vadd.f32 %v7120, 1.0
  %v7163 = vadd.f32 %v7122, 1.0
  %v7164 = vadd.f32 %v7124, 1.0
  %v7165 = vadd.f32 %v7126, 1.0
  %v7166 = vadd.f32 %v7128, 1.0
  %v7167 = vadd.f32 %v7130, 1.0
  %v7168 = vadd.f32 %v7132, 1.0
  %v7169 = vadd.f32 %v7134, 1.0
  %v7170 = vadd.f32 %v7136, 1.0
  %v7171 = vadd.f32 %v7138, 1.0
  %v7172 = vadd.f32 %v7140, 1.0
  %v7173 = vrcp.pop %v7141
  %v7174 = vmul.f32 %v7141, %v7173
  %v7175 = vsub.f32 1.0, %v7174
  %v7176 = vmul.f32 %v7173, %v7175
  %v7177 = vadd.f32 %v7173, %v7176
  %vm7178 = vweird.f32 %v7141
  %vm7179 = vweird.f32 %v7173
  %vm7180 = vmor %vm7178, %vm7179
  %v7181 = vsel %vm7180, %v7173, %v7177
  %v7182 = vand.u32 2147483647, %v7141
  %vm7183 = vcmp.eq.f32.partialorder %v7182, 8.507059e+37
  %v7184 = vand.u32 %v7141, 2147483648
  %v7185 = vor.u32 1.1754944e-38, %v7184
  %v7186 = vsel %vm7183, %v7185, %v7181
  %v7187 = vmul.f32 1.0, %v7186
  %v7188 = vrcp.pop %v7142
  %v7189 = vmul.f32 %v7142, %v7188
  %v7190 = vsub.f32 1.0, %v7189
  %v7191 = vmul.f32 %v7188, %v7190
  %v7192 = vadd.f32 %v7188, %v7191
  %vm7193 = vweird.f32 %v7142
  %vm7194 = vweird.f32 %v7188
  %vm7195 = vmor %vm7193, %vm7194
  %v7196 = vsel %vm7195, %v7188, %v7192
  %v7197 = vand.u32 2147483647, %v7142
  %vm7198 = vcmp.eq.f32.partialorder %v7197, 8.507059e+37
  %v7199 = vand.u32 %v7142, 2147483648
  %v7200 = vor.u32 1.1754944e-38, %v7199
  %v7201 = vsel %vm7198, %v7200, %v7196
  %v7202 = vmul.f32 1.0, %v7201
  %v7203 = vrcp.pop %v7143
  %v7204 = vmul.f32 %v7143, %v7203
  %v7205 = vsub.f32 1.0, %v7204
  %v7206 = vmul.f32 %v7203, %v7205
  %v7207 = vadd.f32 %v7203, %v7206
  %vm7208 = vweird.f32 %v7143
  %vm7209 = vweird.f32 %v7203
  %vm7210 = vmor %vm7208, %vm7209
  %v7211 = vsel %vm7210, %v7203, %v7207
  %v7212 = vand.u32 2147483647, %v7143
  %vm7213 = vcmp.eq.f32.partialorder %v7212, 8.507059e+37
  %v7214 = vand.u32 %v7143, 2147483648
  %v7215 = vor.u32 1.1754944e-38, %v7214
  %v7216 = vsel %vm7213, %v7215, %v7211
  %v7217 = vmul.f32 1.0, %v7216
  %v7218 = vrcp.pop %v7144
  %v7219 = vmul.f32 %v7144, %v7218
  %v7220 = vsub.f32 1.0, %v7219
  %v7221 = vmul.f32 %v7218, %v7220
  %v7222 = vadd.f32 %v7218, %v7221
  %vm7223 = vweird.f32 %v7144
  %vm7224 = vweird.f32 %v7218
  %vm7225 = vmor %vm7223, %vm7224
  %v7226 = vsel %vm7225, %v7218, %v7222
  %v7227 = vand.u32 2147483647, %v7144
  %vm7228 = vcmp.eq.f32.partialorder %v7227, 8.507059e+37
  %v7229 = vand.u32 %v7144, 2147483648
  %v7230 = vor.u32 1.1754944e-38, %v7229
  %v7231 = vsel %vm7228, %v7230, %v7226
  %v7232 = vmul.f32 1.0, %v7231
  %v7233 = vrcp.pop %v7145
  %v7234 = vmul.f32 %v7145, %v7233
  %v7235 = vsub.f32 1.0, %v7234
  %v7236 = vmul.f32 %v7233, %v7235
  %v7237 = vadd.f32 %v7233, %v7236
  %vm7238 = vweird.f32 %v7145
  %vm7239 = vweird.f32 %v7233
  %vm7240 = vmor %vm7238, %vm7239
  %v7241 = vsel %vm7240, %v7233, %v7237
  %v7242 = vand.u32 2147483647, %v7145
  %vm7243 = vcmp.eq.f32.partialorder %v7242, 8.507059e+37
  %v7244 = vand.u32 %v7145, 2147483648
  %v7245 = vor.u32 1.1754944e-38, %v7244
  %v7246 = vsel %vm7243, %v7245, %v7241
  %v7247 = vmul.f32 1.0, %v7246
  %v7248 = vrcp.pop %v7146
  %v7249 = vmul.f32 %v7146, %v7248
  %v7250 = vsub.f32 1.0, %v7249
  %v7251 = vmul.f32 %v7248, %v7250
  %v7252 = vadd.f32 %v7248, %v7251
  %vm7253 = vweird.f32 %v7146
  %vm7254 = vweird.f32 %v7248
  %vm7255 = vmor %vm7253, %vm7254
  %v7256 = vsel %vm7255, %v7248, %v7252
  %v7257 = vand.u32 2147483647, %v7146
  %vm7258 = vcmp.eq.f32.partialorder %v7257, 8.507059e+37
  %v7259 = vand.u32 %v7146, 2147483648
  %v7260 = vor.u32 1.1754944e-38, %v7259
  %v7261 = vsel %vm7258, %v7260, %v7256
  %v7262 = vmul.f32 1.0, %v7261
  %v7263 = vrcp.pop %v7147
  %v7264 = vmul.f32 %v7147, %v7263
  %v7265 = vsub.f32 1.0, %v7264
  %v7266 = vmul.f32 %v7263, %v7265
  %v7267 = vadd.f32 %v7263, %v7266
  %vm7268 = vweird.f32 %v7147
  %vm7269 = vweird.f32 %v7263
  %vm7270 = vmor %vm7268, %vm7269
  %v7271 = vsel %vm7270, %v7263, %v7267
  %v7272 = vand.u32 2147483647, %v7147
  %vm7273 = vcmp.eq.f32.partialorder %v7272, 8.507059e+37
  %v7274 = vand.u32 %v7147, 2147483648
  %v7275 = vor.u32 1.1754944e-38, %v7274
  %v7276 = vsel %vm7273, %v7275, %v7271
  %v7277 = vmul.f32 1.0, %v7276
  %v7278 = vrcp.pop %v7148
  %v7279 = vmul.f32 %v7148, %v7278
  %v7280 = vsub.f32 1.0, %v7279
  %v7281 = vmul.f32 %v7278, %v7280
  %v7282 = vadd.f32 %v7278, %v7281
  %vm7283 = vweird.f32 %v7148
  %vm7284 = vweird.f32 %v7278
  %vm7285 = vmor %vm7283, %vm7284
  %v7286 = vsel %vm7285, %v7278, %v7282
  %v7287 = vand.u32 2147483647, %v7148
  %vm7288 = vcmp.eq.f32.partialorder %v7287, 8.507059e+37
  %v7289 = vand.u32 %v7148, 2147483648
  %v7290 = vor.u32 1.1754944e-38, %v7289
  %v7291 = vsel %vm7288, %v7290, %v7286
  %v7292 = vmul.f32 1.0, %v7291
  %v7293 = vrcp.pop %v7149
  %v7294 = vmul.f32 %v7149, %v7293
  %v7295 = vsub.f32 1.0, %v7294
  %v7296 = vmul.f32 %v7293, %v7295
  %v7297 = vadd.f32 %v7293, %v7296
  %vm7298 = vweird.f32 %v7149
  %vm7299 = vweird.f32 %v7293
  %vm7300 = vmor %vm7298, %vm7299
  %v7301 = vsel %vm7300, %v7293, %v7297
  %v7302 = vand.u32 2147483647, %v7149
  %vm7303 = vcmp.eq.f32.partialorder %v7302, 8.507059e+37
  %v7304 = vand.u32 %v7149, 2147483648
  %v7305 = vor.u32 1.1754944e-38, %v7304
  %v7306 = vsel %vm7303, %v7305, %v7301
  %v7307 = vmul.f32 1.0, %v7306
  %v7308 = vrcp.pop %v7150
  %v7309 = vmul.f32 %v7150, %v7308
  %v7310 = vsub.f32 1.0, %v7309
  %v7311 = vmul.f32 %v7308, %v7310
  %v7312 = vadd.f32 %v7308, %v7311
  %vm7313 = vweird.f32 %v7150
  %vm7314 = vweird.f32 %v7308
  %vm7315 = vmor %vm7313, %vm7314
  %v7316 = vsel %vm7315, %v7308, %v7312
  %v7317 = vand.u32 2147483647, %v7150
  %vm7318 = vcmp.eq.f32.partialorder %v7317, 8.507059e+37
  %v7319 = vand.u32 %v7150, 2147483648
  %v7320 = vor.u32 1.1754944e-38, %v7319
  %v7321 = vsel %vm7318, %v7320, %v7316
  %v7322 = vmul.f32 1.0, %v7321
  %v7323 = vrcp.pop %v7151
  %v7324 = vmul.f32 %v7151, %v7323
  %v7325 = vsub.f32 1.0, %v7324
  %v7326 = vmul.f32 %v7323, %v7325
  %v7327 = vadd.f32 %v7323, %v7326
  %vm7328 = vweird.f32 %v7151
  %vm7329 = vweird.f32 %v7323
  %vm7330 = vmor %vm7328, %vm7329
  %v7331 = vsel %vm7330, %v7323, %v7327
  %v7332 = vand.u32 2147483647, %v7151
  %vm7333 = vcmp.eq.f32.partialorder %v7332, 8.507059e+37
  %v7334 = vand.u32 %v7151, 2147483648
  %v7335 = vor.u32 1.1754944e-38, %v7334
  %v7336 = vsel %vm7333, %v7335, %v7331
  %v7337 = vmul.f32 1.0, %v7336
  %v7338 = vrcp.pop %v7152
  %v7339 = vmul.f32 %v7152, %v7338
  %v7340 = vsub.f32 1.0, %v7339
  %v7341 = vmul.f32 %v7338, %v7340
  %v7342 = vadd.f32 %v7338, %v7341
  %vm7343 = vweird.f32 %v7152
  %vm7344 = vweird.f32 %v7338
  %vm7345 = vmor %vm7343, %vm7344
  %v7346 = vsel %vm7345, %v7338, %v7342
  %v7347 = vand.u32 2147483647, %v7152
  %vm7348 = vcmp.eq.f32.partialorder %v7347, 8.507059e+37
  %v7349 = vand.u32 %v7152, 2147483648
  %v7350 = vor.u32 1.1754944e-38, %v7349
  %v7351 = vsel %vm7348, %v7350, %v7346
  %v7352 = vmul.f32 1.0, %v7351
  %v7353 = vrcp.pop %v7153
  %v7354 = vmul.f32 %v7153, %v7353
  %v7355 = vsub.f32 1.0, %v7354
  %v7356 = vmul.f32 %v7353, %v7355
  %v7357 = vadd.f32 %v7353, %v7356
  %vm7358 = vweird.f32 %v7153
  %vm7359 = vweird.f32 %v7353
  %vm7360 = vmor %vm7358, %vm7359
  %v7361 = vsel %vm7360, %v7353, %v7357
  %v7362 = vand.u32 2147483647, %v7153
  %vm7363 = vcmp.eq.f32.partialorder %v7362, 8.507059e+37
  %v7364 = vand.u32 %v7153, 2147483648
  %v7365 = vor.u32 1.1754944e-38, %v7364
  %v7366 = vsel %vm7363, %v7365, %v7361
  %v7367 = vmul.f32 1.0, %v7366
  %v7368 = vrcp.pop %v7154
  %v7369 = vmul.f32 %v7154, %v7368
  %v7370 = vsub.f32 1.0, %v7369
  %v7371 = vmul.f32 %v7368, %v7370
  %v7372 = vadd.f32 %v7368, %v7371
  %vm7373 = vweird.f32 %v7154
  %vm7374 = vweird.f32 %v7368
  %vm7375 = vmor %vm7373, %vm7374
  %v7376 = vsel %vm7375, %v7368, %v7372
  %v7377 = vand.u32 2147483647, %v7154
  %vm7378 = vcmp.eq.f32.partialorder %v7377, 8.507059e+37
  %v7379 = vand.u32 %v7154, 2147483648
  %v7380 = vor.u32 1.1754944e-38, %v7379
  %v7381 = vsel %vm7378, %v7380, %v7376
  %v7382 = vmul.f32 1.0, %v7381
  %v7383 = vrcp.pop %v7155
  %v7384 = vmul.f32 %v7155, %v7383
  %v7385 = vsub.f32 1.0, %v7384
  %v7386 = vmul.f32 %v7383, %v7385
  %v7387 = vadd.f32 %v7383, %v7386
  %vm7388 = vweird.f32 %v7155
  %vm7389 = vweird.f32 %v7383
  %vm7390 = vmor %vm7388, %vm7389
  %v7391 = vsel %vm7390, %v7383, %v7387
  %v7392 = vand.u32 2147483647, %v7155
  %vm7393 = vcmp.eq.f32.partialorder %v7392, 8.507059e+37
  %v7394 = vand.u32 %v7155, 2147483648
  %v7395 = vor.u32 1.1754944e-38, %v7394
  %v7396 = vsel %vm7393, %v7395, %v7391
  %v7397 = vmul.f32 1.0, %v7396
  %v7398 = vrcp.pop %v7156
  %v7399 = vmul.f32 %v7156, %v7398
  %v7400 = vsub.f32 1.0, %v7399
  %v7401 = vmul.f32 %v7398, %v7400
  %v7402 = vadd.f32 %v7398, %v7401
  %vm7403 = vweird.f32 %v7156
  %vm7404 = vweird.f32 %v7398
  %vm7405 = vmor %vm7403, %vm7404
  %v7406 = vsel %vm7405, %v7398, %v7402
  %v7407 = vand.u32 2147483647, %v7156
  %vm7408 = vcmp.eq.f32.partialorder %v7407, 8.507059e+37
  %v7409 = vand.u32 %v7156, 2147483648
  %v7410 = vor.u32 1.1754944e-38, %v7409
  %v7411 = vsel %vm7408, %v7410, %v7406
  %v7412 = vmul.f32 1.0, %v7411
  %v7413 = vrcp.pop %v7157
  %v7414 = vmul.f32 %v7157, %v7413
  %v7415 = vsub.f32 1.0, %v7414
  %v7416 = vmul.f32 %v7413, %v7415
  %v7417 = vadd.f32 %v7413, %v7416
  %vm7418 = vweird.f32 %v7157
  %vm7419 = vweird.f32 %v7413
  %vm7420 = vmor %vm7418, %vm7419
  %v7421 = vsel %vm7420, %v7413, %v7417
  %v7422 = vand.u32 2147483647, %v7157
  %vm7423 = vcmp.eq.f32.partialorder %v7422, 8.507059e+37
  %v7424 = vand.u32 %v7157, 2147483648
  %v7425 = vor.u32 1.1754944e-38, %v7424
  %v7426 = vsel %vm7423, %v7425, %v7421
  %v7427 = vmul.f32 1.0, %v7426
  %v7428 = vrcp.pop %v7158
  %v7429 = vmul.f32 %v7158, %v7428
  %v7430 = vsub.f32 1.0, %v7429
  %v7431 = vmul.f32 %v7428, %v7430
  %v7432 = vadd.f32 %v7428, %v7431
  %vm7433 = vweird.f32 %v7158
  %vm7434 = vweird.f32 %v7428
  %vm7435 = vmor %vm7433, %vm7434
  %v7436 = vsel %vm7435, %v7428, %v7432
  %v7437 = vand.u32 2147483647, %v7158
  %vm7438 = vcmp.eq.f32.partialorder %v7437, 8.507059e+37
  %v7439 = vand.u32 %v7158, 2147483648
  %v7440 = vor.u32 1.1754944e-38, %v7439
  %v7441 = vsel %vm7438, %v7440, %v7436
  %v7442 = vmul.f32 1.0, %v7441
  %v7443 = vrcp.pop %v7159
  %v7444 = vmul.f32 %v7159, %v7443
  %v7445 = vsub.f32 1.0, %v7444
  %v7446 = vmul.f32 %v7443, %v7445
  %v7447 = vadd.f32 %v7443, %v7446
  %vm7448 = vweird.f32 %v7159
  %vm7449 = vweird.f32 %v7443
  %vm7450 = vmor %vm7448, %vm7449
  %v7451 = vsel %vm7450, %v7443, %v7447
  %v7452 = vand.u32 2147483647, %v7159
  %vm7453 = vcmp.eq.f32.partialorder %v7452, 8.507059e+37
  %v7454 = vand.u32 %v7159, 2147483648
  %v7455 = vor.u32 1.1754944e-38, %v7454
  %v7456 = vsel %vm7453, %v7455, %v7451
  %v7457 = vmul.f32 1.0, %v7456
  %v7458 = vrcp.pop %v7160
  %v7459 = vmul.f32 %v7160, %v7458
  %v7460 = vsub.f32 1.0, %v7459
  %v7461 = vmul.f32 %v7458, %v7460
  %v7462 = vadd.f32 %v7458, %v7461
  %vm7463 = vweird.f32 %v7160
  %vm7464 = vweird.f32 %v7458
  %vm7465 = vmor %vm7463, %vm7464
  %v7466 = vsel %vm7465, %v7458, %v7462
  %v7467 = vand.u32 2147483647, %v7160
  %vm7468 = vcmp.eq.f32.partialorder %v7467, 8.507059e+37
  %v7469 = vand.u32 %v7160, 2147483648
  %v7470 = vor.u32 1.1754944e-38, %v7469
  %v7471 = vsel %vm7468, %v7470, %v7466
  %v7472 = vmul.f32 1.0, %v7471
  %v7473 = vrcp.pop %v7161
  %v7474 = vmul.f32 %v7161, %v7473
  %v7475 = vsub.f32 1.0, %v7474
  %v7476 = vmul.f32 %v7473, %v7475
  %v7477 = vadd.f32 %v7473, %v7476
  %vm7478 = vweird.f32 %v7161
  %vm7479 = vweird.f32 %v7473
  %vm7480 = vmor %vm7478, %vm7479
  %v7481 = vsel %vm7480, %v7473, %v7477
  %v7482 = vand.u32 2147483647, %v7161
  %vm7483 = vcmp.eq.f32.partialorder %v7482, 8.507059e+37
  %v7484 = vand.u32 %v7161, 2147483648
  %v7485 = vor.u32 1.1754944e-38, %v7484
  %v7486 = vsel %vm7483, %v7485, %v7481
  %v7487 = vmul.f32 1.0, %v7486
  %v7488 = vrcp.pop %v7162
  %v7489 = vmul.f32 %v7162, %v7488
  %v7490 = vsub.f32 1.0, %v7489
  %v7491 = vmul.f32 %v7488, %v7490
  %v7492 = vadd.f32 %v7488, %v7491
  %vm7493 = vweird.f32 %v7162
  %vm7494 = vweird.f32 %v7488
  %vm7495 = vmor %vm7493, %vm7494
  %v7496 = vsel %vm7495, %v7488, %v7492
  %v7497 = vand.u32 2147483647, %v7162
  %vm7498 = vcmp.eq.f32.partialorder %v7497, 8.507059e+37
  %v7499 = vand.u32 %v7162, 2147483648
  %v7500 = vor.u32 1.1754944e-38, %v7499
  %v7501 = vsel %vm7498, %v7500, %v7496
  %v7502 = vmul.f32 1.0, %v7501
  %v7503 = vrcp.pop %v7163
  %v7504 = vmul.f32 %v7163, %v7503
  %v7505 = vsub.f32 1.0, %v7504
  %v7506 = vmul.f32 %v7503, %v7505
  %v7507 = vadd.f32 %v7503, %v7506
  %vm7508 = vweird.f32 %v7163
  %vm7509 = vweird.f32 %v7503
  %vm7510 = vmor %vm7508, %vm7509
  %v7511 = vsel %vm7510, %v7503, %v7507
  %v7512 = vand.u32 2147483647, %v7163
  %vm7513 = vcmp.eq.f32.partialorder %v7512, 8.507059e+37
  %v7514 = vand.u32 %v7163, 2147483648
  %v7515 = vor.u32 1.1754944e-38, %v7514
  %v7516 = vsel %vm7513, %v7515, %v7511
  %v7517 = vmul.f32 1.0, %v7516
  %v7518 = vrcp.pop %v7164
  %v7519 = vmul.f32 %v7164, %v7518
  %v7520 = vsub.f32 1.0, %v7519
  %v7521 = vmul.f32 %v7518, %v7520
  %v7522 = vadd.f32 %v7518, %v7521
  %vm7523 = vweird.f32 %v7164
  %vm7524 = vweird.f32 %v7518
  %vm7525 = vmor %vm7523, %vm7524
  %v7526 = vsel %vm7525, %v7518, %v7522
  %v7527 = vand.u32 2147483647, %v7164
  %vm7528 = vcmp.eq.f32.partialorder %v7527, 8.507059e+37
  %v7529 = vand.u32 %v7164, 2147483648
  %v7530 = vor.u32 1.1754944e-38, %v7529
  %v7531 = vsel %vm7528, %v7530, %v7526
  %v7532 = vmul.f32 1.0, %v7531
  %v7533 = vrcp.pop %v7165
  %v7534 = vmul.f32 %v7165, %v7533
  %v7535 = vsub.f32 1.0, %v7534
  %v7536 = vmul.f32 %v7533, %v7535
  %v7537 = vadd.f32 %v7533, %v7536
  %vm7538 = vweird.f32 %v7165
  %vm7539 = vweird.f32 %v7533
  %vm7540 = vmor %vm7538, %vm7539
  %v7541 = vsel %vm7540, %v7533, %v7537
  %v7542 = vand.u32 2147483647, %v7165
  %vm7543 = vcmp.eq.f32.partialorder %v7542, 8.507059e+37
  %v7544 = vand.u32 %v7165, 2147483648
  %v7545 = vor.u32 1.1754944e-38, %v7544
  %v7546 = vsel %vm7543, %v7545, %v7541
  %v7547 = vmul.f32 1.0, %v7546
  %v7548 = vrcp.pop %v7166
  %v7549 = vmul.f32 %v7166, %v7548
  %v7550 = vsub.f32 1.0, %v7549
  %v7551 = vmul.f32 %v7548, %v7550
  %v7552 = vadd.f32 %v7548, %v7551
  %vm7553 = vweird.f32 %v7166
  %vm7554 = vweird.f32 %v7548
  %vm7555 = vmor %vm7553, %vm7554
  %v7556 = vsel %vm7555, %v7548, %v7552
  %v7557 = vand.u32 2147483647, %v7166
  %vm7558 = vcmp.eq.f32.partialorder %v7557, 8.507059e+37
  %v7559 = vand.u32 %v7166, 2147483648
  %v7560 = vor.u32 1.1754944e-38, %v7559
  %v7561 = vsel %vm7558, %v7560, %v7556
  %v7562 = vmul.f32 1.0, %v7561
  %v7563 = vrcp.pop %v7167
  %v7564 = vmul.f32 %v7167, %v7563
  %v7565 = vsub.f32 1.0, %v7564
  %v7566 = vmul.f32 %v7563, %v7565
  %v7567 = vadd.f32 %v7563, %v7566
  %vm7568 = vweird.f32 %v7167
  %vm7569 = vweird.f32 %v7563
  %vm7570 = vmor %vm7568, %vm7569
  %v7571 = vsel %vm7570, %v7563, %v7567
  %v7572 = vand.u32 2147483647, %v7167
  %vm7573 = vcmp.eq.f32.partialorder %v7572, 8.507059e+37
  %v7574 = vand.u32 %v7167, 2147483648
  %v7575 = vor.u32 1.1754944e-38, %v7574
  %v7576 = vsel %vm7573, %v7575, %v7571
  %v7577 = vmul.f32 1.0, %v7576
  %v7578 = vrcp.pop %v7168
  %v7579 = vmul.f32 %v7168, %v7578
  %v7580 = vsub.f32 1.0, %v7579
  %v7581 = vmul.f32 %v7578, %v7580
  %v7582 = vadd.f32 %v7578, %v7581
  %vm7583 = vweird.f32 %v7168
  %vm7584 = vweird.f32 %v7578
  %vm7585 = vmor %vm7583, %vm7584
  %v7586 = vsel %vm7585, %v7578, %v7582
  %v7587 = vand.u32 2147483647, %v7168
  %vm7588 = vcmp.eq.f32.partialorder %v7587, 8.507059e+37
  %v7589 = vand.u32 %v7168, 2147483648
  %v7590 = vor.u32 1.1754944e-38, %v7589
  %v7591 = vsel %vm7588, %v7590, %v7586
  %v7592 = vmul.f32 1.0, %v7591
  %v7593 = vrcp.pop %v7169
  %v7594 = vmul.f32 %v7169, %v7593
  %v7595 = vsub.f32 1.0, %v7594
  %v7596 = vmul.f32 %v7593, %v7595
  %v7597 = vadd.f32 %v7593, %v7596
  %vm7598 = vweird.f32 %v7169
  %vm7599 = vweird.f32 %v7593
  %vm7600 = vmor %vm7598, %vm7599
  %v7601 = vsel %vm7600, %v7593, %v7597
  %v7602 = vand.u32 2147483647, %v7169
  %vm7603 = vcmp.eq.f32.partialorder %v7602, 8.507059e+37
  %v7604 = vand.u32 %v7169, 2147483648
  %v7605 = vor.u32 1.1754944e-38, %v7604
  %v7606 = vsel %vm7603, %v7605, %v7601
  %v7607 = vmul.f32 1.0, %v7606
  %v7608 = vrcp.pop %v7170
  %v7609 = vmul.f32 %v7170, %v7608
  %v7610 = vsub.f32 1.0, %v7609
  %v7611 = vmul.f32 %v7608, %v7610
  %v7612 = vadd.f32 %v7608, %v7611
  %vm7613 = vweird.f32 %v7170
  %vm7614 = vweird.f32 %v7608
  %vm7615 = vmor %vm7613, %vm7614
  %v7616 = vsel %vm7615, %v7608, %v7612
  %v7617 = vand.u32 2147483647, %v7170
  %vm7618 = vcmp.eq.f32.partialorder %v7617, 8.507059e+37
  %v7619 = vand.u32 %v7170, 2147483648
  %v7620 = vor.u32 1.1754944e-38, %v7619
  %v7621 = vsel %vm7618, %v7620, %v7616
  %v7622 = vmul.f32 1.0, %v7621
  %v7623 = vrcp.pop %v7171
  %v7624 = vmul.f32 %v7171, %v7623
  %v7625 = vsub.f32 1.0, %v7624
  %v7626 = vmul.f32 %v7623, %v7625
  %v7627 = vadd.f32 %v7623, %v7626
  %vm7628 = vweird.f32 %v7171
  %vm7629 = vweird.f32 %v7623
  %vm7630 = vmor %vm7628, %vm7629
  %v7631 = vsel %vm7630, %v7623, %v7627
  %v7632 = vand.u32 2147483647, %v7171
  %vm7633 = vcmp.eq.f32.partialorder %v7632, 8.507059e+37
  %v7634 = vand.u32 %v7171, 2147483648
  %v7635 = vor.u32 1.1754944e-38, %v7634
  %v7636 = vsel %vm7633, %v7635, %v7631
  %v7637 = vmul.f32 1.0, %v7636
  %v7638 = vrcp.pop %v7172
  %v7639 = vmul.f32 %v7172, %v7638
  %v7640 = vsub.f32 1.0, %v7639
  %v7641 = vmul.f32 %v7638, %v7640
  %v7642 = vadd.f32 %v7638, %v7641
  %vm7643 = vweird.f32 %v7172
  %vm7644 = vweird.f32 %v7638
  %vm7645 = vmor %vm7643, %vm7644
  %v7646 = vsel %vm7645, %v7638, %v7642
  %v7647 = vand.u32 2147483647, %v7172
  %vm7648 = vcmp.eq.f32.partialorder %v7647, 8.507059e+37
  %v7649 = vand.u32 %v7172, 2147483648
  %v7650 = vor.u32 1.1754944e-38, %v7649
  %v7651 = vsel %vm7648, %v7650, %v7646
  %v7652 = vmul.f32 1.0, %v7651
  %v7653 = vmul.f32 %v6547, %v6294
  %v7654 = vmul.f32 %v6562, %v6296
  %v7655 = vmul.f32 %v6577, %v6299
  %v7656 = vmul.f32 %v6592, %v6301
  %v7657 = vmul.f32 %v6607, %v6304
  %v7658 = vmul.f32 %v6622, %v6306
  %v7659 = vmul.f32 %v6637, %v6309
  %v7660 = vmul.f32 %v6652, %v6311
  %v7661 = vmul.f32 %v6667, %v6314
  %v7662 = vmul.f32 %v6682, %v6316
  %v7663 = vmul.f32 %v6697, %v6319
  %v7664 = vmul.f32 %v6712, %v6321
  %v7665 = vmul.f32 %v6727, %v6324
  %v7666 = vmul.f32 %v6742, %v6326
  %v7667 = vmul.f32 %v6757, %v6329
  %v7668 = vmul.f32 %v6772, %v6331
  %v7669 = vmul.f32 %v6787, %v6334
  %v7670 = vmul.f32 %v6802, %v6336
  %v7671 = vmul.f32 %v6817, %v6339
  %v7672 = vmul.f32 %v6832, %v6341
  %v7673 = vmul.f32 %v6847, %v6344
  %v7674 = vmul.f32 %v6862, %v6346
  %v7675 = vmul.f32 %v6877, %v6349
  %v7676 = vmul.f32 %v6892, %v6351
  %v7677 = vmul.f32 %v6907, %v6354
  %v7678 = vmul.f32 %v6922, %v6356
  %v7679 = vmul.f32 %v6937, %v6359
  %v7680 = vmul.f32 %v6952, %v6361
  %v7681 = vmul.f32 %v6967, %v6364
  %v7682 = vmul.f32 %v6982, %v6366
  %v7683 = vmul.f32 %v6997, %v6369
  %v7684 = vmul.f32 %v7012, %v6371
  %v7685 = vadd.f32 %v6011, %v7653
  %v7686 = vadd.f32 %v6013, %v7654
  %v7687 = vadd.f32 %v6016, %v7655
  %v7688 = vadd.f32 %v6018, %v7656
  %v7689 = vadd.f32 %v6021, %v7657
  %v7690 = vadd.f32 %v6023, %v7658
  %v7691 = vadd.f32 %v6026, %v7659
  %v7692 = vadd.f32 %v6028, %v7660
  %v7693 = vadd.f32 %v6031, %v7661
  %v7694 = vadd.f32 %v6033, %v7662
  %v7695 = vadd.f32 %v6036, %v7663
  %v7696 = vadd.f32 %v6038, %v7664
  %v7697 = vadd.f32 %v6041, %v7665
  %v7698 = vadd.f32 %v6043, %v7666
  %v7699 = vadd.f32 %v6046, %v7667
  %v7700 = vadd.f32 %v6048, %v7668
  %v7701 = vadd.f32 %v6051, %v7669
  %v7702 = vadd.f32 %v6053, %v7670
  %v7703 = vadd.f32 %v6056, %v7671
  %v7704 = vadd.f32 %v6058, %v7672
  %v7705 = vadd.f32 %v6061, %v7673
  %v7706 = vadd.f32 %v6063, %v7674
  %v7707 = vadd.f32 %v6066, %v7675
  %v7708 = vadd.f32 %v6068, %v7676
  %v7709 = vadd.f32 %v6071, %v7677
  %v7710 = vadd.f32 %v6073, %v7678
  %v7711 = vadd.f32 %v6076, %v7679
  %v7712 = vadd.f32 %v6078, %v7680
  %v7713 = vadd.f32 %v6081, %v7681
  %v7714 = vadd.f32 %v6083, %v7682
  %v7715 = vadd.f32 %v6086, %v7683
  %v7716 = vadd.f32 %v6088, %v7684
  %v7717 = vtanh.pop %v7685
  %v7718 = vtanh.pop %v7686
  %v7719 = vtanh.pop %v7687
  %v7720 = vtanh.pop %v7688
  %v7721 = vtanh.pop %v7689
  %v7722 = vtanh.pop %v7690
  %v7723 = vtanh.pop %v7691
  %v7724 = vtanh.pop %v7692
  %v7725 = vtanh.pop %v7693
  %v7726 = vtanh.pop %v7694
  %v7727 = vtanh.pop %v7695
  %v7728 = vtanh.pop %v7696
  %v7729 = vtanh.pop %v7697
  %v7730 = vtanh.pop %v7698
  %v7731 = vtanh.pop %v7699
  %v7732 = vtanh.pop %v7700
  %v7733 = vtanh.pop %v7701
  %v7734 = vtanh.pop %v7702
  %v7735 = vtanh.pop %v7703
  %v7736 = vtanh.pop %v7704
  %v7737 = vtanh.pop %v7705
  %v7738 = vtanh.pop %v7706
  %v7739 = vtanh.pop %v7707
  %v7740 = vtanh.pop %v7708
  %v7741 = vtanh.pop %v7709
  %v7742 = vtanh.pop %v7710
  %v7743 = vtanh.pop %v7711
  %v7744 = vtanh.pop %v7712
  %v7745 = vtanh.pop %v7713
  %v7746 = vtanh.pop %v7714
  %v7747 = vtanh.pop %v7715
  %v7748 = vtanh.pop %v7716
  %v7749 = vsub.f32 1.0, %v7187
  %v7750 = vsub.f32 1.0, %v7202
  %v7751 = vsub.f32 1.0, %v7217
  %v7752 = vsub.f32 1.0, %v7232
  %v7753 = vsub.f32 1.0, %v7247
  %v7754 = vsub.f32 1.0, %v7262
  %v7755 = vsub.f32 1.0, %v7277
  %v7756 = vsub.f32 1.0, %v7292
  %v7757 = vsub.f32 1.0, %v7307
  %v7758 = vsub.f32 1.0, %v7322
  %v7759 = vsub.f32 1.0, %v7337
  %v7760 = vsub.f32 1.0, %v7352
  %v7761 = vsub.f32 1.0, %v7367
  %v7762 = vsub.f32 1.0, %v7382
  %v7763 = vsub.f32 1.0, %v7397
  %v7764 = vsub.f32 1.0, %v7412
  %v7765 = vsub.f32 1.0, %v7427
  %v7766 = vsub.f32 1.0, %v7442
  %v7767 = vsub.f32 1.0, %v7457
  %v7768 = vsub.f32 1.0, %v7472
  %v7769 = vsub.f32 1.0, %v7487
  %v7770 = vsub.f32 1.0, %v7502
  %v7771 = vsub.f32 1.0, %v7517
  %v7772 = vsub.f32 1.0, %v7532
  %v7773 = vsub.f32 1.0, %v7547
  %v7774 = vsub.f32 1.0, %v7562
  %v7775 = vsub.f32 1.0, %v7577
  %v7776 = vsub.f32 1.0, %v7592
  %v7777 = vsub.f32 1.0, %v7607
  %v7778 = vsub.f32 1.0, %v7622
  %v7779 = vsub.f32 1.0, %v7637
  %v7780 = vsub.f32 1.0, %v7652
  %v7781 = vmul.f32 %v7749, %v7717
  %v7782 = vmul.f32 %v7750, %v7718
  %v7783 = vmul.f32 %v7751, %v7719
  %v7784 = vmul.f32 %v7752, %v7720
  %v7785 = vmul.f32 %v7753, %v7721
  %v7786 = vmul.f32 %v7754, %v7722
  %v7787 = vmul.f32 %v7755, %v7723
  %v7788 = vmul.f32 %v7756, %v7724
  %v7789 = vmul.f32 %v7757, %v7725
  %v7790 = vmul.f32 %v7758, %v7726
  %v7791 = vmul.f32 %v7759, %v7727
  %v7792 = vmul.f32 %v7760, %v7728
  %v7793 = vmul.f32 %v7761, %v7729
  %v7794 = vmul.f32 %v7762, %v7730
  %v7795 = vmul.f32 %v7763, %v7731
  %v7796 = vmul.f32 %v7764, %v7732
  %v7797 = vmul.f32 %v7765, %v7733
  %v7798 = vmul.f32 %v7766, %v7734
  %v7799 = vmul.f32 %v7767, %v7735
  %v7800 = vmul.f32 %v7768, %v7736
  %v7801 = vmul.f32 %v7769, %v7737
  %v7802 = vmul.f32 %v7770, %v7738
  %v7803 = vmul.f32 %v7771, %v7739
  %v7804 = vmul.f32 %v7772, %v7740
  %v7805 = vmul.f32 %v7773, %v7741
  %v7806 = vmul.f32 %v7774, %v7742
  %v7807 = vmul.f32 %v7775, %v7743
  %v7808 = vmul.f32 %v7776, %v7744
  %v7809 = vmul.f32 %v7777, %v7745
  %v7810 = vmul.f32 %v7778, %v7746
  %v7811 = vmul.f32 %v7779, %v7747
  %v7812 = vmul.f32 %v7780, %v7748
  %v7813 = vmul.f32 %v7187, %v5390
  %v7814 = vmul.f32 %v7202, %v5391
  %v7815 = vmul.f32 %v7217, %v5392
  %v7816 = vmul.f32 %v7232, %v5393
  %v7817 = vmul.f32 %v7247, %v5394
  %v7818 = vmul.f32 %v7262, %v5395
  %v7819 = vmul.f32 %v7277, %v5396
  %v7820 = vmul.f32 %v7292, %v5397
  %v7821 = vmul.f32 %v7307, %v5398
  %v7822 = vmul.f32 %v7322, %v5399
  %v7823 = vmul.f32 %v7337, %v5400
  %v7824 = vmul.f32 %v7352, %v5401
  %v7825 = vmul.f32 %v7367, %v5402
  %v7826 = vmul.f32 %v7382, %v5403
  %v7827 = vmul.f32 %v7397, %v5404
  %v7828 = vmul.f32 %v7412, %v5405
  %v7829 = vmul.f32 %v7427, %v5406
  %v7830 = vmul.f32 %v7442, %v5407
  %v7831 = vmul.f32 %v7457, %v5408
  %v7832 = vmul.f32 %v7472, %v5409
  %v7833 = vmul.f32 %v7487, %v5410
  %v7834 = vmul.f32 %v7502, %v5411
  %v7835 = vmul.f32 %v7517, %v5412
  %v7836 = vmul.f32 %v7532, %v5413
  %v7837 = vmul.f32 %v7547, %v5414
  %v7838 = vmul.f32 %v7562, %v5415
  %v7839 = vmul.f32 %v7577, %v5416
  %v7840 = vmul.f32 %v7592, %v5417
  %v7841 = vmul.f32 %v7607, %v5418
  %v7842 = vmul.f32 %v7622, %v5419
  %v7843 = vmul.f32 %v7637, %v5420
  %v7844 = vmul.f32 %v7652, %v5421
  %v7845 = vadd.f32 %v7781, %v7813
  %v7846 = vadd.f32 %v7782, %v7814
  %v7847 = vadd.f32 %v7783, %v7815
  %v7848 = vadd.f32 %v7784, %v7816
  %v7849 = vadd.f32 %v7785, %v7817
  %v7850 = vadd.f32 %v7786, %v7818
  %v7851 = vadd.f32 %v7787, %v7819
  %v7852 = vadd.f32 %v7788, %v7820
  %v7853 = vadd.f32 %v7789, %v7821
  %v7854 = vadd.f32 %v7790, %v7822
  %v7855 = vadd.f32 %v7791, %v7823
  %v7856 = vadd.f32 %v7792, %v7824
  %v7857 = vadd.f32 %v7793, %v7825
  %v7858 = vadd.f32 %v7794, %v7826
  %v7859 = vadd.f32 %v7795, %v7827
  %v7860 = vadd.f32 %v7796, %v7828
  %v7861 = vadd.f32 %v7797, %v7829
  %v7862 = vadd.f32 %v7798, %v7830
  %v7863 = vadd.f32 %v7799, %v7831
  %v7864 = vadd.f32 %v7800, %v7832
  %v7865 = vadd.f32 %v7801, %v7833
  %v7866 = vadd.f32 %v7802, %v7834
  %v7867 = vadd.f32 %v7803, %v7835
  %v7868 = vadd.f32 %v7804, %v7836
  %v7869 = vadd.f32 %v7805, %v7837
  %v7870 = vadd.f32 %v7806, %v7838
  %v7871 = vadd.f32 %v7807, %v7839
  %v7872 = vadd.f32 %v7808, %v7840
  %v7873 = vadd.f32 %v7809, %v7841
  %v7874 = vadd.f32 %v7810, %v7842
  %v7875 = vadd.f32 %v7811, %v7843
  %v7876 = vadd.f32 %v7812, %v7844
  %v7877 = vpack.c.bf16 %v7846, %v7845
  %v7878 = vpack.c.bf16 %v7848, %v7847
  %v7879 = vpack.c.bf16 %v7850, %v7849
  %v7880 = vpack.c.bf16 %v7852, %v7851
  %v7881 = vpack.c.bf16 %v7854, %v7853
  %v7882 = vpack.c.bf16 %v7856, %v7855
  %v7883 = vpack.c.bf16 %v7858, %v7857
  %v7884 = vpack.c.bf16 %v7860, %v7859
  %v7885 = vpack.c.bf16 %v7862, %v7861
  %v7886 = vpack.c.bf16 %v7864, %v7863
  %v7887 = vpack.c.bf16 %v7866, %v7865
  %v7888 = vpack.c.bf16 %v7868, %v7867
  %v7889 = vpack.c.bf16 %v7870, %v7869
  %v7890 = vpack.c.bf16 %v7872, %v7871
  %v7891 = vpack.c.bf16 %v7874, %v7873
  %v7892 = vpack.c.bf16 %v7876, %v7875
  %v7893 = vld [vmem:[%s11] sm:$0xf]
  %v7894 = vld [vmem:[%s11 + $0x4] sm:$0xf]
  %v7895 = vld [vmem:[%s11 + $0x8] sm:$0xf]
  %v7896 = vld [vmem:[%s11 + $0xc] sm:$0xf]
  %v7897 = vld [vmem:[%s11 + $0x10] sm:$0xf]
  %v7898 = vld [vmem:[%s11 + $0x14] sm:$0xf]
  %v7899 = vld [vmem:[%s11 + $0x18] sm:$0xf]
  %v7900 = vld [vmem:[%s11 + $0x1c] sm:$0xf]
  %v7901 = vld [vmem:[%s11 + $0x20] sm:$0xf]
  %v7902 = vld [vmem:[%s11 + $0x24] sm:$0xf]
  %v7903 = vld [vmem:[%s11 + $0x28] sm:$0xf]
  %v7904 = vld [vmem:[%s11 + $0x2c] sm:$0xf]
  %v7905 = vld [vmem:[%s11 + $0x30] sm:$0xf]
  %v7906 = vld [vmem:[%s11 + $0x34] sm:$0xf]
  %v7907 = vld [vmem:[%s11 + $0x38] sm:$0xf]
  %v7908 = vld [vmem:[%s11 + $0x3c] sm:$0xf]
  %v7909 = vld [vmem:[%s12] sm:$0x1]
  %v7911 = vperm.slane %v7909, 0
  %v7929 = vunpack.c.l.b16 %v7893
  %v7930 = vunpack.c.l.b16 %v7894
  %v7931 = vunpack.c.l.b16 %v7895
  %v7932 = vunpack.c.l.b16 %v7896
  %v7933 = vunpack.c.l.b16 %v7897
  %v7934 = vunpack.c.l.b16 %v7898
  %v7935 = vunpack.c.l.b16 %v7899
  %v7936 = vunpack.c.l.b16 %v7900
  %v7937 = vunpack.c.l.b16 %v7901
  %v7938 = vunpack.c.l.b16 %v7902
  %v7939 = vunpack.c.l.b16 %v7903
  %v7940 = vunpack.c.l.b16 %v7904
  %v7941 = vunpack.c.l.b16 %v7905
  %v7942 = vunpack.c.l.b16 %v7906
  %v7943 = vunpack.c.l.b16 %v7907
  %v7944 = vunpack.c.l.b16 %v7908
  %v7945 = vpack.c.b16 %v7930, %v7929
  %v7946 = vpack.c.b16 %v7932, %v7931
  %v7947 = vpack.c.b16 %v7934, %v7933
  %v7948 = vpack.c.b16 %v7936, %v7935
  %v7949 = vpack.c.b16 %v7938, %v7937
  %v7950 = vpack.c.b16 %v7940, %v7939
  %v7951 = vpack.c.b16 %v7942, %v7941
  %v7952 = vpack.c.b16 %v7944, %v7943
  %7961 = vmatpush.bf16.msra.mxu0 %v7952
  %7962 = vmatpush.bf16.msra.mxu0 %v7951
  %7963 = vmatpush.bf16.msra.mxu0 %v7950
  %7964 = vmatpush.bf16.msra.mxu0 %v7949
  %7965 = vmatpush.bf16.msra.mxu0 %v7948
  %7966 = vmatpush.bf16.msra.mxu0 %v7947
  %7967 = vmatpush.bf16.msra.mxu0 %v7946
  %7968 = vmatpush.bf16.msra.mxu0 %v7945
  %7969 = vmatmul.bf16.gmra.mxu0 %v7877
  %v7970 = vpop.f32.mrf.mxu0
  %v7971 = vadd.f32 %v7911, %v7970
  %v7972 = vpop.f32.mrf.mxu0
  %v7973 = vadd.f32 %v7911, %v7972
  %7974 = vmatmul.bf16.gmra.mxu0 %v7878
  %v7975 = vpop.f32.mrf.mxu0
  %v7976 = vadd.f32 %v7911, %v7975
  %v7977 = vpop.f32.mrf.mxu0
  %v7978 = vadd.f32 %v7911, %v7977
  %7979 = vmatmul.bf16.gmra.mxu0 %v7879
  %v7980 = vpop.f32.mrf.mxu0
  %v7981 = vadd.f32 %v7911, %v7980
  %v7982 = vpop.f32.mrf.mxu0
  %v7983 = vadd.f32 %v7911, %v7982
  %7984 = vmatmul.bf16.gmra.mxu0 %v7880
  %v7985 = vpop.f32.mrf.mxu0
  %v7986 = vadd.f32 %v7911, %v7985
  %v7987 = vpop.f32.mrf.mxu0
  %v7988 = vadd.f32 %v7911, %v7987
  %7989 = vmatmul.bf16.gmra.mxu0 %v7881
  %v7990 = vpop.f32.mrf.mxu0
  %v7991 = vadd.f32 %v7911, %v7990
  %v7992 = vpop.f32.mrf.mxu0
  %v7993 = vadd.f32 %v7911, %v7992
  %7994 = vmatmul.bf16.gmra.mxu0 %v7882
  %v7995 = vpop.f32.mrf.mxu0
  %v7996 = vadd.f32 %v7911, %v7995
  %v7997 = vpop.f32.mrf.mxu0
  %v7998 = vadd.f32 %v7911, %v7997
  %7999 = vmatmul.bf16.gmra.mxu0 %v7883
  %v8000 = vpop.f32.mrf.mxu0
  %v8001 = vadd.f32 %v7911, %v8000
  %v8002 = vpop.f32.mrf.mxu0
  %v8003 = vadd.f32 %v7911, %v8002
  %8004 = vmatmul.bf16.gmra.mxu0 %v7884
  %v8005 = vpop.f32.mrf.mxu0
  %v8006 = vadd.f32 %v7911, %v8005
  %v8007 = vpop.f32.mrf.mxu0
  %v8008 = vadd.f32 %v7911, %v8007
  %8009 = vmatmul.bf16.gmra.mxu0 %v7885
  %v8010 = vpop.f32.mrf.mxu0
  %v8011 = vadd.f32 %v7911, %v8010
  %v8012 = vpop.f32.mrf.mxu0
  %v8013 = vadd.f32 %v7911, %v8012
  %8014 = vmatmul.bf16.gmra.mxu0 %v7886
  %v8015 = vpop.f32.mrf.mxu0
  %v8016 = vadd.f32 %v7911, %v8015
  %v8017 = vpop.f32.mrf.mxu0
  %v8018 = vadd.f32 %v7911, %v8017
  %8019 = vmatmul.bf16.gmra.mxu0 %v7887
  %v8020 = vpop.f32.mrf.mxu0
  %v8021 = vadd.f32 %v7911, %v8020
  %v8022 = vpop.f32.mrf.mxu0
  %v8023 = vadd.f32 %v7911, %v8022
  %8024 = vmatmul.bf16.gmra.mxu0 %v7888
  %v8025 = vpop.f32.mrf.mxu0
  %v8026 = vadd.f32 %v7911, %v8025
  %v8027 = vpop.f32.mrf.mxu0
  %v8028 = vadd.f32 %v7911, %v8027
  %8029 = vmatmul.bf16.gmra.mxu0 %v7889
  %v8030 = vpop.f32.mrf.mxu0
  %v8031 = vadd.f32 %v7911, %v8030
  %v8032 = vpop.f32.mrf.mxu0
  %v8033 = vadd.f32 %v7911, %v8032
  %8034 = vmatmul.bf16.gmra.mxu0 %v7890
  %v8035 = vpop.f32.mrf.mxu0
  %v8036 = vadd.f32 %v7911, %v8035
  %v8037 = vpop.f32.mrf.mxu0
  %v8038 = vadd.f32 %v7911, %v8037
  %8039 = vmatmul.bf16.gmra.mxu0 %v7891
  %v8040 = vpop.f32.mrf.mxu0
  %v8041 = vadd.f32 %v7911, %v8040
  %v8042 = vpop.f32.mrf.mxu0
  %v8043 = vadd.f32 %v7911, %v8042
  %8044 = vmatmul.bf16.gmra.mxu0 %v7892
  %v8045 = vpop.f32.mrf.mxu0
  %v8046 = vadd.f32 %v7911, %v8045
  %v8047 = vpop.f32.mrf.mxu0
  %v8048 = vadd.f32 %v7911, %v8047
  %8049 = vdwg.mxu0
  %8050 = vst [vmem:[%s13] sm:$0xff] %v7971
  %8051 = vst [vmem:[%s13 + $0x8] sm:$0xff] %v7973
  %8052 = vst [vmem:[%s13 + $0x10] sm:$0xff] %v7976
  %8053 = vst [vmem:[%s13 + $0x18] sm:$0xff] %v7978
  %8054 = vst [vmem:[%s13 + $0x20] sm:$0xff] %v7981
  %8055 = vst [vmem:[%s13 + $0x28] sm:$0xff] %v7983
  %8056 = vst [vmem:[%s13 + $0x30] sm:$0xff] %v7986
  %8057 = vst [vmem:[%s13 + $0x38] sm:$0xff] %v7988
  %8058 = vst [vmem:[%s13 + $0x40] sm:$0xff] %v7991
  %8059 = vst [vmem:[%s13 + $0x48] sm:$0xff] %v7993
  %8060 = vst [vmem:[%s13 + $0x50] sm:$0xff] %v7996
  %8061 = vst [vmem:[%s13 + $0x58] sm:$0xff] %v7998
  %8062 = vst [vmem:[%s13 + $0x60] sm:$0xff] %v8001
  %8063 = vst [vmem:[%s13 + $0x68] sm:$0xff] %v8003
  %8064 = vst [vmem:[%s13 + $0x70] sm:$0xff] %v8006
  %8065 = vst [vmem:[%s13 + $0x78] sm:$0xff] %v8008
  %8066 = vst [vmem:[%s13 + $0x80] sm:$0xff] %v8011
  %8067 = vst [vmem:[%s13 + $0x88] sm:$0xff] %v8013
  %8068 = vst [vmem:[%s13 + $0x90] sm:$0xff] %v8016
  %8069 = vst [vmem:[%s13 + $0x98] sm:$0xff] %v8018
  %8070 = vst [vmem:[%s13 + $0xa0] sm:$0xff] %v8021
  %8071 = vst [vmem:[%s13 + $0xa8] sm:$0xff] %v8023
  %8072 = vst [vmem:[%s13 + $0xb0] sm:$0xff] %v8026
  %8073 = vst [vmem:[%s13 + $0xb8] sm:$0xff] %v8028
  %8074 = vst [vmem:[%s13 + $0xc0] sm:$0xff] %v8031
  %8075 = vst [vmem:[%s13 + $0xc8] sm:$0xff] %v8033
  %8076 = vst [vmem:[%s13 + $0xd0] sm:$0xff] %v8036
  %8077 = vst [vmem:[%s13 + $0xd8] sm:$0xff] %v8038
  %8078 = vst [vmem:[%s13 + $0xe0] sm:$0xff] %v8041
  %8079 = vst [vmem:[%s13 + $0xe8] sm:$0xff] %v8043
  %8080 = vst [vmem:[%s13 + $0xf0] sm:$0xff] %v8046
  %8081 = vst [vmem:[%s13 + $0xf8] sm:$0xff] %v8048
  // Predicated region
  $region54: #{gcn_forward.1} parent=0 // pred_check
    _
  $region55: #{gcn_forward.1} parent=0 // pred_check_branch
    %8083 = sbr.rel (0) target = $region57
  $region56: #{gcn_forward.1} parent=0 // pred_region
    _
  $region57: #{gcn_forward.1} parent=0 // pred_fallthru
    _
  // Predicated region
  $region58: #{gcn_forward.1} parent=0 // pred_check
    _
  $region59: #{gcn_forward.1} parent=0 // pred_check_branch
    %8085 = sbr.rel (0) target = $region61
  $region60: #{gcn_forward.1} parent=0 // pred_region
    _
  $region61: #{gcn_forward.1} parent=0 // pred_fallthru
    _

</llo_original>
